<compile_context>
chip_gen: v7x
topology: tpu7x:2x2x1
jax: 0.10.0
libtpu: 0.0.40
codegen_flags: <defaults>
</compile_context>

<pallas_src>
import functools
import math

import jax
import jax.numpy as jnp
from jax.experimental import pallas as pl
from jax.experimental.pallas import tpu as pltpu

DATA_SIZE = 4
LATENT_SIZE = 4
CONTEXT_SIZE = 8
HIDDEN_SIZE = 16
U_SIZE = 1
DT = 0.01
_LANES = 128


# --------------------------------------------------------------------------
# Fused kernel: encoder GRU + qz0 + Euler-Maruyama SDE (with logqp) + loss
# --------------------------------------------------------------------------
def _latent_sde_kernel(xs_ref, noise_ref, w_ref, b_ref, o_ref,
                       *, woffs, boffs, noise_std, T, B):
    H, L = HIDDEN_SIZE, LATENT_SIZE

    def W(name):
        r0, nr, nc = woffs[name]
        return w_ref[r0:r0 + nr, :nc]                    # (nr, nc)

    def bvec(name):
        r0, nc = boffs[name]
        return b_ref[r0:r0 + 1, :nc]                     # (1, nc)

    def dot(a, w):
        return jnp.dot(a, w, preferred_element_type=jnp.float32)

    # ---- hoist every weight / bias out of the unrolled recurrences --------
    wih_rz, wih_n = W('wih_rz'), W('wih_n')
    whh_rz, whh_n = W('whh_rz'), W('whh_n')
    bih_rz, bih_n = bvec('bih_rz'), bvec('bih_n')
    bhh_rz, bhh_n = bvec('bhh_rz'), bvec('bhh_n')
    encw, encb = W('encw'), bvec('encb')
    qzw, qzb = W('qzw'), bvec('qzb')
    fw1_z, fw1_c, fb1 = W('fw1_z'), W('fw1_c'), bvec('fb1')
    fw2, fb2 = W('fw2'), bvec('fb2')
    fw3, fb3 = W('fw3'), bvec('fb3')
    hw_eff, hb_eff = W('hw_eff'), bvec('hb_eff')
    projw, projb = W('projw'), bvec('projb')
    gw1, gb1 = W('gw1'), bvec('gb1')
    gw2, gb2 = W('gw2'), bvec('gb2')
    pz0_mean, pz0_logstd = bvec('pz0_mean'), bvec('pz0_logstd')

    xs_all = xs_ref[...]          # (T*B, D)
    noise_all = noise_ref[...]    # (T*B, L): rows 0..B-1 -> z0 noise,
                                  # rows (k+1)*B.. -> sqrt(dt)-scaled dW_k

    # ---- encoder, hoisted part: input-to-hidden matmuls for all timesteps.
    # c_net(x) is folded into wih_*/bih_* at pack time (exact, linear).
    gi_rz_all = dot(xs_all, wih_rz) + bih_rz             # (T*B, 2H)
    gi_n_all = dot(xs_all, wih_n) + bih_n                # (T*B, H)

    # ---- encoder, serial part: reverse-time GRU recurrence ----------------
    # ctx = flip(encoder(flip(cat(xs, c_net(xs))))): processing t = T-1 .. 0
    # and storing at index t realizes both flips by index arithmetic.
    h = jnp.zeros((B, H), jnp.float32)
    h_list = [None] * T
    for i in range(T):
        t = T - 1 - i
        gi_rz = gi_rz_all[t * B:(t + 1) * B]
        gi_n = gi_n_all[t * B:(t + 1) * B]
        s = jax.nn.sigmoid(gi_rz + dot(h, whh_rz) + bhh_rz)   # (B, 2H) r|z
        r, zg = s[:, :H], s[:, H:]
        n = jnp.tanh(gi_n + r * (dot(h, whh_n) + bhh_n))
        h = (1.0 - zg) * n + zg * h
        h_list[t] = h

    # Batched output projection + f-net context term (one matmul each).
    h_all = jnp.concatenate(h_list, axis=0)              # (T*B, H)
    ctx_all = dot(h_all, encw) + encb                    # (T*B, C)
    fc_all = dot(ctx_all, fw1_c) + fb1                   # (T*B, H)

    # ---- qz0 + sample z0 ---------------------------------------------------
    q = dot(ctx_all[:B], qzw) + qzb                      # (B, 2L)
    qm, qls = q[:, :L], q[:, L:]
    z = qm + 0.2 * jnp.exp(qls) * noise_all[:B]          # (B, L)

    # ---- Euler-Maruyama + fused loss accumulation --------------------------
    log_c = math.log(noise_std) + 0.5 * math.log(2.0 * math.pi)
    inv_2var = 1.0 / (2.0 * noise_std * noise_std)
    lp_acc = jnp.zeros((B, 1), jnp.float32)
    r_acc = jnp.zeros((B, 1), jnp.float32)
    path_acc = jnp.zeros((B, 1), jnp.float32)

    def observe(zcur, t):
        _x = dot(zcur, projw) + projb                    # (B, D)
        diff = xs_all[t * B:(t + 1) * B] - _x
        lp = -(diff * diff) * inv_2var - log_c
        return (jnp.sum(lp, axis=1, keepdims=True),
                jnp.sqrt(jnp.sum(_x * _x, axis=1, keepdims=True)))

    for k in range(T - 1):
        lp_k, r_k = observe(z, k)
        lp_acc += lp_k
        r_acc += r_k

        # posterior drift f(ts[k], z); ctx index == k+1 (uniform ts, dt==DT).
        h1 = jax.nn.softplus(dot(z, fw1_z) + fc_all[(k + 1) * B:(k + 2) * B])
        h2 = jax.nn.softplus(dot(h1, fw2) + fb2)
        f = dot(h2, fw3) + fb3                           # (B, L)

        # prior drift h(ts[k], z): projector + c_net + h_net folded (exact).
        hdrift = dot(z, hw_eff) + hb_eff                 # (B, L)

        # diagonal diffusion: per-dim 1->H->1 sigmoid nets as block matmuls.
        hg = jax.nn.softplus(dot(z, gw1) + gb1)          # (B, L*H)
        g = jax.nn.sigmoid(dot(hg, gw2) + gb2)           # (B, L)

        # logqp path increment; g > 0 (sigmoid) so max() is the stable div.
        u_stab = (f - hdrift) / jnp.maximum(g, 1e-7)
        path_acc += 0.5 * DT * jnp.sum(u_stab * u_stab, axis=1, keepdims=True)

        # Euler-Maruyama step (noise rows already scaled by sqrt(dt)).
        z = z + f * DT + g * noise_all[(k + 1) * B:(k + 2) * B]

    lp_k, r_k = observe(z, T - 1)
    lp_acc += lp_k
    r_acc += r_k

    # KL(q(z0) || p(z0)) for diagonal Normals (scale = exp(logstd), as torch).
    kl = ((pz0_logstd - qls)
          + (jnp.exp(2.0 * qls) + (qm - pz0_mean) ** 2)
          / (2.0 * jnp.exp(2.0 * pz0_logstd))
          - 0.5)
    logqp0 = jnp.sum(kl, axis=1, keepdims=True)          # (B, 1)

    inv_b = 1.0 / B
    lp_s = jnp.sum(lp_acc, axis=0, keepdims=True) * inv_b            # (1,1)
    kl_s = jnp.sum(logqp0 + 35.0 * path_acc, axis=0, keepdims=True) * inv_b
    r_s = jnp.sum(r_acc, axis=0, keepdims=True) * inv_b

    # Single lane-dense output row: lane0=log_pxs, lane1=kl-term, lane2=r.
    lane = jax.lax.broadcasted_iota(jnp.int32, (1, _LANES), 1)
    row = jnp.where(lane == 0, lp_s,
                    jnp.where(lane == 1, kl_s,
                              jnp.where(lane == 2, r_s, 0.0)))
    o_ref[...] = row


# --------------------------------------------------------------------------
# Parameter packing: algebraic folds + two VMEM slabs (weights / biases)
# --------------------------------------------------------------------------
def _pack_params(p):
    H, L, D, U = HIDDEN_SIZE, LATENT_SIZE, DATA_SIZE, U_SIZE
    LH = L * H

    cw = p['c_w'].T.astype(jnp.float32)                  # (D, U)
    cb = p['c_b'].astype(jnp.float32)                    # (1, U)

    # Fold c_net into GRU input weights: u = x@cw + cb is linear in x.
    wih = p['gru_wih'].T                                 # (D+U, 3H), r|z|n
    bih = p['gru_bih'].reshape(1, 3 * H)
    wih_x, wih_u = wih[:D], wih[D:]
    wih_eff = wih_x + cw @ wih_u                         # (D, 3H)
    bih_eff = bih + cb @ wih_u                           # (1, 3H)

    whh = p['gru_whh'].T                                 # (H, 3H)
    bhh = p['gru_bhh'].reshape(1, 3 * H)

    # Fold projector + c_net into h_net: hdrift = z @ hw_eff + hb_eff.
    projw = p['proj_w'].T                                # (L, D)
    projb = p['proj_b']                                  # (1, D)
    hw = p['h_w'].T                                      # (L+U, L)
    hb = p['h_b']                                        # (1, L)
    hw_y, hw_u = hw[:L], hw[L:]
    hw_eff = hw_y + (projw @ cw) @ hw_u                  # (L, L)
    hb_eff = hb + (projb @ cw + cb) @ hw_u               # (1, L)

    # Split f-net first layer (kills the per-step zc concat).
    fw1 = p['f_w1'].T                                    # (L+C, H)
    fw1_z, fw1_c = fw1[:L], fw1[L:]

    # Per-latent-dim g-nets as block-structured matrices.
    g_w1m = jnp.zeros((L, LH), jnp.float32)
    g_w2bd = jnp.zeros((LH, L), jnp.float32)
    for j in range(L):
        g_w1m = g_w1m.at[j, j * H:(j + 1) * H].set(p['g_w1'][j])
        g_w2bd = g_w2bd.at[j * H:(j + 1) * H, j].set(p['g_w2'][j])

    weights = [
        ('wih_rz', wih_eff[:, :2 * H]),   # (D, 2H)
        ('wih_n', wih_eff[:, 2 * H:]),    # (D, H)
        ('whh_rz', whh[:, :2 * H]),       # (H, 2H)
        ('whh_n', whh[:, 2 * H:]),        # (H, H)
        ('encw', p['enc_w'].T),           # (H, C)
        ('qzw', p['qz0_w'].T),            # (C, 2L)
        ('fw1_z', fw1_z),                 # (L, H)
        ('fw1_c', fw1_c),                 # (C, H)
        ('fw2', p['f_w2'].T),             # (H, H)
        ('fw3', p['f_w3'].T),             # (H, L)
        ('hw_eff', hw_eff),               # (L, L)
        ('projw', projw),                 # (L, D)
        ('gw1', g_w1m),                   # (L, L*H)
        ('gw2', g_w2bd),                  # (L*H, L)
    ]
    woffs, wrows, row = {}, [], 0
    for name, a in weights:
        a = jnp.asarray(a, jnp.float32)
        nr, nc = a.shape
        nr8 = -(-nr // 8) * 8                             # 8-row aligned blocks
        woffs[name] = (row, nr, nc)
        wrows.append(jnp.pad(a, ((0, nr8 - nr), (0, _LANES - nc))))
        row += nr8
    w_slab = jnp.concatenate(wrows, axis=0)               # (208, 128)

    biases = [
        ('bih_rz', bih_eff[:, :2 * H]),
        ('bih_n', bih_eff[:, 2 * H:]),
        ('bhh_rz', bhh[:, :2 * H]),
        ('bhh_n', bhh[:, 2 * H:]),
        ('encb', p['enc_b']),
        ('qzb', p['qz0_b']),
        ('fb1', p['f_b1']),
        ('fb2', p['f_b2']),
        ('fb3', p['f_b3']),
        ('hb_eff', hb_eff),
        ('projb', projb),
        ('gb1', p['g_b1'].reshape(1, LH)),
        ('gb2', p['g_b2'].reshape(1, L)),
        ('pz0_mean', p['pz0_mean']),
        ('pz0_logstd', p['pz0_logstd']),
    ]
    boffs, brows = {}, []
    for i, (name, a) in enumerate(biases):
        a = jnp.asarray(a, jnp.float32)
        boffs[name] = (i, a.shape[1])
        brows.append(jnp.pad(a, ((0, 0), (0, _LANES - a.shape[1]))))
    nbias = len(brows)
    nbias8 = -(-nbias // 8) * 8
    brows.append(jnp.zeros((nbias8 - nbias, _LANES), jnp.float32))
    b_slab = jnp.concatenate(brows, axis=0)               # (16, 128)
    return w_slab, woffs, b_slab, boffs


# --------------------------------------------------------------------------
# Wrapper: single pallas_call, 4 input refs, 1 lane-dense output row
# --------------------------------------------------------------------------
def latent_sde_pallas(params, xs_flat, noise_flat, noise_std, T, B):
    w_slab, woffs, b_slab, boffs = _pack_params(params)
    args = (xs_flat, noise_flat, w_slab, b_slab)

    kernel = functools.partial(_latent_sde_kernel, woffs=woffs, boffs=boffs,
                               noise_std=float(noise_std), T=T, B=B)
    in_specs = [pl.BlockSpec(a.shape, lambda i, nd=a.ndim: (0,) * nd)
                for a in args]
    out_specs = pl.BlockSpec((1, _LANES), lambda i: (0, 0))

    out = pl.pallas_call(
        kernel,
        out_shape=jax.ShapeDtypeStruct((1, _LANES), jnp.float32),
        grid_spec=pltpu.PrefetchScalarGridSpec(
            num_scalar_prefetch=0, grid=(1,),
            in_specs=in_specs, out_specs=out_specs),
        compiler_params=pltpu.CompilerParams(
            dimension_semantics=("arbitrary",)),
    )(*args)
    return out[0, 0], out[0, 1], out[0, 2]


def latent_sde_forward(params, xs, ts, noise_std, key):
    # TODO(synk): ts spacing == DT is assumed (baked into ctx indexing == k+1).
    del ts
    T, B, _ = xs.shape
    k_z0, k_bm = jax.random.split(key)
    eps = jax.random.normal(k_z0, (1, B, LATENT_SIZE), jnp.float32)
    dw = math.sqrt(DT) * jax.random.normal(k_bm, (T - 1, B, LATENT_SIZE),
                                           jnp.float32)
    noise_flat = jnp.concatenate([eps, dw], axis=0).reshape(T * B, LATENT_SIZE)
    xs_flat = xs.reshape(T * B, DATA_SIZE)
    return latent_sde_pallas(params, xs_flat, noise_flat, noise_std, T, B)


# --------------------------------------------------------------------------
# Parameter init (deterministic, synthetic — no checkpoint loading)
# --------------------------------------------------------------------------
def init_params(key):
    ks = jax.random.split(key, 24)

    def lin(k, out_f, in_f):
        scale = 1.0 / math.sqrt(in_f)
        kw, kb = jax.random.split(k)
        w = jax.random.uniform(kw, (out_f, in_f), jnp.float32, -scale, scale)
        b = jax.random.uniform(kb, (1, out_f), jnp.float32, -scale, scale)
        return w, b

    p = {}
    # Controller: weight fixed as in the PyTorch module; bias default-init.
    p['c_w'] = jnp.array([[-0.0652, -0.2577, -1.308, -0.6947]], jnp.float32)
    _, p['c_b'] = lin(ks[0], U_SIZE, DATA_SIZE)
    # Encoder GRU + linear.
    din = DATA_SIZE + U_SIZE
    H = HIDDEN_SIZE
    s = 1.0 / math.sqrt(H)
    p['gru_wih'] = jax.random.uniform(ks[1], (3 * H, din), jnp.float32, -s, s)
    p['gru_whh'] = jax.random.uniform(ks[2], (3 * H, H), jnp.float32, -s, s)
    p['gru_bih'] = jax.random.uniform(ks[3], (3, H), jnp.float32, -s, s)
    p['gru_bhh'] = jax.random.uniform(ks[4], (3, H), jnp.float32, -s, s)
    p['enc_w'], p['enc_b'] = lin(ks[5], CONTEXT_SIZE, H)
    # qz0_net.
    p['qz0_w'], p['qz0_b'] = lin(ks[6], 2 * LATENT_SIZE, CONTEXT_SIZE)
    # f_net.
    p['f_w1'], p['f_b1'] = lin(ks[7], H, LATENT_SIZE + CONTEXT_SIZE)
    p['f_w2'], p['f_b2'] = lin(ks[8], H, H)
    p['f_w3'], p['f_b3'] = lin(ks[9], LATENT_SIZE, H)
    # h_net.
    p['h_w'], p['h_b'] = lin(ks[10], LATENT_SIZE, LATENT_SIZE + U_SIZE)
    # g_nets (stacked over latent dim).
    gw1, gb1, gw2, gb2 = [], [], [], []
    for j in range(LATENT_SIZE):
        w1, b1 = lin(ks[11 + j], H, 1)
        w2, b2 = lin(ks[15 + j], 1, H)
        gw1.append(w1[:, 0]); gb1.append(b1[0])
        gw2.append(w2[0]); gb2.append(b2[0])
    p['g_w1'] = jnp.stack(gw1)          # (L, H)
    p['g_b1'] = jnp.stack(gb1)          # (L, H)
    p['g_w2'] = jnp.stack(gw2)          # (L, H)
    p['g_b2'] = jnp.stack(gb2)          # (L, 1)
    # projector + pz0.
    p['proj_w'], p['proj_b'] = lin(ks[19], DATA_SIZE, LATENT_SIZE)
    p['pz0_mean'] = jnp.zeros((1, LATENT_SIZE), jnp.float32)
    p['pz0_logstd'] = jnp.zeros((1, LATENT_SIZE), jnp.float32)
    return p


if __name__ == "__main__":
    key = jax.random.PRNGKey(0)
    kp, kx, kn = jax.random.split(key, 3)
    params = init_params(kp)

    T, B = 8, 2
    xs = jax.random.normal(kx, (T, B, DATA_SIZE), jnp.float32)
    ts = jnp.arange(T, dtype=jnp.float32) * DT
    noise_std = 0.05

    fwd = jax.jit(functools.partial(latent_sde_forward, noise_std=noise_std))
    out = fwd(params, xs, ts, key=kn)
    out = jax.block_until_ready(out)
    assert all(bool(jnp.isfinite(o)) for o in out), "non-finite output"
    print("KERNEL_OK")
</pallas_src>

<mosaic_0001>
module attributes {stable_mosaic.version = 11 : i64} {
  func.func @_latent_sde_kernel(%arg0: i32, %arg1: memref<16x4xf32, #tpu.memory_space<vmem>>, %arg2: memref<16x4xf32, #tpu.memory_space<vmem>>, %arg3: memref<208x128xf32, #tpu.memory_space<vmem>>, %arg4: memref<16x128xf32, #tpu.memory_space<vmem>>, %arg5: memref<1x128xf32, #tpu.memory_space<vmem>>) attributes {dimension_semantics = [#tpu.dimension_semantics<arbitrary>], iteration_bounds = array<i64: 1>, scalar_prefetch = 0 : i64, scratch_operands = 0 : i64, tpu.core_type = #tpu.core_type<tc>, window_params = [{pipeline_mode = #tpu.pipeline_mode<synchronous>, transform_indices = @transform_0, window_bounds = array<i64: 16, 4>}, {pipeline_mode = #tpu.pipeline_mode<synchronous>, transform_indices = @transform_1, window_bounds = array<i64: 16, 4>}, {pipeline_mode = #tpu.pipeline_mode<synchronous>, transform_indices = @transform_2, window_bounds = array<i64: 208, 128>}, {pipeline_mode = #tpu.pipeline_mode<synchronous>, transform_indices = @transform_3, window_bounds = array<i64: 16, 128>}, {pipeline_mode = #tpu.pipeline_mode<synchronous>, transform_indices = @transform_4, window_bounds = array<i64: 1, 128>}]} {
    %c0 = arith.constant 0 : index
    %c0_0 = arith.constant 0 : index
    %0 = vector.load %arg3[%c0, %c0_0] : memref<208x128xf32, #tpu.memory_space<vmem>>, vector<4x32xf32>
    %c8 = arith.constant 8 : index
    %c0_1 = arith.constant 0 : index
    %1 = vector.load %arg3[%c8, %c0_1] : memref<208x128xf32, #tpu.memory_space<vmem>>, vector<4x16xf32>
    %c16 = arith.constant 16 : index
    %c0_2 = arith.constant 0 : index
    %2 = vector.load %arg3[%c16, %c0_2] : memref<208x128xf32, #tpu.memory_space<vmem>>, vector<16x32xf32>
    %c32 = arith.constant 32 : index
    %c0_3 = arith.constant 0 : index
    %3 = vector.load %arg3[%c32, %c0_3] : memref<208x128xf32, #tpu.memory_space<vmem>>, vector<16x16xf32>
    %c0_4 = arith.constant 0 : index
    %c0_5 = arith.constant 0 : index
    %4 = vector.load %arg4[%c0_4, %c0_5] : memref<16x128xf32, #tpu.memory_space<vmem>>, vector<1x32xf32>
    %c1 = arith.constant 1 : index
    %c0_6 = arith.constant 0 : index
    %5 = vector.load %arg4[%c1, %c0_6] : memref<16x128xf32, #tpu.memory_space<vmem>>, vector<1x16xf32>
    %c2 = arith.constant 2 : index
    %c0_7 = arith.constant 0 : index
    %6 = vector.load %arg4[%c2, %c0_7] : memref<16x128xf32, #tpu.memory_space<vmem>>, vector<1x32xf32>
    %c3 = arith.constant 3 : index
    %c0_8 = arith.constant 0 : index
    %7 = vector.load %arg4[%c3, %c0_8] : memref<16x128xf32, #tpu.memory_space<vmem>>, vector<1x16xf32>
    %c48 = arith.constant 48 : index
    %c0_9 = arith.constant 0 : index
    %8 = vector.load %arg3[%c48, %c0_9] : memref<208x128xf32, #tpu.memory_space<vmem>>, vector<16x8xf32>
    %c4 = arith.constant 4 : index
    %c0_10 = arith.constant 0 : index
    %9 = vector.load %arg4[%c4, %c0_10] : memref<16x128xf32, #tpu.memory_space<vmem>>, vector<1x8xf32>
    %c64 = arith.constant 64 : index
    %c0_11 = arith.constant 0 : index
    %10 = vector.load %arg3[%c64, %c0_11] : memref<208x128xf32, #tpu.memory_space<vmem>>, vector<8x8xf32>
    %c5 = arith.constant 5 : index
    %c0_12 = arith.constant 0 : index
    %11 = vector.load %arg4[%c5, %c0_12] : memref<16x128xf32, #tpu.memory_space<vmem>>, vector<1x8xf32>
    %c72 = arith.constant 72 : index
    %c0_13 = arith.constant 0 : index
    %12 = vector.load %arg3[%c72, %c0_13] : memref<208x128xf32, #tpu.memory_space<vmem>>, vector<4x16xf32>
    %c80 = arith.constant 80 : index
    %c0_14 = arith.constant 0 : index
    %13 = vector.load %arg3[%c80, %c0_14] : memref<208x128xf32, #tpu.memory_space<vmem>>, vector<8x16xf32>
    %c6 = arith.constant 6 : index
    %c0_15 = arith.constant 0 : index
    %14 = vector.load %arg4[%c6, %c0_15] : memref<16x128xf32, #tpu.memory_space<vmem>>, vector<1x16xf32>
    %c88 = arith.constant 88 : index
    %c0_16 = arith.constant 0 : index
    %15 = vector.load %arg3[%c88, %c0_16] : memref<208x128xf32, #tpu.memory_space<vmem>>, vector<16x16xf32>
    %c7 = arith.constant 7 : index
    %c0_17 = arith.constant 0 : index
    %16 = vector.load %arg4[%c7, %c0_17] : memref<16x128xf32, #tpu.memory_space<vmem>>, vector<1x16xf32>
    %c104 = arith.constant 104 : index
    %c0_18 = arith.constant 0 : index
    %17 = vector.load %arg3[%c104, %c0_18] : memref<208x128xf32, #tpu.memory_space<vmem>>, vector<16x4xf32>
    %c8_19 = arith.constant 8 : index
    %c0_20 = arith.constant 0 : index
    %18 = vector.load %arg4[%c8_19, %c0_20] : memref<16x128xf32, #tpu.memory_space<vmem>>, vector<1x4xf32>
    %c120 = arith.constant 120 : index
    %c0_21 = arith.constant 0 : index
    %19 = vector.load %arg3[%c120, %c0_21] : memref<208x128xf32, #tpu.memory_space<vmem>>, vector<4x4xf32>
    %c9 = arith.constant 9 : index
    %c0_22 = arith.constant 0 : index
    %20 = vector.load %arg4[%c9, %c0_22] : memref<16x128xf32, #tpu.memory_space<vmem>>, vector<1x4xf32>
    %c128 = arith.constant 128 : index
    %c0_23 = arith.constant 0 : index
    %21 = vector.load %arg3[%c128, %c0_23] : memref<208x128xf32, #tpu.memory_space<vmem>>, vector<4x4xf32>
    %c10 = arith.constant 10 : index
    %c0_24 = arith.constant 0 : index
    %22 = vector.load %arg4[%c10, %c0_24] : memref<16x128xf32, #tpu.memory_space<vmem>>, vector<1x4xf32>
    %c136 = arith.constant 136 : index
    %c0_25 = arith.constant 0 : index
    %23 = vector.load %arg3[%c136, %c0_25] : memref<208x128xf32, #tpu.memory_space<vmem>>, vector<4x64xf32>
    %c11 = arith.constant 11 : index
    %c0_26 = arith.constant 0 : index
    %24 = vector.load %arg4[%c11, %c0_26] : memref<16x128xf32, #tpu.memory_space<vmem>>, vector<1x64xf32>
    %c144 = arith.constant 144 : index
    %c0_27 = arith.constant 0 : index
    %25 = vector.load %arg3[%c144, %c0_27] : memref<208x128xf32, #tpu.memory_space<vmem>>, vector<64x4xf32>
    %c12 = arith.constant 12 : index
    %c0_28 = arith.constant 0 : index
    %26 = vector.load %arg4[%c12, %c0_28] : memref<16x128xf32, #tpu.memory_space<vmem>>, vector<1x4xf32>
    %c13 = arith.constant 13 : index
    %c0_29 = arith.constant 0 : index
    %27 = vector.load %arg4[%c13, %c0_29] : memref<16x128xf32, #tpu.memory_space<vmem>>, vector<1x4xf32>
    %c14 = arith.constant 14 : index
    %c0_30 = arith.constant 0 : index
    %28 = vector.load %arg4[%c14, %c0_30] : memref<16x128xf32, #tpu.memory_space<vmem>>, vector<1x4xf32>
    %c0_31 = arith.constant 0 : index
    %c0_32 = arith.constant 0 : index
    %29 = vector.load %arg1[%c0_31, %c0_32] : memref<16x4xf32, #tpu.memory_space<vmem>>, vector<16x4xf32>
    %c0_33 = arith.constant 0 : index
    %c0_34 = arith.constant 0 : index
    %30 = vector.load %arg2[%c0_33, %c0_34] : memref<16x4xf32, #tpu.memory_space<vmem>>, vector<16x4xf32>
    %cst = arith.constant dense<0.000000e+00> : vector<16x32xf32>
    %31 = tpu.matmul %29, %0, %cst {dimension_numbers = #tpu.dot_dimension_numbers<[1], [0], [0], [1], [0, 0, 1, 1], [], []>} : vector<16x4xf32>, vector<4x32xf32>, vector<16x32xf32> -> vector<16x32xf32>
    %32 = vector.broadcast %4 : vector<1x32xf32> to vector<16x32xf32>
    %33 = arith.addf %31, %32 : vector<16x32xf32>
    %cst_35 = arith.constant dense<0.000000e+00> : vector<16x16xf32>
    %34 = tpu.matmul %29, %1, %cst_35 {dimension_numbers = #tpu.dot_dimension_numbers<[1], [0], [0], [1], [0, 0, 1, 1], [], []>} : vector<16x4xf32>, vector<4x16xf32>, vector<16x16xf32> -> vector<16x16xf32>
    %35 = vector.broadcast %5 : vector<1x16xf32> to vector<16x16xf32>
    %36 = arith.addf %34, %35 : vector<16x16xf32>
    %cst_36 = arith.constant 0.000000e+00 : f32
    %37 = vector.broadcast %cst_36 : f32 to vector<2x16xf32>
    %38 = vector.extract_strided_slice %33 {offsets = [14, 0], sizes = [2, 32], strides = [1, 1]} : vector<16x32xf32> to vector<2x32xf32>
    %39 = vector.extract_strided_slice %36 {offsets = [14, 0], sizes = [2, 16], strides = [1, 1]} : vector<16x16xf32> to vector<2x16xf32>
    %cst_37 = arith.constant dense<0.000000e+00> : vector<2x32xf32>
    %40 = tpu.matmul %37, %2, %cst_37 {dimension_numbers = #tpu.dot_dimension_numbers<[1], [0], [0], [1], [0, 0, 1, 1], [], []>} : vector<2x16xf32>, vector<16x32xf32>, vector<2x32xf32> -> vector<2x32xf32>
    %41 = arith.addf %38, %40 : vector<2x32xf32>
    %42 = vector.broadcast %6 : vector<1x32xf32> to vector<2x32xf32>
    %43 = arith.addf %41, %42 : vector<2x32xf32>
    %44 = arith.negf %43 : vector<2x32xf32>
    %45 = math.exp %44 : vector<2x32xf32>
    %cst_38 = arith.constant 1.000000e+00 : f32
    %46 = vector.broadcast %cst_38 : f32 to vector<2x32xf32>
    %47 = arith.addf %46, %45 : vector<2x32xf32>
    %48 = arith.divf %46, %47 : vector<2x32xf32>
    %49 = vector.extract_strided_slice %48 {offsets = [0, 0], sizes = [2, 16], strides = [1, 1]} : vector<2x32xf32> to vector<2x16xf32>
    %50 = vector.extract_strided_slice %48 {offsets = [0, 16], sizes = [2, 16], strides = [1, 1]} : vector<2x32xf32> to vector<2x16xf32>
    %cst_39 = arith.constant dense<0.000000e+00> : vector<2x16xf32>
    %51 = tpu.matmul %37, %3, %cst_39 {dimension_numbers = #tpu.dot_dimension_numbers<[1], [0], [0], [1], [0, 0, 1, 1], [], []>} : vector<2x16xf32>, vector<16x16xf32>, vector<2x16xf32> -> vector<2x16xf32>
    %52 = vector.broadcast %7 : vector<1x16xf32> to vector<2x16xf32>
    %53 = arith.addf %51, %52 : vector<2x16xf32>
    %54 = arith.mulf %49, %53 : vector<2x16xf32>
    %55 = arith.addf %39, %54 : vector<2x16xf32>
    %56 = math.tanh %55 : vector<2x16xf32>
    %cst_40 = arith.constant 1.000000e+00 : f32
    %57 = vector.broadcast %cst_40 : f32 to vector<2x16xf32>
    %58 = arith.subf %57, %50 : vector<2x16xf32>
    %59 = arith.mulf %58, %56 : vector<2x16xf32>
    %60 = arith.mulf %50, %37 : vector<2x16xf32>
    %61 = arith.addf %59, %60 : vector<2x16xf32>
    %62 = vector.extract_strided_slice %33 {offsets = [12, 0], sizes = [2, 32], strides = [1, 1]} : vector<16x32xf32> to vector<2x32xf32>
    %63 = vector.extract_strided_slice %36 {offsets = [12, 0], sizes = [2, 16], strides = [1, 1]} : vector<16x16xf32> to vector<2x16xf32>
    %cst_41 = arith.constant dense<0.000000e+00> : vector<2x32xf32>
    %64 = tpu.matmul %61, %2, %cst_41 {dimension_numbers = #tpu.dot_dimension_numbers<[1], [0], [0], [1], [0, 0, 1, 1], [], []>} : vector<2x16xf32>, vector<16x32xf32>, vector<2x32xf32> -> vector<2x32xf32>
    %65 = arith.addf %62, %64 : vector<2x32xf32>
    %66 = vector.broadcast %6 : vector<1x32xf32> to vector<2x32xf32>
    %67 = arith.addf %65, %66 : vector<2x32xf32>
    %68 = arith.negf %67 : vector<2x32xf32>
    %69 = math.exp %68 : vector<2x32xf32>
    %cst_42 = arith.constant 1.000000e+00 : f32
    %70 = vector.broadcast %cst_42 : f32 to vector<2x32xf32>
    %71 = arith.addf %70, %69 : vector<2x32xf32>
    %72 = arith.divf %70, %71 : vector<2x32xf32>
    %73 = vector.extract_strided_slice %72 {offsets = [0, 0], sizes = [2, 16], strides = [1, 1]} : vector<2x32xf32> to vector<2x16xf32>
    %74 = vector.extract_strided_slice %72 {offsets = [0, 16], sizes = [2, 16], strides = [1, 1]} : vector<2x32xf32> to vector<2x16xf32>
    %cst_43 = arith.constant dense<0.000000e+00> : vector<2x16xf32>
    %75 = tpu.matmul %61, %3, %cst_43 {dimension_numbers = #tpu.dot_dimension_numbers<[1], [0], [0], [1], [0, 0, 1, 1], [], []>} : vector<2x16xf32>, vector<16x16xf32>, vector<2x16xf32> -> vector<2x16xf32>
    %76 = vector.broadcast %7 : vector<1x16xf32> to vector<2x16xf32>
    %77 = arith.addf %75, %76 : vector<2x16xf32>
    %78 = arith.mulf %73, %77 : vector<2x16xf32>
    %79 = arith.addf %63, %78 : vector<2x16xf32>
    %80 = math.tanh %79 : vector<2x16xf32>
    %cst_44 = arith.constant 1.000000e+00 : f32
    %81 = vector.broadcast %cst_44 : f32 to vector<2x16xf32>
    %82 = arith.subf %81, %74 : vector<2x16xf32>
    %83 = arith.mulf %82, %80 : vector<2x16xf32>
    %84 = arith.mulf %74, %61 : vector<2x16xf32>
    %85 = arith.addf %83, %84 : vector<2x16xf32>
    %86 = vector.extract_strided_slice %33 {offsets = [10, 0], sizes = [2, 32], strides = [1, 1]} : vector<16x32xf32> to vector<2x32xf32>
    %87 = vector.extract_strided_slice %36 {offsets = [10, 0], sizes = [2, 16], strides = [1, 1]} : vector<16x16xf32> to vector<2x16xf32>
    %cst_45 = arith.constant dense<0.000000e+00> : vector<2x32xf32>
    %88 = tpu.matmul %85, %2, %cst_45 {dimension_numbers = #tpu.dot_dimension_numbers<[1], [0], [0], [1], [0, 0, 1, 1], [], []>} : vector<2x16xf32>, vector<16x32xf32>, vector<2x32xf32> -> vector<2x32xf32>
    %89 = arith.addf %86, %88 : vector<2x32xf32>
    %90 = vector.broadcast %6 : vector<1x32xf32> to vector<2x32xf32>
    %91 = arith.addf %89, %90 : vector<2x32xf32>
    %92 = arith.negf %91 : vector<2x32xf32>
    %93 = math.exp %92 : vector<2x32xf32>
    %cst_46 = arith.constant 1.000000e+00 : f32
    %94 = vector.broadcast %cst_46 : f32 to vector<2x32xf32>
    %95 = arith.addf %94, %93 : vector<2x32xf32>
    %96 = arith.divf %94, %95 : vector<2x32xf32>
    %97 = vector.extract_strided_slice %96 {offsets = [0, 0], sizes = [2, 16], strides = [1, 1]} : vector<2x32xf32> to vector<2x16xf32>
    %98 = vector.extract_strided_slice %96 {offsets = [0, 16], sizes = [2, 16], strides = [1, 1]} : vector<2x32xf32> to vector<2x16xf32>
    %cst_47 = arith.constant dense<0.000000e+00> : vector<2x16xf32>
    %99 = tpu.matmul %85, %3, %cst_47 {dimension_numbers = #tpu.dot_dimension_numbers<[1], [0], [0], [1], [0, 0, 1, 1], [], []>} : vector<2x16xf32>, vector<16x16xf32>, vector<2x16xf32> -> vector<2x16xf32>
    %100 = vector.broadcast %7 : vector<1x16xf32> to vector<2x16xf32>
    %101 = arith.addf %99, %100 : vector<2x16xf32>
    %102 = arith.mulf %97, %101 : vector<2x16xf32>
    %103 = arith.addf %87, %102 : vector<2x16xf32>
    %104 = math.tanh %103 : vector<2x16xf32>
    %cst_48 = arith.constant 1.000000e+00 : f32
    %105 = vector.broadcast %cst_48 : f32 to vector<2x16xf32>
    %106 = arith.subf %105, %98 : vector<2x16xf32>
    %107 = arith.mulf %106, %104 : vector<2x16xf32>
    %108 = arith.mulf %98, %85 : vector<2x16xf32>
    %109 = arith.addf %107, %108 : vector<2x16xf32>
    %110 = vector.extract_strided_slice %33 {offsets = [8, 0], sizes = [2, 32], strides = [1, 1]} : vector<16x32xf32> to vector<2x32xf32>
    %111 = vector.extract_strided_slice %36 {offsets = [8, 0], sizes = [2, 16], strides = [1, 1]} : vector<16x16xf32> to vector<2x16xf32>
    %cst_49 = arith.constant dense<0.000000e+00> : vector<2x32xf32>
    %112 = tpu.matmul %109, %2, %cst_49 {dimension_numbers = #tpu.dot_dimension_numbers<[1], [0], [0], [1], [0, 0, 1, 1], [], []>} : vector<2x16xf32>, vector<16x32xf32>, vector<2x32xf32> -> vector<2x32xf32>
    %113 = arith.addf %110, %112 : vector<2x32xf32>
    %114 = vector.broadcast %6 : vector<1x32xf32> to vector<2x32xf32>
    %115 = arith.addf %113, %114 : vector<2x32xf32>
    %116 = arith.negf %115 : vector<2x32xf32>
    %117 = math.exp %116 : vector<2x32xf32>
    %cst_50 = arith.constant 1.000000e+00 : f32
    %118 = vector.broadcast %cst_50 : f32 to vector<2x32xf32>
    %119 = arith.addf %118, %117 : vector<2x32xf32>
    %120 = arith.divf %118, %119 : vector<2x32xf32>
    %121 = vector.extract_strided_slice %120 {offsets = [0, 0], sizes = [2, 16], strides = [1, 1]} : vector<2x32xf32> to vector<2x16xf32>
    %122 = vector.extract_strided_slice %120 {offsets = [0, 16], sizes = [2, 16], strides = [1, 1]} : vector<2x32xf32> to vector<2x16xf32>
    %cst_51 = arith.constant dense<0.000000e+00> : vector<2x16xf32>
    %123 = tpu.matmul %109, %3, %cst_51 {dimension_numbers = #tpu.dot_dimension_numbers<[1], [0], [0], [1], [0, 0, 1, 1], [], []>} : vector<2x16xf32>, vector<16x16xf32>, vector<2x16xf32> -> vector<2x16xf32>
    %124 = vector.broadcast %7 : vector<1x16xf32> to vector<2x16xf32>
    %125 = arith.addf %123, %124 : vector<2x16xf32>
    %126 = arith.mulf %121, %125 : vector<2x16xf32>
    %127 = arith.addf %111, %126 : vector<2x16xf32>
    %128 = math.tanh %127 : vector<2x16xf32>
    %cst_52 = arith.constant 1.000000e+00 : f32
    %129 = vector.broadcast %cst_52 : f32 to vector<2x16xf32>
    %130 = arith.subf %129, %122 : vector<2x16xf32>
    %131 = arith.mulf %130, %128 : vector<2x16xf32>
    %132 = arith.mulf %122, %109 : vector<2x16xf32>
    %133 = arith.addf %131, %132 : vector<2x16xf32>
    %134 = vector.extract_strided_slice %33 {offsets = [6, 0], sizes = [2, 32], strides = [1, 1]} : vector<16x32xf32> to vector<2x32xf32>
    %135 = vector.extract_strided_slice %36 {offsets = [6, 0], sizes = [2, 16], strides = [1, 1]} : vector<16x16xf32> to vector<2x16xf32>
    %cst_53 = arith.constant dense<0.000000e+00> : vector<2x32xf32>
    %136 = tpu.matmul %133, %2, %cst_53 {dimension_numbers = #tpu.dot_dimension_numbers<[1], [0], [0], [1], [0, 0, 1, 1], [], []>} : vector<2x16xf32>, vector<16x32xf32>, vector<2x32xf32> -> vector<2x32xf32>
    %137 = arith.addf %134, %136 : vector<2x32xf32>
    %138 = vector.broadcast %6 : vector<1x32xf32> to vector<2x32xf32>
    %139 = arith.addf %137, %138 : vector<2x32xf32>
    %140 = arith.negf %139 : vector<2x32xf32>
    %141 = math.exp %140 : vector<2x32xf32>
    %cst_54 = arith.constant 1.000000e+00 : f32
    %142 = vector.broadcast %cst_54 : f32 to vector<2x32xf32>
    %143 = arith.addf %142, %141 : vector<2x32xf32>
    %144 = arith.divf %142, %143 : vector<2x32xf32>
    %145 = vector.extract_strided_slice %144 {offsets = [0, 0], sizes = [2, 16], strides = [1, 1]} : vector<2x32xf32> to vector<2x16xf32>
    %146 = vector.extract_strided_slice %144 {offsets = [0, 16], sizes = [2, 16], strides = [1, 1]} : vector<2x32xf32> to vector<2x16xf32>
    %cst_55 = arith.constant dense<0.000000e+00> : vector<2x16xf32>
    %147 = tpu.matmul %133, %3, %cst_55 {dimension_numbers = #tpu.dot_dimension_numbers<[1], [0], [0], [1], [0, 0, 1, 1], [], []>} : vector<2x16xf32>, vector<16x16xf32>, vector<2x16xf32> -> vector<2x16xf32>
    %148 = vector.broadcast %7 : vector<1x16xf32> to vector<2x16xf32>
    %149 = arith.addf %147, %148 : vector<2x16xf32>
    %150 = arith.mulf %145, %149 : vector<2x16xf32>
    %151 = arith.addf %135, %150 : vector<2x16xf32>
    %152 = math.tanh %151 : vector<2x16xf32>
    %cst_56 = arith.constant 1.000000e+00 : f32
    %153 = vector.broadcast %cst_56 : f32 to vector<2x16xf32>
    %154 = arith.subf %153, %146 : vector<2x16xf32>
    %155 = arith.mulf %154, %152 : vector<2x16xf32>
    %156 = arith.mulf %146, %133 : vector<2x16xf32>
    %157 = arith.addf %155, %156 : vector<2x16xf32>
    %158 = vector.extract_strided_slice %33 {offsets = [4, 0], sizes = [2, 32], strides = [1, 1]} : vector<16x32xf32> to vector<2x32xf32>
    %159 = vector.extract_strided_slice %36 {offsets = [4, 0], sizes = [2, 16], strides = [1, 1]} : vector<16x16xf32> to vector<2x16xf32>
    %cst_57 = arith.constant dense<0.000000e+00> : vector<2x32xf32>
    %160 = tpu.matmul %157, %2, %cst_57 {dimension_numbers = #tpu.dot_dimension_numbers<[1], [0], [0], [1], [0, 0, 1, 1], [], []>} : vector<2x16xf32>, vector<16x32xf32>, vector<2x32xf32> -> vector<2x32xf32>
    %161 = arith.addf %158, %160 : vector<2x32xf32>
    %162 = vector.broadcast %6 : vector<1x32xf32> to vector<2x32xf32>
    %163 = arith.addf %161, %162 : vector<2x32xf32>
    %164 = arith.negf %163 : vector<2x32xf32>
    %165 = math.exp %164 : vector<2x32xf32>
    %cst_58 = arith.constant 1.000000e+00 : f32
    %166 = vector.broadcast %cst_58 : f32 to vector<2x32xf32>
    %167 = arith.addf %166, %165 : vector<2x32xf32>
    %168 = arith.divf %166, %167 : vector<2x32xf32>
    %169 = vector.extract_strided_slice %168 {offsets = [0, 0], sizes = [2, 16], strides = [1, 1]} : vector<2x32xf32> to vector<2x16xf32>
    %170 = vector.extract_strided_slice %168 {offsets = [0, 16], sizes = [2, 16], strides = [1, 1]} : vector<2x32xf32> to vector<2x16xf32>
    %cst_59 = arith.constant dense<0.000000e+00> : vector<2x16xf32>
    %171 = tpu.matmul %157, %3, %cst_59 {dimension_numbers = #tpu.dot_dimension_numbers<[1], [0], [0], [1], [0, 0, 1, 1], [], []>} : vector<2x16xf32>, vector<16x16xf32>, vector<2x16xf32> -> vector<2x16xf32>
    %172 = vector.broadcast %7 : vector<1x16xf32> to vector<2x16xf32>
    %173 = arith.addf %171, %172 : vector<2x16xf32>
    %174 = arith.mulf %169, %173 : vector<2x16xf32>
    %175 = arith.addf %159, %174 : vector<2x16xf32>
    %176 = math.tanh %175 : vector<2x16xf32>
    %cst_60 = arith.constant 1.000000e+00 : f32
    %177 = vector.broadcast %cst_60 : f32 to vector<2x16xf32>
    %178 = arith.subf %177, %170 : vector<2x16xf32>
    %179 = arith.mulf %178, %176 : vector<2x16xf32>
    %180 = arith.mulf %170, %157 : vector<2x16xf32>
    %181 = arith.addf %179, %180 : vector<2x16xf32>
    %182 = vector.extract_strided_slice %33 {offsets = [2, 0], sizes = [2, 32], strides = [1, 1]} : vector<16x32xf32> to vector<2x32xf32>
    %183 = vector.extract_strided_slice %36 {offsets = [2, 0], sizes = [2, 16], strides = [1, 1]} : vector<16x16xf32> to vector<2x16xf32>
    %cst_61 = arith.constant dense<0.000000e+00> : vector<2x32xf32>
    %184 = tpu.matmul %181, %2, %cst_61 {dimension_numbers = #tpu.dot_dimension_numbers<[1], [0], [0], [1], [0, 0, 1, 1], [], []>} : vector<2x16xf32>, vector<16x32xf32>, vector<2x32xf32> -> vector<2x32xf32>
    %185 = arith.addf %182, %184 : vector<2x32xf32>
    %186 = vector.broadcast %6 : vector<1x32xf32> to vector<2x32xf32>
    %187 = arith.addf %185, %186 : vector<2x32xf32>
    %188 = arith.negf %187 : vector<2x32xf32>
    %189 = math.exp %188 : vector<2x32xf32>
    %cst_62 = arith.constant 1.000000e+00 : f32
    %190 = vector.broadcast %cst_62 : f32 to vector<2x32xf32>
    %191 = arith.addf %190, %189 : vector<2x32xf32>
    %192 = arith.divf %190, %191 : vector<2x32xf32>
    %193 = vector.extract_strided_slice %192 {offsets = [0, 0], sizes = [2, 16], strides = [1, 1]} : vector<2x32xf32> to vector<2x16xf32>
    %194 = vector.extract_strided_slice %192 {offsets = [0, 16], sizes = [2, 16], strides = [1, 1]} : vector<2x32xf32> to vector<2x16xf32>
    %cst_63 = arith.constant dense<0.000000e+00> : vector<2x16xf32>
    %195 = tpu.matmul %181, %3, %cst_63 {dimension_numbers = #tpu.dot_dimension_numbers<[1], [0], [0], [1], [0, 0, 1, 1], [], []>} : vector<2x16xf32>, vector<16x16xf32>, vector<2x16xf32> -> vector<2x16xf32>
    %196 = vector.broadcast %7 : vector<1x16xf32> to vector<2x16xf32>
    %197 = arith.addf %195, %196 : vector<2x16xf32>
    %198 = arith.mulf %193, %197 : vector<2x16xf32>
    %199 = arith.addf %183, %198 : vector<2x16xf32>
    %200 = math.tanh %199 : vector<2x16xf32>
    %cst_64 = arith.constant 1.000000e+00 : f32
    %201 = vector.broadcast %cst_64 : f32 to vector<2x16xf32>
    %202 = arith.subf %201, %194 : vector<2x16xf32>
    %203 = arith.mulf %202, %200 : vector<2x16xf32>
    %204 = arith.mulf %194, %181 : vector<2x16xf32>
    %205 = arith.addf %203, %204 : vector<2x16xf32>
    %206 = vector.extract_strided_slice %33 {offsets = [0, 0], sizes = [2, 32], strides = [1, 1]} : vector<16x32xf32> to vector<2x32xf32>
    %207 = vector.extract_strided_slice %36 {offsets = [0, 0], sizes = [2, 16], strides = [1, 1]} : vector<16x16xf32> to vector<2x16xf32>
    %cst_65 = arith.constant dense<0.000000e+00> : vector<2x32xf32>
    %208 = tpu.matmul %205, %2, %cst_65 {dimension_numbers = #tpu.dot_dimension_numbers<[1], [0], [0], [1], [0, 0, 1, 1], [], []>} : vector<2x16xf32>, vector<16x32xf32>, vector<2x32xf32> -> vector<2x32xf32>
    %209 = arith.addf %206, %208 : vector<2x32xf32>
    %210 = vector.broadcast %6 : vector<1x32xf32> to vector<2x32xf32>
    %211 = arith.addf %209, %210 : vector<2x32xf32>
    %212 = arith.negf %211 : vector<2x32xf32>
    %213 = math.exp %212 : vector<2x32xf32>
    %cst_66 = arith.constant 1.000000e+00 : f32
    %214 = vector.broadcast %cst_66 : f32 to vector<2x32xf32>
    %215 = arith.addf %214, %213 : vector<2x32xf32>
    %216 = arith.divf %214, %215 : vector<2x32xf32>
    %217 = vector.extract_strided_slice %216 {offsets = [0, 0], sizes = [2, 16], strides = [1, 1]} : vector<2x32xf32> to vector<2x16xf32>
    %218 = vector.extract_strided_slice %216 {offsets = [0, 16], sizes = [2, 16], strides = [1, 1]} : vector<2x32xf32> to vector<2x16xf32>
    %cst_67 = arith.constant dense<0.000000e+00> : vector<2x16xf32>
    %219 = tpu.matmul %205, %3, %cst_67 {dimension_numbers = #tpu.dot_dimension_numbers<[1], [0], [0], [1], [0, 0, 1, 1], [], []>} : vector<2x16xf32>, vector<16x16xf32>, vector<2x16xf32> -> vector<2x16xf32>
    %220 = vector.broadcast %7 : vector<1x16xf32> to vector<2x16xf32>
    %221 = arith.addf %219, %220 : vector<2x16xf32>
    %222 = arith.mulf %217, %221 : vector<2x16xf32>
    %223 = arith.addf %207, %222 : vector<2x16xf32>
    %224 = math.tanh %223 : vector<2x16xf32>
    %cst_68 = arith.constant 1.000000e+00 : f32
    %225 = vector.broadcast %cst_68 : f32 to vector<2x16xf32>
    %226 = arith.subf %225, %218 : vector<2x16xf32>
    %227 = arith.mulf %226, %224 : vector<2x16xf32>
    %228 = arith.mulf %218, %205 : vector<2x16xf32>
    %229 = arith.addf %227, %228 : vector<2x16xf32>
    %230 = tpu.concatenate %229, %205, %181, %157, %133, %109, %85, %61 in 0 : vector<2x16xf32>, vector<2x16xf32>, vector<2x16xf32>, vector<2x16xf32>, vector<2x16xf32>, vector<2x16xf32>, vector<2x16xf32>, vector<2x16xf32> -> vector<16x16xf32>
    %cst_69 = arith.constant dense<0.000000e+00> : vector<16x8xf32>
    %231 = tpu.matmul %230, %8, %cst_69 {dimension_numbers = #tpu.dot_dimension_numbers<[1], [0], [0], [1], [0, 0, 1, 1], [], []>} : vector<16x16xf32>, vector<16x8xf32>, vector<16x8xf32> -> vector<16x8xf32>
    %232 = vector.broadcast %9 : vector<1x8xf32> to vector<16x8xf32>
    %233 = arith.addf %231, %232 : vector<16x8xf32>
    %cst_70 = arith.constant dense<0.000000e+00> : vector<16x16xf32>
    %234 = tpu.matmul %233, %13, %cst_70 {dimension_numbers = #tpu.dot_dimension_numbers<[1], [0], [0], [1], [0, 0, 1, 1], [], []>} : vector<16x8xf32>, vector<8x16xf32>, vector<16x16xf32> -> vector<16x16xf32>
    %235 = vector.broadcast %14 : vector<1x16xf32> to vector<16x16xf32>
    %236 = arith.addf %234, %235 : vector<16x16xf32>
    %237 = vector.extract_strided_slice %233 {offsets = [0, 0], sizes = [2, 8], strides = [1, 1]} : vector<16x8xf32> to vector<2x8xf32>
    %cst_71 = arith.constant dense<0.000000e+00> : vector<2x8xf32>
    %238 = tpu.matmul %237, %10, %cst_71 {dimension_numbers = #tpu.dot_dimension_numbers<[1], [0], [0], [1], [0, 0, 1, 1], [], []>} : vector<2x8xf32>, vector<8x8xf32>, vector<2x8xf32> -> vector<2x8xf32>
    %239 = vector.broadcast %11 : vector<1x8xf32> to vector<2x8xf32>
    %240 = arith.addf %238, %239 : vector<2x8xf32>
    %241 = vector.extract_strided_slice %240 {offsets = [0, 0], sizes = [2, 4], strides = [1, 1]} : vector<2x8xf32> to vector<2x4xf32>
    %242 = vector.extract_strided_slice %240 {offsets = [0, 4], sizes = [2, 4], strides = [1, 1]} : vector<2x8xf32> to vector<2x4xf32>
    %243 = math.exp %242 : vector<2x4xf32>
    %cst_72 = arith.constant 2.000000e-01 : f32
    %244 = vector.broadcast %cst_72 : f32 to vector<2x4xf32>
    %245 = arith.mulf %244, %243 : vector<2x4xf32>
    %246 = vector.extract_strided_slice %30 {offsets = [0, 0], sizes = [2, 4], strides = [1, 1]} : vector<16x4xf32> to vector<2x4xf32>
    %247 = arith.mulf %245, %246 : vector<2x4xf32>
    %248 = arith.addf %241, %247 : vector<2x4xf32>
    %cst_73 = arith.constant 0.000000e+00 : f32
    %249 = vector.broadcast %cst_73 : f32 to vector<2x1xf32>
    %cst_74 = arith.constant 0.000000e+00 : f32
    %250 = vector.broadcast %cst_74 : f32 to vector<2x1xf32>
    %cst_75 = arith.constant 0.000000e+00 : f32
    %251 = vector.broadcast %cst_75 : f32 to vector<2x1xf32>
    %cst_76 = arith.constant dense<0.000000e+00> : vector<2x4xf32>
    %252 = tpu.matmul %248, %21, %cst_76 {dimension_numbers = #tpu.dot_dimension_numbers<[1], [0], [0], [1], [0, 0, 1, 1], [], []>} : vector<2x4xf32>, vector<4x4xf32>, vector<2x4xf32> -> vector<2x4xf32>
    %253 = vector.broadcast %22 : vector<1x4xf32> to vector<2x4xf32>
    %254 = arith.addf %252, %253 : vector<2x4xf32>
    %255 = vector.extract_strided_slice %29 {offsets = [0, 0], sizes = [2, 4], strides = [1, 1]} : vector<16x4xf32> to vector<2x4xf32>
    %256 = arith.subf %255, %254 : vector<2x4xf32>
    %257 = arith.mulf %256, %256 : vector<2x4xf32>
    %cst_77 = arith.constant 0.000000e+00 : f32
    %258 = vector.broadcast %cst_77 : f32 to vector<2x4xf32>
    %259 = arith.subf %258, %257 : vector<2x4xf32>
    %cst_78 = arith.constant 2.000000e+02 : f32
    %260 = vector.broadcast %cst_78 : f32 to vector<2x4xf32>
    %261 = arith.mulf %259, %260 : vector<2x4xf32>
    %cst_79 = arith.constant -2.07679367 : f32
    %262 = vector.broadcast %cst_79 : f32 to vector<2x4xf32>
    %263 = arith.subf %261, %262 : vector<2x4xf32>
    %cst_80 = arith.constant dense<0.000000e+00> : vector<2xf32>
    %264 = vector.multi_reduction <add>, %263, %cst_80 [1] : vector<2x4xf32> to vector<2xf32>
    %265 = vector.shape_cast %264 : vector<2xf32> to vector<2x1xf32>
    %266 = arith.mulf %254, %254 : vector<2x4xf32>
    %cst_81 = arith.constant dense<0.000000e+00> : vector<2xf32>
    %267 = vector.multi_reduction <add>, %266, %cst_81 [1] : vector<2x4xf32> to vector<2xf32>
    %268 = vector.shape_cast %267 : vector<2xf32> to vector<2x1xf32>
    %269 = math.sqrt %268 : vector<2x1xf32>
    %270 = arith.addf %249, %265 : vector<2x1xf32>
    %271 = arith.addf %250, %269 : vector<2x1xf32>
    %cst_82 = arith.constant dense<0.000000e+00> : vector<2x16xf32>
    %272 = tpu.matmul %248, %12, %cst_82 {dimension_numbers = #tpu.dot_dimension_numbers<[1], [0], [0], [1], [0, 0, 1, 1], [], []>} : vector<2x4xf32>, vector<4x16xf32>, vector<2x16xf32> -> vector<2x16xf32>
    %273 = vector.extract_strided_slice %236 {offsets = [2, 0], sizes = [2, 16], strides = [1, 1]} : vector<16x16xf32> to vector<2x16xf32>
    %274 = arith.addf %272, %273 : vector<2x16xf32>
    %cst_83 = arith.constant 0.000000e+00 : f32
    %275 = vector.broadcast %cst_83 : f32 to vector<2x16xf32>
    %276 = arith.maximumf %274, %275 : vector<2x16xf32>
    %277 = vector.broadcast %cst_83 : f32 to vector<2x16xf32>
    %278 = arith.subf %274, %277 : vector<2x16xf32>
    %279 = arith.cmpf one, %278, %278 : vector<2x16xf32>
    %280 = vector.broadcast %cst_83 : f32 to vector<2x16xf32>
    %281 = arith.addf %274, %280 : vector<2x16xf32>
    %282 = math.absf %278 : vector<2x16xf32>
    %cst_84 = arith.constant 0.000000e+00 : f32
    %283 = vector.broadcast %cst_84 : f32 to vector<2x16xf32>
    %284 = arith.subf %283, %282 : vector<2x16xf32>
    %285 = math.exp %284 : vector<2x16xf32>
    %286 = math.log1p %285 : vector<2x16xf32>
    %287 = arith.addf %276, %286 : vector<2x16xf32>
    %288 = arith.select %279, %281, %287 : vector<2x16xi1>, vector<2x16xf32>
    %cst_85 = arith.constant dense<0.000000e+00> : vector<2x16xf32>
    %289 = tpu.matmul %288, %15, %cst_85 {dimension_numbers = #tpu.dot_dimension_numbers<[1], [0], [0], [1], [0, 0, 1, 1], [], []>} : vector<2x16xf32>, vector<16x16xf32>, vector<2x16xf32> -> vector<2x16xf32>
    %290 = vector.broadcast %16 : vector<1x16xf32> to vector<2x16xf32>
    %291 = arith.addf %289, %290 : vector<2x16xf32>
    %cst_86 = arith.constant 0.000000e+00 : f32
    %292 = vector.broadcast %cst_86 : f32 to vector<2x16xf32>
    %293 = arith.maximumf %291, %292 : vector<2x16xf32>
    %294 = vector.broadcast %cst_86 : f32 to vector<2x16xf32>
    %295 = arith.subf %291, %294 : vector<2x16xf32>
    %296 = arith.cmpf one, %295, %295 : vector<2x16xf32>
    %297 = vector.broadcast %cst_86 : f32 to vector<2x16xf32>
    %298 = arith.addf %291, %297 : vector<2x16xf32>
    %299 = math.absf %295 : vector<2x16xf32>
    %cst_87 = arith.constant 0.000000e+00 : f32
    %300 = vector.broadcast %cst_87 : f32 to vector<2x16xf32>
    %301 = arith.subf %300, %299 : vector<2x16xf32>
    %302 = math.exp %301 : vector<2x16xf32>
    %303 = math.log1p %302 : vector<2x16xf32>
    %304 = arith.addf %293, %303 : vector<2x16xf32>
    %305 = arith.select %296, %298, %304 : vector<2x16xi1>, vector<2x16xf32>
    %cst_88 = arith.constant dense<0.000000e+00> : vector<2x4xf32>
    %306 = tpu.matmul %305, %17, %cst_88 {dimension_numbers = #tpu.dot_dimension_numbers<[1], [0], [0], [1], [0, 0, 1, 1], [], []>} : vector<2x16xf32>, vector<16x4xf32>, vector<2x4xf32> -> vector<2x4xf32>
    %307 = vector.broadcast %18 : vector<1x4xf32> to vector<2x4xf32>
    %308 = arith.addf %306, %307 : vector<2x4xf32>
    %cst_89 = arith.constant dense<0.000000e+00> : vector<2x4xf32>
    %309 = tpu.matmul %248, %19, %cst_89 {dimension_numbers = #tpu.dot_dimension_numbers<[1], [0], [0], [1], [0, 0, 1, 1], [], []>} : vector<2x4xf32>, vector<4x4xf32>, vector<2x4xf32> -> vector<2x4xf32>
    %310 = vector.broadcast %20 : vector<1x4xf32> to vector<2x4xf32>
    %311 = arith.addf %309, %310 : vector<2x4xf32>
    %cst_90 = arith.constant dense<0.000000e+00> : vector<2x64xf32>
    %312 = tpu.matmul %248, %23, %cst_90 {dimension_numbers = #tpu.dot_dimension_numbers<[1], [0], [0], [1], [0, 0, 1, 1], [], []>} : vector<2x4xf32>, vector<4x64xf32>, vector<2x64xf32> -> vector<2x64xf32>
    %313 = vector.broadcast %24 : vector<1x64xf32> to vector<2x64xf32>
    %314 = arith.addf %312, %313 : vector<2x64xf32>
    %cst_91 = arith.constant 0.000000e+00 : f32
    %315 = vector.broadcast %cst_91 : f32 to vector<2x64xf32>
    %316 = arith.maximumf %314, %315 : vector<2x64xf32>
    %317 = vector.broadcast %cst_91 : f32 to vector<2x64xf32>
    %318 = arith.subf %314, %317 : vector<2x64xf32>
    %319 = arith.cmpf one, %318, %318 : vector<2x64xf32>
    %320 = vector.broadcast %cst_91 : f32 to vector<2x64xf32>
    %321 = arith.addf %314, %320 : vector<2x64xf32>
    %322 = math.absf %318 : vector<2x64xf32>
    %cst_92 = arith.constant 0.000000e+00 : f32
    %323 = vector.broadcast %cst_92 : f32 to vector<2x64xf32>
    %324 = arith.subf %323, %322 : vector<2x64xf32>
    %325 = math.exp %324 : vector<2x64xf32>
    %326 = math.log1p %325 : vector<2x64xf32>
    %327 = arith.addf %316, %326 : vector<2x64xf32>
    %328 = arith.select %319, %321, %327 : vector<2x64xi1>, vector<2x64xf32>
    %cst_93 = arith.constant dense<0.000000e+00> : vector<2x4xf32>
    %329 = tpu.matmul %328, %25, %cst_93 {dimension_numbers = #tpu.dot_dimension_numbers<[1], [0], [0], [1], [0, 0, 1, 1], [], []>} : vector<2x64xf32>, vector<64x4xf32>, vector<2x4xf32> -> vector<2x4xf32>
    %330 = vector.broadcast %26 : vector<1x4xf32> to vector<2x4xf32>
    %331 = arith.addf %329, %330 : vector<2x4xf32>
    %332 = arith.negf %331 : vector<2x4xf32>
    %333 = math.exp %332 : vector<2x4xf32>
    %cst_94 = arith.constant 1.000000e+00 : f32
    %334 = vector.broadcast %cst_94 : f32 to vector<2x4xf32>
    %335 = arith.addf %334, %333 : vector<2x4xf32>
    %336 = arith.divf %334, %335 : vector<2x4xf32>
    %337 = arith.subf %308, %311 : vector<2x4xf32>
    %cst_95 = arith.constant 1.000000e-07 : f32
    %338 = vector.broadcast %cst_95 : f32 to vector<2x4xf32>
    %339 = arith.maximumf %336, %338 : vector<2x4xf32>
    %340 = arith.divf %337, %339 : vector<2x4xf32>
    %341 = arith.mulf %340, %340 : vector<2x4xf32>
    %cst_96 = arith.constant dense<0.000000e+00> : vector<2xf32>
    %342 = vector.multi_reduction <add>, %341, %cst_96 [1] : vector<2x4xf32> to vector<2xf32>
    %343 = vector.shape_cast %342 : vector<2xf32> to vector<2x1xf32>
    %cst_97 = arith.constant 5.000000e-03 : f32
    %344 = vector.broadcast %cst_97 : f32 to vector<2x1xf32>
    %345 = arith.mulf %344, %343 : vector<2x1xf32>
    %346 = arith.addf %251, %345 : vector<2x1xf32>
    %cst_98 = arith.constant 0.00999999977 : f32
    %347 = vector.broadcast %cst_98 : f32 to vector<2x4xf32>
    %348 = arith.mulf %308, %347 : vector<2x4xf32>
    %349 = arith.addf %248, %348 : vector<2x4xf32>
    %350 = vector.extract_strided_slice %30 {offsets = [2, 0], sizes = [2, 4], strides = [1, 1]} : vector<16x4xf32> to vector<2x4xf32>
    %351 = arith.mulf %336, %350 : vector<2x4xf32>
    %352 = arith.addf %349, %351 : vector<2x4xf32>
    %cst_99 = arith.constant dense<0.000000e+00> : vector<2x4xf32>
    %353 = tpu.matmul %352, %21, %cst_99 {dimension_numbers = #tpu.dot_dimension_numbers<[1], [0], [0], [1], [0, 0, 1, 1], [], []>} : vector<2x4xf32>, vector<4x4xf32>, vector<2x4xf32> -> vector<2x4xf32>
    %354 = vector.broadcast %22 : vector<1x4xf32> to vector<2x4xf32>
    %355 = arith.addf %353, %354 : vector<2x4xf32>
    %356 = vector.extract_strided_slice %29 {offsets = [2, 0], sizes = [2, 4], strides = [1, 1]} : vector<16x4xf32> to vector<2x4xf32>
    %357 = arith.subf %356, %355 : vector<2x4xf32>
    %358 = arith.mulf %357, %357 : vector<2x4xf32>
    %cst_100 = arith.constant 0.000000e+00 : f32
    %359 = vector.broadcast %cst_100 : f32 to vector<2x4xf32>
    %360 = arith.subf %359, %358 : vector<2x4xf32>
    %cst_101 = arith.constant 2.000000e+02 : f32
    %361 = vector.broadcast %cst_101 : f32 to vector<2x4xf32>
    %362 = arith.mulf %360, %361 : vector<2x4xf32>
    %cst_102 = arith.constant -2.07679367 : f32
    %363 = vector.broadcast %cst_102 : f32 to vector<2x4xf32>
    %364 = arith.subf %362, %363 : vector<2x4xf32>
    %cst_103 = arith.constant dense<0.000000e+00> : vector<2xf32>
    %365 = vector.multi_reduction <add>, %364, %cst_103 [1] : vector<2x4xf32> to vector<2xf32>
    %366 = vector.shape_cast %365 : vector<2xf32> to vector<2x1xf32>
    %367 = arith.mulf %355, %355 : vector<2x4xf32>
    %cst_104 = arith.constant dense<0.000000e+00> : vector<2xf32>
    %368 = vector.multi_reduction <add>, %367, %cst_104 [1] : vector<2x4xf32> to vector<2xf32>
    %369 = vector.shape_cast %368 : vector<2xf32> to vector<2x1xf32>
    %370 = math.sqrt %369 : vector<2x1xf32>
    %371 = arith.addf %270, %366 : vector<2x1xf32>
    %372 = arith.addf %271, %370 : vector<2x1xf32>
    %cst_105 = arith.constant dense<0.000000e+00> : vector<2x16xf32>
    %373 = tpu.matmul %352, %12, %cst_105 {dimension_numbers = #tpu.dot_dimension_numbers<[1], [0], [0], [1], [0, 0, 1, 1], [], []>} : vector<2x4xf32>, vector<4x16xf32>, vector<2x16xf32> -> vector<2x16xf32>
    %374 = vector.extract_strided_slice %236 {offsets = [4, 0], sizes = [2, 16], strides = [1, 1]} : vector<16x16xf32> to vector<2x16xf32>
    %375 = arith.addf %373, %374 : vector<2x16xf32>
    %cst_106 = arith.constant 0.000000e+00 : f32
    %376 = vector.broadcast %cst_106 : f32 to vector<2x16xf32>
    %377 = arith.maximumf %375, %376 : vector<2x16xf32>
    %378 = vector.broadcast %cst_106 : f32 to vector<2x16xf32>
    %379 = arith.subf %375, %378 : vector<2x16xf32>
    %380 = arith.cmpf one, %379, %379 : vector<2x16xf32>
    %381 = vector.broadcast %cst_106 : f32 to vector<2x16xf32>
    %382 = arith.addf %375, %381 : vector<2x16xf32>
    %383 = math.absf %379 : vector<2x16xf32>
    %cst_107 = arith.constant 0.000000e+00 : f32
    %384 = vector.broadcast %cst_107 : f32 to vector<2x16xf32>
    %385 = arith.subf %384, %383 : vector<2x16xf32>
    %386 = math.exp %385 : vector<2x16xf32>
    %387 = math.log1p %386 : vector<2x16xf32>
    %388 = arith.addf %377, %387 : vector<2x16xf32>
    %389 = arith.select %380, %382, %388 : vector<2x16xi1>, vector<2x16xf32>
    %cst_108 = arith.constant dense<0.000000e+00> : vector<2x16xf32>
    %390 = tpu.matmul %389, %15, %cst_108 {dimension_numbers = #tpu.dot_dimension_numbers<[1], [0], [0], [1], [0, 0, 1, 1], [], []>} : vector<2x16xf32>, vector<16x16xf32>, vector<2x16xf32> -> vector<2x16xf32>
    %391 = vector.broadcast %16 : vector<1x16xf32> to vector<2x16xf32>
    %392 = arith.addf %390, %391 : vector<2x16xf32>
    %cst_109 = arith.constant 0.000000e+00 : f32
    %393 = vector.broadcast %cst_109 : f32 to vector<2x16xf32>
    %394 = arith.maximumf %392, %393 : vector<2x16xf32>
    %395 = vector.broadcast %cst_109 : f32 to vector<2x16xf32>
    %396 = arith.subf %392, %395 : vector<2x16xf32>
    %397 = arith.cmpf one, %396, %396 : vector<2x16xf32>
    %398 = vector.broadcast %cst_109 : f32 to vector<2x16xf32>
    %399 = arith.addf %392, %398 : vector<2x16xf32>
    %400 = math.absf %396 : vector<2x16xf32>
    %cst_110 = arith.constant 0.000000e+00 : f32
    %401 = vector.broadcast %cst_110 : f32 to vector<2x16xf32>
    %402 = arith.subf %401, %400 : vector<2x16xf32>
    %403 = math.exp %402 : vector<2x16xf32>
    %404 = math.log1p %403 : vector<2x16xf32>
    %405 = arith.addf %394, %404 : vector<2x16xf32>
    %406 = arith.select %397, %399, %405 : vector<2x16xi1>, vector<2x16xf32>
    %cst_111 = arith.constant dense<0.000000e+00> : vector<2x4xf32>
    %407 = tpu.matmul %406, %17, %cst_111 {dimension_numbers = #tpu.dot_dimension_numbers<[1], [0], [0], [1], [0, 0, 1, 1], [], []>} : vector<2x16xf32>, vector<16x4xf32>, vector<2x4xf32> -> vector<2x4xf32>
    %408 = vector.broadcast %18 : vector<1x4xf32> to vector<2x4xf32>
    %409 = arith.addf %407, %408 : vector<2x4xf32>
    %cst_112 = arith.constant dense<0.000000e+00> : vector<2x4xf32>
    %410 = tpu.matmul %352, %19, %cst_112 {dimension_numbers = #tpu.dot_dimension_numbers<[1], [0], [0], [1], [0, 0, 1, 1], [], []>} : vector<2x4xf32>, vector<4x4xf32>, vector<2x4xf32> -> vector<2x4xf32>
    %411 = vector.broadcast %20 : vector<1x4xf32> to vector<2x4xf32>
    %412 = arith.addf %410, %411 : vector<2x4xf32>
    %cst_113 = arith.constant dense<0.000000e+00> : vector<2x64xf32>
    %413 = tpu.matmul %352, %23, %cst_113 {dimension_numbers = #tpu.dot_dimension_numbers<[1], [0], [0], [1], [0, 0, 1, 1], [], []>} : vector<2x4xf32>, vector<4x64xf32>, vector<2x64xf32> -> vector<2x64xf32>
    %414 = vector.broadcast %24 : vector<1x64xf32> to vector<2x64xf32>
    %415 = arith.addf %413, %414 : vector<2x64xf32>
    %cst_114 = arith.constant 0.000000e+00 : f32
    %416 = vector.broadcast %cst_114 : f32 to vector<2x64xf32>
    %417 = arith.maximumf %415, %416 : vector<2x64xf32>
    %418 = vector.broadcast %cst_114 : f32 to vector<2x64xf32>
    %419 = arith.subf %415, %418 : vector<2x64xf32>
    %420 = arith.cmpf one, %419, %419 : vector<2x64xf32>
    %421 = vector.broadcast %cst_114 : f32 to vector<2x64xf32>
    %422 = arith.addf %415, %421 : vector<2x64xf32>
    %423 = math.absf %419 : vector<2x64xf32>
    %cst_115 = arith.constant 0.000000e+00 : f32
    %424 = vector.broadcast %cst_115 : f32 to vector<2x64xf32>
    %425 = arith.subf %424, %423 : vector<2x64xf32>
    %426 = math.exp %425 : vector<2x64xf32>
    %427 = math.log1p %426 : vector<2x64xf32>
    %428 = arith.addf %417, %427 : vector<2x64xf32>
    %429 = arith.select %420, %422, %428 : vector<2x64xi1>, vector<2x64xf32>
    %cst_116 = arith.constant dense<0.000000e+00> : vector<2x4xf32>
    %430 = tpu.matmul %429, %25, %cst_116 {dimension_numbers = #tpu.dot_dimension_numbers<[1], [0], [0], [1], [0, 0, 1, 1], [], []>} : vector<2x64xf32>, vector<64x4xf32>, vector<2x4xf32> -> vector<2x4xf32>
    %431 = vector.broadcast %26 : vector<1x4xf32> to vector<2x4xf32>
    %432 = arith.addf %430, %431 : vector<2x4xf32>
    %433 = arith.negf %432 : vector<2x4xf32>
    %434 = math.exp %433 : vector<2x4xf32>
    %cst_117 = arith.constant 1.000000e+00 : f32
    %435 = vector.broadcast %cst_117 : f32 to vector<2x4xf32>
    %436 = arith.addf %435, %434 : vector<2x4xf32>
    %437 = arith.divf %435, %436 : vector<2x4xf32>
    %438 = arith.subf %409, %412 : vector<2x4xf32>
    %cst_118 = arith.constant 1.000000e-07 : f32
    %439 = vector.broadcast %cst_118 : f32 to vector<2x4xf32>
    %440 = arith.maximumf %437, %439 : vector<2x4xf32>
    %441 = arith.divf %438, %440 : vector<2x4xf32>
    %442 = arith.mulf %441, %441 : vector<2x4xf32>
    %cst_119 = arith.constant dense<0.000000e+00> : vector<2xf32>
    %443 = vector.multi_reduction <add>, %442, %cst_119 [1] : vector<2x4xf32> to vector<2xf32>
    %444 = vector.shape_cast %443 : vector<2xf32> to vector<2x1xf32>
    %cst_120 = arith.constant 5.000000e-03 : f32
    %445 = vector.broadcast %cst_120 : f32 to vector<2x1xf32>
    %446 = arith.mulf %445, %444 : vector<2x1xf32>
    %447 = arith.addf %346, %446 : vector<2x1xf32>
    %cst_121 = arith.constant 0.00999999977 : f32
    %448 = vector.broadcast %cst_121 : f32 to vector<2x4xf32>
    %449 = arith.mulf %409, %448 : vector<2x4xf32>
    %450 = arith.addf %352, %449 : vector<2x4xf32>
    %451 = vector.extract_strided_slice %30 {offsets = [4, 0], sizes = [2, 4], strides = [1, 1]} : vector<16x4xf32> to vector<2x4xf32>
    %452 = arith.mulf %437, %451 : vector<2x4xf32>
    %453 = arith.addf %450, %452 : vector<2x4xf32>
    %cst_122 = arith.constant dense<0.000000e+00> : vector<2x4xf32>
    %454 = tpu.matmul %453, %21, %cst_122 {dimension_numbers = #tpu.dot_dimension_numbers<[1], [0], [0], [1], [0, 0, 1, 1], [], []>} : vector<2x4xf32>, vector<4x4xf32>, vector<2x4xf32> -> vector<2x4xf32>
    %455 = vector.broadcast %22 : vector<1x4xf32> to vector<2x4xf32>
    %456 = arith.addf %454, %455 : vector<2x4xf32>
    %457 = vector.extract_strided_slice %29 {offsets = [4, 0], sizes = [2, 4], strides = [1, 1]} : vector<16x4xf32> to vector<2x4xf32>
    %458 = arith.subf %457, %456 : vector<2x4xf32>
    %459 = arith.mulf %458, %458 : vector<2x4xf32>
    %cst_123 = arith.constant 0.000000e+00 : f32
    %460 = vector.broadcast %cst_123 : f32 to vector<2x4xf32>
    %461 = arith.subf %460, %459 : vector<2x4xf32>
    %cst_124 = arith.constant 2.000000e+02 : f32
    %462 = vector.broadcast %cst_124 : f32 to vector<2x4xf32>
    %463 = arith.mulf %461, %462 : vector<2x4xf32>
    %cst_125 = arith.constant -2.07679367 : f32
    %464 = vector.broadcast %cst_125 : f32 to vector<2x4xf32>
    %465 = arith.subf %463, %464 : vector<2x4xf32>
    %cst_126 = arith.constant dense<0.000000e+00> : vector<2xf32>
    %466 = vector.multi_reduction <add>, %465, %cst_126 [1] : vector<2x4xf32> to vector<2xf32>
    %467 = vector.shape_cast %466 : vector<2xf32> to vector<2x1xf32>
    %468 = arith.mulf %456, %456 : vector<2x4xf32>
    %cst_127 = arith.constant dense<0.000000e+00> : vector<2xf32>
    %469 = vector.multi_reduction <add>, %468, %cst_127 [1] : vector<2x4xf32> to vector<2xf32>
    %470 = vector.shape_cast %469 : vector<2xf32> to vector<2x1xf32>
    %471 = math.sqrt %470 : vector<2x1xf32>
    %472 = arith.addf %371, %467 : vector<2x1xf32>
    %473 = arith.addf %372, %471 : vector<2x1xf32>
    %cst_128 = arith.constant dense<0.000000e+00> : vector<2x16xf32>
    %474 = tpu.matmul %453, %12, %cst_128 {dimension_numbers = #tpu.dot_dimension_numbers<[1], [0], [0], [1], [0, 0, 1, 1], [], []>} : vector<2x4xf32>, vector<4x16xf32>, vector<2x16xf32> -> vector<2x16xf32>
    %475 = vector.extract_strided_slice %236 {offsets = [6, 0], sizes = [2, 16], strides = [1, 1]} : vector<16x16xf32> to vector<2x16xf32>
    %476 = arith.addf %474, %475 : vector<2x16xf32>
    %cst_129 = arith.constant 0.000000e+00 : f32
    %477 = vector.broadcast %cst_129 : f32 to vector<2x16xf32>
    %478 = arith.maximumf %476, %477 : vector<2x16xf32>
    %479 = vector.broadcast %cst_129 : f32 to vector<2x16xf32>
    %480 = arith.subf %476, %479 : vector<2x16xf32>
    %481 = arith.cmpf one, %480, %480 : vector<2x16xf32>
    %482 = vector.broadcast %cst_129 : f32 to vector<2x16xf32>
    %483 = arith.addf %476, %482 : vector<2x16xf32>
    %484 = math.absf %480 : vector<2x16xf32>
    %cst_130 = arith.constant 0.000000e+00 : f32
    %485 = vector.broadcast %cst_130 : f32 to vector<2x16xf32>
    %486 = arith.subf %485, %484 : vector<2x16xf32>
    %487 = math.exp %486 : vector<2x16xf32>
    %488 = math.log1p %487 : vector<2x16xf32>
    %489 = arith.addf %478, %488 : vector<2x16xf32>
    %490 = arith.select %481, %483, %489 : vector<2x16xi1>, vector<2x16xf32>
    %cst_131 = arith.constant dense<0.000000e+00> : vector<2x16xf32>
    %491 = tpu.matmul %490, %15, %cst_131 {dimension_numbers = #tpu.dot_dimension_numbers<[1], [0], [0], [1], [0, 0, 1, 1], [], []>} : vector<2x16xf32>, vector<16x16xf32>, vector<2x16xf32> -> vector<2x16xf32>
    %492 = vector.broadcast %16 : vector<1x16xf32> to vector<2x16xf32>
    %493 = arith.addf %491, %492 : vector<2x16xf32>
    %cst_132 = arith.constant 0.000000e+00 : f32
    %494 = vector.broadcast %cst_132 : f32 to vector<2x16xf32>
    %495 = arith.maximumf %493, %494 : vector<2x16xf32>
    %496 = vector.broadcast %cst_132 : f32 to vector<2x16xf32>
    %497 = arith.subf %493, %496 : vector<2x16xf32>
    %498 = arith.cmpf one, %497, %497 : vector<2x16xf32>
    %499 = vector.broadcast %cst_132 : f32 to vector<2x16xf32>
    %500 = arith.addf %493, %499 : vector<2x16xf32>
    %501 = math.absf %497 : vector<2x16xf32>
    %cst_133 = arith.constant 0.000000e+00 : f32
    %502 = vector.broadcast %cst_133 : f32 to vector<2x16xf32>
    %503 = arith.subf %502, %501 : vector<2x16xf32>
    %504 = math.exp %503 : vector<2x16xf32>
    %505 = math.log1p %504 : vector<2x16xf32>
    %506 = arith.addf %495, %505 : vector<2x16xf32>
    %507 = arith.select %498, %500, %506 : vector<2x16xi1>, vector<2x16xf32>
    %cst_134 = arith.constant dense<0.000000e+00> : vector<2x4xf32>
    %508 = tpu.matmul %507, %17, %cst_134 {dimension_numbers = #tpu.dot_dimension_numbers<[1], [0], [0], [1], [0, 0, 1, 1], [], []>} : vector<2x16xf32>, vector<16x4xf32>, vector<2x4xf32> -> vector<2x4xf32>
    %509 = vector.broadcast %18 : vector<1x4xf32> to vector<2x4xf32>
    %510 = arith.addf %508, %509 : vector<2x4xf32>
    %cst_135 = arith.constant dense<0.000000e+00> : vector<2x4xf32>
    %511 = tpu.matmul %453, %19, %cst_135 {dimension_numbers = #tpu.dot_dimension_numbers<[1], [0], [0], [1], [0, 0, 1, 1], [], []>} : vector<2x4xf32>, vector<4x4xf32>, vector<2x4xf32> -> vector<2x4xf32>
    %512 = vector.broadcast %20 : vector<1x4xf32> to vector<2x4xf32>
    %513 = arith.addf %511, %512 : vector<2x4xf32>
    %cst_136 = arith.constant dense<0.000000e+00> : vector<2x64xf32>
    %514 = tpu.matmul %453, %23, %cst_136 {dimension_numbers = #tpu.dot_dimension_numbers<[1], [0], [0], [1], [0, 0, 1, 1], [], []>} : vector<2x4xf32>, vector<4x64xf32>, vector<2x64xf32> -> vector<2x64xf32>
    %515 = vector.broadcast %24 : vector<1x64xf32> to vector<2x64xf32>
    %516 = arith.addf %514, %515 : vector<2x64xf32>
    %cst_137 = arith.constant 0.000000e+00 : f32
    %517 = vector.broadcast %cst_137 : f32 to vector<2x64xf32>
    %518 = arith.maximumf %516, %517 : vector<2x64xf32>
    %519 = vector.broadcast %cst_137 : f32 to vector<2x64xf32>
    %520 = arith.subf %516, %519 : vector<2x64xf32>
    %521 = arith.cmpf one, %520, %520 : vector<2x64xf32>
    %522 = vector.broadcast %cst_137 : f32 to vector<2x64xf32>
    %523 = arith.addf %516, %522 : vector<2x64xf32>
    %524 = math.absf %520 : vector<2x64xf32>
    %cst_138 = arith.constant 0.000000e+00 : f32
    %525 = vector.broadcast %cst_138 : f32 to vector<2x64xf32>
    %526 = arith.subf %525, %524 : vector<2x64xf32>
    %527 = math.exp %526 : vector<2x64xf32>
    %528 = math.log1p %527 : vector<2x64xf32>
    %529 = arith.addf %518, %528 : vector<2x64xf32>
    %530 = arith.select %521, %523, %529 : vector<2x64xi1>, vector<2x64xf32>
    %cst_139 = arith.constant dense<0.000000e+00> : vector<2x4xf32>
    %531 = tpu.matmul %530, %25, %cst_139 {dimension_numbers = #tpu.dot_dimension_numbers<[1], [0], [0], [1], [0, 0, 1, 1], [], []>} : vector<2x64xf32>, vector<64x4xf32>, vector<2x4xf32> -> vector<2x4xf32>
    %532 = vector.broadcast %26 : vector<1x4xf32> to vector<2x4xf32>
    %533 = arith.addf %531, %532 : vector<2x4xf32>
    %534 = arith.negf %533 : vector<2x4xf32>
    %535 = math.exp %534 : vector<2x4xf32>
    %cst_140 = arith.constant 1.000000e+00 : f32
    %536 = vector.broadcast %cst_140 : f32 to vector<2x4xf32>
    %537 = arith.addf %536, %535 : vector<2x4xf32>
    %538 = arith.divf %536, %537 : vector<2x4xf32>
    %539 = arith.subf %510, %513 : vector<2x4xf32>
    %cst_141 = arith.constant 1.000000e-07 : f32
    %540 = vector.broadcast %cst_141 : f32 to vector<2x4xf32>
    %541 = arith.maximumf %538, %540 : vector<2x4xf32>
    %542 = arith.divf %539, %541 : vector<2x4xf32>
    %543 = arith.mulf %542, %542 : vector<2x4xf32>
    %cst_142 = arith.constant dense<0.000000e+00> : vector<2xf32>
    %544 = vector.multi_reduction <add>, %543, %cst_142 [1] : vector<2x4xf32> to vector<2xf32>
    %545 = vector.shape_cast %544 : vector<2xf32> to vector<2x1xf32>
    %cst_143 = arith.constant 5.000000e-03 : f32
    %546 = vector.broadcast %cst_143 : f32 to vector<2x1xf32>
    %547 = arith.mulf %546, %545 : vector<2x1xf32>
    %548 = arith.addf %447, %547 : vector<2x1xf32>
    %cst_144 = arith.constant 0.00999999977 : f32
    %549 = vector.broadcast %cst_144 : f32 to vector<2x4xf32>
    %550 = arith.mulf %510, %549 : vector<2x4xf32>
    %551 = arith.addf %453, %550 : vector<2x4xf32>
    %552 = vector.extract_strided_slice %30 {offsets = [6, 0], sizes = [2, 4], strides = [1, 1]} : vector<16x4xf32> to vector<2x4xf32>
    %553 = arith.mulf %538, %552 : vector<2x4xf32>
    %554 = arith.addf %551, %553 : vector<2x4xf32>
    %cst_145 = arith.constant dense<0.000000e+00> : vector<2x4xf32>
    %555 = tpu.matmul %554, %21, %cst_145 {dimension_numbers = #tpu.dot_dimension_numbers<[1], [0], [0], [1], [0, 0, 1, 1], [], []>} : vector<2x4xf32>, vector<4x4xf32>, vector<2x4xf32> -> vector<2x4xf32>
    %556 = vector.broadcast %22 : vector<1x4xf32> to vector<2x4xf32>
    %557 = arith.addf %555, %556 : vector<2x4xf32>
    %558 = vector.extract_strided_slice %29 {offsets = [6, 0], sizes = [2, 4], strides = [1, 1]} : vector<16x4xf32> to vector<2x4xf32>
    %559 = arith.subf %558, %557 : vector<2x4xf32>
    %560 = arith.mulf %559, %559 : vector<2x4xf32>
    %cst_146 = arith.constant 0.000000e+00 : f32
    %561 = vector.broadcast %cst_146 : f32 to vector<2x4xf32>
    %562 = arith.subf %561, %560 : vector<2x4xf32>
    %cst_147 = arith.constant 2.000000e+02 : f32
    %563 = vector.broadcast %cst_147 : f32 to vector<2x4xf32>
    %564 = arith.mulf %562, %563 : vector<2x4xf32>
    %cst_148 = arith.constant -2.07679367 : f32
    %565 = vector.broadcast %cst_148 : f32 to vector<2x4xf32>
    %566 = arith.subf %564, %565 : vector<2x4xf32>
    %cst_149 = arith.constant dense<0.000000e+00> : vector<2xf32>
    %567 = vector.multi_reduction <add>, %566, %cst_149 [1] : vector<2x4xf32> to vector<2xf32>
    %568 = vector.shape_cast %567 : vector<2xf32> to vector<2x1xf32>
    %569 = arith.mulf %557, %557 : vector<2x4xf32>
    %cst_150 = arith.constant dense<0.000000e+00> : vector<2xf32>
    %570 = vector.multi_reduction <add>, %569, %cst_150 [1] : vector<2x4xf32> to vector<2xf32>
    %571 = vector.shape_cast %570 : vector<2xf32> to vector<2x1xf32>
    %572 = math.sqrt %571 : vector<2x1xf32>
    %573 = arith.addf %472, %568 : vector<2x1xf32>
    %574 = arith.addf %473, %572 : vector<2x1xf32>
    %cst_151 = arith.constant dense<0.000000e+00> : vector<2x16xf32>
    %575 = tpu.matmul %554, %12, %cst_151 {dimension_numbers = #tpu.dot_dimension_numbers<[1], [0], [0], [1], [0, 0, 1, 1], [], []>} : vector<2x4xf32>, vector<4x16xf32>, vector<2x16xf32> -> vector<2x16xf32>
    %576 = vector.extract_strided_slice %236 {offsets = [8, 0], sizes = [2, 16], strides = [1, 1]} : vector<16x16xf32> to vector<2x16xf32>
    %577 = arith.addf %575, %576 : vector<2x16xf32>
    %cst_152 = arith.constant 0.000000e+00 : f32
    %578 = vector.broadcast %cst_152 : f32 to vector<2x16xf32>
    %579 = arith.maximumf %577, %578 : vector<2x16xf32>
    %580 = vector.broadcast %cst_152 : f32 to vector<2x16xf32>
    %581 = arith.subf %577, %580 : vector<2x16xf32>
    %582 = arith.cmpf one, %581, %581 : vector<2x16xf32>
    %583 = vector.broadcast %cst_152 : f32 to vector<2x16xf32>
    %584 = arith.addf %577, %583 : vector<2x16xf32>
    %585 = math.absf %581 : vector<2x16xf32>
    %cst_153 = arith.constant 0.000000e+00 : f32
    %586 = vector.broadcast %cst_153 : f32 to vector<2x16xf32>
    %587 = arith.subf %586, %585 : vector<2x16xf32>
    %588 = math.exp %587 : vector<2x16xf32>
    %589 = math.log1p %588 : vector<2x16xf32>
    %590 = arith.addf %579, %589 : vector<2x16xf32>
    %591 = arith.select %582, %584, %590 : vector<2x16xi1>, vector<2x16xf32>
    %cst_154 = arith.constant dense<0.000000e+00> : vector<2x16xf32>
    %592 = tpu.matmul %591, %15, %cst_154 {dimension_numbers = #tpu.dot_dimension_numbers<[1], [0], [0], [1], [0, 0, 1, 1], [], []>} : vector<2x16xf32>, vector<16x16xf32>, vector<2x16xf32> -> vector<2x16xf32>
    %593 = vector.broadcast %16 : vector<1x16xf32> to vector<2x16xf32>
    %594 = arith.addf %592, %593 : vector<2x16xf32>
    %cst_155 = arith.constant 0.000000e+00 : f32
    %595 = vector.broadcast %cst_155 : f32 to vector<2x16xf32>
    %596 = arith.maximumf %594, %595 : vector<2x16xf32>
    %597 = vector.broadcast %cst_155 : f32 to vector<2x16xf32>
    %598 = arith.subf %594, %597 : vector<2x16xf32>
    %599 = arith.cmpf one, %598, %598 : vector<2x16xf32>
    %600 = vector.broadcast %cst_155 : f32 to vector<2x16xf32>
    %601 = arith.addf %594, %600 : vector<2x16xf32>
    %602 = math.absf %598 : vector<2x16xf32>
    %cst_156 = arith.constant 0.000000e+00 : f32
    %603 = vector.broadcast %cst_156 : f32 to vector<2x16xf32>
    %604 = arith.subf %603, %602 : vector<2x16xf32>
    %605 = math.exp %604 : vector<2x16xf32>
    %606 = math.log1p %605 : vector<2x16xf32>
    %607 = arith.addf %596, %606 : vector<2x16xf32>
    %608 = arith.select %599, %601, %607 : vector<2x16xi1>, vector<2x16xf32>
    %cst_157 = arith.constant dense<0.000000e+00> : vector<2x4xf32>
    %609 = tpu.matmul %608, %17, %cst_157 {dimension_numbers = #tpu.dot_dimension_numbers<[1], [0], [0], [1], [0, 0, 1, 1], [], []>} : vector<2x16xf32>, vector<16x4xf32>, vector<2x4xf32> -> vector<2x4xf32>
    %610 = vector.broadcast %18 : vector<1x4xf32> to vector<2x4xf32>
    %611 = arith.addf %609, %610 : vector<2x4xf32>
    %cst_158 = arith.constant dense<0.000000e+00> : vector<2x4xf32>
    %612 = tpu.matmul %554, %19, %cst_158 {dimension_numbers = #tpu.dot_dimension_numbers<[1], [0], [0], [1], [0, 0, 1, 1], [], []>} : vector<2x4xf32>, vector<4x4xf32>, vector<2x4xf32> -> vector<2x4xf32>
    %613 = vector.broadcast %20 : vector<1x4xf32> to vector<2x4xf32>
    %614 = arith.addf %612, %613 : vector<2x4xf32>
    %cst_159 = arith.constant dense<0.000000e+00> : vector<2x64xf32>
    %615 = tpu.matmul %554, %23, %cst_159 {dimension_numbers = #tpu.dot_dimension_numbers<[1], [0], [0], [1], [0, 0, 1, 1], [], []>} : vector<2x4xf32>, vector<4x64xf32>, vector<2x64xf32> -> vector<2x64xf32>
    %616 = vector.broadcast %24 : vector<1x64xf32> to vector<2x64xf32>
    %617 = arith.addf %615, %616 : vector<2x64xf32>
    %cst_160 = arith.constant 0.000000e+00 : f32
    %618 = vector.broadcast %cst_160 : f32 to vector<2x64xf32>
    %619 = arith.maximumf %617, %618 : vector<2x64xf32>
    %620 = vector.broadcast %cst_160 : f32 to vector<2x64xf32>
    %621 = arith.subf %617, %620 : vector<2x64xf32>
    %622 = arith.cmpf one, %621, %621 : vector<2x64xf32>
    %623 = vector.broadcast %cst_160 : f32 to vector<2x64xf32>
    %624 = arith.addf %617, %623 : vector<2x64xf32>
    %625 = math.absf %621 : vector<2x64xf32>
    %cst_161 = arith.constant 0.000000e+00 : f32
    %626 = vector.broadcast %cst_161 : f32 to vector<2x64xf32>
    %627 = arith.subf %626, %625 : vector<2x64xf32>
    %628 = math.exp %627 : vector<2x64xf32>
    %629 = math.log1p %628 : vector<2x64xf32>
    %630 = arith.addf %619, %629 : vector<2x64xf32>
    %631 = arith.select %622, %624, %630 : vector<2x64xi1>, vector<2x64xf32>
    %cst_162 = arith.constant dense<0.000000e+00> : vector<2x4xf32>
    %632 = tpu.matmul %631, %25, %cst_162 {dimension_numbers = #tpu.dot_dimension_numbers<[1], [0], [0], [1], [0, 0, 1, 1], [], []>} : vector<2x64xf32>, vector<64x4xf32>, vector<2x4xf32> -> vector<2x4xf32>
    %633 = vector.broadcast %26 : vector<1x4xf32> to vector<2x4xf32>
    %634 = arith.addf %632, %633 : vector<2x4xf32>
    %635 = arith.negf %634 : vector<2x4xf32>
    %636 = math.exp %635 : vector<2x4xf32>
    %cst_163 = arith.constant 1.000000e+00 : f32
    %637 = vector.broadcast %cst_163 : f32 to vector<2x4xf32>
    %638 = arith.addf %637, %636 : vector<2x4xf32>
    %639 = arith.divf %637, %638 : vector<2x4xf32>
    %640 = arith.subf %611, %614 : vector<2x4xf32>
    %cst_164 = arith.constant 1.000000e-07 : f32
    %641 = vector.broadcast %cst_164 : f32 to vector<2x4xf32>
    %642 = arith.maximumf %639, %641 : vector<2x4xf32>
    %643 = arith.divf %640, %642 : vector<2x4xf32>
    %644 = arith.mulf %643, %643 : vector<2x4xf32>
    %cst_165 = arith.constant dense<0.000000e+00> : vector<2xf32>
    %645 = vector.multi_reduction <add>, %644, %cst_165 [1] : vector<2x4xf32> to vector<2xf32>
    %646 = vector.shape_cast %645 : vector<2xf32> to vector<2x1xf32>
    %cst_166 = arith.constant 5.000000e-03 : f32
    %647 = vector.broadcast %cst_166 : f32 to vector<2x1xf32>
    %648 = arith.mulf %647, %646 : vector<2x1xf32>
    %649 = arith.addf %548, %648 : vector<2x1xf32>
    %cst_167 = arith.constant 0.00999999977 : f32
    %650 = vector.broadcast %cst_167 : f32 to vector<2x4xf32>
    %651 = arith.mulf %611, %650 : vector<2x4xf32>
    %652 = arith.addf %554, %651 : vector<2x4xf32>
    %653 = vector.extract_strided_slice %30 {offsets = [8, 0], sizes = [2, 4], strides = [1, 1]} : vector<16x4xf32> to vector<2x4xf32>
    %654 = arith.mulf %639, %653 : vector<2x4xf32>
    %655 = arith.addf %652, %654 : vector<2x4xf32>
    %cst_168 = arith.constant dense<0.000000e+00> : vector<2x4xf32>
    %656 = tpu.matmul %655, %21, %cst_168 {dimension_numbers = #tpu.dot_dimension_numbers<[1], [0], [0], [1], [0, 0, 1, 1], [], []>} : vector<2x4xf32>, vector<4x4xf32>, vector<2x4xf32> -> vector<2x4xf32>
    %657 = vector.broadcast %22 : vector<1x4xf32> to vector<2x4xf32>
    %658 = arith.addf %656, %657 : vector<2x4xf32>
    %659 = vector.extract_strided_slice %29 {offsets = [8, 0], sizes = [2, 4], strides = [1, 1]} : vector<16x4xf32> to vector<2x4xf32>
    %660 = arith.subf %659, %658 : vector<2x4xf32>
    %661 = arith.mulf %660, %660 : vector<2x4xf32>
    %cst_169 = arith.constant 0.000000e+00 : f32
    %662 = vector.broadcast %cst_169 : f32 to vector<2x4xf32>
    %663 = arith.subf %662, %661 : vector<2x4xf32>
    %cst_170 = arith.constant 2.000000e+02 : f32
    %664 = vector.broadcast %cst_170 : f32 to vector<2x4xf32>
    %665 = arith.mulf %663, %664 : vector<2x4xf32>
    %cst_171 = arith.constant -2.07679367 : f32
    %666 = vector.broadcast %cst_171 : f32 to vector<2x4xf32>
    %667 = arith.subf %665, %666 : vector<2x4xf32>
    %cst_172 = arith.constant dense<0.000000e+00> : vector<2xf32>
    %668 = vector.multi_reduction <add>, %667, %cst_172 [1] : vector<2x4xf32> to vector<2xf32>
    %669 = vector.shape_cast %668 : vector<2xf32> to vector<2x1xf32>
    %670 = arith.mulf %658, %658 : vector<2x4xf32>
    %cst_173 = arith.constant dense<0.000000e+00> : vector<2xf32>
    %671 = vector.multi_reduction <add>, %670, %cst_173 [1] : vector<2x4xf32> to vector<2xf32>
    %672 = vector.shape_cast %671 : vector<2xf32> to vector<2x1xf32>
    %673 = math.sqrt %672 : vector<2x1xf32>
    %674 = arith.addf %573, %669 : vector<2x1xf32>
    %675 = arith.addf %574, %673 : vector<2x1xf32>
    %cst_174 = arith.constant dense<0.000000e+00> : vector<2x16xf32>
    %676 = tpu.matmul %655, %12, %cst_174 {dimension_numbers = #tpu.dot_dimension_numbers<[1], [0], [0], [1], [0, 0, 1, 1], [], []>} : vector<2x4xf32>, vector<4x16xf32>, vector<2x16xf32> -> vector<2x16xf32>
    %677 = vector.extract_strided_slice %236 {offsets = [10, 0], sizes = [2, 16], strides = [1, 1]} : vector<16x16xf32> to vector<2x16xf32>
    %678 = arith.addf %676, %677 : vector<2x16xf32>
    %cst_175 = arith.constant 0.000000e+00 : f32
    %679 = vector.broadcast %cst_175 : f32 to vector<2x16xf32>
    %680 = arith.maximumf %678, %679 : vector<2x16xf32>
    %681 = vector.broadcast %cst_175 : f32 to vector<2x16xf32>
    %682 = arith.subf %678, %681 : vector<2x16xf32>
    %683 = arith.cmpf one, %682, %682 : vector<2x16xf32>
    %684 = vector.broadcast %cst_175 : f32 to vector<2x16xf32>
    %685 = arith.addf %678, %684 : vector<2x16xf32>
    %686 = math.absf %682 : vector<2x16xf32>
    %cst_176 = arith.constant 0.000000e+00 : f32
    %687 = vector.broadcast %cst_176 : f32 to vector<2x16xf32>
    %688 = arith.subf %687, %686 : vector<2x16xf32>
    %689 = math.exp %688 : vector<2x16xf32>
    %690 = math.log1p %689 : vector<2x16xf32>
    %691 = arith.addf %680, %690 : vector<2x16xf32>
    %692 = arith.select %683, %685, %691 : vector<2x16xi1>, vector<2x16xf32>
    %cst_177 = arith.constant dense<0.000000e+00> : vector<2x16xf32>
    %693 = tpu.matmul %692, %15, %cst_177 {dimension_numbers = #tpu.dot_dimension_numbers<[1], [0], [0], [1], [0, 0, 1, 1], [], []>} : vector<2x16xf32>, vector<16x16xf32>, vector<2x16xf32> -> vector<2x16xf32>
    %694 = vector.broadcast %16 : vector<1x16xf32> to vector<2x16xf32>
    %695 = arith.addf %693, %694 : vector<2x16xf32>
    %cst_178 = arith.constant 0.000000e+00 : f32
    %696 = vector.broadcast %cst_178 : f32 to vector<2x16xf32>
    %697 = arith.maximumf %695, %696 : vector<2x16xf32>
    %698 = vector.broadcast %cst_178 : f32 to vector<2x16xf32>
    %699 = arith.subf %695, %698 : vector<2x16xf32>
    %700 = arith.cmpf one, %699, %699 : vector<2x16xf32>
    %701 = vector.broadcast %cst_178 : f32 to vector<2x16xf32>
    %702 = arith.addf %695, %701 : vector<2x16xf32>
    %703 = math.absf %699 : vector<2x16xf32>
    %cst_179 = arith.constant 0.000000e+00 : f32
    %704 = vector.broadcast %cst_179 : f32 to vector<2x16xf32>
    %705 = arith.subf %704, %703 : vector<2x16xf32>
    %706 = math.exp %705 : vector<2x16xf32>
    %707 = math.log1p %706 : vector<2x16xf32>
    %708 = arith.addf %697, %707 : vector<2x16xf32>
    %709 = arith.select %700, %702, %708 : vector<2x16xi1>, vector<2x16xf32>
    %cst_180 = arith.constant dense<0.000000e+00> : vector<2x4xf32>
    %710 = tpu.matmul %709, %17, %cst_180 {dimension_numbers = #tpu.dot_dimension_numbers<[1], [0], [0], [1], [0, 0, 1, 1], [], []>} : vector<2x16xf32>, vector<16x4xf32>, vector<2x4xf32> -> vector<2x4xf32>
    %711 = vector.broadcast %18 : vector<1x4xf32> to vector<2x4xf32>
    %712 = arith.addf %710, %711 : vector<2x4xf32>
    %cst_181 = arith.constant dense<0.000000e+00> : vector<2x4xf32>
    %713 = tpu.matmul %655, %19, %cst_181 {dimension_numbers = #tpu.dot_dimension_numbers<[1], [0], [0], [1], [0, 0, 1, 1], [], []>} : vector<2x4xf32>, vector<4x4xf32>, vector<2x4xf32> -> vector<2x4xf32>
    %714 = vector.broadcast %20 : vector<1x4xf32> to vector<2x4xf32>
    %715 = arith.addf %713, %714 : vector<2x4xf32>
    %cst_182 = arith.constant dense<0.000000e+00> : vector<2x64xf32>
    %716 = tpu.matmul %655, %23, %cst_182 {dimension_numbers = #tpu.dot_dimension_numbers<[1], [0], [0], [1], [0, 0, 1, 1], [], []>} : vector<2x4xf32>, vector<4x64xf32>, vector<2x64xf32> -> vector<2x64xf32>
    %717 = vector.broadcast %24 : vector<1x64xf32> to vector<2x64xf32>
    %718 = arith.addf %716, %717 : vector<2x64xf32>
    %cst_183 = arith.constant 0.000000e+00 : f32
    %719 = vector.broadcast %cst_183 : f32 to vector<2x64xf32>
    %720 = arith.maximumf %718, %719 : vector<2x64xf32>
    %721 = vector.broadcast %cst_183 : f32 to vector<2x64xf32>
    %722 = arith.subf %718, %721 : vector<2x64xf32>
    %723 = arith.cmpf one, %722, %722 : vector<2x64xf32>
    %724 = vector.broadcast %cst_183 : f32 to vector<2x64xf32>
    %725 = arith.addf %718, %724 : vector<2x64xf32>
    %726 = math.absf %722 : vector<2x64xf32>
    %cst_184 = arith.constant 0.000000e+00 : f32
    %727 = vector.broadcast %cst_184 : f32 to vector<2x64xf32>
    %728 = arith.subf %727, %726 : vector<2x64xf32>
    %729 = math.exp %728 : vector<2x64xf32>
    %730 = math.log1p %729 : vector<2x64xf32>
    %731 = arith.addf %720, %730 : vector<2x64xf32>
    %732 = arith.select %723, %725, %731 : vector<2x64xi1>, vector<2x64xf32>
    %cst_185 = arith.constant dense<0.000000e+00> : vector<2x4xf32>
    %733 = tpu.matmul %732, %25, %cst_185 {dimension_numbers = #tpu.dot_dimension_numbers<[1], [0], [0], [1], [0, 0, 1, 1], [], []>} : vector<2x64xf32>, vector<64x4xf32>, vector<2x4xf32> -> vector<2x4xf32>
    %734 = vector.broadcast %26 : vector<1x4xf32> to vector<2x4xf32>
    %735 = arith.addf %733, %734 : vector<2x4xf32>
    %736 = arith.negf %735 : vector<2x4xf32>
    %737 = math.exp %736 : vector<2x4xf32>
    %cst_186 = arith.constant 1.000000e+00 : f32
    %738 = vector.broadcast %cst_186 : f32 to vector<2x4xf32>
    %739 = arith.addf %738, %737 : vector<2x4xf32>
    %740 = arith.divf %738, %739 : vector<2x4xf32>
    %741 = arith.subf %712, %715 : vector<2x4xf32>
    %cst_187 = arith.constant 1.000000e-07 : f32
    %742 = vector.broadcast %cst_187 : f32 to vector<2x4xf32>
    %743 = arith.maximumf %740, %742 : vector<2x4xf32>
    %744 = arith.divf %741, %743 : vector<2x4xf32>
    %745 = arith.mulf %744, %744 : vector<2x4xf32>
    %cst_188 = arith.constant dense<0.000000e+00> : vector<2xf32>
    %746 = vector.multi_reduction <add>, %745, %cst_188 [1] : vector<2x4xf32> to vector<2xf32>
    %747 = vector.shape_cast %746 : vector<2xf32> to vector<2x1xf32>
    %cst_189 = arith.constant 5.000000e-03 : f32
    %748 = vector.broadcast %cst_189 : f32 to vector<2x1xf32>
    %749 = arith.mulf %748, %747 : vector<2x1xf32>
    %750 = arith.addf %649, %749 : vector<2x1xf32>
    %cst_190 = arith.constant 0.00999999977 : f32
    %751 = vector.broadcast %cst_190 : f32 to vector<2x4xf32>
    %752 = arith.mulf %712, %751 : vector<2x4xf32>
    %753 = arith.addf %655, %752 : vector<2x4xf32>
    %754 = vector.extract_strided_slice %30 {offsets = [10, 0], sizes = [2, 4], strides = [1, 1]} : vector<16x4xf32> to vector<2x4xf32>
    %755 = arith.mulf %740, %754 : vector<2x4xf32>
    %756 = arith.addf %753, %755 : vector<2x4xf32>
    %cst_191 = arith.constant dense<0.000000e+00> : vector<2x4xf32>
    %757 = tpu.matmul %756, %21, %cst_191 {dimension_numbers = #tpu.dot_dimension_numbers<[1], [0], [0], [1], [0, 0, 1, 1], [], []>} : vector<2x4xf32>, vector<4x4xf32>, vector<2x4xf32> -> vector<2x4xf32>
    %758 = vector.broadcast %22 : vector<1x4xf32> to vector<2x4xf32>
    %759 = arith.addf %757, %758 : vector<2x4xf32>
    %760 = vector.extract_strided_slice %29 {offsets = [10, 0], sizes = [2, 4], strides = [1, 1]} : vector<16x4xf32> to vector<2x4xf32>
    %761 = arith.subf %760, %759 : vector<2x4xf32>
    %762 = arith.mulf %761, %761 : vector<2x4xf32>
    %cst_192 = arith.constant 0.000000e+00 : f32
    %763 = vector.broadcast %cst_192 : f32 to vector<2x4xf32>
    %764 = arith.subf %763, %762 : vector<2x4xf32>
    %cst_193 = arith.constant 2.000000e+02 : f32
    %765 = vector.broadcast %cst_193 : f32 to vector<2x4xf32>
    %766 = arith.mulf %764, %765 : vector<2x4xf32>
    %cst_194 = arith.constant -2.07679367 : f32
    %767 = vector.broadcast %cst_194 : f32 to vector<2x4xf32>
    %768 = arith.subf %766, %767 : vector<2x4xf32>
    %cst_195 = arith.constant dense<0.000000e+00> : vector<2xf32>
    %769 = vector.multi_reduction <add>, %768, %cst_195 [1] : vector<2x4xf32> to vector<2xf32>
    %770 = vector.shape_cast %769 : vector<2xf32> to vector<2x1xf32>
    %771 = arith.mulf %759, %759 : vector<2x4xf32>
    %cst_196 = arith.constant dense<0.000000e+00> : vector<2xf32>
    %772 = vector.multi_reduction <add>, %771, %cst_196 [1] : vector<2x4xf32> to vector<2xf32>
    %773 = vector.shape_cast %772 : vector<2xf32> to vector<2x1xf32>
    %774 = math.sqrt %773 : vector<2x1xf32>
    %775 = arith.addf %674, %770 : vector<2x1xf32>
    %776 = arith.addf %675, %774 : vector<2x1xf32>
    %cst_197 = arith.constant dense<0.000000e+00> : vector<2x16xf32>
    %777 = tpu.matmul %756, %12, %cst_197 {dimension_numbers = #tpu.dot_dimension_numbers<[1], [0], [0], [1], [0, 0, 1, 1], [], []>} : vector<2x4xf32>, vector<4x16xf32>, vector<2x16xf32> -> vector<2x16xf32>
    %778 = vector.extract_strided_slice %236 {offsets = [12, 0], sizes = [2, 16], strides = [1, 1]} : vector<16x16xf32> to vector<2x16xf32>
    %779 = arith.addf %777, %778 : vector<2x16xf32>
    %cst_198 = arith.constant 0.000000e+00 : f32
    %780 = vector.broadcast %cst_198 : f32 to vector<2x16xf32>
    %781 = arith.maximumf %779, %780 : vector<2x16xf32>
    %782 = vector.broadcast %cst_198 : f32 to vector<2x16xf32>
    %783 = arith.subf %779, %782 : vector<2x16xf32>
    %784 = arith.cmpf one, %783, %783 : vector<2x16xf32>
    %785 = vector.broadcast %cst_198 : f32 to vector<2x16xf32>
    %786 = arith.addf %779, %785 : vector<2x16xf32>
    %787 = math.absf %783 : vector<2x16xf32>
    %cst_199 = arith.constant 0.000000e+00 : f32
    %788 = vector.broadcast %cst_199 : f32 to vector<2x16xf32>
    %789 = arith.subf %788, %787 : vector<2x16xf32>
    %790 = math.exp %789 : vector<2x16xf32>
    %791 = math.log1p %790 : vector<2x16xf32>
    %792 = arith.addf %781, %791 : vector<2x16xf32>
    %793 = arith.select %784, %786, %792 : vector<2x16xi1>, vector<2x16xf32>
    %cst_200 = arith.constant dense<0.000000e+00> : vector<2x16xf32>
    %794 = tpu.matmul %793, %15, %cst_200 {dimension_numbers = #tpu.dot_dimension_numbers<[1], [0], [0], [1], [0, 0, 1, 1], [], []>} : vector<2x16xf32>, vector<16x16xf32>, vector<2x16xf32> -> vector<2x16xf32>
    %795 = vector.broadcast %16 : vector<1x16xf32> to vector<2x16xf32>
    %796 = arith.addf %794, %795 : vector<2x16xf32>
    %cst_201 = arith.constant 0.000000e+00 : f32
    %797 = vector.broadcast %cst_201 : f32 to vector<2x16xf32>
    %798 = arith.maximumf %796, %797 : vector<2x16xf32>
    %799 = vector.broadcast %cst_201 : f32 to vector<2x16xf32>
    %800 = arith.subf %796, %799 : vector<2x16xf32>
    %801 = arith.cmpf one, %800, %800 : vector<2x16xf32>
    %802 = vector.broadcast %cst_201 : f32 to vector<2x16xf32>
    %803 = arith.addf %796, %802 : vector<2x16xf32>
    %804 = math.absf %800 : vector<2x16xf32>
    %cst_202 = arith.constant 0.000000e+00 : f32
    %805 = vector.broadcast %cst_202 : f32 to vector<2x16xf32>
    %806 = arith.subf %805, %804 : vector<2x16xf32>
    %807 = math.exp %806 : vector<2x16xf32>
    %808 = math.log1p %807 : vector<2x16xf32>
    %809 = arith.addf %798, %808 : vector<2x16xf32>
    %810 = arith.select %801, %803, %809 : vector<2x16xi1>, vector<2x16xf32>
    %cst_203 = arith.constant dense<0.000000e+00> : vector<2x4xf32>
    %811 = tpu.matmul %810, %17, %cst_203 {dimension_numbers = #tpu.dot_dimension_numbers<[1], [0], [0], [1], [0, 0, 1, 1], [], []>} : vector<2x16xf32>, vector<16x4xf32>, vector<2x4xf32> -> vector<2x4xf32>
    %812 = vector.broadcast %18 : vector<1x4xf32> to vector<2x4xf32>
    %813 = arith.addf %811, %812 : vector<2x4xf32>
    %cst_204 = arith.constant dense<0.000000e+00> : vector<2x4xf32>
    %814 = tpu.matmul %756, %19, %cst_204 {dimension_numbers = #tpu.dot_dimension_numbers<[1], [0], [0], [1], [0, 0, 1, 1], [], []>} : vector<2x4xf32>, vector<4x4xf32>, vector<2x4xf32> -> vector<2x4xf32>
    %815 = vector.broadcast %20 : vector<1x4xf32> to vector<2x4xf32>
    %816 = arith.addf %814, %815 : vector<2x4xf32>
    %cst_205 = arith.constant dense<0.000000e+00> : vector<2x64xf32>
    %817 = tpu.matmul %756, %23, %cst_205 {dimension_numbers = #tpu.dot_dimension_numbers<[1], [0], [0], [1], [0, 0, 1, 1], [], []>} : vector<2x4xf32>, vector<4x64xf32>, vector<2x64xf32> -> vector<2x64xf32>
    %818 = vector.broadcast %24 : vector<1x64xf32> to vector<2x64xf32>
    %819 = arith.addf %817, %818 : vector<2x64xf32>
    %cst_206 = arith.constant 0.000000e+00 : f32
    %820 = vector.broadcast %cst_206 : f32 to vector<2x64xf32>
    %821 = arith.maximumf %819, %820 : vector<2x64xf32>
    %822 = vector.broadcast %cst_206 : f32 to vector<2x64xf32>
    %823 = arith.subf %819, %822 : vector<2x64xf32>
    %824 = arith.cmpf one, %823, %823 : vector<2x64xf32>
    %825 = vector.broadcast %cst_206 : f32 to vector<2x64xf32>
    %826 = arith.addf %819, %825 : vector<2x64xf32>
    %827 = math.absf %823 : vector<2x64xf32>
    %cst_207 = arith.constant 0.000000e+00 : f32
    %828 = vector.broadcast %cst_207 : f32 to vector<2x64xf32>
    %829 = arith.subf %828, %827 : vector<2x64xf32>
    %830 = math.exp %829 : vector<2x64xf32>
    %831 = math.log1p %830 : vector<2x64xf32>
    %832 = arith.addf %821, %831 : vector<2x64xf32>
    %833 = arith.select %824, %826, %832 : vector<2x64xi1>, vector<2x64xf32>
    %cst_208 = arith.constant dense<0.000000e+00> : vector<2x4xf32>
    %834 = tpu.matmul %833, %25, %cst_208 {dimension_numbers = #tpu.dot_dimension_numbers<[1], [0], [0], [1], [0, 0, 1, 1], [], []>} : vector<2x64xf32>, vector<64x4xf32>, vector<2x4xf32> -> vector<2x4xf32>
    %835 = vector.broadcast %26 : vector<1x4xf32> to vector<2x4xf32>
    %836 = arith.addf %834, %835 : vector<2x4xf32>
    %837 = arith.negf %836 : vector<2x4xf32>
    %838 = math.exp %837 : vector<2x4xf32>
    %cst_209 = arith.constant 1.000000e+00 : f32
    %839 = vector.broadcast %cst_209 : f32 to vector<2x4xf32>
    %840 = arith.addf %839, %838 : vector<2x4xf32>
    %841 = arith.divf %839, %840 : vector<2x4xf32>
    %842 = arith.subf %813, %816 : vector<2x4xf32>
    %cst_210 = arith.constant 1.000000e-07 : f32
    %843 = vector.broadcast %cst_210 : f32 to vector<2x4xf32>
    %844 = arith.maximumf %841, %843 : vector<2x4xf32>
    %845 = arith.divf %842, %844 : vector<2x4xf32>
    %846 = arith.mulf %845, %845 : vector<2x4xf32>
    %cst_211 = arith.constant dense<0.000000e+00> : vector<2xf32>
    %847 = vector.multi_reduction <add>, %846, %cst_211 [1] : vector<2x4xf32> to vector<2xf32>
    %848 = vector.shape_cast %847 : vector<2xf32> to vector<2x1xf32>
    %cst_212 = arith.constant 5.000000e-03 : f32
    %849 = vector.broadcast %cst_212 : f32 to vector<2x1xf32>
    %850 = arith.mulf %849, %848 : vector<2x1xf32>
    %851 = arith.addf %750, %850 : vector<2x1xf32>
    %cst_213 = arith.constant 0.00999999977 : f32
    %852 = vector.broadcast %cst_213 : f32 to vector<2x4xf32>
    %853 = arith.mulf %813, %852 : vector<2x4xf32>
    %854 = arith.addf %756, %853 : vector<2x4xf32>
    %855 = vector.extract_strided_slice %30 {offsets = [12, 0], sizes = [2, 4], strides = [1, 1]} : vector<16x4xf32> to vector<2x4xf32>
    %856 = arith.mulf %841, %855 : vector<2x4xf32>
    %857 = arith.addf %854, %856 : vector<2x4xf32>
    %cst_214 = arith.constant dense<0.000000e+00> : vector<2x4xf32>
    %858 = tpu.matmul %857, %21, %cst_214 {dimension_numbers = #tpu.dot_dimension_numbers<[1], [0], [0], [1], [0, 0, 1, 1], [], []>} : vector<2x4xf32>, vector<4x4xf32>, vector<2x4xf32> -> vector<2x4xf32>
    %859 = vector.broadcast %22 : vector<1x4xf32> to vector<2x4xf32>
    %860 = arith.addf %858, %859 : vector<2x4xf32>
    %861 = vector.extract_strided_slice %29 {offsets = [12, 0], sizes = [2, 4], strides = [1, 1]} : vector<16x4xf32> to vector<2x4xf32>
    %862 = arith.subf %861, %860 : vector<2x4xf32>
    %863 = arith.mulf %862, %862 : vector<2x4xf32>
    %cst_215 = arith.constant 0.000000e+00 : f32
    %864 = vector.broadcast %cst_215 : f32 to vector<2x4xf32>
    %865 = arith.subf %864, %863 : vector<2x4xf32>
    %cst_216 = arith.constant 2.000000e+02 : f32
    %866 = vector.broadcast %cst_216 : f32 to vector<2x4xf32>
    %867 = arith.mulf %865, %866 : vector<2x4xf32>
    %cst_217 = arith.constant -2.07679367 : f32
    %868 = vector.broadcast %cst_217 : f32 to vector<2x4xf32>
    %869 = arith.subf %867, %868 : vector<2x4xf32>
    %cst_218 = arith.constant dense<0.000000e+00> : vector<2xf32>
    %870 = vector.multi_reduction <add>, %869, %cst_218 [1] : vector<2x4xf32> to vector<2xf32>
    %871 = vector.shape_cast %870 : vector<2xf32> to vector<2x1xf32>
    %872 = arith.mulf %860, %860 : vector<2x4xf32>
    %cst_219 = arith.constant dense<0.000000e+00> : vector<2xf32>
    %873 = vector.multi_reduction <add>, %872, %cst_219 [1] : vector<2x4xf32> to vector<2xf32>
    %874 = vector.shape_cast %873 : vector<2xf32> to vector<2x1xf32>
    %875 = math.sqrt %874 : vector<2x1xf32>
    %876 = arith.addf %775, %871 : vector<2x1xf32>
    %877 = arith.addf %776, %875 : vector<2x1xf32>
    %cst_220 = arith.constant dense<0.000000e+00> : vector<2x16xf32>
    %878 = tpu.matmul %857, %12, %cst_220 {dimension_numbers = #tpu.dot_dimension_numbers<[1], [0], [0], [1], [0, 0, 1, 1], [], []>} : vector<2x4xf32>, vector<4x16xf32>, vector<2x16xf32> -> vector<2x16xf32>
    %879 = vector.extract_strided_slice %236 {offsets = [14, 0], sizes = [2, 16], strides = [1, 1]} : vector<16x16xf32> to vector<2x16xf32>
    %880 = arith.addf %878, %879 : vector<2x16xf32>
    %cst_221 = arith.constant 0.000000e+00 : f32
    %881 = vector.broadcast %cst_221 : f32 to vector<2x16xf32>
    %882 = arith.maximumf %880, %881 : vector<2x16xf32>
    %883 = vector.broadcast %cst_221 : f32 to vector<2x16xf32>
    %884 = arith.subf %880, %883 : vector<2x16xf32>
    %885 = arith.cmpf one, %884, %884 : vector<2x16xf32>
    %886 = vector.broadcast %cst_221 : f32 to vector<2x16xf32>
    %887 = arith.addf %880, %886 : vector<2x16xf32>
    %888 = math.absf %884 : vector<2x16xf32>
    %cst_222 = arith.constant 0.000000e+00 : f32
    %889 = vector.broadcast %cst_222 : f32 to vector<2x16xf32>
    %890 = arith.subf %889, %888 : vector<2x16xf32>
    %891 = math.exp %890 : vector<2x16xf32>
    %892 = math.log1p %891 : vector<2x16xf32>
    %893 = arith.addf %882, %892 : vector<2x16xf32>
    %894 = arith.select %885, %887, %893 : vector<2x16xi1>, vector<2x16xf32>
    %cst_223 = arith.constant dense<0.000000e+00> : vector<2x16xf32>
    %895 = tpu.matmul %894, %15, %cst_223 {dimension_numbers = #tpu.dot_dimension_numbers<[1], [0], [0], [1], [0, 0, 1, 1], [], []>} : vector<2x16xf32>, vector<16x16xf32>, vector<2x16xf32> -> vector<2x16xf32>
    %896 = vector.broadcast %16 : vector<1x16xf32> to vector<2x16xf32>
    %897 = arith.addf %895, %896 : vector<2x16xf32>
    %cst_224 = arith.constant 0.000000e+00 : f32
    %898 = vector.broadcast %cst_224 : f32 to vector<2x16xf32>
    %899 = arith.maximumf %897, %898 : vector<2x16xf32>
    %900 = vector.broadcast %cst_224 : f32 to vector<2x16xf32>
    %901 = arith.subf %897, %900 : vector<2x16xf32>
    %902 = arith.cmpf one, %901, %901 : vector<2x16xf32>
    %903 = vector.broadcast %cst_224 : f32 to vector<2x16xf32>
    %904 = arith.addf %897, %903 : vector<2x16xf32>
    %905 = math.absf %901 : vector<2x16xf32>
    %cst_225 = arith.constant 0.000000e+00 : f32
    %906 = vector.broadcast %cst_225 : f32 to vector<2x16xf32>
    %907 = arith.subf %906, %905 : vector<2x16xf32>
    %908 = math.exp %907 : vector<2x16xf32>
    %909 = math.log1p %908 : vector<2x16xf32>
    %910 = arith.addf %899, %909 : vector<2x16xf32>
    %911 = arith.select %902, %904, %910 : vector<2x16xi1>, vector<2x16xf32>
    %cst_226 = arith.constant dense<0.000000e+00> : vector<2x4xf32>
    %912 = tpu.matmul %911, %17, %cst_226 {dimension_numbers = #tpu.dot_dimension_numbers<[1], [0], [0], [1], [0, 0, 1, 1], [], []>} : vector<2x16xf32>, vector<16x4xf32>, vector<2x4xf32> -> vector<2x4xf32>
    %913 = vector.broadcast %18 : vector<1x4xf32> to vector<2x4xf32>
    %914 = arith.addf %912, %913 : vector<2x4xf32>
    %cst_227 = arith.constant dense<0.000000e+00> : vector<2x4xf32>
    %915 = tpu.matmul %857, %19, %cst_227 {dimension_numbers = #tpu.dot_dimension_numbers<[1], [0], [0], [1], [0, 0, 1, 1], [], []>} : vector<2x4xf32>, vector<4x4xf32>, vector<2x4xf32> -> vector<2x4xf32>
    %916 = vector.broadcast %20 : vector<1x4xf32> to vector<2x4xf32>
    %917 = arith.addf %915, %916 : vector<2x4xf32>
    %cst_228 = arith.constant dense<0.000000e+00> : vector<2x64xf32>
    %918 = tpu.matmul %857, %23, %cst_228 {dimension_numbers = #tpu.dot_dimension_numbers<[1], [0], [0], [1], [0, 0, 1, 1], [], []>} : vector<2x4xf32>, vector<4x64xf32>, vector<2x64xf32> -> vector<2x64xf32>
    %919 = vector.broadcast %24 : vector<1x64xf32> to vector<2x64xf32>
    %920 = arith.addf %918, %919 : vector<2x64xf32>
    %cst_229 = arith.constant 0.000000e+00 : f32
    %921 = vector.broadcast %cst_229 : f32 to vector<2x64xf32>
    %922 = arith.maximumf %920, %921 : vector<2x64xf32>
    %923 = vector.broadcast %cst_229 : f32 to vector<2x64xf32>
    %924 = arith.subf %920, %923 : vector<2x64xf32>
    %925 = arith.cmpf one, %924, %924 : vector<2x64xf32>
    %926 = vector.broadcast %cst_229 : f32 to vector<2x64xf32>
    %927 = arith.addf %920, %926 : vector<2x64xf32>
    %928 = math.absf %924 : vector<2x64xf32>
    %cst_230 = arith.constant 0.000000e+00 : f32
    %929 = vector.broadcast %cst_230 : f32 to vector<2x64xf32>
    %930 = arith.subf %929, %928 : vector<2x64xf32>
    %931 = math.exp %930 : vector<2x64xf32>
    %932 = math.log1p %931 : vector<2x64xf32>
    %933 = arith.addf %922, %932 : vector<2x64xf32>
    %934 = arith.select %925, %927, %933 : vector<2x64xi1>, vector<2x64xf32>
    %cst_231 = arith.constant dense<0.000000e+00> : vector<2x4xf32>
    %935 = tpu.matmul %934, %25, %cst_231 {dimension_numbers = #tpu.dot_dimension_numbers<[1], [0], [0], [1], [0, 0, 1, 1], [], []>} : vector<2x64xf32>, vector<64x4xf32>, vector<2x4xf32> -> vector<2x4xf32>
    %936 = vector.broadcast %26 : vector<1x4xf32> to vector<2x4xf32>
    %937 = arith.addf %935, %936 : vector<2x4xf32>
    %938 = arith.negf %937 : vector<2x4xf32>
    %939 = math.exp %938 : vector<2x4xf32>
    %cst_232 = arith.constant 1.000000e+00 : f32
    %940 = vector.broadcast %cst_232 : f32 to vector<2x4xf32>
    %941 = arith.addf %940, %939 : vector<2x4xf32>
    %942 = arith.divf %940, %941 : vector<2x4xf32>
    %943 = arith.subf %914, %917 : vector<2x4xf32>
    %cst_233 = arith.constant 1.000000e-07 : f32
    %944 = vector.broadcast %cst_233 : f32 to vector<2x4xf32>
    %945 = arith.maximumf %942, %944 : vector<2x4xf32>
    %946 = arith.divf %943, %945 : vector<2x4xf32>
    %947 = arith.mulf %946, %946 : vector<2x4xf32>
    %cst_234 = arith.constant dense<0.000000e+00> : vector<2xf32>
    %948 = vector.multi_reduction <add>, %947, %cst_234 [1] : vector<2x4xf32> to vector<2xf32>
    %949 = vector.shape_cast %948 : vector<2xf32> to vector<2x1xf32>
    %cst_235 = arith.constant 5.000000e-03 : f32
    %950 = vector.broadcast %cst_235 : f32 to vector<2x1xf32>
    %951 = arith.mulf %950, %949 : vector<2x1xf32>
    %952 = arith.addf %851, %951 : vector<2x1xf32>
    %cst_236 = arith.constant 0.00999999977 : f32
    %953 = vector.broadcast %cst_236 : f32 to vector<2x4xf32>
    %954 = arith.mulf %914, %953 : vector<2x4xf32>
    %955 = arith.addf %857, %954 : vector<2x4xf32>
    %956 = vector.extract_strided_slice %30 {offsets = [14, 0], sizes = [2, 4], strides = [1, 1]} : vector<16x4xf32> to vector<2x4xf32>
    %957 = arith.mulf %942, %956 : vector<2x4xf32>
    %958 = arith.addf %955, %957 : vector<2x4xf32>
    %cst_237 = arith.constant dense<0.000000e+00> : vector<2x4xf32>
    %959 = tpu.matmul %958, %21, %cst_237 {dimension_numbers = #tpu.dot_dimension_numbers<[1], [0], [0], [1], [0, 0, 1, 1], [], []>} : vector<2x4xf32>, vector<4x4xf32>, vector<2x4xf32> -> vector<2x4xf32>
    %960 = vector.broadcast %22 : vector<1x4xf32> to vector<2x4xf32>
    %961 = arith.addf %959, %960 : vector<2x4xf32>
    %962 = vector.extract_strided_slice %29 {offsets = [14, 0], sizes = [2, 4], strides = [1, 1]} : vector<16x4xf32> to vector<2x4xf32>
    %963 = arith.subf %962, %961 : vector<2x4xf32>
    %964 = arith.mulf %963, %963 : vector<2x4xf32>
    %cst_238 = arith.constant 0.000000e+00 : f32
    %965 = vector.broadcast %cst_238 : f32 to vector<2x4xf32>
    %966 = arith.subf %965, %964 : vector<2x4xf32>
    %cst_239 = arith.constant 2.000000e+02 : f32
    %967 = vector.broadcast %cst_239 : f32 to vector<2x4xf32>
    %968 = arith.mulf %966, %967 : vector<2x4xf32>
    %cst_240 = arith.constant -2.07679367 : f32
    %969 = vector.broadcast %cst_240 : f32 to vector<2x4xf32>
    %970 = arith.subf %968, %969 : vector<2x4xf32>
    %cst_241 = arith.constant dense<0.000000e+00> : vector<2xf32>
    %971 = vector.multi_reduction <add>, %970, %cst_241 [1] : vector<2x4xf32> to vector<2xf32>
    %972 = vector.shape_cast %971 : vector<2xf32> to vector<2x1xf32>
    %973 = arith.mulf %961, %961 : vector<2x4xf32>
    %cst_242 = arith.constant dense<0.000000e+00> : vector<2xf32>
    %974 = vector.multi_reduction <add>, %973, %cst_242 [1] : vector<2x4xf32> to vector<2xf32>
    %975 = vector.shape_cast %974 : vector<2xf32> to vector<2x1xf32>
    %976 = math.sqrt %975 : vector<2x1xf32>
    %977 = arith.addf %876, %972 : vector<2x1xf32>
    %978 = arith.addf %877, %976 : vector<2x1xf32>
    %979 = vector.broadcast %28 : vector<1x4xf32> to vector<2x4xf32>
    %980 = arith.subf %979, %242 : vector<2x4xf32>
    %cst_243 = arith.constant 2.000000e+00 : f32
    %981 = vector.broadcast %cst_243 : f32 to vector<2x4xf32>
    %982 = arith.mulf %981, %242 : vector<2x4xf32>
    %983 = math.exp %982 : vector<2x4xf32>
    %984 = vector.broadcast %27 : vector<1x4xf32> to vector<2x4xf32>
    %985 = arith.subf %241, %984 : vector<2x4xf32>
    %986 = arith.mulf %985, %985 : vector<2x4xf32>
    %987 = arith.addf %983, %986 : vector<2x4xf32>
    %cst_244 = arith.constant 2.000000e+00 : f32
    %988 = vector.broadcast %cst_244 : f32 to vector<1x4xf32>
    %989 = arith.mulf %988, %28 : vector<1x4xf32>
    %990 = math.exp %989 : vector<1x4xf32>
    %cst_245 = arith.constant 2.000000e+00 : f32
    %991 = vector.broadcast %cst_245 : f32 to vector<1x4xf32>
    %992 = arith.mulf %991, %990 : vector<1x4xf32>
    %993 = vector.broadcast %992 : vector<1x4xf32> to vector<2x4xf32>
    %994 = arith.divf %987, %993 : vector<2x4xf32>
    %995 = arith.addf %980, %994 : vector<2x4xf32>
    %cst_246 = arith.constant 5.000000e-01 : f32
    %996 = vector.broadcast %cst_246 : f32 to vector<2x4xf32>
    %997 = arith.subf %995, %996 : vector<2x4xf32>
    %cst_247 = arith.constant dense<0.000000e+00> : vector<2xf32>
    %998 = vector.multi_reduction <add>, %997, %cst_247 [1] : vector<2x4xf32> to vector<2xf32>
    %999 = vector.shape_cast %998 : vector<2xf32> to vector<2x1xf32>
    %cst_248 = arith.constant dense<0.000000e+00> : vector<1xf32>
    %1000 = vector.multi_reduction <add>, %977, %cst_248 [0] : vector<2x1xf32> to vector<1xf32>
    %1001 = vector.shape_cast %1000 : vector<1xf32> to vector<1x1xf32>
    %cst_249 = arith.constant 5.000000e-01 : f32
    %1002 = vector.broadcast %cst_249 : f32 to vector<1x1xf32>
    %1003 = arith.mulf %1001, %1002 : vector<1x1xf32>
    %cst_250 = arith.constant 3.500000e+01 : f32
    %1004 = vector.broadcast %cst_250 : f32 to vector<2x1xf32>
    %1005 = arith.mulf %1004, %952 : vector<2x1xf32>
    %1006 = arith.addf %999, %1005 : vector<2x1xf32>
    %cst_251 = arith.constant dense<0.000000e+00> : vector<1xf32>
    %1007 = vector.multi_reduction <add>, %1006, %cst_251 [0] : vector<2x1xf32> to vector<1xf32>
    %1008 = vector.shape_cast %1007 : vector<1xf32> to vector<1x1xf32>
    %cst_252 = arith.constant 5.000000e-01 : f32
    %1009 = vector.broadcast %cst_252 : f32 to vector<1x1xf32>
    %1010 = arith.mulf %1008, %1009 : vector<1x1xf32>
    %cst_253 = arith.constant dense<0.000000e+00> : vector<1xf32>
    %1011 = vector.multi_reduction <add>, %978, %cst_253 [0] : vector<2x1xf32> to vector<1xf32>
    %1012 = vector.shape_cast %1011 : vector<1xf32> to vector<1x1xf32>
    %cst_254 = arith.constant 5.000000e-01 : f32
    %1013 = vector.broadcast %cst_254 : f32 to vector<1x1xf32>
    %1014 = arith.mulf %1012, %1013 : vector<1x1xf32>
    %1015 = tpu.iota {dimensions = array<i32: 1>} : vector<1x128xi32>
    %c0_i32 = arith.constant 0 : i32
    %1016 = vector.broadcast %c0_i32 : i32 to vector<1x128xi32>
    %1017 = arith.cmpi eq, %1015, %1016 : vector<1x128xi32>
    %c1_i32 = arith.constant 1 : i32
    %1018 = vector.broadcast %c1_i32 : i32 to vector<1x128xi32>
    %1019 = arith.cmpi eq, %1015, %1018 : vector<1x128xi32>
    %c2_i32 = arith.constant 2 : i32
    %1020 = vector.broadcast %c2_i32 : i32 to vector<1x128xi32>
    %1021 = arith.cmpi eq, %1015, %1020 : vector<1x128xi32>
    %cst_255 = arith.constant 0.000000e+00 : f32
    %1022 = vector.shape_cast %1014 : vector<1x1xf32> to vector<1x1xf32>
    %1023 = vector.broadcast %1022 : vector<1x1xf32> to vector<1x128xf32>
    %1024 = vector.broadcast %cst_255 : f32 to vector<1x128xf32>
    %1025 = arith.select %1021, %1023, %1024 : vector<1x128xi1>, vector<1x128xf32>
    %1026 = vector.shape_cast %1010 : vector<1x1xf32> to vector<1x1xf32>
    %1027 = vector.broadcast %1026 : vector<1x1xf32> to vector<1x128xf32>
    %1028 = arith.select %1019, %1027, %1025 : vector<1x128xi1>, vector<1x128xf32>
    %1029 = vector.shape_cast %1003 : vector<1x1xf32> to vector<1x1xf32>
    %1030 = vector.broadcast %1029 : vector<1x1xf32> to vector<1x128xf32>
    %1031 = arith.select %1017, %1030, %1028 : vector<1x128xi1>, vector<1x128xf32>
    %c0_256 = arith.constant 0 : index
    %c0_257 = arith.constant 0 : index
    %1032 = vector.load %arg5[%c0_256, %c0_257] : memref<1x128xf32, #tpu.memory_space<vmem>>, vector<1x128xf32>
    tpu.vector_store %arg5[%c0_256, %c0_257], %1031 {strides = array<i32>} : memref<1x128xf32, #tpu.memory_space<vmem>>, vector<1x128xf32>,
    return
  }
  func.func @transform_0(%arg0: i32) -> (i32, i32) {
    %c0_i32 = arith.constant 0 : i32
    %c0_i32_0 = arith.constant 0 : i32
    %c0_i32_1 = arith.constant 0 : i32
    return %c0_i32, %c0_i32_0 : i32, i32
  }
  func.func @transform_1(%arg0: i32) -> (i32, i32) {
    %c0_i32 = arith.constant 0 : i32
    %c0_i32_0 = arith.constant 0 : i32
    %c0_i32_1 = arith.constant 0 : i32
    return %c0_i32, %c0_i32_0 : i32, i32
  }
  func.func @transform_2(%arg0: i32) -> (i32, i32) {
    %c0_i32 = arith.constant 0 : i32
    %c0_i32_0 = arith.constant 0 : i32
    %c0_i32_1 = arith.constant 0 : i32
    return %c0_i32, %c0_i32_0 : i32, i32
  }
  func.func @transform_3(%arg0: i32) -> (i32, i32) {
    %c0_i32 = arith.constant 0 : i32
    %c0_i32_0 = arith.constant 0 : i32
    %c0_i32_1 = arith.constant 0 : i32
    return %c0_i32, %c0_i32_0 : i32, i32
  }
  func.func @transform_4(%arg0: i32) -> (i32, i32) {
    %c0_i32 = arith.constant 0 : i32
    %c0_i32_0 = arith.constant 0 : i32
    %c0_i32_1 = arith.constant 0 : i32
    return %c0_i32, %c0_i32_0 : i32, i32
  }
}

</mosaic_0001>

<llo_original>
// kernel: latent_sde_forward.3
$region0: #{latent_sde_forward.3}
  #allocation0 [shape = 'u32[]', space=smem, size = 0x4, offset = 0x4, fixed_abs, tag = 'smem constant byte address 0x4 - core index']
  #allocation1 [shape = 'u32[144,128]{1,0:T(1,128)}', space=vmem, size = 0x12000, scoped, tag = 'internal scratch']
  %s0 = inlined_call_operand.vmem [shape: f32[16,4], index: 0, kind: input, shape index: {}]
  %s1 = inlined_call_operand.vmem [shape: f32[16,4], index: 1, kind: input, shape index: {}]
  %s2 = inlined_call_operand.vmem [shape: f32[208,128], index: 2, kind: input, shape index: {}]
  %s3 = inlined_call_operand.vmem [shape: f32[16,128], index: 3, kind: input, shape index: {}]
  %s4 = inlined_call_operand.vmem [shape: f32[1,128], index: 4, kind: output, shape index: {}]
  %s5 = sld [smem:[#allocation0]]
  $region26: #{latent_sde_forward.3} parent=0
    _
  %s7 = ssub.s32 1, %s5
  %s8 = scalar_select 0, %s7, %s5
  // Predicated region
  $region2: #{latent_sde_forward.3} parent=0 // pred_check
    _
  $region3: #{latent_sde_forward.3} parent=0 // pred_check_branch
    %10 = sbr.rel (0) target = $region5
  $region4: #{latent_sde_forward.3} parent=0 // pred_region
    _
  $region5: #{latent_sde_forward.3} parent=0 // pred_fallthru
    _
  // Predicated region
  $region6: #{latent_sde_forward.3} parent=0 // pred_check
    _
  $region7: #{latent_sde_forward.3} parent=0 // pred_check_branch
    %12 = sbr.rel (0) target = $region9
  $region8: #{latent_sde_forward.3} parent=0 // pred_region
    _
  $region9: #{latent_sde_forward.3} parent=0 // pred_fallthru
    _
  // Predicated region
  $region10: #{latent_sde_forward.3} parent=0 // pred_check
    _
  $region11: #{latent_sde_forward.3} parent=0 // pred_check_branch
    %14 = sbr.rel (0) target = $region13
  $region12: #{latent_sde_forward.3} parent=0 // pred_region
    _
  $region13: #{latent_sde_forward.3} parent=0 // pred_fallthru
    _
  // Predicated region
  $region14: #{latent_sde_forward.3} parent=0 // pred_check
    _
  $region15: #{latent_sde_forward.3} parent=0 // pred_check_branch
    %16 = sbr.rel (0) target = $region17
  $region16: #{latent_sde_forward.3} parent=0 // pred_region
    _
  $region17: #{latent_sde_forward.3} parent=0 // pred_fallthru
    _
  %v17 = vld [vmem:[%s2] sm:$0xf]
  %v18 = vld [vmem:[%s2 + $0x8] sm:$0xf]
  %v19 = vld [vmem:[%s2 + $0x10] sm:$0xff]
  %v20 = vld [vmem:[%s2 + $0x18] sm:$0xff]
  %v21 = vld [vmem:[%s2 + $0x20] sm:$0xff]
  %v22 = vld [vmem:[%s2 + $0x28] sm:$0xff]
  %v23 = vld [vmem:[%s3] sm:$0x1]
  %v24 = vld [vmem:[%s3 + $0x1] sm:$0x1]
  %v25 = vld [vmem:[%s3 + $0x2] sm:$0x1]
  %v26 = vld [vmem:[%s3 + $0x3] sm:$0x1]
  %v27 = vld [vmem:[%s2 + $0x30] sm:$0xff]
  %v28 = vld [vmem:[%s2 + $0x38] sm:$0xff]
  %v29 = vld [vmem:[%s3 + $0x4] sm:$0x1]
  %v30 = vld [vmem:[%s2 + $0x40] sm:$0xff]
  %v31 = vld [vmem:[%s3 + $0x5] sm:$0x1]
  %v32 = vld [vmem:[%s2 + $0x48] sm:$0xf]
  %v33 = vld [vmem:[%s2 + $0x50] sm:$0xff]
  %v34 = vld [vmem:[%s3 + $0x6] sm:$0x1]
  %v35 = vld [vmem:[%s2 + $0x58] sm:$0xff]
  %v36 = vld [vmem:[%s2 + $0x60] sm:$0xff]
  %v37 = vld [vmem:[%s3 + $0x7] sm:$0x1]
  %v38 = vld [vmem:[%s2 + $0x68] sm:$0xff]
  %v39 = vld [vmem:[%s2 + $0x70] sm:$0xff]
  %v40 = vld [vmem:[%s3 + $0x8] sm:$0x1]
  %v41 = vld [vmem:[%s2 + $0x78] sm:$0xf]
  %v42 = vld [vmem:[%s3 + $0x9] sm:$0x1]
  %v43 = vld [vmem:[%s2 + $0x80] sm:$0xf]
  %v44 = vld [vmem:[%s3 + $0xa] sm:$0x1]
  %v45 = vld [vmem:[%s2 + $0x88] sm:$0xf]
  %v46 = vld [vmem:[%s3 + $0xb] sm:$0x1]
  %v47 = vld [vmem:[%s2 + $0x90] sm:$0xff]
  %v48 = vld [vmem:[%s2 + $0x98] sm:$0xff]
  %v49 = vld [vmem:[%s2 + $0xa0] sm:$0xff]
  %v50 = vld [vmem:[%s2 + $0xa8] sm:$0xff]
  %v51 = vld [vmem:[%s2 + $0xb0] sm:$0xff]
  %v52 = vld [vmem:[%s2 + $0xb8] sm:$0xff]
  %v53 = vld [vmem:[%s2 + $0xc0] sm:$0xff]
  %v54 = vld [vmem:[%s2 + $0xc8] sm:$0xff]
  %v55 = vld [vmem:[%s3 + $0xc] sm:$0x1]
  %v56 = vld [vmem:[%s3 + $0xd] sm:$0x1]
  %v57 = vld [vmem:[%s3 + $0xe] sm:$0x1]
  %v58 = vld [vmem:[%s0] sm:$0xff]
  %v59 = vld [vmem:[%s0 + $0x8] sm:$0xff]
  %v60 = vld [vmem:[%s1] sm:$0xff]
  %v61 = vld [vmem:[%s1 + $0x8] sm:$0xff]
  %v62 = vlaneseq
  %v63 = vshrl.u32 %v62, 7
  %v64 = vsub.s32 0, %v63
  %v65 = vrot.slane %v23, %v64
  %vm66 = vcmask 31744
  %v68 = vsel %vm66, %v58, 0
  %v71 = vsel %vm66, %v59, 0
  %vm73 = vcmask 1043456
  %v75 = vsel %vm73, %v17, 0
  %77 = vmatprep.subr.mxu0 0.0
  %78 = vmatpush1.msra.mxu0 %v75
  %79 = vmatprep.subr.mxu0 0.0
  %80 = vmatpush1.msra.mxu0 0.0
  %81 = vmatprep.subr.mxu0 0.0
  %82 = vmatpush1.msra.mxu0 0.0
  %83 = vmatprep.subr.mxu0 0.0
  %84 = vmatpush1.msra.mxu0 0.0
  %85 = vmatprep.subr.mxu0 0.0
  %86 = vmatpush1.msra.mxu0 0.0
  %87 = vmatprep.subr.mxu0 0.0
  %88 = vmatpush1.msra.mxu0 0.0
  %89 = vmatprep.subr.mxu0 0.0
  %90 = vmatpush1.msra.mxu0 0.0
  %91 = vmatprep.subr.mxu0 0.0
  %92 = vmatpush1.msra.mxu0 0.0
  %93 = vmatprep.subr.mxu0 0.0
  %94 = vmatpush1.msra.mxu0 0.0
  %95 = vmatprep.subr.mxu0 0.0
  %96 = vmatpush1.msra.mxu0 0.0
  %97 = vmatprep.subr.mxu0 0.0
  %98 = vmatpush1.msra.mxu0 0.0
  %99 = vmatprep.subr.mxu0 0.0
  %100 = vmatpush1.msra.mxu0 0.0
  %101 = vmatprep.subr.mxu0 0.0
  %102 = vmatpush1.msra.mxu0 0.0
  %103 = vmatprep.subr.mxu0 0.0
  %104 = vmatpush1.msra.mxu0 0.0
  %105 = vmatprep.subr.mxu0 0.0
  %106 = vmatpush1.msra.mxu0 0.0
  %107 = vmatprep.subr.mxu0 0.0
  %108 = vmatpush1.msra.mxu0 0.0
  %109 = vmatprep.subr.mxu0 0.0
  %110 = vmatpush1.msra.mxu0 0.0
  %111 = vmatprep.subr.mxu0 0.0
  %112 = vmatpush1.msra.mxu0 0.0
  %113 = vmatprep.subr.mxu0 0.0
  %114 = vmatpush1.msra.mxu0 0.0
  %115 = vmatprep.subr.mxu0 0.0
  %116 = vmatpush1.msra.mxu0 0.0
  %117 = vmatprep.subr.mxu0 0.0
  %118 = vmatpush1.msra.mxu0 0.0
  %119 = vmatprep.subr.mxu0 0.0
  %120 = vmatpush1.msra.mxu0 0.0
  %121 = vmatprep.subr.mxu0 0.0
  %122 = vmatpush1.msra.mxu0 0.0
  %123 = vmatprep.subr.mxu0 0.0
  %124 = vmatpush1.msra.mxu0 0.0
  %125 = vmatprep.subr.mxu0 0.0
  %126 = vmatpush1.msra.mxu0 0.0
  %127 = vmatprep.subr.mxu0 0.0
  %128 = vmatpush1.msra.mxu0 0.0
  %129 = vmatprep.subr.mxu0 0.0
  %130 = vmatpush1.msra.mxu0 0.0
  %131 = vmatprep.subr.mxu0 0.0
  %132 = vmatpush1.msra.mxu0 0.0
  %133 = vmatprep.subr.mxu0 0.0
  %134 = vmatpush1.msra.mxu0 0.0
  %135 = vmatprep.subr.mxu0 0.0
  %136 = vmatpush1.msra.mxu0 0.0
  %137 = vmatprep.subr.mxu0 0.0
  %138 = vmatpush1.msra.mxu0 0.0
  %139 = vmatprep.subr.mxu0 0.0
  %140 = vmatpush1.msra.mxu0 0.0
  %141 = vmatprep.mubr.f32.mxu0 0.0
  %142 = vmatmul.mubr.f32.gmra.mrb[0].mxu0 %v68
  %v143 = vpop.f32.mrb[0].mxu0
  %v144 = vadd.f32 %v65, %v143
  %v145 = vpop.f32.mrb[0].mxu0
  %146 = vmatprep.mubr.f32.mxu0 0.0
  %147 = vmatmul.mubr.f32.gmra.mrb[0].mxu0 %v71
  %v148 = vpop.f32.mrb[0].mxu0
  %v149 = vadd.f32 %v65, %v148
  %v150 = vpop.f32.mrb[0].mxu0
  %151 = vdwg.mxu0
  %v152 = vlaneseq
  %v153 = vshrl.u32 %v152, 7
  %v154 = vsub.s32 0, %v153
  %v155 = vrot.slane %v24, %v154
  %v157 = vsel %vm73, %v18, 0
  %159 = vmatprep.subr.mxu0 0.0
  %160 = vmatpush1.msra.mxu0 %v157
  %161 = vmatprep.subr.mxu0 0.0
  %162 = vmatpush1.msra.mxu0 0.0
  %163 = vmatprep.subr.mxu0 0.0
  %164 = vmatpush1.msra.mxu0 0.0
  %165 = vmatprep.subr.mxu0 0.0
  %166 = vmatpush1.msra.mxu0 0.0
  %167 = vmatprep.subr.mxu0 0.0
  %168 = vmatpush1.msra.mxu0 0.0
  %169 = vmatprep.subr.mxu0 0.0
  %170 = vmatpush1.msra.mxu0 0.0
  %171 = vmatprep.subr.mxu0 0.0
  %172 = vmatpush1.msra.mxu0 0.0
  %173 = vmatprep.subr.mxu0 0.0
  %174 = vmatpush1.msra.mxu0 0.0
  %175 = vmatprep.subr.mxu0 0.0
  %176 = vmatpush1.msra.mxu0 0.0
  %177 = vmatprep.subr.mxu0 0.0
  %178 = vmatpush1.msra.mxu0 0.0
  %179 = vmatprep.subr.mxu0 0.0
  %180 = vmatpush1.msra.mxu0 0.0
  %181 = vmatprep.subr.mxu0 0.0
  %182 = vmatpush1.msra.mxu0 0.0
  %183 = vmatprep.subr.mxu0 0.0
  %184 = vmatpush1.msra.mxu0 0.0
  %185 = vmatprep.subr.mxu0 0.0
  %186 = vmatpush1.msra.mxu0 0.0
  %187 = vmatprep.subr.mxu0 0.0
  %188 = vmatpush1.msra.mxu0 0.0
  %189 = vmatprep.subr.mxu0 0.0
  %190 = vmatpush1.msra.mxu0 0.0
  %191 = vmatprep.subr.mxu0 0.0
  %192 = vmatpush1.msra.mxu0 0.0
  %193 = vmatprep.subr.mxu0 0.0
  %194 = vmatpush1.msra.mxu0 0.0
  %195 = vmatprep.subr.mxu0 0.0
  %196 = vmatpush1.msra.mxu0 0.0
  %197 = vmatprep.subr.mxu0 0.0
  %198 = vmatpush1.msra.mxu0 0.0
  %199 = vmatprep.subr.mxu0 0.0
  %200 = vmatpush1.msra.mxu0 0.0
  %201 = vmatprep.subr.mxu0 0.0
  %202 = vmatpush1.msra.mxu0 0.0
  %203 = vmatprep.subr.mxu0 0.0
  %204 = vmatpush1.msra.mxu0 0.0
  %205 = vmatprep.subr.mxu0 0.0
  %206 = vmatpush1.msra.mxu0 0.0
  %207 = vmatprep.subr.mxu0 0.0
  %208 = vmatpush1.msra.mxu0 0.0
  %209 = vmatprep.subr.mxu0 0.0
  %210 = vmatpush1.msra.mxu0 0.0
  %211 = vmatprep.subr.mxu0 0.0
  %212 = vmatpush1.msra.mxu0 0.0
  %213 = vmatprep.subr.mxu0 0.0
  %214 = vmatpush1.msra.mxu0 0.0
  %215 = vmatprep.subr.mxu0 0.0
  %216 = vmatpush1.msra.mxu0 0.0
  %217 = vmatprep.subr.mxu0 0.0
  %218 = vmatpush1.msra.mxu0 0.0
  %219 = vmatprep.subr.mxu0 0.0
  %220 = vmatpush1.msra.mxu0 0.0
  %221 = vmatprep.subr.mxu0 0.0
  %222 = vmatpush1.msra.mxu0 0.0
  %223 = vmatprep.mubr.f32.mxu0 0.0
  %224 = vmatmul.mubr.f32.gmra.mrb[0].mxu0 %v68
  %v225 = vpop.f32.mrb[0].mxu0
  %v226 = vadd.f32 %v155, %v225
  %v227 = vpop.f32.mrb[0].mxu0
  %228 = vmatprep.mubr.f32.mxu0 0.0
  %229 = vmatmul.mubr.f32.gmra.mrb[0].mxu0 %v71
  %v230 = vpop.f32.mrb[0].mxu0
  %v231 = vadd.f32 %v155, %v230
  %v232 = vpop.f32.mrb[0].mxu0
  %233 = vdwg.mxu0
  %vm234 = vcmask 130048
  %v236 = vsel %vm234, 0.0, 0
  %238 = vmatprep.subr.mxu0 0.0
  %239 = vmatpush1.msra.mxu0 %v19
  %240 = vmatprep.subr.mxu0 0.0
  %241 = vmatpush1.msra.mxu0 %v20
  %242 = vmatprep.subr.mxu0 0.0
  %243 = vmatpush1.msra.mxu0 0.0
  %244 = vmatprep.subr.mxu0 0.0
  %245 = vmatpush1.msra.mxu0 0.0
  %246 = vmatprep.subr.mxu0 0.0
  %247 = vmatpush1.msra.mxu0 0.0
  %248 = vmatprep.subr.mxu0 0.0
  %249 = vmatpush1.msra.mxu0 0.0
  %250 = vmatprep.subr.mxu0 0.0
  %251 = vmatpush1.msra.mxu0 0.0
  %252 = vmatprep.subr.mxu0 0.0
  %253 = vmatpush1.msra.mxu0 0.0
  %254 = vmatprep.subr.mxu0 0.0
  %255 = vmatpush1.msra.mxu0 0.0
  %256 = vmatprep.subr.mxu0 0.0
  %257 = vmatpush1.msra.mxu0 0.0
  %258 = vmatprep.subr.mxu0 0.0
  %259 = vmatpush1.msra.mxu0 0.0
  %260 = vmatprep.subr.mxu0 0.0
  %261 = vmatpush1.msra.mxu0 0.0
  %262 = vmatprep.subr.mxu0 0.0
  %263 = vmatpush1.msra.mxu0 0.0
  %264 = vmatprep.subr.mxu0 0.0
  %265 = vmatpush1.msra.mxu0 0.0
  %266 = vmatprep.subr.mxu0 0.0
  %267 = vmatpush1.msra.mxu0 0.0
  %268 = vmatprep.subr.mxu0 0.0
  %269 = vmatpush1.msra.mxu0 0.0
  %270 = vmatprep.subr.mxu0 0.0
  %271 = vmatpush1.msra.mxu0 0.0
  %272 = vmatprep.subr.mxu0 0.0
  %273 = vmatpush1.msra.mxu0 0.0
  %274 = vmatprep.subr.mxu0 0.0
  %275 = vmatpush1.msra.mxu0 0.0
  %276 = vmatprep.subr.mxu0 0.0
  %277 = vmatpush1.msra.mxu0 0.0
  %278 = vmatprep.subr.mxu0 0.0
  %279 = vmatpush1.msra.mxu0 0.0
  %280 = vmatprep.subr.mxu0 0.0
  %281 = vmatpush1.msra.mxu0 0.0
  %282 = vmatprep.subr.mxu0 0.0
  %283 = vmatpush1.msra.mxu0 0.0
  %284 = vmatprep.subr.mxu0 0.0
  %285 = vmatpush1.msra.mxu0 0.0
  %286 = vmatprep.subr.mxu0 0.0
  %287 = vmatpush1.msra.mxu0 0.0
  %288 = vmatprep.subr.mxu0 0.0
  %289 = vmatpush1.msra.mxu0 0.0
  %290 = vmatprep.subr.mxu0 0.0
  %291 = vmatpush1.msra.mxu0 0.0
  %292 = vmatprep.subr.mxu0 0.0
  %293 = vmatpush1.msra.mxu0 0.0
  %294 = vmatprep.subr.mxu0 0.0
  %295 = vmatpush1.msra.mxu0 0.0
  %296 = vmatprep.subr.mxu0 0.0
  %297 = vmatpush1.msra.mxu0 0.0
  %298 = vmatprep.subr.mxu0 0.0
  %299 = vmatpush1.msra.mxu0 0.0
  %300 = vmatprep.subr.mxu0 0.0
  %301 = vmatpush1.msra.mxu0 0.0
  %302 = vmatprep.mubr.f32.mxu0 0.0
  %303 = vmatmul.mubr.f32.gmra.mrb[0].mxu0 %v236
  %v304 = vpop.f32.mrb[0].mxu0
  %v305 = vadd.f32 0.0, %v304
  %v306 = vpop.f32.mrb[0].mxu0
  %307 = vdwg.mxu0
  %v309 = vrot.slane %v305, 2
  %v311 = vadd.f32 %v149, %v309
  %v312 = vlaneseq
  %v313 = vshrl.u32 %v312, 7
  %v314 = vsub.s32 0, %v313
  %v315 = vrot.slane %v25, %v314
  %v316 = vadd.f32 %v311, %v315
  %v317 = vxor.u32 %v316, 2147483648
  %v318 = vmul.f32 %v317, 1.442695
  %v319 = vpow.pop %v318
  %v320 = vadd.f32 %v319, 1.0
  %v321 = vrcp.pop %v320
  %v322 = vmul.f32 1.0, %v321
  %v323 = vlaneseq
  %v324 = vshrl.u32 %v323, 7
  %v325 = vsub.s32 0, %v324
  %v326 = vrot.slane %v26, %v325
  %327 = vmatprep.subr.mxu0 0.0
  %328 = vmatpush1.msra.mxu0 %v21
  %329 = vmatprep.subr.mxu0 0.0
  %330 = vmatpush1.msra.mxu0 %v22
  %331 = vmatprep.subr.mxu0 0.0
  %332 = vmatpush1.msra.mxu0 0.0
  %333 = vmatprep.subr.mxu0 0.0
  %334 = vmatpush1.msra.mxu0 0.0
  %335 = vmatprep.subr.mxu0 0.0
  %336 = vmatpush1.msra.mxu0 0.0
  %337 = vmatprep.subr.mxu0 0.0
  %338 = vmatpush1.msra.mxu0 0.0
  %339 = vmatprep.subr.mxu0 0.0
  %340 = vmatpush1.msra.mxu0 0.0
  %341 = vmatprep.subr.mxu0 0.0
  %342 = vmatpush1.msra.mxu0 0.0
  %343 = vmatprep.subr.mxu0 0.0
  %344 = vmatpush1.msra.mxu0 0.0
  %345 = vmatprep.subr.mxu0 0.0
  %346 = vmatpush1.msra.mxu0 0.0
  %347 = vmatprep.subr.mxu0 0.0
  %348 = vmatpush1.msra.mxu0 0.0
  %349 = vmatprep.subr.mxu0 0.0
  %350 = vmatpush1.msra.mxu0 0.0
  %351 = vmatprep.subr.mxu0 0.0
  %352 = vmatpush1.msra.mxu0 0.0
  %353 = vmatprep.subr.mxu0 0.0
  %354 = vmatpush1.msra.mxu0 0.0
  %355 = vmatprep.subr.mxu0 0.0
  %356 = vmatpush1.msra.mxu0 0.0
  %357 = vmatprep.subr.mxu0 0.0
  %358 = vmatpush1.msra.mxu0 0.0
  %359 = vmatprep.subr.mxu0 0.0
  %360 = vmatpush1.msra.mxu0 0.0
  %361 = vmatprep.subr.mxu0 0.0
  %362 = vmatpush1.msra.mxu0 0.0
  %363 = vmatprep.subr.mxu0 0.0
  %364 = vmatpush1.msra.mxu0 0.0
  %365 = vmatprep.subr.mxu0 0.0
  %366 = vmatpush1.msra.mxu0 0.0
  %367 = vmatprep.subr.mxu0 0.0
  %368 = vmatpush1.msra.mxu0 0.0
  %369 = vmatprep.subr.mxu0 0.0
  %370 = vmatpush1.msra.mxu0 0.0
  %371 = vmatprep.subr.mxu0 0.0
  %372 = vmatpush1.msra.mxu0 0.0
  %373 = vmatprep.subr.mxu0 0.0
  %374 = vmatpush1.msra.mxu0 0.0
  %375 = vmatprep.subr.mxu0 0.0
  %376 = vmatpush1.msra.mxu0 0.0
  %377 = vmatprep.subr.mxu0 0.0
  %378 = vmatpush1.msra.mxu0 0.0
  %379 = vmatprep.subr.mxu0 0.0
  %380 = vmatpush1.msra.mxu0 0.0
  %381 = vmatprep.subr.mxu0 0.0
  %382 = vmatpush1.msra.mxu0 0.0
  %383 = vmatprep.subr.mxu0 0.0
  %384 = vmatpush1.msra.mxu0 0.0
  %385 = vmatprep.subr.mxu0 0.0
  %386 = vmatpush1.msra.mxu0 0.0
  %387 = vmatprep.subr.mxu0 0.0
  %388 = vmatpush1.msra.mxu0 0.0
  %389 = vmatprep.subr.mxu0 0.0
  %390 = vmatpush1.msra.mxu0 0.0
  %391 = vmatprep.mubr.f32.mxu0 0.0
  %392 = vmatmul.mubr.f32.gmra.mrb[0].mxu0 %v236
  %v393 = vpop.f32.mrb[0].mxu0
  %v394 = vadd.f32 %v326, %v393
  %v395 = vpop.f32.mrb[0].mxu0
  %396 = vdwg.mxu0
  %v398 = vrot.slane %v394, 2
  %v400 = vmul.f32 %v322, %v398
  %v401 = vadd.f32 %v231, %v400
  %v402 = vtanh.pop %v401
  %v403 = vsub.f32 1.0, %v322
  %405 = vrot.lane.b32.xlu0 %v402, 16
  %v406 = vpop.permute.xlu0 %405
  %v408 = vmul.f32 %v403, %v406
  %v409 = vmul.f32 %v322, 0.0
  %v410 = vadd.f32 %v408, %v409
  %v412 = vrot.slane %v410, 6
  %413 = vrot.lane.b32.xlu0 %v412, 112
  %v414 = vpop.permute.xlu0 %413
  %v415 = vsel %vm234, %v414, 0
  %417 = vmatprep.subr.mxu0 0.0
  %418 = vmatpush1.msra.mxu0 %v19
  %419 = vmatprep.subr.mxu0 0.0
  %420 = vmatpush1.msra.mxu0 %v20
  %421 = vmatprep.subr.mxu0 0.0
  %422 = vmatpush1.msra.mxu0 0.0
  %423 = vmatprep.subr.mxu0 0.0
  %424 = vmatpush1.msra.mxu0 0.0
  %425 = vmatprep.subr.mxu0 0.0
  %426 = vmatpush1.msra.mxu0 0.0
  %427 = vmatprep.subr.mxu0 0.0
  %428 = vmatpush1.msra.mxu0 0.0
  %429 = vmatprep.subr.mxu0 0.0
  %430 = vmatpush1.msra.mxu0 0.0
  %431 = vmatprep.subr.mxu0 0.0
  %432 = vmatpush1.msra.mxu0 0.0
  %433 = vmatprep.subr.mxu0 0.0
  %434 = vmatpush1.msra.mxu0 0.0
  %435 = vmatprep.subr.mxu0 0.0
  %436 = vmatpush1.msra.mxu0 0.0
  %437 = vmatprep.subr.mxu0 0.0
  %438 = vmatpush1.msra.mxu0 0.0
  %439 = vmatprep.subr.mxu0 0.0
  %440 = vmatpush1.msra.mxu0 0.0
  %441 = vmatprep.subr.mxu0 0.0
  %442 = vmatpush1.msra.mxu0 0.0
  %443 = vmatprep.subr.mxu0 0.0
  %444 = vmatpush1.msra.mxu0 0.0
  %445 = vmatprep.subr.mxu0 0.0
  %446 = vmatpush1.msra.mxu0 0.0
  %447 = vmatprep.subr.mxu0 0.0
  %448 = vmatpush1.msra.mxu0 0.0
  %449 = vmatprep.subr.mxu0 0.0
  %450 = vmatpush1.msra.mxu0 0.0
  %451 = vmatprep.subr.mxu0 0.0
  %452 = vmatpush1.msra.mxu0 0.0
  %453 = vmatprep.subr.mxu0 0.0
  %454 = vmatpush1.msra.mxu0 0.0
  %455 = vmatprep.subr.mxu0 0.0
  %456 = vmatpush1.msra.mxu0 0.0
  %457 = vmatprep.subr.mxu0 0.0
  %458 = vmatpush1.msra.mxu0 0.0
  %459 = vmatprep.subr.mxu0 0.0
  %460 = vmatpush1.msra.mxu0 0.0
  %461 = vmatprep.subr.mxu0 0.0
  %462 = vmatpush1.msra.mxu0 0.0
  %463 = vmatprep.subr.mxu0 0.0
  %464 = vmatpush1.msra.mxu0 0.0
  %465 = vmatprep.subr.mxu0 0.0
  %466 = vmatpush1.msra.mxu0 0.0
  %467 = vmatprep.subr.mxu0 0.0
  %468 = vmatpush1.msra.mxu0 0.0
  %469 = vmatprep.subr.mxu0 0.0
  %470 = vmatpush1.msra.mxu0 0.0
  %471 = vmatprep.subr.mxu0 0.0
  %472 = vmatpush1.msra.mxu0 0.0
  %473 = vmatprep.subr.mxu0 0.0
  %474 = vmatpush1.msra.mxu0 0.0
  %475 = vmatprep.subr.mxu0 0.0
  %476 = vmatpush1.msra.mxu0 0.0
  %477 = vmatprep.subr.mxu0 0.0
  %478 = vmatpush1.msra.mxu0 0.0
  %479 = vmatprep.subr.mxu0 0.0
  %480 = vmatpush1.msra.mxu0 0.0
  %481 = vmatprep.mubr.f32.mxu0 0.0
  %482 = vmatmul.mubr.f32.gmra.mrb[0].mxu0 %v415
  %v483 = vpop.f32.mrb[0].mxu0
  %v484 = vadd.f32 0.0, %v483
  %v485 = vpop.f32.mrb[0].mxu0
  %486 = vdwg.mxu0
  %v488 = vrot.slane %v484, 4
  %v490 = vadd.f32 %v149, %v488
  %v491 = vadd.f32 %v490, %v315
  %v492 = vxor.u32 %v491, 2147483648
  %v493 = vmul.f32 %v492, 1.442695
  %v494 = vpow.pop %v493
  %v495 = vadd.f32 %v494, 1.0
  %v496 = vrcp.pop %v495
  %v497 = vmul.f32 1.0, %v496
  %498 = vmatprep.subr.mxu0 0.0
  %499 = vmatpush1.msra.mxu0 %v21
  %500 = vmatprep.subr.mxu0 0.0
  %501 = vmatpush1.msra.mxu0 %v22
  %502 = vmatprep.subr.mxu0 0.0
  %503 = vmatpush1.msra.mxu0 0.0
  %504 = vmatprep.subr.mxu0 0.0
  %505 = vmatpush1.msra.mxu0 0.0
  %506 = vmatprep.subr.mxu0 0.0
  %507 = vmatpush1.msra.mxu0 0.0
  %508 = vmatprep.subr.mxu0 0.0
  %509 = vmatpush1.msra.mxu0 0.0
  %510 = vmatprep.subr.mxu0 0.0
  %511 = vmatpush1.msra.mxu0 0.0
  %512 = vmatprep.subr.mxu0 0.0
  %513 = vmatpush1.msra.mxu0 0.0
  %514 = vmatprep.subr.mxu0 0.0
  %515 = vmatpush1.msra.mxu0 0.0
  %516 = vmatprep.subr.mxu0 0.0
  %517 = vmatpush1.msra.mxu0 0.0
  %518 = vmatprep.subr.mxu0 0.0
  %519 = vmatpush1.msra.mxu0 0.0
  %520 = vmatprep.subr.mxu0 0.0
  %521 = vmatpush1.msra.mxu0 0.0
  %522 = vmatprep.subr.mxu0 0.0
  %523 = vmatpush1.msra.mxu0 0.0
  %524 = vmatprep.subr.mxu0 0.0
  %525 = vmatpush1.msra.mxu0 0.0
  %526 = vmatprep.subr.mxu0 0.0
  %527 = vmatpush1.msra.mxu0 0.0
  %528 = vmatprep.subr.mxu0 0.0
  %529 = vmatpush1.msra.mxu0 0.0
  %530 = vmatprep.subr.mxu0 0.0
  %531 = vmatpush1.msra.mxu0 0.0
  %532 = vmatprep.subr.mxu0 0.0
  %533 = vmatpush1.msra.mxu0 0.0
  %534 = vmatprep.subr.mxu0 0.0
  %535 = vmatpush1.msra.mxu0 0.0
  %536 = vmatprep.subr.mxu0 0.0
  %537 = vmatpush1.msra.mxu0 0.0
  %538 = vmatprep.subr.mxu0 0.0
  %539 = vmatpush1.msra.mxu0 0.0
  %540 = vmatprep.subr.mxu0 0.0
  %541 = vmatpush1.msra.mxu0 0.0
  %542 = vmatprep.subr.mxu0 0.0
  %543 = vmatpush1.msra.mxu0 0.0
  %544 = vmatprep.subr.mxu0 0.0
  %545 = vmatpush1.msra.mxu0 0.0
  %546 = vmatprep.subr.mxu0 0.0
  %547 = vmatpush1.msra.mxu0 0.0
  %548 = vmatprep.subr.mxu0 0.0
  %549 = vmatpush1.msra.mxu0 0.0
  %550 = vmatprep.subr.mxu0 0.0
  %551 = vmatpush1.msra.mxu0 0.0
  %552 = vmatprep.subr.mxu0 0.0
  %553 = vmatpush1.msra.mxu0 0.0
  %554 = vmatprep.subr.mxu0 0.0
  %555 = vmatpush1.msra.mxu0 0.0
  %556 = vmatprep.subr.mxu0 0.0
  %557 = vmatpush1.msra.mxu0 0.0
  %558 = vmatprep.subr.mxu0 0.0
  %559 = vmatpush1.msra.mxu0 0.0
  %560 = vmatprep.subr.mxu0 0.0
  %561 = vmatpush1.msra.mxu0 0.0
  %562 = vmatprep.mubr.f32.mxu0 0.0
  %563 = vmatmul.mubr.f32.gmra.mrb[0].mxu0 %v415
  %v564 = vpop.f32.mrb[0].mxu0
  %v565 = vadd.f32 %v326, %v564
  %v566 = vpop.f32.mrb[0].mxu0
  %567 = vdwg.mxu0
  %v569 = vrot.slane %v565, 4
  %v571 = vmul.f32 %v497, %v569
  %v572 = vadd.f32 %v231, %v571
  %v573 = vtanh.pop %v572
  %v574 = vsub.f32 1.0, %v497
  %576 = vrot.lane.b32.xlu0 %v573, 16
  %v577 = vpop.permute.xlu0 %576
  %v579 = vmul.f32 %v574, %v577
  %v580 = vrot.slane %v410, 2
  %v582 = vmul.f32 %v497, %v580
  %v583 = vadd.f32 %v579, %v582
  %v585 = vrot.slane %v583, 4
  %586 = vrot.lane.b32.xlu0 %v585, 112
  %v587 = vpop.permute.xlu0 %586
  %v588 = vsel %vm234, %v587, 0
  %590 = vmatprep.subr.mxu0 0.0
  %591 = vmatpush1.msra.mxu0 %v19
  %592 = vmatprep.subr.mxu0 0.0
  %593 = vmatpush1.msra.mxu0 %v20
  %594 = vmatprep.subr.mxu0 0.0
  %595 = vmatpush1.msra.mxu0 0.0
  %596 = vmatprep.subr.mxu0 0.0
  %597 = vmatpush1.msra.mxu0 0.0
  %598 = vmatprep.subr.mxu0 0.0
  %599 = vmatpush1.msra.mxu0 0.0
  %600 = vmatprep.subr.mxu0 0.0
  %601 = vmatpush1.msra.mxu0 0.0
  %602 = vmatprep.subr.mxu0 0.0
  %603 = vmatpush1.msra.mxu0 0.0
  %604 = vmatprep.subr.mxu0 0.0
  %605 = vmatpush1.msra.mxu0 0.0
  %606 = vmatprep.subr.mxu0 0.0
  %607 = vmatpush1.msra.mxu0 0.0
  %608 = vmatprep.subr.mxu0 0.0
  %609 = vmatpush1.msra.mxu0 0.0
  %610 = vmatprep.subr.mxu0 0.0
  %611 = vmatpush1.msra.mxu0 0.0
  %612 = vmatprep.subr.mxu0 0.0
  %613 = vmatpush1.msra.mxu0 0.0
  %614 = vmatprep.subr.mxu0 0.0
  %615 = vmatpush1.msra.mxu0 0.0
  %616 = vmatprep.subr.mxu0 0.0
  %617 = vmatpush1.msra.mxu0 0.0
  %618 = vmatprep.subr.mxu0 0.0
  %619 = vmatpush1.msra.mxu0 0.0
  %620 = vmatprep.subr.mxu0 0.0
  %621 = vmatpush1.msra.mxu0 0.0
  %622 = vmatprep.subr.mxu0 0.0
  %623 = vmatpush1.msra.mxu0 0.0
  %624 = vmatprep.subr.mxu0 0.0
  %625 = vmatpush1.msra.mxu0 0.0
  %626 = vmatprep.subr.mxu0 0.0
  %627 = vmatpush1.msra.mxu0 0.0
  %628 = vmatprep.subr.mxu0 0.0
  %629 = vmatpush1.msra.mxu0 0.0
  %630 = vmatprep.subr.mxu0 0.0
  %631 = vmatpush1.msra.mxu0 0.0
  %632 = vmatprep.subr.mxu0 0.0
  %633 = vmatpush1.msra.mxu0 0.0
  %634 = vmatprep.subr.mxu0 0.0
  %635 = vmatpush1.msra.mxu0 0.0
  %636 = vmatprep.subr.mxu0 0.0
  %637 = vmatpush1.msra.mxu0 0.0
  %638 = vmatprep.subr.mxu0 0.0
  %639 = vmatpush1.msra.mxu0 0.0
  %640 = vmatprep.subr.mxu0 0.0
  %641 = vmatpush1.msra.mxu0 0.0
  %642 = vmatprep.subr.mxu0 0.0
  %643 = vmatpush1.msra.mxu0 0.0
  %644 = vmatprep.subr.mxu0 0.0
  %645 = vmatpush1.msra.mxu0 0.0
  %646 = vmatprep.subr.mxu0 0.0
  %647 = vmatpush1.msra.mxu0 0.0
  %648 = vmatprep.subr.mxu0 0.0
  %649 = vmatpush1.msra.mxu0 0.0
  %650 = vmatprep.subr.mxu0 0.0
  %651 = vmatpush1.msra.mxu0 0.0
  %652 = vmatprep.subr.mxu0 0.0
  %653 = vmatpush1.msra.mxu0 0.0
  %654 = vmatprep.mubr.f32.mxu0 0.0
  %655 = vmatmul.mubr.f32.gmra.mrb[0].mxu0 %v588
  %v656 = vpop.f32.mrb[0].mxu0
  %v657 = vadd.f32 0.0, %v656
  %v658 = vpop.f32.mrb[0].mxu0
  %659 = vdwg.mxu0
  %v661 = vrot.slane %v657, 6
  %v663 = vadd.f32 %v149, %v661
  %v664 = vadd.f32 %v663, %v315
  %v665 = vxor.u32 %v664, 2147483648
  %v666 = vmul.f32 %v665, 1.442695
  %v667 = vpow.pop %v666
  %v668 = vadd.f32 %v667, 1.0
  %v669 = vrcp.pop %v668
  %v670 = vmul.f32 1.0, %v669
  %671 = vmatprep.subr.mxu0 0.0
  %672 = vmatpush1.msra.mxu0 %v21
  %673 = vmatprep.subr.mxu0 0.0
  %674 = vmatpush1.msra.mxu0 %v22
  %675 = vmatprep.subr.mxu0 0.0
  %676 = vmatpush1.msra.mxu0 0.0
  %677 = vmatprep.subr.mxu0 0.0
  %678 = vmatpush1.msra.mxu0 0.0
  %679 = vmatprep.subr.mxu0 0.0
  %680 = vmatpush1.msra.mxu0 0.0
  %681 = vmatprep.subr.mxu0 0.0
  %682 = vmatpush1.msra.mxu0 0.0
  %683 = vmatprep.subr.mxu0 0.0
  %684 = vmatpush1.msra.mxu0 0.0
  %685 = vmatprep.subr.mxu0 0.0
  %686 = vmatpush1.msra.mxu0 0.0
  %687 = vmatprep.subr.mxu0 0.0
  %688 = vmatpush1.msra.mxu0 0.0
  %689 = vmatprep.subr.mxu0 0.0
  %690 = vmatpush1.msra.mxu0 0.0
  %691 = vmatprep.subr.mxu0 0.0
  %692 = vmatpush1.msra.mxu0 0.0
  %693 = vmatprep.subr.mxu0 0.0
  %694 = vmatpush1.msra.mxu0 0.0
  %695 = vmatprep.subr.mxu0 0.0
  %696 = vmatpush1.msra.mxu0 0.0
  %697 = vmatprep.subr.mxu0 0.0
  %698 = vmatpush1.msra.mxu0 0.0
  %699 = vmatprep.subr.mxu0 0.0
  %700 = vmatpush1.msra.mxu0 0.0
  %701 = vmatprep.subr.mxu0 0.0
  %702 = vmatpush1.msra.mxu0 0.0
  %703 = vmatprep.subr.mxu0 0.0
  %704 = vmatpush1.msra.mxu0 0.0
  %705 = vmatprep.subr.mxu0 0.0
  %706 = vmatpush1.msra.mxu0 0.0
  %707 = vmatprep.subr.mxu0 0.0
  %708 = vmatpush1.msra.mxu0 0.0
  %709 = vmatprep.subr.mxu0 0.0
  %710 = vmatpush1.msra.mxu0 0.0
  %711 = vmatprep.subr.mxu0 0.0
  %712 = vmatpush1.msra.mxu0 0.0
  %713 = vmatprep.subr.mxu0 0.0
  %714 = vmatpush1.msra.mxu0 0.0
  %715 = vmatprep.subr.mxu0 0.0
  %716 = vmatpush1.msra.mxu0 0.0
  %717 = vmatprep.subr.mxu0 0.0
  %718 = vmatpush1.msra.mxu0 0.0
  %719 = vmatprep.subr.mxu0 0.0
  %720 = vmatpush1.msra.mxu0 0.0
  %721 = vmatprep.subr.mxu0 0.0
  %722 = vmatpush1.msra.mxu0 0.0
  %723 = vmatprep.subr.mxu0 0.0
  %724 = vmatpush1.msra.mxu0 0.0
  %725 = vmatprep.subr.mxu0 0.0
  %726 = vmatpush1.msra.mxu0 0.0
  %727 = vmatprep.subr.mxu0 0.0
  %728 = vmatpush1.msra.mxu0 0.0
  %729 = vmatprep.subr.mxu0 0.0
  %730 = vmatpush1.msra.mxu0 0.0
  %731 = vmatprep.subr.mxu0 0.0
  %732 = vmatpush1.msra.mxu0 0.0
  %733 = vmatprep.subr.mxu0 0.0
  %734 = vmatpush1.msra.mxu0 0.0
  %735 = vmatprep.mubr.f32.mxu0 0.0
  %736 = vmatmul.mubr.f32.gmra.mrb[0].mxu0 %v588
  %v737 = vpop.f32.mrb[0].mxu0
  %v738 = vadd.f32 %v326, %v737
  %v739 = vpop.f32.mrb[0].mxu0
  %740 = vdwg.mxu0
  %v742 = vrot.slane %v738, 6
  %v744 = vmul.f32 %v670, %v742
  %v745 = vadd.f32 %v231, %v744
  %v746 = vtanh.pop %v745
  %v747 = vsub.f32 1.0, %v670
  %749 = vrot.lane.b32.xlu0 %v746, 16
  %v750 = vpop.permute.xlu0 %749
  %v752 = vmul.f32 %v747, %v750
  %v753 = vrot.slane %v583, 2
  %v755 = vmul.f32 %v670, %v753
  %v756 = vadd.f32 %v752, %v755
  %v758 = vrot.slane %v756, 2
  %759 = vrot.lane.b32.xlu0 %v758, 112
  %v760 = vpop.permute.xlu0 %759
  %v761 = vsel %vm234, %v760, 0
  %763 = vmatprep.subr.mxu0 0.0
  %764 = vmatpush1.msra.mxu0 %v19
  %765 = vmatprep.subr.mxu0 0.0
  %766 = vmatpush1.msra.mxu0 %v20
  %767 = vmatprep.subr.mxu0 0.0
  %768 = vmatpush1.msra.mxu0 0.0
  %769 = vmatprep.subr.mxu0 0.0
  %770 = vmatpush1.msra.mxu0 0.0
  %771 = vmatprep.subr.mxu0 0.0
  %772 = vmatpush1.msra.mxu0 0.0
  %773 = vmatprep.subr.mxu0 0.0
  %774 = vmatpush1.msra.mxu0 0.0
  %775 = vmatprep.subr.mxu0 0.0
  %776 = vmatpush1.msra.mxu0 0.0
  %777 = vmatprep.subr.mxu0 0.0
  %778 = vmatpush1.msra.mxu0 0.0
  %779 = vmatprep.subr.mxu0 0.0
  %780 = vmatpush1.msra.mxu0 0.0
  %781 = vmatprep.subr.mxu0 0.0
  %782 = vmatpush1.msra.mxu0 0.0
  %783 = vmatprep.subr.mxu0 0.0
  %784 = vmatpush1.msra.mxu0 0.0
  %785 = vmatprep.subr.mxu0 0.0
  %786 = vmatpush1.msra.mxu0 0.0
  %787 = vmatprep.subr.mxu0 0.0
  %788 = vmatpush1.msra.mxu0 0.0
  %789 = vmatprep.subr.mxu0 0.0
  %790 = vmatpush1.msra.mxu0 0.0
  %791 = vmatprep.subr.mxu0 0.0
  %792 = vmatpush1.msra.mxu0 0.0
  %793 = vmatprep.subr.mxu0 0.0
  %794 = vmatpush1.msra.mxu0 0.0
  %795 = vmatprep.subr.mxu0 0.0
  %796 = vmatpush1.msra.mxu0 0.0
  %797 = vmatprep.subr.mxu0 0.0
  %798 = vmatpush1.msra.mxu0 0.0
  %799 = vmatprep.subr.mxu0 0.0
  %800 = vmatpush1.msra.mxu0 0.0
  %801 = vmatprep.subr.mxu0 0.0
  %802 = vmatpush1.msra.mxu0 0.0
  %803 = vmatprep.subr.mxu0 0.0
  %804 = vmatpush1.msra.mxu0 0.0
  %805 = vmatprep.subr.mxu0 0.0
  %806 = vmatpush1.msra.mxu0 0.0
  %807 = vmatprep.subr.mxu0 0.0
  %808 = vmatpush1.msra.mxu0 0.0
  %809 = vmatprep.subr.mxu0 0.0
  %810 = vmatpush1.msra.mxu0 0.0
  %811 = vmatprep.subr.mxu0 0.0
  %812 = vmatpush1.msra.mxu0 0.0
  %813 = vmatprep.subr.mxu0 0.0
  %814 = vmatpush1.msra.mxu0 0.0
  %815 = vmatprep.subr.mxu0 0.0
  %816 = vmatpush1.msra.mxu0 0.0
  %817 = vmatprep.subr.mxu0 0.0
  %818 = vmatpush1.msra.mxu0 0.0
  %819 = vmatprep.subr.mxu0 0.0
  %820 = vmatpush1.msra.mxu0 0.0
  %821 = vmatprep.subr.mxu0 0.0
  %822 = vmatpush1.msra.mxu0 0.0
  %823 = vmatprep.subr.mxu0 0.0
  %824 = vmatpush1.msra.mxu0 0.0
  %825 = vmatprep.subr.mxu0 0.0
  %826 = vmatpush1.msra.mxu0 0.0
  %827 = vmatprep.mubr.f32.mxu0 0.0
  %828 = vmatmul.mubr.f32.gmra.mrb[0].mxu0 %v761
  %v829 = vpop.f32.mrb[0].mxu0
  %v830 = vadd.f32 0.0, %v829
  %v831 = vpop.f32.mrb[0].mxu0
  %832 = vdwg.mxu0
  %v833 = vadd.f32 %v149, %v830
  %v834 = vadd.f32 %v833, %v315
  %v835 = vxor.u32 %v834, 2147483648
  %v836 = vmul.f32 %v835, 1.442695
  %v837 = vpow.pop %v836
  %v838 = vadd.f32 %v837, 1.0
  %v839 = vrcp.pop %v838
  %v840 = vmul.f32 1.0, %v839
  %841 = vmatprep.subr.mxu0 0.0
  %842 = vmatpush1.msra.mxu0 %v21
  %843 = vmatprep.subr.mxu0 0.0
  %844 = vmatpush1.msra.mxu0 %v22
  %845 = vmatprep.subr.mxu0 0.0
  %846 = vmatpush1.msra.mxu0 0.0
  %847 = vmatprep.subr.mxu0 0.0
  %848 = vmatpush1.msra.mxu0 0.0
  %849 = vmatprep.subr.mxu0 0.0
  %850 = vmatpush1.msra.mxu0 0.0
  %851 = vmatprep.subr.mxu0 0.0
  %852 = vmatpush1.msra.mxu0 0.0
  %853 = vmatprep.subr.mxu0 0.0
  %854 = vmatpush1.msra.mxu0 0.0
  %855 = vmatprep.subr.mxu0 0.0
  %856 = vmatpush1.msra.mxu0 0.0
  %857 = vmatprep.subr.mxu0 0.0
  %858 = vmatpush1.msra.mxu0 0.0
  %859 = vmatprep.subr.mxu0 0.0
  %860 = vmatpush1.msra.mxu0 0.0
  %861 = vmatprep.subr.mxu0 0.0
  %862 = vmatpush1.msra.mxu0 0.0
  %863 = vmatprep.subr.mxu0 0.0
  %864 = vmatpush1.msra.mxu0 0.0
  %865 = vmatprep.subr.mxu0 0.0
  %866 = vmatpush1.msra.mxu0 0.0
  %867 = vmatprep.subr.mxu0 0.0
  %868 = vmatpush1.msra.mxu0 0.0
  %869 = vmatprep.subr.mxu0 0.0
  %870 = vmatpush1.msra.mxu0 0.0
  %871 = vmatprep.subr.mxu0 0.0
  %872 = vmatpush1.msra.mxu0 0.0
  %873 = vmatprep.subr.mxu0 0.0
  %874 = vmatpush1.msra.mxu0 0.0
  %875 = vmatprep.subr.mxu0 0.0
  %876 = vmatpush1.msra.mxu0 0.0
  %877 = vmatprep.subr.mxu0 0.0
  %878 = vmatpush1.msra.mxu0 0.0
  %879 = vmatprep.subr.mxu0 0.0
  %880 = vmatpush1.msra.mxu0 0.0
  %881 = vmatprep.subr.mxu0 0.0
  %882 = vmatpush1.msra.mxu0 0.0
  %883 = vmatprep.subr.mxu0 0.0
  %884 = vmatpush1.msra.mxu0 0.0
  %885 = vmatprep.subr.mxu0 0.0
  %886 = vmatpush1.msra.mxu0 0.0
  %887 = vmatprep.subr.mxu0 0.0
  %888 = vmatpush1.msra.mxu0 0.0
  %889 = vmatprep.subr.mxu0 0.0
  %890 = vmatpush1.msra.mxu0 0.0
  %891 = vmatprep.subr.mxu0 0.0
  %892 = vmatpush1.msra.mxu0 0.0
  %893 = vmatprep.subr.mxu0 0.0
  %894 = vmatpush1.msra.mxu0 0.0
  %895 = vmatprep.subr.mxu0 0.0
  %896 = vmatpush1.msra.mxu0 0.0
  %897 = vmatprep.subr.mxu0 0.0
  %898 = vmatpush1.msra.mxu0 0.0
  %899 = vmatprep.subr.mxu0 0.0
  %900 = vmatpush1.msra.mxu0 0.0
  %901 = vmatprep.subr.mxu0 0.0
  %902 = vmatpush1.msra.mxu0 0.0
  %903 = vmatprep.subr.mxu0 0.0
  %904 = vmatpush1.msra.mxu0 0.0
  %905 = vmatprep.mubr.f32.mxu0 0.0
  %906 = vmatmul.mubr.f32.gmra.mrb[0].mxu0 %v761
  %v907 = vpop.f32.mrb[0].mxu0
  %v908 = vadd.f32 %v326, %v907
  %v909 = vpop.f32.mrb[0].mxu0
  %910 = vdwg.mxu0
  %v911 = vmul.f32 %v840, %v908
  %v912 = vadd.f32 %v231, %v911
  %v913 = vtanh.pop %v912
  %v914 = vsub.f32 1.0, %v840
  %916 = vrot.lane.b32.xlu0 %v913, 16
  %v917 = vpop.permute.xlu0 %916
  %v919 = vmul.f32 %v914, %v917
  %v921 = vmul.f32 %v840, %v758
  %v922 = vadd.f32 %v919, %v921
  %924 = vrot.lane.b32.xlu0 %v922, 112
  %v925 = vpop.permute.xlu0 %924
  %v926 = vsel %vm234, %v925, 0
  %928 = vmatprep.subr.mxu0 0.0
  %929 = vmatpush1.msra.mxu0 %v19
  %930 = vmatprep.subr.mxu0 0.0
  %931 = vmatpush1.msra.mxu0 %v20
  %932 = vmatprep.subr.mxu0 0.0
  %933 = vmatpush1.msra.mxu0 0.0
  %934 = vmatprep.subr.mxu0 0.0
  %935 = vmatpush1.msra.mxu0 0.0
  %936 = vmatprep.subr.mxu0 0.0
  %937 = vmatpush1.msra.mxu0 0.0
  %938 = vmatprep.subr.mxu0 0.0
  %939 = vmatpush1.msra.mxu0 0.0
  %940 = vmatprep.subr.mxu0 0.0
  %941 = vmatpush1.msra.mxu0 0.0
  %942 = vmatprep.subr.mxu0 0.0
  %943 = vmatpush1.msra.mxu0 0.0
  %944 = vmatprep.subr.mxu0 0.0
  %945 = vmatpush1.msra.mxu0 0.0
  %946 = vmatprep.subr.mxu0 0.0
  %947 = vmatpush1.msra.mxu0 0.0
  %948 = vmatprep.subr.mxu0 0.0
  %949 = vmatpush1.msra.mxu0 0.0
  %950 = vmatprep.subr.mxu0 0.0
  %951 = vmatpush1.msra.mxu0 0.0
  %952 = vmatprep.subr.mxu0 0.0
  %953 = vmatpush1.msra.mxu0 0.0
  %954 = vmatprep.subr.mxu0 0.0
  %955 = vmatpush1.msra.mxu0 0.0
  %956 = vmatprep.subr.mxu0 0.0
  %957 = vmatpush1.msra.mxu0 0.0
  %958 = vmatprep.subr.mxu0 0.0
  %959 = vmatpush1.msra.mxu0 0.0
  %960 = vmatprep.subr.mxu0 0.0
  %961 = vmatpush1.msra.mxu0 0.0
  %962 = vmatprep.subr.mxu0 0.0
  %963 = vmatpush1.msra.mxu0 0.0
  %964 = vmatprep.subr.mxu0 0.0
  %965 = vmatpush1.msra.mxu0 0.0
  %966 = vmatprep.subr.mxu0 0.0
  %967 = vmatpush1.msra.mxu0 0.0
  %968 = vmatprep.subr.mxu0 0.0
  %969 = vmatpush1.msra.mxu0 0.0
  %970 = vmatprep.subr.mxu0 0.0
  %971 = vmatpush1.msra.mxu0 0.0
  %972 = vmatprep.subr.mxu0 0.0
  %973 = vmatpush1.msra.mxu0 0.0
  %974 = vmatprep.subr.mxu0 0.0
  %975 = vmatpush1.msra.mxu0 0.0
  %976 = vmatprep.subr.mxu0 0.0
  %977 = vmatpush1.msra.mxu0 0.0
  %978 = vmatprep.subr.mxu0 0.0
  %979 = vmatpush1.msra.mxu0 0.0
  %980 = vmatprep.subr.mxu0 0.0
  %981 = vmatpush1.msra.mxu0 0.0
  %982 = vmatprep.subr.mxu0 0.0
  %983 = vmatpush1.msra.mxu0 0.0
  %984 = vmatprep.subr.mxu0 0.0
  %985 = vmatpush1.msra.mxu0 0.0
  %986 = vmatprep.subr.mxu0 0.0
  %987 = vmatpush1.msra.mxu0 0.0
  %988 = vmatprep.subr.mxu0 0.0
  %989 = vmatpush1.msra.mxu0 0.0
  %990 = vmatprep.subr.mxu0 0.0
  %991 = vmatpush1.msra.mxu0 0.0
  %992 = vmatprep.mubr.f32.mxu0 0.0
  %993 = vmatmul.mubr.f32.gmra.mrb[0].mxu0 %v926
  %v994 = vpop.f32.mrb[0].mxu0
  %v995 = vadd.f32 0.0, %v994
  %v996 = vpop.f32.mrb[0].mxu0
  %997 = vdwg.mxu0
  %v999 = vrot.slane %v995, 2
  %v1001 = vadd.f32 %v144, %v999
  %v1002 = vadd.f32 %v1001, %v315
  %v1003 = vxor.u32 %v1002, 2147483648
  %v1004 = vmul.f32 %v1003, 1.442695
  %v1005 = vpow.pop %v1004
  %v1006 = vadd.f32 %v1005, 1.0
  %v1007 = vrcp.pop %v1006
  %v1008 = vmul.f32 1.0, %v1007
  %1009 = vmatprep.subr.mxu0 0.0
  %1010 = vmatpush1.msra.mxu0 %v21
  %1011 = vmatprep.subr.mxu0 0.0
  %1012 = vmatpush1.msra.mxu0 %v22
  %1013 = vmatprep.subr.mxu0 0.0
  %1014 = vmatpush1.msra.mxu0 0.0
  %1015 = vmatprep.subr.mxu0 0.0
  %1016 = vmatpush1.msra.mxu0 0.0
  %1017 = vmatprep.subr.mxu0 0.0
  %1018 = vmatpush1.msra.mxu0 0.0
  %1019 = vmatprep.subr.mxu0 0.0
  %1020 = vmatpush1.msra.mxu0 0.0
  %1021 = vmatprep.subr.mxu0 0.0
  %1022 = vmatpush1.msra.mxu0 0.0
  %1023 = vmatprep.subr.mxu0 0.0
  %1024 = vmatpush1.msra.mxu0 0.0
  %1025 = vmatprep.subr.mxu0 0.0
  %1026 = vmatpush1.msra.mxu0 0.0
  %1027 = vmatprep.subr.mxu0 0.0
  %1028 = vmatpush1.msra.mxu0 0.0
  %1029 = vmatprep.subr.mxu0 0.0
  %1030 = vmatpush1.msra.mxu0 0.0
  %1031 = vmatprep.subr.mxu0 0.0
  %1032 = vmatpush1.msra.mxu0 0.0
  %1033 = vmatprep.subr.mxu0 0.0
  %1034 = vmatpush1.msra.mxu0 0.0
  %1035 = vmatprep.subr.mxu0 0.0
  %1036 = vmatpush1.msra.mxu0 0.0
  %1037 = vmatprep.subr.mxu0 0.0
  %1038 = vmatpush1.msra.mxu0 0.0
  %1039 = vmatprep.subr.mxu0 0.0
  %1040 = vmatpush1.msra.mxu0 0.0
  %1041 = vmatprep.subr.mxu0 0.0
  %1042 = vmatpush1.msra.mxu0 0.0
  %1043 = vmatprep.subr.mxu0 0.0
  %1044 = vmatpush1.msra.mxu0 0.0
  %1045 = vmatprep.subr.mxu0 0.0
  %1046 = vmatpush1.msra.mxu0 0.0
  %1047 = vmatprep.subr.mxu0 0.0
  %1048 = vmatpush1.msra.mxu0 0.0
  %1049 = vmatprep.subr.mxu0 0.0
  %1050 = vmatpush1.msra.mxu0 0.0
  %1051 = vmatprep.subr.mxu0 0.0
  %1052 = vmatpush1.msra.mxu0 0.0
  %1053 = vmatprep.subr.mxu0 0.0
  %1054 = vmatpush1.msra.mxu0 0.0
  %1055 = vmatprep.subr.mxu0 0.0
  %1056 = vmatpush1.msra.mxu0 0.0
  %1057 = vmatprep.subr.mxu0 0.0
  %1058 = vmatpush1.msra.mxu0 0.0
  %1059 = vmatprep.subr.mxu0 0.0
  %1060 = vmatpush1.msra.mxu0 0.0
  %1061 = vmatprep.subr.mxu0 0.0
  %1062 = vmatpush1.msra.mxu0 0.0
  %1063 = vmatprep.subr.mxu0 0.0
  %1064 = vmatpush1.msra.mxu0 0.0
  %1065 = vmatprep.subr.mxu0 0.0
  %1066 = vmatpush1.msra.mxu0 0.0
  %1067 = vmatprep.subr.mxu0 0.0
  %1068 = vmatpush1.msra.mxu0 0.0
  %1069 = vmatprep.subr.mxu0 0.0
  %1070 = vmatpush1.msra.mxu0 0.0
  %1071 = vmatprep.subr.mxu0 0.0
  %1072 = vmatpush1.msra.mxu0 0.0
  %1073 = vmatprep.mubr.f32.mxu0 0.0
  %1074 = vmatmul.mubr.f32.gmra.mrb[0].mxu0 %v926
  %v1075 = vpop.f32.mrb[0].mxu0
  %v1076 = vadd.f32 %v326, %v1075
  %v1077 = vpop.f32.mrb[0].mxu0
  %1078 = vdwg.mxu0
  %v1080 = vrot.slane %v1076, 2
  %v1082 = vmul.f32 %v1008, %v1080
  %v1083 = vadd.f32 %v226, %v1082
  %v1084 = vtanh.pop %v1083
  %v1085 = vsub.f32 1.0, %v1008
  %1087 = vrot.lane.b32.xlu0 %v1084, 16
  %v1088 = vpop.permute.xlu0 %1087
  %v1090 = vmul.f32 %v1085, %v1088
  %v1091 = vrot.slane %v922, 2
  %v1093 = vmul.f32 %v1008, %v1091
  %v1094 = vadd.f32 %v1090, %v1093
  %v1096 = vrot.slane %v1094, 6
  %1097 = vrot.lane.b32.xlu0 %v1096, 112
  %v1098 = vpop.permute.xlu0 %1097
  %v1099 = vsel %vm234, %v1098, 0
  %1101 = vmatprep.subr.mxu0 0.0
  %1102 = vmatpush1.msra.mxu0 %v19
  %1103 = vmatprep.subr.mxu0 0.0
  %1104 = vmatpush1.msra.mxu0 %v20
  %1105 = vmatprep.subr.mxu0 0.0
  %1106 = vmatpush1.msra.mxu0 0.0
  %1107 = vmatprep.subr.mxu0 0.0
  %1108 = vmatpush1.msra.mxu0 0.0
  %1109 = vmatprep.subr.mxu0 0.0
  %1110 = vmatpush1.msra.mxu0 0.0
  %1111 = vmatprep.subr.mxu0 0.0
  %1112 = vmatpush1.msra.mxu0 0.0
  %1113 = vmatprep.subr.mxu0 0.0
  %1114 = vmatpush1.msra.mxu0 0.0
  %1115 = vmatprep.subr.mxu0 0.0
  %1116 = vmatpush1.msra.mxu0 0.0
  %1117 = vmatprep.subr.mxu0 0.0
  %1118 = vmatpush1.msra.mxu0 0.0
  %1119 = vmatprep.subr.mxu0 0.0
  %1120 = vmatpush1.msra.mxu0 0.0
  %1121 = vmatprep.subr.mxu0 0.0
  %1122 = vmatpush1.msra.mxu0 0.0
  %1123 = vmatprep.subr.mxu0 0.0
  %1124 = vmatpush1.msra.mxu0 0.0
  %1125 = vmatprep.subr.mxu0 0.0
  %1126 = vmatpush1.msra.mxu0 0.0
  %1127 = vmatprep.subr.mxu0 0.0
  %1128 = vmatpush1.msra.mxu0 0.0
  %1129 = vmatprep.subr.mxu0 0.0
  %1130 = vmatpush1.msra.mxu0 0.0
  %1131 = vmatprep.subr.mxu0 0.0
  %1132 = vmatpush1.msra.mxu0 0.0
  %1133 = vmatprep.subr.mxu0 0.0
  %1134 = vmatpush1.msra.mxu0 0.0
  %1135 = vmatprep.subr.mxu0 0.0
  %1136 = vmatpush1.msra.mxu0 0.0
  %1137 = vmatprep.subr.mxu0 0.0
  %1138 = vmatpush1.msra.mxu0 0.0
  %1139 = vmatprep.subr.mxu0 0.0
  %1140 = vmatpush1.msra.mxu0 0.0
  %1141 = vmatprep.subr.mxu0 0.0
  %1142 = vmatpush1.msra.mxu0 0.0
  %1143 = vmatprep.subr.mxu0 0.0
  %1144 = vmatpush1.msra.mxu0 0.0
  %1145 = vmatprep.subr.mxu0 0.0
  %1146 = vmatpush1.msra.mxu0 0.0
  %1147 = vmatprep.subr.mxu0 0.0
  %1148 = vmatpush1.msra.mxu0 0.0
  %1149 = vmatprep.subr.mxu0 0.0
  %1150 = vmatpush1.msra.mxu0 0.0
  %1151 = vmatprep.subr.mxu0 0.0
  %1152 = vmatpush1.msra.mxu0 0.0
  %1153 = vmatprep.subr.mxu0 0.0
  %1154 = vmatpush1.msra.mxu0 0.0
  %1155 = vmatprep.subr.mxu0 0.0
  %1156 = vmatpush1.msra.mxu0 0.0
  %1157 = vmatprep.subr.mxu0 0.0
  %1158 = vmatpush1.msra.mxu0 0.0
  %1159 = vmatprep.subr.mxu0 0.0
  %1160 = vmatpush1.msra.mxu0 0.0
  %1161 = vmatprep.subr.mxu0 0.0
  %1162 = vmatpush1.msra.mxu0 0.0
  %1163 = vmatprep.subr.mxu0 0.0
  %1164 = vmatpush1.msra.mxu0 0.0
  %1165 = vmatprep.mubr.f32.mxu0 0.0
  %1166 = vmatmul.mubr.f32.gmra.mrb[0].mxu0 %v1099
  %v1167 = vpop.f32.mrb[0].mxu0
  %v1168 = vadd.f32 0.0, %v1167
  %v1169 = vpop.f32.mrb[0].mxu0
  %1170 = vdwg.mxu0
  %v1172 = vrot.slane %v1168, 4
  %v1174 = vadd.f32 %v144, %v1172
  %v1175 = vadd.f32 %v1174, %v315
  %v1176 = vxor.u32 %v1175, 2147483648
  %v1177 = vmul.f32 %v1176, 1.442695
  %v1178 = vpow.pop %v1177
  %v1179 = vadd.f32 %v1178, 1.0
  %v1180 = vrcp.pop %v1179
  %v1181 = vmul.f32 1.0, %v1180
  %1182 = vmatprep.subr.mxu0 0.0
  %1183 = vmatpush1.msra.mxu0 %v21
  %1184 = vmatprep.subr.mxu0 0.0
  %1185 = vmatpush1.msra.mxu0 %v22
  %1186 = vmatprep.subr.mxu0 0.0
  %1187 = vmatpush1.msra.mxu0 0.0
  %1188 = vmatprep.subr.mxu0 0.0
  %1189 = vmatpush1.msra.mxu0 0.0
  %1190 = vmatprep.subr.mxu0 0.0
  %1191 = vmatpush1.msra.mxu0 0.0
  %1192 = vmatprep.subr.mxu0 0.0
  %1193 = vmatpush1.msra.mxu0 0.0
  %1194 = vmatprep.subr.mxu0 0.0
  %1195 = vmatpush1.msra.mxu0 0.0
  %1196 = vmatprep.subr.mxu0 0.0
  %1197 = vmatpush1.msra.mxu0 0.0
  %1198 = vmatprep.subr.mxu0 0.0
  %1199 = vmatpush1.msra.mxu0 0.0
  %1200 = vmatprep.subr.mxu0 0.0
  %1201 = vmatpush1.msra.mxu0 0.0
  %1202 = vmatprep.subr.mxu0 0.0
  %1203 = vmatpush1.msra.mxu0 0.0
  %1204 = vmatprep.subr.mxu0 0.0
  %1205 = vmatpush1.msra.mxu0 0.0
  %1206 = vmatprep.subr.mxu0 0.0
  %1207 = vmatpush1.msra.mxu0 0.0
  %1208 = vmatprep.subr.mxu0 0.0
  %1209 = vmatpush1.msra.mxu0 0.0
  %1210 = vmatprep.subr.mxu0 0.0
  %1211 = vmatpush1.msra.mxu0 0.0
  %1212 = vmatprep.subr.mxu0 0.0
  %1213 = vmatpush1.msra.mxu0 0.0
  %1214 = vmatprep.subr.mxu0 0.0
  %1215 = vmatpush1.msra.mxu0 0.0
  %1216 = vmatprep.subr.mxu0 0.0
  %1217 = vmatpush1.msra.mxu0 0.0
  %1218 = vmatprep.subr.mxu0 0.0
  %1219 = vmatpush1.msra.mxu0 0.0
  %1220 = vmatprep.subr.mxu0 0.0
  %1221 = vmatpush1.msra.mxu0 0.0
  %1222 = vmatprep.subr.mxu0 0.0
  %1223 = vmatpush1.msra.mxu0 0.0
  %1224 = vmatprep.subr.mxu0 0.0
  %1225 = vmatpush1.msra.mxu0 0.0
  %1226 = vmatprep.subr.mxu0 0.0
  %1227 = vmatpush1.msra.mxu0 0.0
  %1228 = vmatprep.subr.mxu0 0.0
  %1229 = vmatpush1.msra.mxu0 0.0
  %1230 = vmatprep.subr.mxu0 0.0
  %1231 = vmatpush1.msra.mxu0 0.0
  %1232 = vmatprep.subr.mxu0 0.0
  %1233 = vmatpush1.msra.mxu0 0.0
  %1234 = vmatprep.subr.mxu0 0.0
  %1235 = vmatpush1.msra.mxu0 0.0
  %1236 = vmatprep.subr.mxu0 0.0
  %1237 = vmatpush1.msra.mxu0 0.0
  %1238 = vmatprep.subr.mxu0 0.0
  %1239 = vmatpush1.msra.mxu0 0.0
  %1240 = vmatprep.subr.mxu0 0.0
  %1241 = vmatpush1.msra.mxu0 0.0
  %1242 = vmatprep.subr.mxu0 0.0
  %1243 = vmatpush1.msra.mxu0 0.0
  %1244 = vmatprep.subr.mxu0 0.0
  %1245 = vmatpush1.msra.mxu0 0.0
  %1246 = vmatprep.mubr.f32.mxu0 0.0
  %1247 = vmatmul.mubr.f32.gmra.mrb[0].mxu0 %v1099
  %v1248 = vpop.f32.mrb[0].mxu0
  %v1249 = vadd.f32 %v326, %v1248
  %v1250 = vpop.f32.mrb[0].mxu0
  %1251 = vdwg.mxu0
  %v1253 = vrot.slane %v1249, 4
  %v1255 = vmul.f32 %v1181, %v1253
  %v1256 = vadd.f32 %v226, %v1255
  %v1257 = vtanh.pop %v1256
  %v1258 = vsub.f32 1.0, %v1181
  %1260 = vrot.lane.b32.xlu0 %v1257, 16
  %v1261 = vpop.permute.xlu0 %1260
  %v1263 = vmul.f32 %v1258, %v1261
  %v1264 = vrot.slane %v1094, 2
  %v1266 = vmul.f32 %v1181, %v1264
  %v1267 = vadd.f32 %v1263, %v1266
  %v1269 = vrot.slane %v1267, 4
  %1270 = vrot.lane.b32.xlu0 %v1269, 112
  %v1271 = vpop.permute.xlu0 %1270
  %v1272 = vsel %vm234, %v1271, 0
  %1274 = vmatprep.subr.mxu0 0.0
  %1275 = vmatpush1.msra.mxu0 %v19
  %1276 = vmatprep.subr.mxu0 0.0
  %1277 = vmatpush1.msra.mxu0 %v20
  %1278 = vmatprep.subr.mxu0 0.0
  %1279 = vmatpush1.msra.mxu0 0.0
  %1280 = vmatprep.subr.mxu0 0.0
  %1281 = vmatpush1.msra.mxu0 0.0
  %1282 = vmatprep.subr.mxu0 0.0
  %1283 = vmatpush1.msra.mxu0 0.0
  %1284 = vmatprep.subr.mxu0 0.0
  %1285 = vmatpush1.msra.mxu0 0.0
  %1286 = vmatprep.subr.mxu0 0.0
  %1287 = vmatpush1.msra.mxu0 0.0
  %1288 = vmatprep.subr.mxu0 0.0
  %1289 = vmatpush1.msra.mxu0 0.0
  %1290 = vmatprep.subr.mxu0 0.0
  %1291 = vmatpush1.msra.mxu0 0.0
  %1292 = vmatprep.subr.mxu0 0.0
  %1293 = vmatpush1.msra.mxu0 0.0
  %1294 = vmatprep.subr.mxu0 0.0
  %1295 = vmatpush1.msra.mxu0 0.0
  %1296 = vmatprep.subr.mxu0 0.0
  %1297 = vmatpush1.msra.mxu0 0.0
  %1298 = vmatprep.subr.mxu0 0.0
  %1299 = vmatpush1.msra.mxu0 0.0
  %1300 = vmatprep.subr.mxu0 0.0
  %1301 = vmatpush1.msra.mxu0 0.0
  %1302 = vmatprep.subr.mxu0 0.0
  %1303 = vmatpush1.msra.mxu0 0.0
  %1304 = vmatprep.subr.mxu0 0.0
  %1305 = vmatpush1.msra.mxu0 0.0
  %1306 = vmatprep.subr.mxu0 0.0
  %1307 = vmatpush1.msra.mxu0 0.0
  %1308 = vmatprep.subr.mxu0 0.0
  %1309 = vmatpush1.msra.mxu0 0.0
  %1310 = vmatprep.subr.mxu0 0.0
  %1311 = vmatpush1.msra.mxu0 0.0
  %1312 = vmatprep.subr.mxu0 0.0
  %1313 = vmatpush1.msra.mxu0 0.0
  %1314 = vmatprep.subr.mxu0 0.0
  %1315 = vmatpush1.msra.mxu0 0.0
  %1316 = vmatprep.subr.mxu0 0.0
  %1317 = vmatpush1.msra.mxu0 0.0
  %1318 = vmatprep.subr.mxu0 0.0
  %1319 = vmatpush1.msra.mxu0 0.0
  %1320 = vmatprep.subr.mxu0 0.0
  %1321 = vmatpush1.msra.mxu0 0.0
  %1322 = vmatprep.subr.mxu0 0.0
  %1323 = vmatpush1.msra.mxu0 0.0
  %1324 = vmatprep.subr.mxu0 0.0
  %1325 = vmatpush1.msra.mxu0 0.0
  %1326 = vmatprep.subr.mxu0 0.0
  %1327 = vmatpush1.msra.mxu0 0.0
  %1328 = vmatprep.subr.mxu0 0.0
  %1329 = vmatpush1.msra.mxu0 0.0
  %1330 = vmatprep.subr.mxu0 0.0
  %1331 = vmatpush1.msra.mxu0 0.0
  %1332 = vmatprep.subr.mxu0 0.0
  %1333 = vmatpush1.msra.mxu0 0.0
  %1334 = vmatprep.subr.mxu0 0.0
  %1335 = vmatpush1.msra.mxu0 0.0
  %1336 = vmatprep.subr.mxu0 0.0
  %1337 = vmatpush1.msra.mxu0 0.0
  %1338 = vmatprep.mubr.f32.mxu0 0.0
  %1339 = vmatmul.mubr.f32.gmra.mrb[0].mxu0 %v1272
  %v1340 = vpop.f32.mrb[0].mxu0
  %v1341 = vadd.f32 0.0, %v1340
  %v1342 = vpop.f32.mrb[0].mxu0
  %1343 = vdwg.mxu0
  %v1345 = vrot.slane %v1341, 6
  %v1347 = vadd.f32 %v144, %v1345
  %v1348 = vadd.f32 %v1347, %v315
  %v1349 = vxor.u32 %v1348, 2147483648
  %v1350 = vmul.f32 %v1349, 1.442695
  %v1351 = vpow.pop %v1350
  %v1352 = vadd.f32 %v1351, 1.0
  %v1353 = vrcp.pop %v1352
  %v1354 = vmul.f32 1.0, %v1353
  %1355 = vmatprep.subr.mxu0 0.0
  %1356 = vmatpush1.msra.mxu0 %v21
  %1357 = vmatprep.subr.mxu0 0.0
  %1358 = vmatpush1.msra.mxu0 %v22
  %1359 = vmatprep.subr.mxu0 0.0
  %1360 = vmatpush1.msra.mxu0 0.0
  %1361 = vmatprep.subr.mxu0 0.0
  %1362 = vmatpush1.msra.mxu0 0.0
  %1363 = vmatprep.subr.mxu0 0.0
  %1364 = vmatpush1.msra.mxu0 0.0
  %1365 = vmatprep.subr.mxu0 0.0
  %1366 = vmatpush1.msra.mxu0 0.0
  %1367 = vmatprep.subr.mxu0 0.0
  %1368 = vmatpush1.msra.mxu0 0.0
  %1369 = vmatprep.subr.mxu0 0.0
  %1370 = vmatpush1.msra.mxu0 0.0
  %1371 = vmatprep.subr.mxu0 0.0
  %1372 = vmatpush1.msra.mxu0 0.0
  %1373 = vmatprep.subr.mxu0 0.0
  %1374 = vmatpush1.msra.mxu0 0.0
  %1375 = vmatprep.subr.mxu0 0.0
  %1376 = vmatpush1.msra.mxu0 0.0
  %1377 = vmatprep.subr.mxu0 0.0
  %1378 = vmatpush1.msra.mxu0 0.0
  %1379 = vmatprep.subr.mxu0 0.0
  %1380 = vmatpush1.msra.mxu0 0.0
  %1381 = vmatprep.subr.mxu0 0.0
  %1382 = vmatpush1.msra.mxu0 0.0
  %1383 = vmatprep.subr.mxu0 0.0
  %1384 = vmatpush1.msra.mxu0 0.0
  %1385 = vmatprep.subr.mxu0 0.0
  %1386 = vmatpush1.msra.mxu0 0.0
  %1387 = vmatprep.subr.mxu0 0.0
  %1388 = vmatpush1.msra.mxu0 0.0
  %1389 = vmatprep.subr.mxu0 0.0
  %1390 = vmatpush1.msra.mxu0 0.0
  %1391 = vmatprep.subr.mxu0 0.0
  %1392 = vmatpush1.msra.mxu0 0.0
  %1393 = vmatprep.subr.mxu0 0.0
  %1394 = vmatpush1.msra.mxu0 0.0
  %1395 = vmatprep.subr.mxu0 0.0
  %1396 = vmatpush1.msra.mxu0 0.0
  %1397 = vmatprep.subr.mxu0 0.0
  %1398 = vmatpush1.msra.mxu0 0.0
  %1399 = vmatprep.subr.mxu0 0.0
  %1400 = vmatpush1.msra.mxu0 0.0
  %1401 = vmatprep.subr.mxu0 0.0
  %1402 = vmatpush1.msra.mxu0 0.0
  %1403 = vmatprep.subr.mxu0 0.0
  %1404 = vmatpush1.msra.mxu0 0.0
  %1405 = vmatprep.subr.mxu0 0.0
  %1406 = vmatpush1.msra.mxu0 0.0
  %1407 = vmatprep.subr.mxu0 0.0
  %1408 = vmatpush1.msra.mxu0 0.0
  %1409 = vmatprep.subr.mxu0 0.0
  %1410 = vmatpush1.msra.mxu0 0.0
  %1411 = vmatprep.subr.mxu0 0.0
  %1412 = vmatpush1.msra.mxu0 0.0
  %1413 = vmatprep.subr.mxu0 0.0
  %1414 = vmatpush1.msra.mxu0 0.0
  %1415 = vmatprep.subr.mxu0 0.0
  %1416 = vmatpush1.msra.mxu0 0.0
  %1417 = vmatprep.subr.mxu0 0.0
  %1418 = vmatpush1.msra.mxu0 0.0
  %1419 = vmatprep.mubr.f32.mxu0 0.0
  %1420 = vmatmul.mubr.f32.gmra.mrb[0].mxu0 %v1272
  %v1421 = vpop.f32.mrb[0].mxu0
  %v1422 = vadd.f32 %v326, %v1421
  %v1423 = vpop.f32.mrb[0].mxu0
  %1424 = vdwg.mxu0
  %v1426 = vrot.slane %v1422, 6
  %v1428 = vmul.f32 %v1354, %v1426
  %v1429 = vadd.f32 %v226, %v1428
  %v1430 = vtanh.pop %v1429
  %v1431 = vsub.f32 1.0, %v1354
  %1433 = vrot.lane.b32.xlu0 %v1430, 16
  %v1434 = vpop.permute.xlu0 %1433
  %v1436 = vmul.f32 %v1431, %v1434
  %v1437 = vrot.slane %v1267, 2
  %v1439 = vmul.f32 %v1354, %v1437
  %v1440 = vadd.f32 %v1436, %v1439
  %v1442 = vrot.slane %v1440, 2
  %1443 = vrot.lane.b32.xlu0 %v1442, 112
  %v1444 = vpop.permute.xlu0 %1443
  %v1445 = vsel %vm234, %v1444, 0
  %1447 = vmatprep.subr.mxu0 0.0
  %1448 = vmatpush1.msra.mxu0 %v19
  %1449 = vmatprep.subr.mxu0 0.0
  %1450 = vmatpush1.msra.mxu0 %v20
  %1451 = vmatprep.subr.mxu0 0.0
  %1452 = vmatpush1.msra.mxu0 0.0
  %1453 = vmatprep.subr.mxu0 0.0
  %1454 = vmatpush1.msra.mxu0 0.0
  %1455 = vmatprep.subr.mxu0 0.0
  %1456 = vmatpush1.msra.mxu0 0.0
  %1457 = vmatprep.subr.mxu0 0.0
  %1458 = vmatpush1.msra.mxu0 0.0
  %1459 = vmatprep.subr.mxu0 0.0
  %1460 = vmatpush1.msra.mxu0 0.0
  %1461 = vmatprep.subr.mxu0 0.0
  %1462 = vmatpush1.msra.mxu0 0.0
  %1463 = vmatprep.subr.mxu0 0.0
  %1464 = vmatpush1.msra.mxu0 0.0
  %1465 = vmatprep.subr.mxu0 0.0
  %1466 = vmatpush1.msra.mxu0 0.0
  %1467 = vmatprep.subr.mxu0 0.0
  %1468 = vmatpush1.msra.mxu0 0.0
  %1469 = vmatprep.subr.mxu0 0.0
  %1470 = vmatpush1.msra.mxu0 0.0
  %1471 = vmatprep.subr.mxu0 0.0
  %1472 = vmatpush1.msra.mxu0 0.0
  %1473 = vmatprep.subr.mxu0 0.0
  %1474 = vmatpush1.msra.mxu0 0.0
  %1475 = vmatprep.subr.mxu0 0.0
  %1476 = vmatpush1.msra.mxu0 0.0
  %1477 = vmatprep.subr.mxu0 0.0
  %1478 = vmatpush1.msra.mxu0 0.0
  %1479 = vmatprep.subr.mxu0 0.0
  %1480 = vmatpush1.msra.mxu0 0.0
  %1481 = vmatprep.subr.mxu0 0.0
  %1482 = vmatpush1.msra.mxu0 0.0
  %1483 = vmatprep.subr.mxu0 0.0
  %1484 = vmatpush1.msra.mxu0 0.0
  %1485 = vmatprep.subr.mxu0 0.0
  %1486 = vmatpush1.msra.mxu0 0.0
  %1487 = vmatprep.subr.mxu0 0.0
  %1488 = vmatpush1.msra.mxu0 0.0
  %1489 = vmatprep.subr.mxu0 0.0
  %1490 = vmatpush1.msra.mxu0 0.0
  %1491 = vmatprep.subr.mxu0 0.0
  %1492 = vmatpush1.msra.mxu0 0.0
  %1493 = vmatprep.subr.mxu0 0.0
  %1494 = vmatpush1.msra.mxu0 0.0
  %1495 = vmatprep.subr.mxu0 0.0
  %1496 = vmatpush1.msra.mxu0 0.0
  %1497 = vmatprep.subr.mxu0 0.0
  %1498 = vmatpush1.msra.mxu0 0.0
  %1499 = vmatprep.subr.mxu0 0.0
  %1500 = vmatpush1.msra.mxu0 0.0
  %1501 = vmatprep.subr.mxu0 0.0
  %1502 = vmatpush1.msra.mxu0 0.0
  %1503 = vmatprep.subr.mxu0 0.0
  %1504 = vmatpush1.msra.mxu0 0.0
  %1505 = vmatprep.subr.mxu0 0.0
  %1506 = vmatpush1.msra.mxu0 0.0
  %1507 = vmatprep.subr.mxu0 0.0
  %1508 = vmatpush1.msra.mxu0 0.0
  %1509 = vmatprep.subr.mxu0 0.0
  %1510 = vmatpush1.msra.mxu0 0.0
  %1511 = vmatprep.mubr.f32.mxu0 0.0
  %1512 = vmatmul.mubr.f32.gmra.mrb[0].mxu0 %v1445
  %v1513 = vpop.f32.mrb[0].mxu0
  %v1514 = vadd.f32 0.0, %v1513
  %v1515 = vpop.f32.mrb[0].mxu0
  %1516 = vdwg.mxu0
  %v1517 = vadd.f32 %v144, %v1514
  %v1518 = vadd.f32 %v1517, %v315
  %v1519 = vxor.u32 %v1518, 2147483648
  %v1520 = vmul.f32 %v1519, 1.442695
  %v1521 = vpow.pop %v1520
  %v1522 = vadd.f32 %v1521, 1.0
  %v1523 = vrcp.pop %v1522
  %v1524 = vmul.f32 1.0, %v1523
  %1525 = vmatprep.subr.mxu0 0.0
  %1526 = vmatpush1.msra.mxu0 %v21
  %1527 = vmatprep.subr.mxu0 0.0
  %1528 = vmatpush1.msra.mxu0 %v22
  %1529 = vmatprep.subr.mxu0 0.0
  %1530 = vmatpush1.msra.mxu0 0.0
  %1531 = vmatprep.subr.mxu0 0.0
  %1532 = vmatpush1.msra.mxu0 0.0
  %1533 = vmatprep.subr.mxu0 0.0
  %1534 = vmatpush1.msra.mxu0 0.0
  %1535 = vmatprep.subr.mxu0 0.0
  %1536 = vmatpush1.msra.mxu0 0.0
  %1537 = vmatprep.subr.mxu0 0.0
  %1538 = vmatpush1.msra.mxu0 0.0
  %1539 = vmatprep.subr.mxu0 0.0
  %1540 = vmatpush1.msra.mxu0 0.0
  %1541 = vmatprep.subr.mxu0 0.0
  %1542 = vmatpush1.msra.mxu0 0.0
  %1543 = vmatprep.subr.mxu0 0.0
  %1544 = vmatpush1.msra.mxu0 0.0
  %1545 = vmatprep.subr.mxu0 0.0
  %1546 = vmatpush1.msra.mxu0 0.0
  %1547 = vmatprep.subr.mxu0 0.0
  %1548 = vmatpush1.msra.mxu0 0.0
  %1549 = vmatprep.subr.mxu0 0.0
  %1550 = vmatpush1.msra.mxu0 0.0
  %1551 = vmatprep.subr.mxu0 0.0
  %1552 = vmatpush1.msra.mxu0 0.0
  %1553 = vmatprep.subr.mxu0 0.0
  %1554 = vmatpush1.msra.mxu0 0.0
  %1555 = vmatprep.subr.mxu0 0.0
  %1556 = vmatpush1.msra.mxu0 0.0
  %1557 = vmatprep.subr.mxu0 0.0
  %1558 = vmatpush1.msra.mxu0 0.0
  %1559 = vmatprep.subr.mxu0 0.0
  %1560 = vmatpush1.msra.mxu0 0.0
  %1561 = vmatprep.subr.mxu0 0.0
  %1562 = vmatpush1.msra.mxu0 0.0
  %1563 = vmatprep.subr.mxu0 0.0
  %1564 = vmatpush1.msra.mxu0 0.0
  %1565 = vmatprep.subr.mxu0 0.0
  %1566 = vmatpush1.msra.mxu0 0.0
  %1567 = vmatprep.subr.mxu0 0.0
  %1568 = vmatpush1.msra.mxu0 0.0
  %1569 = vmatprep.subr.mxu0 0.0
  %1570 = vmatpush1.msra.mxu0 0.0
  %1571 = vmatprep.subr.mxu0 0.0
  %1572 = vmatpush1.msra.mxu0 0.0
  %1573 = vmatprep.subr.mxu0 0.0
  %1574 = vmatpush1.msra.mxu0 0.0
  %1575 = vmatprep.subr.mxu0 0.0
  %1576 = vmatpush1.msra.mxu0 0.0
  %1577 = vmatprep.subr.mxu0 0.0
  %1578 = vmatpush1.msra.mxu0 0.0
  %1579 = vmatprep.subr.mxu0 0.0
  %1580 = vmatpush1.msra.mxu0 0.0
  %1581 = vmatprep.subr.mxu0 0.0
  %1582 = vmatpush1.msra.mxu0 0.0
  %1583 = vmatprep.subr.mxu0 0.0
  %1584 = vmatpush1.msra.mxu0 0.0
  %1585 = vmatprep.subr.mxu0 0.0
  %1586 = vmatpush1.msra.mxu0 0.0
  %1587 = vmatprep.subr.mxu0 0.0
  %1588 = vmatpush1.msra.mxu0 0.0
  %1589 = vmatprep.mubr.f32.mxu0 0.0
  %1590 = vmatmul.mubr.f32.gmra.mrb[0].mxu0 %v1445
  %v1591 = vpop.f32.mrb[0].mxu0
  %v1592 = vadd.f32 %v326, %v1591
  %v1593 = vpop.f32.mrb[0].mxu0
  %1594 = vdwg.mxu0
  %v1595 = vmul.f32 %v1524, %v1592
  %v1596 = vadd.f32 %v226, %v1595
  %v1597 = vtanh.pop %v1596
  %v1598 = vsub.f32 1.0, %v1524
  %1600 = vrot.lane.b32.xlu0 %v1597, 16
  %v1601 = vpop.permute.xlu0 %1600
  %v1603 = vmul.f32 %v1598, %v1601
  %v1605 = vmul.f32 %v1524, %v1442
  %v1606 = vadd.f32 %v1603, %v1605
  %vm1607 = vcmask 1041408
  %v1608 = vsel %vm1607, %v1606, %v1440
  %v1609 = vsel %vm73, %v1608, %v1267
  %vm1610 = vcmask 1045504
  %v1611 = vsel %vm1610, %v1609, %v1094
  %v1612 = vsel %vm1607, %v922, %v756
  %v1613 = vsel %vm73, %v1612, %v583
  %v1614 = vsel %vm1610, %v1613, %v410
  %v1615 = vlaneseq
  %v1616 = vshrl.u32 %v1615, 7
  %v1617 = vsub.s32 0, %v1616
  %v1618 = vrot.slane %v29, %v1617
  %1621 = vrot.lane.b32.xlu0 %v1611, 112
  %v1622 = vpop.permute.xlu0 %1621
  %1623 = vrot.lane.b32.xlu0 %v1614, 112
  %v1624 = vpop.permute.xlu0 %1623
  %v1625 = vsel %vm234, %v1622, 0
  %v1627 = vsel %vm234, %v1624, 0
  %1629 = vmatprep.subr.mxu0 0.0
  %1630 = vmatpush1.msra.mxu0 %v27
  %1631 = vmatprep.subr.mxu0 0.0
  %1632 = vmatpush1.msra.mxu0 %v28
  %1633 = vmatprep.subr.mxu0 0.0
  %1634 = vmatpush1.msra.mxu0 0.0
  %1635 = vmatprep.subr.mxu0 0.0
  %1636 = vmatpush1.msra.mxu0 0.0
  %1637 = vmatprep.subr.mxu0 0.0
  %1638 = vmatpush1.msra.mxu0 0.0
  %1639 = vmatprep.subr.mxu0 0.0
  %1640 = vmatpush1.msra.mxu0 0.0
  %1641 = vmatprep.subr.mxu0 0.0
  %1642 = vmatpush1.msra.mxu0 0.0
  %1643 = vmatprep.subr.mxu0 0.0
  %1644 = vmatpush1.msra.mxu0 0.0
  %1645 = vmatprep.subr.mxu0 0.0
  %1646 = vmatpush1.msra.mxu0 0.0
  %1647 = vmatprep.subr.mxu0 0.0
  %1648 = vmatpush1.msra.mxu0 0.0
  %1649 = vmatprep.subr.mxu0 0.0
  %1650 = vmatpush1.msra.mxu0 0.0
  %1651 = vmatprep.subr.mxu0 0.0
  %1652 = vmatpush1.msra.mxu0 0.0
  %1653 = vmatprep.subr.mxu0 0.0
  %1654 = vmatpush1.msra.mxu0 0.0
  %1655 = vmatprep.subr.mxu0 0.0
  %1656 = vmatpush1.msra.mxu0 0.0
  %1657 = vmatprep.subr.mxu0 0.0
  %1658 = vmatpush1.msra.mxu0 0.0
  %1659 = vmatprep.subr.mxu0 0.0
  %1660 = vmatpush1.msra.mxu0 0.0
  %1661 = vmatprep.subr.mxu0 0.0
  %1662 = vmatpush1.msra.mxu0 0.0
  %1663 = vmatprep.subr.mxu0 0.0
  %1664 = vmatpush1.msra.mxu0 0.0
  %1665 = vmatprep.subr.mxu0 0.0
  %1666 = vmatpush1.msra.mxu0 0.0
  %1667 = vmatprep.subr.mxu0 0.0
  %1668 = vmatpush1.msra.mxu0 0.0
  %1669 = vmatprep.subr.mxu0 0.0
  %1670 = vmatpush1.msra.mxu0 0.0
  %1671 = vmatprep.subr.mxu0 0.0
  %1672 = vmatpush1.msra.mxu0 0.0
  %1673 = vmatprep.subr.mxu0 0.0
  %1674 = vmatpush1.msra.mxu0 0.0
  %1675 = vmatprep.subr.mxu0 0.0
  %1676 = vmatpush1.msra.mxu0 0.0
  %1677 = vmatprep.subr.mxu0 0.0
  %1678 = vmatpush1.msra.mxu0 0.0
  %1679 = vmatprep.subr.mxu0 0.0
  %1680 = vmatpush1.msra.mxu0 0.0
  %1681 = vmatprep.subr.mxu0 0.0
  %1682 = vmatpush1.msra.mxu0 0.0
  %1683 = vmatprep.subr.mxu0 0.0
  %1684 = vmatpush1.msra.mxu0 0.0
  %1685 = vmatprep.subr.mxu0 0.0
  %1686 = vmatpush1.msra.mxu0 0.0
  %1687 = vmatprep.subr.mxu0 0.0
  %1688 = vmatpush1.msra.mxu0 0.0
  %1689 = vmatprep.subr.mxu0 0.0
  %1690 = vmatpush1.msra.mxu0 0.0
  %1691 = vmatprep.subr.mxu0 0.0
  %1692 = vmatpush1.msra.mxu0 0.0
  %1693 = vmatprep.mubr.f32.mxu0 0.0
  %1694 = vmatmul.mubr.f32.gmra.mrb[0].mxu0 %v1625
  %v1695 = vpop.f32.mrb[0].mxu0
  %v1696 = vadd.f32 %v1618, %v1695
  %v1697 = vpop.f32.mrb[0].mxu0
  %1698 = vmatprep.mubr.f32.mxu0 0.0
  %1699 = vmatmul.mubr.f32.gmra.mrb[0].mxu0 %v1627
  %v1700 = vpop.f32.mrb[0].mxu0
  %v1701 = vadd.f32 %v1618, %v1700
  %v1702 = vpop.f32.mrb[0].mxu0
  %1703 = vdwg.mxu0
  %v1704 = vlaneseq
  %v1705 = vshrl.u32 %v1704, 7
  %v1706 = vsub.s32 0, %v1705
  %v1707 = vrot.slane %v34, %v1706
  %vm1708 = vcmask 64512
  %v1710 = vsel %vm1708, %v1696, 0
  %v1713 = vsel %vm1708, %v1701, 0
  %1715 = vmatprep.subr.mxu0 0.0
  %1716 = vmatpush1.msra.mxu0 %v33
  %1717 = vmatprep.subr.mxu0 0.0
  %1718 = vmatpush1.msra.mxu0 0.0
  %1719 = vmatprep.subr.mxu0 0.0
  %1720 = vmatpush1.msra.mxu0 0.0
  %1721 = vmatprep.subr.mxu0 0.0
  %1722 = vmatpush1.msra.mxu0 0.0
  %1723 = vmatprep.subr.mxu0 0.0
  %1724 = vmatpush1.msra.mxu0 0.0
  %1725 = vmatprep.subr.mxu0 0.0
  %1726 = vmatpush1.msra.mxu0 0.0
  %1727 = vmatprep.subr.mxu0 0.0
  %1728 = vmatpush1.msra.mxu0 0.0
  %1729 = vmatprep.subr.mxu0 0.0
  %1730 = vmatpush1.msra.mxu0 0.0
  %1731 = vmatprep.subr.mxu0 0.0
  %1732 = vmatpush1.msra.mxu0 0.0
  %1733 = vmatprep.subr.mxu0 0.0
  %1734 = vmatpush1.msra.mxu0 0.0
  %1735 = vmatprep.subr.mxu0 0.0
  %1736 = vmatpush1.msra.mxu0 0.0
  %1737 = vmatprep.subr.mxu0 0.0
  %1738 = vmatpush1.msra.mxu0 0.0
  %1739 = vmatprep.subr.mxu0 0.0
  %1740 = vmatpush1.msra.mxu0 0.0
  %1741 = vmatprep.subr.mxu0 0.0
  %1742 = vmatpush1.msra.mxu0 0.0
  %1743 = vmatprep.subr.mxu0 0.0
  %1744 = vmatpush1.msra.mxu0 0.0
  %1745 = vmatprep.subr.mxu0 0.0
  %1746 = vmatpush1.msra.mxu0 0.0
  %1747 = vmatprep.subr.mxu0 0.0
  %1748 = vmatpush1.msra.mxu0 0.0
  %1749 = vmatprep.subr.mxu0 0.0
  %1750 = vmatpush1.msra.mxu0 0.0
  %1751 = vmatprep.subr.mxu0 0.0
  %1752 = vmatpush1.msra.mxu0 0.0
  %1753 = vmatprep.subr.mxu0 0.0
  %1754 = vmatpush1.msra.mxu0 0.0
  %1755 = vmatprep.subr.mxu0 0.0
  %1756 = vmatpush1.msra.mxu0 0.0
  %1757 = vmatprep.subr.mxu0 0.0
  %1758 = vmatpush1.msra.mxu0 0.0
  %1759 = vmatprep.subr.mxu0 0.0
  %1760 = vmatpush1.msra.mxu0 0.0
  %1761 = vmatprep.subr.mxu0 0.0
  %1762 = vmatpush1.msra.mxu0 0.0
  %1763 = vmatprep.subr.mxu0 0.0
  %1764 = vmatpush1.msra.mxu0 0.0
  %1765 = vmatprep.subr.mxu0 0.0
  %1766 = vmatpush1.msra.mxu0 0.0
  %1767 = vmatprep.subr.mxu0 0.0
  %1768 = vmatpush1.msra.mxu0 0.0
  %1769 = vmatprep.subr.mxu0 0.0
  %1770 = vmatpush1.msra.mxu0 0.0
  %1771 = vmatprep.subr.mxu0 0.0
  %1772 = vmatpush1.msra.mxu0 0.0
  %1773 = vmatprep.subr.mxu0 0.0
  %1774 = vmatpush1.msra.mxu0 0.0
  %1775 = vmatprep.subr.mxu0 0.0
  %1776 = vmatpush1.msra.mxu0 0.0
  %1777 = vmatprep.subr.mxu0 0.0
  %1778 = vmatpush1.msra.mxu0 0.0
  %1779 = vmatprep.mubr.f32.mxu0 0.0
  %1780 = vmatmul.mubr.f32.gmra.mrb[0].mxu0 %v1710
  %v1781 = vpop.f32.mrb[0].mxu0
  %v1782 = vadd.f32 %v1707, %v1781
  %v1783 = vpop.f32.mrb[0].mxu0
  %1784 = vmatprep.mubr.f32.mxu0 0.0
  %1785 = vmatmul.mubr.f32.gmra.mrb[0].mxu0 %v1713
  %v1786 = vpop.f32.mrb[0].mxu0
  %v1787 = vadd.f32 %v1707, %v1786
  %v1788 = vpop.f32.mrb[0].mxu0
  %1789 = vdwg.mxu0
  %v1790 = vlaneseq
  %v1791 = vshrl.u32 %v1790, 7
  %v1792 = vsub.s32 0, %v1791
  %v1793 = vrot.slane %v31, %v1792
  %1794 = vmatprep.subr.mxu0 0.0
  %1795 = vmatpush1.msra.mxu0 %v30
  %1796 = vmatprep.subr.mxu0 0.0
  %1797 = vmatpush1.msra.mxu0 0.0
  %1798 = vmatprep.subr.mxu0 0.0
  %1799 = vmatpush1.msra.mxu0 0.0
  %1800 = vmatprep.subr.mxu0 0.0
  %1801 = vmatpush1.msra.mxu0 0.0
  %1802 = vmatprep.subr.mxu0 0.0
  %1803 = vmatpush1.msra.mxu0 0.0
  %1804 = vmatprep.subr.mxu0 0.0
  %1805 = vmatpush1.msra.mxu0 0.0
  %1806 = vmatprep.subr.mxu0 0.0
  %1807 = vmatpush1.msra.mxu0 0.0
  %1808 = vmatprep.subr.mxu0 0.0
  %1809 = vmatpush1.msra.mxu0 0.0
  %1810 = vmatprep.subr.mxu0 0.0
  %1811 = vmatpush1.msra.mxu0 0.0
  %1812 = vmatprep.subr.mxu0 0.0
  %1813 = vmatpush1.msra.mxu0 0.0
  %1814 = vmatprep.subr.mxu0 0.0
  %1815 = vmatpush1.msra.mxu0 0.0
  %1816 = vmatprep.subr.mxu0 0.0
  %1817 = vmatpush1.msra.mxu0 0.0
  %1818 = vmatprep.subr.mxu0 0.0
  %1819 = vmatpush1.msra.mxu0 0.0
  %1820 = vmatprep.subr.mxu0 0.0
  %1821 = vmatpush1.msra.mxu0 0.0
  %1822 = vmatprep.subr.mxu0 0.0
  %1823 = vmatpush1.msra.mxu0 0.0
  %1824 = vmatprep.subr.mxu0 0.0
  %1825 = vmatpush1.msra.mxu0 0.0
  %1826 = vmatprep.subr.mxu0 0.0
  %1827 = vmatpush1.msra.mxu0 0.0
  %1828 = vmatprep.subr.mxu0 0.0
  %1829 = vmatpush1.msra.mxu0 0.0
  %1830 = vmatprep.subr.mxu0 0.0
  %1831 = vmatpush1.msra.mxu0 0.0
  %1832 = vmatprep.subr.mxu0 0.0
  %1833 = vmatpush1.msra.mxu0 0.0
  %1834 = vmatprep.subr.mxu0 0.0
  %1835 = vmatpush1.msra.mxu0 0.0
  %1836 = vmatprep.subr.mxu0 0.0
  %1837 = vmatpush1.msra.mxu0 0.0
  %1838 = vmatprep.subr.mxu0 0.0
  %1839 = vmatpush1.msra.mxu0 0.0
  %1840 = vmatprep.subr.mxu0 0.0
  %1841 = vmatpush1.msra.mxu0 0.0
  %1842 = vmatprep.subr.mxu0 0.0
  %1843 = vmatpush1.msra.mxu0 0.0
  %1844 = vmatprep.subr.mxu0 0.0
  %1845 = vmatpush1.msra.mxu0 0.0
  %1846 = vmatprep.subr.mxu0 0.0
  %1847 = vmatpush1.msra.mxu0 0.0
  %1848 = vmatprep.subr.mxu0 0.0
  %1849 = vmatpush1.msra.mxu0 0.0
  %1850 = vmatprep.subr.mxu0 0.0
  %1851 = vmatpush1.msra.mxu0 0.0
  %1852 = vmatprep.subr.mxu0 0.0
  %1853 = vmatpush1.msra.mxu0 0.0
  %1854 = vmatprep.subr.mxu0 0.0
  %1855 = vmatpush1.msra.mxu0 0.0
  %1856 = vmatprep.subr.mxu0 0.0
  %1857 = vmatpush1.msra.mxu0 0.0
  %1858 = vmatprep.mubr.f32.mxu0 0.0
  %1859 = vmatmul.mubr.f32.gmra.mrb[0].mxu0 %v1710
  %v1860 = vpop.f32.mrb[0].mxu0
  %v1861 = vadd.f32 %v1793, %v1860
  %v1862 = vpop.f32.mrb[0].mxu0
  %1863 = vdwg.mxu0
  %v1864 = vmul.f32 %v1861, 1.442695
  %v1865 = vpow.pop %v1864
  %v1866 = vmul.f32 %v1865, 0.2
  %1868 = vrot.lane.b32.xlu0 %v60, 4
  %v1869 = vpop.permute.xlu0 %1868
  %v1871 = vmul.f32 %v1866, %v1869
  %1873 = vrot.lane.b32.xlu0 %v1871, 124
  %v1874 = vpop.permute.xlu0 %1873
  %v1876 = vadd.f32 %v1861, %v1874
  %v1877 = vlaneseq
  %v1878 = vshrl.u32 %v1877, 7
  %v1879 = vsub.s32 0, %v1878
  %v1880 = vrot.slane %v44, %v1879
  %v1882 = vsel %vm66, %v1876, 0
  %v1885 = vsel %vm73, %v43, 0
  %1887 = vmatprep.subr.mxu0 0.0
  %1888 = vmatpush1.msra.mxu0 %v1885
  %1889 = vmatprep.subr.mxu0 0.0
  %1890 = vmatpush1.msra.mxu0 0.0
  %1891 = vmatprep.subr.mxu0 0.0
  %1892 = vmatpush1.msra.mxu0 0.0
  %1893 = vmatprep.subr.mxu0 0.0
  %1894 = vmatpush1.msra.mxu0 0.0
  %1895 = vmatprep.subr.mxu0 0.0
  %1896 = vmatpush1.msra.mxu0 0.0
  %1897 = vmatprep.subr.mxu0 0.0
  %1898 = vmatpush1.msra.mxu0 0.0
  %1899 = vmatprep.subr.mxu0 0.0
  %1900 = vmatpush1.msra.mxu0 0.0
  %1901 = vmatprep.subr.mxu0 0.0
  %1902 = vmatpush1.msra.mxu0 0.0
  %1903 = vmatprep.subr.mxu0 0.0
  %1904 = vmatpush1.msra.mxu0 0.0
  %1905 = vmatprep.subr.mxu0 0.0
  %1906 = vmatpush1.msra.mxu0 0.0
  %1907 = vmatprep.subr.mxu0 0.0
  %1908 = vmatpush1.msra.mxu0 0.0
  %1909 = vmatprep.subr.mxu0 0.0
  %1910 = vmatpush1.msra.mxu0 0.0
  %1911 = vmatprep.subr.mxu0 0.0
  %1912 = vmatpush1.msra.mxu0 0.0
  %1913 = vmatprep.subr.mxu0 0.0
  %1914 = vmatpush1.msra.mxu0 0.0
  %1915 = vmatprep.subr.mxu0 0.0
  %1916 = vmatpush1.msra.mxu0 0.0
  %1917 = vmatprep.subr.mxu0 0.0
  %1918 = vmatpush1.msra.mxu0 0.0
  %1919 = vmatprep.subr.mxu0 0.0
  %1920 = vmatpush1.msra.mxu0 0.0
  %1921 = vmatprep.subr.mxu0 0.0
  %1922 = vmatpush1.msra.mxu0 0.0
  %1923 = vmatprep.subr.mxu0 0.0
  %1924 = vmatpush1.msra.mxu0 0.0
  %1925 = vmatprep.subr.mxu0 0.0
  %1926 = vmatpush1.msra.mxu0 0.0
  %1927 = vmatprep.subr.mxu0 0.0
  %1928 = vmatpush1.msra.mxu0 0.0
  %1929 = vmatprep.subr.mxu0 0.0
  %1930 = vmatpush1.msra.mxu0 0.0
  %1931 = vmatprep.subr.mxu0 0.0
  %1932 = vmatpush1.msra.mxu0 0.0
  %1933 = vmatprep.subr.mxu0 0.0
  %1934 = vmatpush1.msra.mxu0 0.0
  %1935 = vmatprep.subr.mxu0 0.0
  %1936 = vmatpush1.msra.mxu0 0.0
  %1937 = vmatprep.subr.mxu0 0.0
  %1938 = vmatpush1.msra.mxu0 0.0
  %1939 = vmatprep.subr.mxu0 0.0
  %1940 = vmatpush1.msra.mxu0 0.0
  %1941 = vmatprep.subr.mxu0 0.0
  %1942 = vmatpush1.msra.mxu0 0.0
  %1943 = vmatprep.subr.mxu0 0.0
  %1944 = vmatpush1.msra.mxu0 0.0
  %1945 = vmatprep.subr.mxu0 0.0
  %1946 = vmatpush1.msra.mxu0 0.0
  %1947 = vmatprep.subr.mxu0 0.0
  %1948 = vmatpush1.msra.mxu0 0.0
  %1949 = vmatprep.subr.mxu0 0.0
  %1950 = vmatpush1.msra.mxu0 0.0
  %1951 = vmatprep.mubr.f32.mxu0 0.0
  %1952 = vmatmul.mubr.f32.gmra.mrb[0].mxu0 %v1882
  %v1953 = vpop.f32.mrb[0].mxu0
  %v1954 = vadd.f32 %v1880, %v1953
  %v1955 = vpop.f32.mrb[0].mxu0
  %1956 = vdwg.mxu0
  %v1957 = vsub.f32 %v58, %v1954
  %v1958 = vmul.f32 %v1957, %v1957
  %v1959 = vsub.f32 0.0, %v1958
  %v1960 = vmul.f32 %v1959, 200.0
  %v1961 = vsub.f32 %v1960, -2.0767937
  %vm1962 = vcmask 25600
  %v1963 = vsel %vm1962, %v1961, 0.0
  %1964 = vadd.xlane.f32.xlu0 %v1963
  %v1965 = vpop.xlane.xlu0 %1964
  %v1966 = vmul.f32 %v1954, %v1954
  %v1967 = vsel %vm1962, %v1966, 0.0
  %1968 = vadd.xlane.f32.xlu0 %v1967
  %v1969 = vpop.xlane.xlu0 %1968
  %v1970 = vrsqrt.pop %v1969
  %v1971 = vmul.f32 %v1969, %v1970
  %vm1972 = vcmp.eq.f32.partialorder %v1969, inf
  %v1973 = vsel %vm1972, %v1969, %v1971
  %vm1974 = vcmp.eq.f32.partialorder %v1969, 0.0
  %v1975 = vand.u32 %v1969, 2147483648
  %v1976 = vsel %vm1974, %v1975, %v1973
  %v1977 = vadd.f32 %v1965, 0.0
  %v1978 = vadd.f32 %v1976, 0.0
  %v1980 = vrot.slane %v1782, 2
  %v1983 = vsel %vm73, %v32, 0
  %1985 = vmatprep.subr.mxu0 0.0
  %1986 = vmatpush1.msra.mxu0 %v1983
  %1987 = vmatprep.subr.mxu0 0.0
  %1988 = vmatpush1.msra.mxu0 0.0
  %1989 = vmatprep.subr.mxu0 0.0
  %1990 = vmatpush1.msra.mxu0 0.0
  %1991 = vmatprep.subr.mxu0 0.0
  %1992 = vmatpush1.msra.mxu0 0.0
  %1993 = vmatprep.subr.mxu0 0.0
  %1994 = vmatpush1.msra.mxu0 0.0
  %1995 = vmatprep.subr.mxu0 0.0
  %1996 = vmatpush1.msra.mxu0 0.0
  %1997 = vmatprep.subr.mxu0 0.0
  %1998 = vmatpush1.msra.mxu0 0.0
  %1999 = vmatprep.subr.mxu0 0.0
  %2000 = vmatpush1.msra.mxu0 0.0
  %2001 = vmatprep.subr.mxu0 0.0
  %2002 = vmatpush1.msra.mxu0 0.0
  %2003 = vmatprep.subr.mxu0 0.0
  %2004 = vmatpush1.msra.mxu0 0.0
  %2005 = vmatprep.subr.mxu0 0.0
  %2006 = vmatpush1.msra.mxu0 0.0
  %2007 = vmatprep.subr.mxu0 0.0
  %2008 = vmatpush1.msra.mxu0 0.0
  %2009 = vmatprep.subr.mxu0 0.0
  %2010 = vmatpush1.msra.mxu0 0.0
  %2011 = vmatprep.subr.mxu0 0.0
  %2012 = vmatpush1.msra.mxu0 0.0
  %2013 = vmatprep.subr.mxu0 0.0
  %2014 = vmatpush1.msra.mxu0 0.0
  %2015 = vmatprep.subr.mxu0 0.0
  %2016 = vmatpush1.msra.mxu0 0.0
  %2017 = vmatprep.subr.mxu0 0.0
  %2018 = vmatpush1.msra.mxu0 0.0
  %2019 = vmatprep.subr.mxu0 0.0
  %2020 = vmatpush1.msra.mxu0 0.0
  %2021 = vmatprep.subr.mxu0 0.0
  %2022 = vmatpush1.msra.mxu0 0.0
  %2023 = vmatprep.subr.mxu0 0.0
  %2024 = vmatpush1.msra.mxu0 0.0
  %2025 = vmatprep.subr.mxu0 0.0
  %2026 = vmatpush1.msra.mxu0 0.0
  %2027 = vmatprep.subr.mxu0 0.0
  %2028 = vmatpush1.msra.mxu0 0.0
  %2029 = vmatprep.subr.mxu0 0.0
  %2030 = vmatpush1.msra.mxu0 0.0
  %2031 = vmatprep.subr.mxu0 0.0
  %2032 = vmatpush1.msra.mxu0 0.0
  %2033 = vmatprep.subr.mxu0 0.0
  %2034 = vmatpush1.msra.mxu0 0.0
  %2035 = vmatprep.subr.mxu0 0.0
  %2036 = vmatpush1.msra.mxu0 0.0
  %2037 = vmatprep.subr.mxu0 0.0
  %2038 = vmatpush1.msra.mxu0 0.0
  %2039 = vmatprep.subr.mxu0 0.0
  %2040 = vmatpush1.msra.mxu0 0.0
  %2041 = vmatprep.subr.mxu0 0.0
  %2042 = vmatpush1.msra.mxu0 0.0
  %2043 = vmatprep.subr.mxu0 0.0
  %2044 = vmatpush1.msra.mxu0 0.0
  %2045 = vmatprep.subr.mxu0 0.0
  %2046 = vmatpush1.msra.mxu0 0.0
  %2047 = vmatprep.subr.mxu0 0.0
  %2048 = vmatpush1.msra.mxu0 0.0
  %2049 = vmatprep.mubr.f32.mxu0 0.0
  %2050 = vmatmul.mubr.f32.gmra.mrb[0].mxu0 %v1882
  %v2051 = vpop.f32.mrb[0].mxu0
  %v2052 = vadd.f32 %v1980, %v2051
  %v2053 = vpop.f32.mrb[0].mxu0
  %2054 = vdwg.mxu0
  %v2055 = vmax.f32 %v2052, 0.0
  %vm2056 = vcmp.ne.f32.partialorder %v2052, %v2052
  %v2057 = vadd.f32 %v2052, 0.0
  %v2058 = vand.u32 2147483647, %v2052
  %v2059 = vsub.f32 0.0, %v2058
  %v2060 = vmul.f32 %v2059, 1.442695
  %v2061 = vpow.pop %v2060
  %v2062 = vadd.f32 %v2061, 1.0
  %v2063 = vlog2.pop %v2062
  %v2064 = vmul.f32 %v2063, 0.6931472
  %v2065 = vmul.f32 -0.5, %v2061
  %v2066 = vadd.f32 %v2065, 1.0
  %v2067 = vmul.f32 %v2066, %v2061
  %v2068 = vand.u32 2147483647, %v2061
  %vm2069 = vcmp.lt.f32.partialorder %v2068, 0.0004427343
  %v2070 = vsel %vm2069, %v2067, %v2064
  %v2071 = vadd.f32 %v2055, %v2070
  %v2072 = vsel %vm2056, %v2057, %v2071
  %v2073 = vlaneseq
  %v2074 = vshrl.u32 %v2073, 7
  %v2075 = vsub.s32 0, %v2074
  %v2076 = vrot.slane %v37, %v2075
  %v2078 = vsel %vm234, %v2072, 0
  %2080 = vmatprep.subr.mxu0 0.0
  %2081 = vmatpush1.msra.mxu0 %v35
  %2082 = vmatprep.subr.mxu0 0.0
  %2083 = vmatpush1.msra.mxu0 %v36
  %2084 = vmatprep.subr.mxu0 0.0
  %2085 = vmatpush1.msra.mxu0 0.0
  %2086 = vmatprep.subr.mxu0 0.0
  %2087 = vmatpush1.msra.mxu0 0.0
  %2088 = vmatprep.subr.mxu0 0.0
  %2089 = vmatpush1.msra.mxu0 0.0
  %2090 = vmatprep.subr.mxu0 0.0
  %2091 = vmatpush1.msra.mxu0 0.0
  %2092 = vmatprep.subr.mxu0 0.0
  %2093 = vmatpush1.msra.mxu0 0.0
  %2094 = vmatprep.subr.mxu0 0.0
  %2095 = vmatpush1.msra.mxu0 0.0
  %2096 = vmatprep.subr.mxu0 0.0
  %2097 = vmatpush1.msra.mxu0 0.0
  %2098 = vmatprep.subr.mxu0 0.0
  %2099 = vmatpush1.msra.mxu0 0.0
  %2100 = vmatprep.subr.mxu0 0.0
  %2101 = vmatpush1.msra.mxu0 0.0
  %2102 = vmatprep.subr.mxu0 0.0
  %2103 = vmatpush1.msra.mxu0 0.0
  %2104 = vmatprep.subr.mxu0 0.0
  %2105 = vmatpush1.msra.mxu0 0.0
  %2106 = vmatprep.subr.mxu0 0.0
  %2107 = vmatpush1.msra.mxu0 0.0
  %2108 = vmatprep.subr.mxu0 0.0
  %2109 = vmatpush1.msra.mxu0 0.0
  %2110 = vmatprep.subr.mxu0 0.0
  %2111 = vmatpush1.msra.mxu0 0.0
  %2112 = vmatprep.subr.mxu0 0.0
  %2113 = vmatpush1.msra.mxu0 0.0
  %2114 = vmatprep.subr.mxu0 0.0
  %2115 = vmatpush1.msra.mxu0 0.0
  %2116 = vmatprep.subr.mxu0 0.0
  %2117 = vmatpush1.msra.mxu0 0.0
  %2118 = vmatprep.subr.mxu0 0.0
  %2119 = vmatpush1.msra.mxu0 0.0
  %2120 = vmatprep.subr.mxu0 0.0
  %2121 = vmatpush1.msra.mxu0 0.0
  %2122 = vmatprep.subr.mxu0 0.0
  %2123 = vmatpush1.msra.mxu0 0.0
  %2124 = vmatprep.subr.mxu0 0.0
  %2125 = vmatpush1.msra.mxu0 0.0
  %2126 = vmatprep.subr.mxu0 0.0
  %2127 = vmatpush1.msra.mxu0 0.0
  %2128 = vmatprep.subr.mxu0 0.0
  %2129 = vmatpush1.msra.mxu0 0.0
  %2130 = vmatprep.subr.mxu0 0.0
  %2131 = vmatpush1.msra.mxu0 0.0
  %2132 = vmatprep.subr.mxu0 0.0
  %2133 = vmatpush1.msra.mxu0 0.0
  %2134 = vmatprep.subr.mxu0 0.0
  %2135 = vmatpush1.msra.mxu0 0.0
  %2136 = vmatprep.subr.mxu0 0.0
  %2137 = vmatpush1.msra.mxu0 0.0
  %2138 = vmatprep.subr.mxu0 0.0
  %2139 = vmatpush1.msra.mxu0 0.0
  %2140 = vmatprep.subr.mxu0 0.0
  %2141 = vmatpush1.msra.mxu0 0.0
  %2142 = vmatprep.subr.mxu0 0.0
  %2143 = vmatpush1.msra.mxu0 0.0
  %2144 = vmatprep.mubr.f32.mxu0 0.0
  %2145 = vmatmul.mubr.f32.gmra.mrb[0].mxu0 %v2078
  %v2146 = vpop.f32.mrb[0].mxu0
  %v2147 = vadd.f32 %v2076, %v2146
  %v2148 = vpop.f32.mrb[0].mxu0
  %2149 = vdwg.mxu0
  %v2150 = vmax.f32 %v2147, 0.0
  %vm2151 = vcmp.ne.f32.partialorder %v2147, %v2147
  %v2152 = vadd.f32 %v2147, 0.0
  %v2153 = vand.u32 2147483647, %v2147
  %v2154 = vsub.f32 0.0, %v2153
  %v2155 = vmul.f32 %v2154, 1.442695
  %v2156 = vpow.pop %v2155
  %v2157 = vadd.f32 %v2156, 1.0
  %v2158 = vlog2.pop %v2157
  %v2159 = vmul.f32 %v2158, 0.6931472
  %v2160 = vmul.f32 -0.5, %v2156
  %v2161 = vadd.f32 %v2160, 1.0
  %v2162 = vmul.f32 %v2161, %v2156
  %v2163 = vand.u32 2147483647, %v2156
  %vm2164 = vcmp.lt.f32.partialorder %v2163, 0.0004427343
  %v2165 = vsel %vm2164, %v2162, %v2159
  %v2166 = vadd.f32 %v2150, %v2165
  %v2167 = vsel %vm2151, %v2152, %v2166
  %v2168 = vlaneseq
  %v2169 = vshrl.u32 %v2168, 7
  %v2170 = vsub.s32 0, %v2169
  %v2171 = vrot.slane %v40, %v2170
  %v2173 = vsel %vm234, %v2167, 0
  %2175 = vmatprep.subr.mxu0 0.0
  %2176 = vmatpush1.msra.mxu0 %v38
  %2177 = vmatprep.subr.mxu0 0.0
  %2178 = vmatpush1.msra.mxu0 %v39
  %2179 = vmatprep.subr.mxu0 0.0
  %2180 = vmatpush1.msra.mxu0 0.0
  %2181 = vmatprep.subr.mxu0 0.0
  %2182 = vmatpush1.msra.mxu0 0.0
  %2183 = vmatprep.subr.mxu0 0.0
  %2184 = vmatpush1.msra.mxu0 0.0
  %2185 = vmatprep.subr.mxu0 0.0
  %2186 = vmatpush1.msra.mxu0 0.0
  %2187 = vmatprep.subr.mxu0 0.0
  %2188 = vmatpush1.msra.mxu0 0.0
  %2189 = vmatprep.subr.mxu0 0.0
  %2190 = vmatpush1.msra.mxu0 0.0
  %2191 = vmatprep.subr.mxu0 0.0
  %2192 = vmatpush1.msra.mxu0 0.0
  %2193 = vmatprep.subr.mxu0 0.0
  %2194 = vmatpush1.msra.mxu0 0.0
  %2195 = vmatprep.subr.mxu0 0.0
  %2196 = vmatpush1.msra.mxu0 0.0
  %2197 = vmatprep.subr.mxu0 0.0
  %2198 = vmatpush1.msra.mxu0 0.0
  %2199 = vmatprep.subr.mxu0 0.0
  %2200 = vmatpush1.msra.mxu0 0.0
  %2201 = vmatprep.subr.mxu0 0.0
  %2202 = vmatpush1.msra.mxu0 0.0
  %2203 = vmatprep.subr.mxu0 0.0
  %2204 = vmatpush1.msra.mxu0 0.0
  %2205 = vmatprep.subr.mxu0 0.0
  %2206 = vmatpush1.msra.mxu0 0.0
  %2207 = vmatprep.subr.mxu0 0.0
  %2208 = vmatpush1.msra.mxu0 0.0
  %2209 = vmatprep.subr.mxu0 0.0
  %2210 = vmatpush1.msra.mxu0 0.0
  %2211 = vmatprep.subr.mxu0 0.0
  %2212 = vmatpush1.msra.mxu0 0.0
  %2213 = vmatprep.subr.mxu0 0.0
  %2214 = vmatpush1.msra.mxu0 0.0
  %2215 = vmatprep.subr.mxu0 0.0
  %2216 = vmatpush1.msra.mxu0 0.0
  %2217 = vmatprep.subr.mxu0 0.0
  %2218 = vmatpush1.msra.mxu0 0.0
  %2219 = vmatprep.subr.mxu0 0.0
  %2220 = vmatpush1.msra.mxu0 0.0
  %2221 = vmatprep.subr.mxu0 0.0
  %2222 = vmatpush1.msra.mxu0 0.0
  %2223 = vmatprep.subr.mxu0 0.0
  %2224 = vmatpush1.msra.mxu0 0.0
  %2225 = vmatprep.subr.mxu0 0.0
  %2226 = vmatpush1.msra.mxu0 0.0
  %2227 = vmatprep.subr.mxu0 0.0
  %2228 = vmatpush1.msra.mxu0 0.0
  %2229 = vmatprep.subr.mxu0 0.0
  %2230 = vmatpush1.msra.mxu0 0.0
  %2231 = vmatprep.subr.mxu0 0.0
  %2232 = vmatpush1.msra.mxu0 0.0
  %2233 = vmatprep.subr.mxu0 0.0
  %2234 = vmatpush1.msra.mxu0 0.0
  %2235 = vmatprep.subr.mxu0 0.0
  %2236 = vmatpush1.msra.mxu0 0.0
  %2237 = vmatprep.subr.mxu0 0.0
  %2238 = vmatpush1.msra.mxu0 0.0
  %2239 = vmatprep.mubr.f32.mxu0 0.0
  %2240 = vmatmul.mubr.f32.gmra.mrb[0].mxu0 %v2173
  %v2241 = vpop.f32.mrb[0].mxu0
  %v2242 = vadd.f32 %v2171, %v2241
  %v2243 = vpop.f32.mrb[0].mxu0
  %2244 = vdwg.mxu0
  %v2245 = vlaneseq
  %v2246 = vshrl.u32 %v2245, 7
  %v2247 = vsub.s32 0, %v2246
  %v2248 = vrot.slane %v42, %v2247
  %v2250 = vsel %vm73, %v41, 0
  %2252 = vmatprep.subr.mxu0 0.0
  %2253 = vmatpush1.msra.mxu0 %v2250
  %2254 = vmatprep.subr.mxu0 0.0
  %2255 = vmatpush1.msra.mxu0 0.0
  %2256 = vmatprep.subr.mxu0 0.0
  %2257 = vmatpush1.msra.mxu0 0.0
  %2258 = vmatprep.subr.mxu0 0.0
  %2259 = vmatpush1.msra.mxu0 0.0
  %2260 = vmatprep.subr.mxu0 0.0
  %2261 = vmatpush1.msra.mxu0 0.0
  %2262 = vmatprep.subr.mxu0 0.0
  %2263 = vmatpush1.msra.mxu0 0.0
  %2264 = vmatprep.subr.mxu0 0.0
  %2265 = vmatpush1.msra.mxu0 0.0
  %2266 = vmatprep.subr.mxu0 0.0
  %2267 = vmatpush1.msra.mxu0 0.0
  %2268 = vmatprep.subr.mxu0 0.0
  %2269 = vmatpush1.msra.mxu0 0.0
  %2270 = vmatprep.subr.mxu0 0.0
  %2271 = vmatpush1.msra.mxu0 0.0
  %2272 = vmatprep.subr.mxu0 0.0
  %2273 = vmatpush1.msra.mxu0 0.0
  %2274 = vmatprep.subr.mxu0 0.0
  %2275 = vmatpush1.msra.mxu0 0.0
  %2276 = vmatprep.subr.mxu0 0.0
  %2277 = vmatpush1.msra.mxu0 0.0
  %2278 = vmatprep.subr.mxu0 0.0
  %2279 = vmatpush1.msra.mxu0 0.0
  %2280 = vmatprep.subr.mxu0 0.0
  %2281 = vmatpush1.msra.mxu0 0.0
  %2282 = vmatprep.subr.mxu0 0.0
  %2283 = vmatpush1.msra.mxu0 0.0
  %2284 = vmatprep.subr.mxu0 0.0
  %2285 = vmatpush1.msra.mxu0 0.0
  %2286 = vmatprep.subr.mxu0 0.0
  %2287 = vmatpush1.msra.mxu0 0.0
  %2288 = vmatprep.subr.mxu0 0.0
  %2289 = vmatpush1.msra.mxu0 0.0
  %2290 = vmatprep.subr.mxu0 0.0
  %2291 = vmatpush1.msra.mxu0 0.0
  %2292 = vmatprep.subr.mxu0 0.0
  %2293 = vmatpush1.msra.mxu0 0.0
  %2294 = vmatprep.subr.mxu0 0.0
  %2295 = vmatpush1.msra.mxu0 0.0
  %2296 = vmatprep.subr.mxu0 0.0
  %2297 = vmatpush1.msra.mxu0 0.0
  %2298 = vmatprep.subr.mxu0 0.0
  %2299 = vmatpush1.msra.mxu0 0.0
  %2300 = vmatprep.subr.mxu0 0.0
  %2301 = vmatpush1.msra.mxu0 0.0
  %2302 = vmatprep.subr.mxu0 0.0
  %2303 = vmatpush1.msra.mxu0 0.0
  %2304 = vmatprep.subr.mxu0 0.0
  %2305 = vmatpush1.msra.mxu0 0.0
  %2306 = vmatprep.subr.mxu0 0.0
  %2307 = vmatpush1.msra.mxu0 0.0
  %2308 = vmatprep.subr.mxu0 0.0
  %2309 = vmatpush1.msra.mxu0 0.0
  %2310 = vmatprep.subr.mxu0 0.0
  %2311 = vmatpush1.msra.mxu0 0.0
  %2312 = vmatprep.subr.mxu0 0.0
  %2313 = vmatpush1.msra.mxu0 0.0
  %2314 = vmatprep.subr.mxu0 0.0
  %2315 = vmatpush1.msra.mxu0 0.0
  %2316 = vmatprep.mubr.f32.mxu0 0.0
  %2317 = vmatmul.mubr.f32.gmra.mrb[0].mxu0 %v1882
  %v2318 = vpop.f32.mrb[0].mxu0
  %v2319 = vadd.f32 %v2248, %v2318
  %v2320 = vpop.f32.mrb[0].mxu0
  %2321 = vdwg.mxu0
  %v2322 = vlaneseq
  %v2323 = vshrl.u32 %v2322, 7
  %v2324 = vsub.s32 0, %v2323
  %v2325 = vrot.slane %v46, %v2324
  %v2327 = vsel %vm73, %v45, 0
  %2329 = vmatprep.subr.mxu0 0.0
  %2330 = vmatpush1.msra.mxu0 %v2327
  %2331 = vmatprep.subr.mxu0 0.0
  %2332 = vmatpush1.msra.mxu0 0.0
  %2333 = vmatprep.subr.mxu0 0.0
  %2334 = vmatpush1.msra.mxu0 0.0
  %2335 = vmatprep.subr.mxu0 0.0
  %2336 = vmatpush1.msra.mxu0 0.0
  %2337 = vmatprep.subr.mxu0 0.0
  %2338 = vmatpush1.msra.mxu0 0.0
  %2339 = vmatprep.subr.mxu0 0.0
  %2340 = vmatpush1.msra.mxu0 0.0
  %2341 = vmatprep.subr.mxu0 0.0
  %2342 = vmatpush1.msra.mxu0 0.0
  %2343 = vmatprep.subr.mxu0 0.0
  %2344 = vmatpush1.msra.mxu0 0.0
  %2345 = vmatprep.subr.mxu0 0.0
  %2346 = vmatpush1.msra.mxu0 0.0
  %2347 = vmatprep.subr.mxu0 0.0
  %2348 = vmatpush1.msra.mxu0 0.0
  %2349 = vmatprep.subr.mxu0 0.0
  %2350 = vmatpush1.msra.mxu0 0.0
  %2351 = vmatprep.subr.mxu0 0.0
  %2352 = vmatpush1.msra.mxu0 0.0
  %2353 = vmatprep.subr.mxu0 0.0
  %2354 = vmatpush1.msra.mxu0 0.0
  %2355 = vmatprep.subr.mxu0 0.0
  %2356 = vmatpush1.msra.mxu0 0.0
  %2357 = vmatprep.subr.mxu0 0.0
  %2358 = vmatpush1.msra.mxu0 0.0
  %2359 = vmatprep.subr.mxu0 0.0
  %2360 = vmatpush1.msra.mxu0 0.0
  %2361 = vmatprep.subr.mxu0 0.0
  %2362 = vmatpush1.msra.mxu0 0.0
  %2363 = vmatprep.subr.mxu0 0.0
  %2364 = vmatpush1.msra.mxu0 0.0
  %2365 = vmatprep.subr.mxu0 0.0
  %2366 = vmatpush1.msra.mxu0 0.0
  %2367 = vmatprep.subr.mxu0 0.0
  %2368 = vmatpush1.msra.mxu0 0.0
  %2369 = vmatprep.subr.mxu0 0.0
  %2370 = vmatpush1.msra.mxu0 0.0
  %2371 = vmatprep.subr.mxu0 0.0
  %2372 = vmatpush1.msra.mxu0 0.0
  %2373 = vmatprep.subr.mxu0 0.0
  %2374 = vmatpush1.msra.mxu0 0.0
  %2375 = vmatprep.subr.mxu0 0.0
  %2376 = vmatpush1.msra.mxu0 0.0
  %2377 = vmatprep.subr.mxu0 0.0
  %2378 = vmatpush1.msra.mxu0 0.0
  %2379 = vmatprep.subr.mxu0 0.0
  %2380 = vmatpush1.msra.mxu0 0.0
  %2381 = vmatprep.subr.mxu0 0.0
  %2382 = vmatpush1.msra.mxu0 0.0
  %2383 = vmatprep.subr.mxu0 0.0
  %2384 = vmatpush1.msra.mxu0 0.0
  %2385 = vmatprep.subr.mxu0 0.0
  %2386 = vmatpush1.msra.mxu0 0.0
  %2387 = vmatprep.subr.mxu0 0.0
  %2388 = vmatpush1.msra.mxu0 0.0
  %2389 = vmatprep.subr.mxu0 0.0
  %2390 = vmatpush1.msra.mxu0 0.0
  %2391 = vmatprep.subr.mxu0 0.0
  %2392 = vmatpush1.msra.mxu0 0.0
  %2393 = vmatprep.mubr.f32.mxu0 0.0
  %2394 = vmatmul.mubr.f32.gmra.mrb[0].mxu0 %v1882
  %v2395 = vpop.f32.mrb[0].mxu0
  %v2396 = vadd.f32 %v2325, %v2395
  %v2397 = vpop.f32.mrb[0].mxu0
  %2398 = vdwg.mxu0
  %v2399 = vmax.f32 %v2396, 0.0
  %vm2400 = vcmp.ne.f32.partialorder %v2396, %v2396
  %v2401 = vadd.f32 %v2396, 0.0
  %v2402 = vand.u32 2147483647, %v2396
  %v2403 = vsub.f32 0.0, %v2402
  %v2404 = vmul.f32 %v2403, 1.442695
  %v2405 = vpow.pop %v2404
  %v2406 = vadd.f32 %v2405, 1.0
  %v2407 = vlog2.pop %v2406
  %v2408 = vmul.f32 %v2407, 0.6931472
  %v2409 = vmul.f32 -0.5, %v2405
  %v2410 = vadd.f32 %v2409, 1.0
  %v2411 = vmul.f32 %v2410, %v2405
  %v2412 = vand.u32 2147483647, %v2405
  %vm2413 = vcmp.lt.f32.partialorder %v2412, 0.0004427343
  %v2414 = vsel %vm2413, %v2411, %v2408
  %v2415 = vadd.f32 %v2399, %v2414
  %v2416 = vsel %vm2400, %v2401, %v2415
  %v2417 = vlaneseq
  %v2418 = vshrl.u32 %v2417, 7
  %v2419 = vsub.s32 0, %v2418
  %v2420 = vrot.slane %v55, %v2419
  %vm2421 = vcmask 523264
  %v2423 = vsel %vm2421, %v2416, 0
  %2425 = vmatprep.subr.mxu0 0.0
  %2426 = vmatpush1.msra.mxu0 %v47
  %2427 = vmatprep.subr.mxu0 0.0
  %2428 = vmatpush1.msra.mxu0 %v48
  %2429 = vmatprep.subr.mxu0 0.0
  %2430 = vmatpush1.msra.mxu0 %v49
  %2431 = vmatprep.subr.mxu0 0.0
  %2432 = vmatpush1.msra.mxu0 %v50
  %2433 = vmatprep.subr.mxu0 0.0
  %2434 = vmatpush1.msra.mxu0 %v51
  %2435 = vmatprep.subr.mxu0 0.0
  %2436 = vmatpush1.msra.mxu0 %v52
  %2437 = vmatprep.subr.mxu0 0.0
  %2438 = vmatpush1.msra.mxu0 %v53
  %2439 = vmatprep.subr.mxu0 0.0
  %2440 = vmatpush1.msra.mxu0 %v54
  %2441 = vmatprep.subr.mxu0 0.0
  %2442 = vmatpush1.msra.mxu0 0.0
  %2443 = vmatprep.subr.mxu0 0.0
  %2444 = vmatpush1.msra.mxu0 0.0
  %2445 = vmatprep.subr.mxu0 0.0
  %2446 = vmatpush1.msra.mxu0 0.0
  %2447 = vmatprep.subr.mxu0 0.0
  %2448 = vmatpush1.msra.mxu0 0.0
  %2449 = vmatprep.subr.mxu0 0.0
  %2450 = vmatpush1.msra.mxu0 0.0
  %2451 = vmatprep.subr.mxu0 0.0
  %2452 = vmatpush1.msra.mxu0 0.0
  %2453 = vmatprep.subr.mxu0 0.0
  %2454 = vmatpush1.msra.mxu0 0.0
  %2455 = vmatprep.subr.mxu0 0.0
  %2456 = vmatpush1.msra.mxu0 0.0
  %2457 = vmatprep.subr.mxu0 0.0
  %2458 = vmatpush1.msra.mxu0 0.0
  %2459 = vmatprep.subr.mxu0 0.0
  %2460 = vmatpush1.msra.mxu0 0.0
  %2461 = vmatprep.subr.mxu0 0.0
  %2462 = vmatpush1.msra.mxu0 0.0
  %2463 = vmatprep.subr.mxu0 0.0
  %2464 = vmatpush1.msra.mxu0 0.0
  %2465 = vmatprep.subr.mxu0 0.0
  %2466 = vmatpush1.msra.mxu0 0.0
  %2467 = vmatprep.subr.mxu0 0.0
  %2468 = vmatpush1.msra.mxu0 0.0
  %2469 = vmatprep.subr.mxu0 0.0
  %2470 = vmatpush1.msra.mxu0 0.0
  %2471 = vmatprep.subr.mxu0 0.0
  %2472 = vmatpush1.msra.mxu0 0.0
  %2473 = vmatprep.subr.mxu0 0.0
  %2474 = vmatpush1.msra.mxu0 0.0
  %2475 = vmatprep.subr.mxu0 0.0
  %2476 = vmatpush1.msra.mxu0 0.0
  %2477 = vmatprep.subr.mxu0 0.0
  %2478 = vmatpush1.msra.mxu0 0.0
  %2479 = vmatprep.subr.mxu0 0.0
  %2480 = vmatpush1.msra.mxu0 0.0
  %2481 = vmatprep.subr.mxu0 0.0
  %2482 = vmatpush1.msra.mxu0 0.0
  %2483 = vmatprep.subr.mxu0 0.0
  %2484 = vmatpush1.msra.mxu0 0.0
  %2485 = vmatprep.subr.mxu0 0.0
  %2486 = vmatpush1.msra.mxu0 0.0
  %2487 = vmatprep.subr.mxu0 0.0
  %2488 = vmatpush1.msra.mxu0 0.0
  %2489 = vmatprep.mubr.f32.mxu0 0.0
  %2490 = vmatmul.mubr.f32.gmra.mrb[0].mxu0 %v2423
  %v2491 = vpop.f32.mrb[0].mxu0
  %v2492 = vadd.f32 %v2420, %v2491
  %v2493 = vpop.f32.mrb[0].mxu0
  %2494 = vdwg.mxu0
  %v2495 = vxor.u32 %v2492, 2147483648
  %v2496 = vmul.f32 %v2495, 1.442695
  %v2497 = vpow.pop %v2496
  %v2498 = vadd.f32 %v2497, 1.0
  %v2499 = vrcp.pop %v2498
  %v2500 = vmul.f32 1.0, %v2499
  %v2501 = vsub.f32 %v2242, %v2319
  %v2502 = vmax.f32 %v2500, 1e-07
  %v2503 = vrcp.pop %v2502
  %v2504 = vmul.f32 %v2501, %v2503
  %v2505 = vmul.f32 %v2504, %v2504
  %v2506 = vsel %vm1962, %v2505, 0.0
  %2507 = vadd.xlane.f32.xlu0 %v2506
  %v2508 = vpop.xlane.xlu0 %2507
  %v2509 = vmul.f32 %v2508, 0.005
  %v2510 = vadd.f32 %v2509, 0.0
  %v2511 = vmul.f32 %v2242, 0.01
  %v2512 = vadd.f32 %v1876, %v2511
  %v2513 = vrot.slane %v60, 2
  %v2515 = vmul.f32 %v2500, %v2513
  %v2516 = vadd.f32 %v2512, %v2515
  %v2518 = vsel %vm66, %v2516, 0
  %2520 = vmatprep.subr.mxu0 0.0
  %2521 = vmatpush1.msra.mxu0 %v1885
  %2522 = vmatprep.subr.mxu0 0.0
  %2523 = vmatpush1.msra.mxu0 0.0
  %2524 = vmatprep.subr.mxu0 0.0
  %2525 = vmatpush1.msra.mxu0 0.0
  %2526 = vmatprep.subr.mxu0 0.0
  %2527 = vmatpush1.msra.mxu0 0.0
  %2528 = vmatprep.subr.mxu0 0.0
  %2529 = vmatpush1.msra.mxu0 0.0
  %2530 = vmatprep.subr.mxu0 0.0
  %2531 = vmatpush1.msra.mxu0 0.0
  %2532 = vmatprep.subr.mxu0 0.0
  %2533 = vmatpush1.msra.mxu0 0.0
  %2534 = vmatprep.subr.mxu0 0.0
  %2535 = vmatpush1.msra.mxu0 0.0
  %2536 = vmatprep.subr.mxu0 0.0
  %2537 = vmatpush1.msra.mxu0 0.0
  %2538 = vmatprep.subr.mxu0 0.0
  %2539 = vmatpush1.msra.mxu0 0.0
  %2540 = vmatprep.subr.mxu0 0.0
  %2541 = vmatpush1.msra.mxu0 0.0
  %2542 = vmatprep.subr.mxu0 0.0
  %2543 = vmatpush1.msra.mxu0 0.0
  %2544 = vmatprep.subr.mxu0 0.0
  %2545 = vmatpush1.msra.mxu0 0.0
  %2546 = vmatprep.subr.mxu0 0.0
  %2547 = vmatpush1.msra.mxu0 0.0
  %2548 = vmatprep.subr.mxu0 0.0
  %2549 = vmatpush1.msra.mxu0 0.0
  %2550 = vmatprep.subr.mxu0 0.0
  %2551 = vmatpush1.msra.mxu0 0.0
  %2552 = vmatprep.subr.mxu0 0.0
  %2553 = vmatpush1.msra.mxu0 0.0
  %2554 = vmatprep.subr.mxu0 0.0
  %2555 = vmatpush1.msra.mxu0 0.0
  %2556 = vmatprep.subr.mxu0 0.0
  %2557 = vmatpush1.msra.mxu0 0.0
  %2558 = vmatprep.subr.mxu0 0.0
  %2559 = vmatpush1.msra.mxu0 0.0
  %2560 = vmatprep.subr.mxu0 0.0
  %2561 = vmatpush1.msra.mxu0 0.0
  %2562 = vmatprep.subr.mxu0 0.0
  %2563 = vmatpush1.msra.mxu0 0.0
  %2564 = vmatprep.subr.mxu0 0.0
  %2565 = vmatpush1.msra.mxu0 0.0
  %2566 = vmatprep.subr.mxu0 0.0
  %2567 = vmatpush1.msra.mxu0 0.0
  %2568 = vmatprep.subr.mxu0 0.0
  %2569 = vmatpush1.msra.mxu0 0.0
  %2570 = vmatprep.subr.mxu0 0.0
  %2571 = vmatpush1.msra.mxu0 0.0
  %2572 = vmatprep.subr.mxu0 0.0
  %2573 = vmatpush1.msra.mxu0 0.0
  %2574 = vmatprep.subr.mxu0 0.0
  %2575 = vmatpush1.msra.mxu0 0.0
  %2576 = vmatprep.subr.mxu0 0.0
  %2577 = vmatpush1.msra.mxu0 0.0
  %2578 = vmatprep.subr.mxu0 0.0
  %2579 = vmatpush1.msra.mxu0 0.0
  %2580 = vmatprep.subr.mxu0 0.0
  %2581 = vmatpush1.msra.mxu0 0.0
  %2582 = vmatprep.subr.mxu0 0.0
  %2583 = vmatpush1.msra.mxu0 0.0
  %2584 = vmatprep.mubr.f32.mxu0 0.0
  %2585 = vmatmul.mubr.f32.gmra.mrb[0].mxu0 %v2518
  %v2586 = vpop.f32.mrb[0].mxu0
  %v2587 = vadd.f32 %v1880, %v2586
  %v2588 = vpop.f32.mrb[0].mxu0
  %2589 = vdwg.mxu0
  %v2591 = vrot.slane %v2587, 6
  %v2593 = vsub.f32 %v58, %v2591
  %v2594 = vmul.f32 %v2593, %v2593
  %v2595 = vsub.f32 0.0, %v2594
  %v2596 = vmul.f32 %v2595, 200.0
  %v2597 = vsub.f32 %v2596, -2.0767937
  %vm2598 = vcmask 27650
  %v2599 = vsel %vm2598, %v2597, 0.0
  %2600 = vadd.xlane.f32.xlu0 %v2599
  %v2601 = vpop.xlane.xlu0 %2600
  %v2602 = vmul.f32 %v2587, %v2587
  %v2603 = vsel %vm1962, %v2602, 0.0
  %2604 = vadd.xlane.f32.xlu0 %v2603
  %v2605 = vpop.xlane.xlu0 %2604
  %v2606 = vrsqrt.pop %v2605
  %v2607 = vmul.f32 %v2605, %v2606
  %vm2608 = vcmp.eq.f32.partialorder %v2605, inf
  %v2609 = vsel %vm2608, %v2605, %v2607
  %vm2610 = vcmp.eq.f32.partialorder %v2605, 0.0
  %v2611 = vand.u32 %v2605, 2147483648
  %v2612 = vsel %vm2610, %v2611, %v2609
  %v2614 = vrot.slane %v2601, 2
  %v2616 = vadd.f32 %v1977, %v2614
  %v2617 = vadd.f32 %v1978, %v2612
  %v2618 = vrot.slane %v1782, 4
  %2620 = vmatprep.subr.mxu0 0.0
  %2621 = vmatpush1.msra.mxu0 %v1983
  %2622 = vmatprep.subr.mxu0 0.0
  %2623 = vmatpush1.msra.mxu0 0.0
  %2624 = vmatprep.subr.mxu0 0.0
  %2625 = vmatpush1.msra.mxu0 0.0
  %2626 = vmatprep.subr.mxu0 0.0
  %2627 = vmatpush1.msra.mxu0 0.0
  %2628 = vmatprep.subr.mxu0 0.0
  %2629 = vmatpush1.msra.mxu0 0.0
  %2630 = vmatprep.subr.mxu0 0.0
  %2631 = vmatpush1.msra.mxu0 0.0
  %2632 = vmatprep.subr.mxu0 0.0
  %2633 = vmatpush1.msra.mxu0 0.0
  %2634 = vmatprep.subr.mxu0 0.0
  %2635 = vmatpush1.msra.mxu0 0.0
  %2636 = vmatprep.subr.mxu0 0.0
  %2637 = vmatpush1.msra.mxu0 0.0
  %2638 = vmatprep.subr.mxu0 0.0
  %2639 = vmatpush1.msra.mxu0 0.0
  %2640 = vmatprep.subr.mxu0 0.0
  %2641 = vmatpush1.msra.mxu0 0.0
  %2642 = vmatprep.subr.mxu0 0.0
  %2643 = vmatpush1.msra.mxu0 0.0
  %2644 = vmatprep.subr.mxu0 0.0
  %2645 = vmatpush1.msra.mxu0 0.0
  %2646 = vmatprep.subr.mxu0 0.0
  %2647 = vmatpush1.msra.mxu0 0.0
  %2648 = vmatprep.subr.mxu0 0.0
  %2649 = vmatpush1.msra.mxu0 0.0
  %2650 = vmatprep.subr.mxu0 0.0
  %2651 = vmatpush1.msra.mxu0 0.0
  %2652 = vmatprep.subr.mxu0 0.0
  %2653 = vmatpush1.msra.mxu0 0.0
  %2654 = vmatprep.subr.mxu0 0.0
  %2655 = vmatpush1.msra.mxu0 0.0
  %2656 = vmatprep.subr.mxu0 0.0
  %2657 = vmatpush1.msra.mxu0 0.0
  %2658 = vmatprep.subr.mxu0 0.0
  %2659 = vmatpush1.msra.mxu0 0.0
  %2660 = vmatprep.subr.mxu0 0.0
  %2661 = vmatpush1.msra.mxu0 0.0
  %2662 = vmatprep.subr.mxu0 0.0
  %2663 = vmatpush1.msra.mxu0 0.0
  %2664 = vmatprep.subr.mxu0 0.0
  %2665 = vmatpush1.msra.mxu0 0.0
  %2666 = vmatprep.subr.mxu0 0.0
  %2667 = vmatpush1.msra.mxu0 0.0
  %2668 = vmatprep.subr.mxu0 0.0
  %2669 = vmatpush1.msra.mxu0 0.0
  %2670 = vmatprep.subr.mxu0 0.0
  %2671 = vmatpush1.msra.mxu0 0.0
  %2672 = vmatprep.subr.mxu0 0.0
  %2673 = vmatpush1.msra.mxu0 0.0
  %2674 = vmatprep.subr.mxu0 0.0
  %2675 = vmatpush1.msra.mxu0 0.0
  %2676 = vmatprep.subr.mxu0 0.0
  %2677 = vmatpush1.msra.mxu0 0.0
  %2678 = vmatprep.subr.mxu0 0.0
  %2679 = vmatpush1.msra.mxu0 0.0
  %2680 = vmatprep.subr.mxu0 0.0
  %2681 = vmatpush1.msra.mxu0 0.0
  %2682 = vmatprep.subr.mxu0 0.0
  %2683 = vmatpush1.msra.mxu0 0.0
  %2684 = vmatprep.mubr.f32.mxu0 0.0
  %2685 = vmatmul.mubr.f32.gmra.mrb[0].mxu0 %v2518
  %v2686 = vpop.f32.mrb[0].mxu0
  %v2687 = vadd.f32 %v2618, %v2686
  %v2688 = vpop.f32.mrb[0].mxu0
  %2689 = vdwg.mxu0
  %v2690 = vmax.f32 %v2687, 0.0
  %vm2691 = vcmp.ne.f32.partialorder %v2687, %v2687
  %v2692 = vadd.f32 %v2687, 0.0
  %v2693 = vand.u32 2147483647, %v2687
  %v2694 = vsub.f32 0.0, %v2693
  %v2695 = vmul.f32 %v2694, 1.442695
  %v2696 = vpow.pop %v2695
  %v2697 = vadd.f32 %v2696, 1.0
  %v2698 = vlog2.pop %v2697
  %v2699 = vmul.f32 %v2698, 0.6931472
  %v2700 = vmul.f32 -0.5, %v2696
  %v2701 = vadd.f32 %v2700, 1.0
  %v2702 = vmul.f32 %v2701, %v2696
  %v2703 = vand.u32 2147483647, %v2696
  %vm2704 = vcmp.lt.f32.partialorder %v2703, 0.0004427343
  %v2705 = vsel %vm2704, %v2702, %v2699
  %v2706 = vadd.f32 %v2690, %v2705
  %v2707 = vsel %vm2691, %v2692, %v2706
  %v2709 = vsel %vm234, %v2707, 0
  %2711 = vmatprep.subr.mxu0 0.0
  %2712 = vmatpush1.msra.mxu0 %v35
  %2713 = vmatprep.subr.mxu0 0.0
  %2714 = vmatpush1.msra.mxu0 %v36
  %2715 = vmatprep.subr.mxu0 0.0
  %2716 = vmatpush1.msra.mxu0 0.0
  %2717 = vmatprep.subr.mxu0 0.0
  %2718 = vmatpush1.msra.mxu0 0.0
  %2719 = vmatprep.subr.mxu0 0.0
  %2720 = vmatpush1.msra.mxu0 0.0
  %2721 = vmatprep.subr.mxu0 0.0
  %2722 = vmatpush1.msra.mxu0 0.0
  %2723 = vmatprep.subr.mxu0 0.0
  %2724 = vmatpush1.msra.mxu0 0.0
  %2725 = vmatprep.subr.mxu0 0.0
  %2726 = vmatpush1.msra.mxu0 0.0
  %2727 = vmatprep.subr.mxu0 0.0
  %2728 = vmatpush1.msra.mxu0 0.0
  %2729 = vmatprep.subr.mxu0 0.0
  %2730 = vmatpush1.msra.mxu0 0.0
  %2731 = vmatprep.subr.mxu0 0.0
  %2732 = vmatpush1.msra.mxu0 0.0
  %2733 = vmatprep.subr.mxu0 0.0
  %2734 = vmatpush1.msra.mxu0 0.0
  %2735 = vmatprep.subr.mxu0 0.0
  %2736 = vmatpush1.msra.mxu0 0.0
  %2737 = vmatprep.subr.mxu0 0.0
  %2738 = vmatpush1.msra.mxu0 0.0
  %2739 = vmatprep.subr.mxu0 0.0
  %2740 = vmatpush1.msra.mxu0 0.0
  %2741 = vmatprep.subr.mxu0 0.0
  %2742 = vmatpush1.msra.mxu0 0.0
  %2743 = vmatprep.subr.mxu0 0.0
  %2744 = vmatpush1.msra.mxu0 0.0
  %2745 = vmatprep.subr.mxu0 0.0
  %2746 = vmatpush1.msra.mxu0 0.0
  %2747 = vmatprep.subr.mxu0 0.0
  %2748 = vmatpush1.msra.mxu0 0.0
  %2749 = vmatprep.subr.mxu0 0.0
  %2750 = vmatpush1.msra.mxu0 0.0
  %2751 = vmatprep.subr.mxu0 0.0
  %2752 = vmatpush1.msra.mxu0 0.0
  %2753 = vmatprep.subr.mxu0 0.0
  %2754 = vmatpush1.msra.mxu0 0.0
  %2755 = vmatprep.subr.mxu0 0.0
  %2756 = vmatpush1.msra.mxu0 0.0
  %2757 = vmatprep.subr.mxu0 0.0
  %2758 = vmatpush1.msra.mxu0 0.0
  %2759 = vmatprep.subr.mxu0 0.0
  %2760 = vmatpush1.msra.mxu0 0.0
  %2761 = vmatprep.subr.mxu0 0.0
  %2762 = vmatpush1.msra.mxu0 0.0
  %2763 = vmatprep.subr.mxu0 0.0
  %2764 = vmatpush1.msra.mxu0 0.0
  %2765 = vmatprep.subr.mxu0 0.0
  %2766 = vmatpush1.msra.mxu0 0.0
  %2767 = vmatprep.subr.mxu0 0.0
  %2768 = vmatpush1.msra.mxu0 0.0
  %2769 = vmatprep.subr.mxu0 0.0
  %2770 = vmatpush1.msra.mxu0 0.0
  %2771 = vmatprep.subr.mxu0 0.0
  %2772 = vmatpush1.msra.mxu0 0.0
  %2773 = vmatprep.subr.mxu0 0.0
  %2774 = vmatpush1.msra.mxu0 0.0
  %2775 = vmatprep.mubr.f32.mxu0 0.0
  %2776 = vmatmul.mubr.f32.gmra.mrb[0].mxu0 %v2709
  %v2777 = vpop.f32.mrb[0].mxu0
  %v2778 = vadd.f32 %v2076, %v2777
  %v2779 = vpop.f32.mrb[0].mxu0
  %2780 = vdwg.mxu0
  %v2781 = vmax.f32 %v2778, 0.0
  %vm2782 = vcmp.ne.f32.partialorder %v2778, %v2778
  %v2783 = vadd.f32 %v2778, 0.0
  %v2784 = vand.u32 2147483647, %v2778
  %v2785 = vsub.f32 0.0, %v2784
  %v2786 = vmul.f32 %v2785, 1.442695
  %v2787 = vpow.pop %v2786
  %v2788 = vadd.f32 %v2787, 1.0
  %v2789 = vlog2.pop %v2788
  %v2790 = vmul.f32 %v2789, 0.6931472
  %v2791 = vmul.f32 -0.5, %v2787
  %v2792 = vadd.f32 %v2791, 1.0
  %v2793 = vmul.f32 %v2792, %v2787
  %v2794 = vand.u32 2147483647, %v2787
  %vm2795 = vcmp.lt.f32.partialorder %v2794, 0.0004427343
  %v2796 = vsel %vm2795, %v2793, %v2790
  %v2797 = vadd.f32 %v2781, %v2796
  %v2798 = vsel %vm2782, %v2783, %v2797
  %v2800 = vsel %vm234, %v2798, 0
  %2802 = vmatprep.subr.mxu0 0.0
  %2803 = vmatpush1.msra.mxu0 %v38
  %2804 = vmatprep.subr.mxu0 0.0
  %2805 = vmatpush1.msra.mxu0 %v39
  %2806 = vmatprep.subr.mxu0 0.0
  %2807 = vmatpush1.msra.mxu0 0.0
  %2808 = vmatprep.subr.mxu0 0.0
  %2809 = vmatpush1.msra.mxu0 0.0
  %2810 = vmatprep.subr.mxu0 0.0
  %2811 = vmatpush1.msra.mxu0 0.0
  %2812 = vmatprep.subr.mxu0 0.0
  %2813 = vmatpush1.msra.mxu0 0.0
  %2814 = vmatprep.subr.mxu0 0.0
  %2815 = vmatpush1.msra.mxu0 0.0
  %2816 = vmatprep.subr.mxu0 0.0
  %2817 = vmatpush1.msra.mxu0 0.0
  %2818 = vmatprep.subr.mxu0 0.0
  %2819 = vmatpush1.msra.mxu0 0.0
  %2820 = vmatprep.subr.mxu0 0.0
  %2821 = vmatpush1.msra.mxu0 0.0
  %2822 = vmatprep.subr.mxu0 0.0
  %2823 = vmatpush1.msra.mxu0 0.0
  %2824 = vmatprep.subr.mxu0 0.0
  %2825 = vmatpush1.msra.mxu0 0.0
  %2826 = vmatprep.subr.mxu0 0.0
  %2827 = vmatpush1.msra.mxu0 0.0
  %2828 = vmatprep.subr.mxu0 0.0
  %2829 = vmatpush1.msra.mxu0 0.0
  %2830 = vmatprep.subr.mxu0 0.0
  %2831 = vmatpush1.msra.mxu0 0.0
  %2832 = vmatprep.subr.mxu0 0.0
  %2833 = vmatpush1.msra.mxu0 0.0
  %2834 = vmatprep.subr.mxu0 0.0
  %2835 = vmatpush1.msra.mxu0 0.0
  %2836 = vmatprep.subr.mxu0 0.0
  %2837 = vmatpush1.msra.mxu0 0.0
  %2838 = vmatprep.subr.mxu0 0.0
  %2839 = vmatpush1.msra.mxu0 0.0
  %2840 = vmatprep.subr.mxu0 0.0
  %2841 = vmatpush1.msra.mxu0 0.0
  %2842 = vmatprep.subr.mxu0 0.0
  %2843 = vmatpush1.msra.mxu0 0.0
  %2844 = vmatprep.subr.mxu0 0.0
  %2845 = vmatpush1.msra.mxu0 0.0
  %2846 = vmatprep.subr.mxu0 0.0
  %2847 = vmatpush1.msra.mxu0 0.0
  %2848 = vmatprep.subr.mxu0 0.0
  %2849 = vmatpush1.msra.mxu0 0.0
  %2850 = vmatprep.subr.mxu0 0.0
  %2851 = vmatpush1.msra.mxu0 0.0
  %2852 = vmatprep.subr.mxu0 0.0
  %2853 = vmatpush1.msra.mxu0 0.0
  %2854 = vmatprep.subr.mxu0 0.0
  %2855 = vmatpush1.msra.mxu0 0.0
  %2856 = vmatprep.subr.mxu0 0.0
  %2857 = vmatpush1.msra.mxu0 0.0
  %2858 = vmatprep.subr.mxu0 0.0
  %2859 = vmatpush1.msra.mxu0 0.0
  %2860 = vmatprep.subr.mxu0 0.0
  %2861 = vmatpush1.msra.mxu0 0.0
  %2862 = vmatprep.subr.mxu0 0.0
  %2863 = vmatpush1.msra.mxu0 0.0
  %2864 = vmatprep.subr.mxu0 0.0
  %2865 = vmatpush1.msra.mxu0 0.0
  %2866 = vmatprep.mubr.f32.mxu0 0.0
  %2867 = vmatmul.mubr.f32.gmra.mrb[0].mxu0 %v2800
  %v2868 = vpop.f32.mrb[0].mxu0
  %v2869 = vadd.f32 %v2171, %v2868
  %v2870 = vpop.f32.mrb[0].mxu0
  %2871 = vdwg.mxu0
  %2872 = vmatprep.subr.mxu0 0.0
  %2873 = vmatpush1.msra.mxu0 %v2250
  %2874 = vmatprep.subr.mxu0 0.0
  %2875 = vmatpush1.msra.mxu0 0.0
  %2876 = vmatprep.subr.mxu0 0.0
  %2877 = vmatpush1.msra.mxu0 0.0
  %2878 = vmatprep.subr.mxu0 0.0
  %2879 = vmatpush1.msra.mxu0 0.0
  %2880 = vmatprep.subr.mxu0 0.0
  %2881 = vmatpush1.msra.mxu0 0.0
  %2882 = vmatprep.subr.mxu0 0.0
  %2883 = vmatpush1.msra.mxu0 0.0
  %2884 = vmatprep.subr.mxu0 0.0
  %2885 = vmatpush1.msra.mxu0 0.0
  %2886 = vmatprep.subr.mxu0 0.0
  %2887 = vmatpush1.msra.mxu0 0.0
  %2888 = vmatprep.subr.mxu0 0.0
  %2889 = vmatpush1.msra.mxu0 0.0
  %2890 = vmatprep.subr.mxu0 0.0
  %2891 = vmatpush1.msra.mxu0 0.0
  %2892 = vmatprep.subr.mxu0 0.0
  %2893 = vmatpush1.msra.mxu0 0.0
  %2894 = vmatprep.subr.mxu0 0.0
  %2895 = vmatpush1.msra.mxu0 0.0
  %2896 = vmatprep.subr.mxu0 0.0
  %2897 = vmatpush1.msra.mxu0 0.0
  %2898 = vmatprep.subr.mxu0 0.0
  %2899 = vmatpush1.msra.mxu0 0.0
  %2900 = vmatprep.subr.mxu0 0.0
  %2901 = vmatpush1.msra.mxu0 0.0
  %2902 = vmatprep.subr.mxu0 0.0
  %2903 = vmatpush1.msra.mxu0 0.0
  %2904 = vmatprep.subr.mxu0 0.0
  %2905 = vmatpush1.msra.mxu0 0.0
  %2906 = vmatprep.subr.mxu0 0.0
  %2907 = vmatpush1.msra.mxu0 0.0
  %2908 = vmatprep.subr.mxu0 0.0
  %2909 = vmatpush1.msra.mxu0 0.0
  %2910 = vmatprep.subr.mxu0 0.0
  %2911 = vmatpush1.msra.mxu0 0.0
  %2912 = vmatprep.subr.mxu0 0.0
  %2913 = vmatpush1.msra.mxu0 0.0
  %2914 = vmatprep.subr.mxu0 0.0
  %2915 = vmatpush1.msra.mxu0 0.0
  %2916 = vmatprep.subr.mxu0 0.0
  %2917 = vmatpush1.msra.mxu0 0.0
  %2918 = vmatprep.subr.mxu0 0.0
  %2919 = vmatpush1.msra.mxu0 0.0
  %2920 = vmatprep.subr.mxu0 0.0
  %2921 = vmatpush1.msra.mxu0 0.0
  %2922 = vmatprep.subr.mxu0 0.0
  %2923 = vmatpush1.msra.mxu0 0.0
  %2924 = vmatprep.subr.mxu0 0.0
  %2925 = vmatpush1.msra.mxu0 0.0
  %2926 = vmatprep.subr.mxu0 0.0
  %2927 = vmatpush1.msra.mxu0 0.0
  %2928 = vmatprep.subr.mxu0 0.0
  %2929 = vmatpush1.msra.mxu0 0.0
  %2930 = vmatprep.subr.mxu0 0.0
  %2931 = vmatpush1.msra.mxu0 0.0
  %2932 = vmatprep.subr.mxu0 0.0
  %2933 = vmatpush1.msra.mxu0 0.0
  %2934 = vmatprep.subr.mxu0 0.0
  %2935 = vmatpush1.msra.mxu0 0.0
  %2936 = vmatprep.mubr.f32.mxu0 0.0
  %2937 = vmatmul.mubr.f32.gmra.mrb[0].mxu0 %v2518
  %v2938 = vpop.f32.mrb[0].mxu0
  %v2939 = vadd.f32 %v2248, %v2938
  %v2940 = vpop.f32.mrb[0].mxu0
  %2941 = vdwg.mxu0
  %2942 = vmatprep.subr.mxu0 0.0
  %2943 = vmatpush1.msra.mxu0 %v2327
  %2944 = vmatprep.subr.mxu0 0.0
  %2945 = vmatpush1.msra.mxu0 0.0
  %2946 = vmatprep.subr.mxu0 0.0
  %2947 = vmatpush1.msra.mxu0 0.0
  %2948 = vmatprep.subr.mxu0 0.0
  %2949 = vmatpush1.msra.mxu0 0.0
  %2950 = vmatprep.subr.mxu0 0.0
  %2951 = vmatpush1.msra.mxu0 0.0
  %2952 = vmatprep.subr.mxu0 0.0
  %2953 = vmatpush1.msra.mxu0 0.0
  %2954 = vmatprep.subr.mxu0 0.0
  %2955 = vmatpush1.msra.mxu0 0.0
  %2956 = vmatprep.subr.mxu0 0.0
  %2957 = vmatpush1.msra.mxu0 0.0
  %2958 = vmatprep.subr.mxu0 0.0
  %2959 = vmatpush1.msra.mxu0 0.0
  %2960 = vmatprep.subr.mxu0 0.0
  %2961 = vmatpush1.msra.mxu0 0.0
  %2962 = vmatprep.subr.mxu0 0.0
  %2963 = vmatpush1.msra.mxu0 0.0
  %2964 = vmatprep.subr.mxu0 0.0
  %2965 = vmatpush1.msra.mxu0 0.0
  %2966 = vmatprep.subr.mxu0 0.0
  %2967 = vmatpush1.msra.mxu0 0.0
  %2968 = vmatprep.subr.mxu0 0.0
  %2969 = vmatpush1.msra.mxu0 0.0
  %2970 = vmatprep.subr.mxu0 0.0
  %2971 = vmatpush1.msra.mxu0 0.0
  %2972 = vmatprep.subr.mxu0 0.0
  %2973 = vmatpush1.msra.mxu0 0.0
  %2974 = vmatprep.subr.mxu0 0.0
  %2975 = vmatpush1.msra.mxu0 0.0
  %2976 = vmatprep.subr.mxu0 0.0
  %2977 = vmatpush1.msra.mxu0 0.0
  %2978 = vmatprep.subr.mxu0 0.0
  %2979 = vmatpush1.msra.mxu0 0.0
  %2980 = vmatprep.subr.mxu0 0.0
  %2981 = vmatpush1.msra.mxu0 0.0
  %2982 = vmatprep.subr.mxu0 0.0
  %2983 = vmatpush1.msra.mxu0 0.0
  %2984 = vmatprep.subr.mxu0 0.0
  %2985 = vmatpush1.msra.mxu0 0.0
  %2986 = vmatprep.subr.mxu0 0.0
  %2987 = vmatpush1.msra.mxu0 0.0
  %2988 = vmatprep.subr.mxu0 0.0
  %2989 = vmatpush1.msra.mxu0 0.0
  %2990 = vmatprep.subr.mxu0 0.0
  %2991 = vmatpush1.msra.mxu0 0.0
  %2992 = vmatprep.subr.mxu0 0.0
  %2993 = vmatpush1.msra.mxu0 0.0
  %2994 = vmatprep.subr.mxu0 0.0
  %2995 = vmatpush1.msra.mxu0 0.0
  %2996 = vmatprep.subr.mxu0 0.0
  %2997 = vmatpush1.msra.mxu0 0.0
  %2998 = vmatprep.subr.mxu0 0.0
  %2999 = vmatpush1.msra.mxu0 0.0
  %3000 = vmatprep.subr.mxu0 0.0
  %3001 = vmatpush1.msra.mxu0 0.0
  %3002 = vmatprep.subr.mxu0 0.0
  %3003 = vmatpush1.msra.mxu0 0.0
  %3004 = vmatprep.subr.mxu0 0.0
  %3005 = vmatpush1.msra.mxu0 0.0
  %3006 = vmatprep.mubr.f32.mxu0 0.0
  %3007 = vmatmul.mubr.f32.gmra.mrb[0].mxu0 %v2518
  %v3008 = vpop.f32.mrb[0].mxu0
  %v3009 = vadd.f32 %v2325, %v3008
  %v3010 = vpop.f32.mrb[0].mxu0
  %3011 = vdwg.mxu0
  %v3012 = vmax.f32 %v3009, 0.0
  %vm3013 = vcmp.ne.f32.partialorder %v3009, %v3009
  %v3014 = vadd.f32 %v3009, 0.0
  %v3015 = vand.u32 2147483647, %v3009
  %v3016 = vsub.f32 0.0, %v3015
  %v3017 = vmul.f32 %v3016, 1.442695
  %v3018 = vpow.pop %v3017
  %v3019 = vadd.f32 %v3018, 1.0
  %v3020 = vlog2.pop %v3019
  %v3021 = vmul.f32 %v3020, 0.6931472
  %v3022 = vmul.f32 -0.5, %v3018
  %v3023 = vadd.f32 %v3022, 1.0
  %v3024 = vmul.f32 %v3023, %v3018
  %v3025 = vand.u32 2147483647, %v3018
  %vm3026 = vcmp.lt.f32.partialorder %v3025, 0.0004427343
  %v3027 = vsel %vm3026, %v3024, %v3021
  %v3028 = vadd.f32 %v3012, %v3027
  %v3029 = vsel %vm3013, %v3014, %v3028
  %v3031 = vsel %vm2421, %v3029, 0
  %3033 = vmatprep.subr.mxu0 0.0
  %3034 = vmatpush1.msra.mxu0 %v47
  %3035 = vmatprep.subr.mxu0 0.0
  %3036 = vmatpush1.msra.mxu0 %v48
  %3037 = vmatprep.subr.mxu0 0.0
  %3038 = vmatpush1.msra.mxu0 %v49
  %3039 = vmatprep.subr.mxu0 0.0
  %3040 = vmatpush1.msra.mxu0 %v50
  %3041 = vmatprep.subr.mxu0 0.0
  %3042 = vmatpush1.msra.mxu0 %v51
  %3043 = vmatprep.subr.mxu0 0.0
  %3044 = vmatpush1.msra.mxu0 %v52
  %3045 = vmatprep.subr.mxu0 0.0
  %3046 = vmatpush1.msra.mxu0 %v53
  %3047 = vmatprep.subr.mxu0 0.0
  %3048 = vmatpush1.msra.mxu0 %v54
  %3049 = vmatprep.subr.mxu0 0.0
  %3050 = vmatpush1.msra.mxu0 0.0
  %3051 = vmatprep.subr.mxu0 0.0
  %3052 = vmatpush1.msra.mxu0 0.0
  %3053 = vmatprep.subr.mxu0 0.0
  %3054 = vmatpush1.msra.mxu0 0.0
  %3055 = vmatprep.subr.mxu0 0.0
  %3056 = vmatpush1.msra.mxu0 0.0
  %3057 = vmatprep.subr.mxu0 0.0
  %3058 = vmatpush1.msra.mxu0 0.0
  %3059 = vmatprep.subr.mxu0 0.0
  %3060 = vmatpush1.msra.mxu0 0.0
  %3061 = vmatprep.subr.mxu0 0.0
  %3062 = vmatpush1.msra.mxu0 0.0
  %3063 = vmatprep.subr.mxu0 0.0
  %3064 = vmatpush1.msra.mxu0 0.0
  %3065 = vmatprep.subr.mxu0 0.0
  %3066 = vmatpush1.msra.mxu0 0.0
  %3067 = vmatprep.subr.mxu0 0.0
  %3068 = vmatpush1.msra.mxu0 0.0
  %3069 = vmatprep.subr.mxu0 0.0
  %3070 = vmatpush1.msra.mxu0 0.0
  %3071 = vmatprep.subr.mxu0 0.0
  %3072 = vmatpush1.msra.mxu0 0.0
  %3073 = vmatprep.subr.mxu0 0.0
  %3074 = vmatpush1.msra.mxu0 0.0
  %3075 = vmatprep.subr.mxu0 0.0
  %3076 = vmatpush1.msra.mxu0 0.0
  %3077 = vmatprep.subr.mxu0 0.0
  %3078 = vmatpush1.msra.mxu0 0.0
  %3079 = vmatprep.subr.mxu0 0.0
  %3080 = vmatpush1.msra.mxu0 0.0
  %3081 = vmatprep.subr.mxu0 0.0
  %3082 = vmatpush1.msra.mxu0 0.0
  %3083 = vmatprep.subr.mxu0 0.0
  %3084 = vmatpush1.msra.mxu0 0.0
  %3085 = vmatprep.subr.mxu0 0.0
  %3086 = vmatpush1.msra.mxu0 0.0
  %3087 = vmatprep.subr.mxu0 0.0
  %3088 = vmatpush1.msra.mxu0 0.0
  %3089 = vmatprep.subr.mxu0 0.0
  %3090 = vmatpush1.msra.mxu0 0.0
  %3091 = vmatprep.subr.mxu0 0.0
  %3092 = vmatpush1.msra.mxu0 0.0
  %3093 = vmatprep.subr.mxu0 0.0
  %3094 = vmatpush1.msra.mxu0 0.0
  %3095 = vmatprep.subr.mxu0 0.0
  %3096 = vmatpush1.msra.mxu0 0.0
  %3097 = vmatprep.mubr.f32.mxu0 0.0
  %3098 = vmatmul.mubr.f32.gmra.mrb[0].mxu0 %v3031
  %v3099 = vpop.f32.mrb[0].mxu0
  %v3100 = vadd.f32 %v2420, %v3099
  %v3101 = vpop.f32.mrb[0].mxu0
  %3102 = vdwg.mxu0
  %v3103 = vxor.u32 %v3100, 2147483648
  %v3104 = vmul.f32 %v3103, 1.442695
  %v3105 = vpow.pop %v3104
  %v3106 = vadd.f32 %v3105, 1.0
  %v3107 = vrcp.pop %v3106
  %v3108 = vmul.f32 1.0, %v3107
  %v3109 = vsub.f32 %v2869, %v2939
  %v3110 = vmax.f32 %v3108, 1e-07
  %v3111 = vrcp.pop %v3110
  %v3112 = vmul.f32 %v3109, %v3111
  %v3113 = vmul.f32 %v3112, %v3112
  %v3114 = vsel %vm1962, %v3113, 0.0
  %3115 = vadd.xlane.f32.xlu0 %v3114
  %v3116 = vpop.xlane.xlu0 %3115
  %v3117 = vmul.f32 %v3116, 0.005
  %v3118 = vadd.f32 %v2510, %v3117
  %v3119 = vmul.f32 %v2869, 0.01
  %v3120 = vadd.f32 %v2516, %v3119
  %v3121 = vrot.slane %v60, 4
  %v3123 = vmul.f32 %v3108, %v3121
  %v3124 = vadd.f32 %v3120, %v3123
  %v3126 = vsel %vm66, %v3124, 0
  %3128 = vmatprep.subr.mxu0 0.0
  %3129 = vmatpush1.msra.mxu0 %v1885
  %3130 = vmatprep.subr.mxu0 0.0
  %3131 = vmatpush1.msra.mxu0 0.0
  %3132 = vmatprep.subr.mxu0 0.0
  %3133 = vmatpush1.msra.mxu0 0.0
  %3134 = vmatprep.subr.mxu0 0.0
  %3135 = vmatpush1.msra.mxu0 0.0
  %3136 = vmatprep.subr.mxu0 0.0
  %3137 = vmatpush1.msra.mxu0 0.0
  %3138 = vmatprep.subr.mxu0 0.0
  %3139 = vmatpush1.msra.mxu0 0.0
  %3140 = vmatprep.subr.mxu0 0.0
  %3141 = vmatpush1.msra.mxu0 0.0
  %3142 = vmatprep.subr.mxu0 0.0
  %3143 = vmatpush1.msra.mxu0 0.0
  %3144 = vmatprep.subr.mxu0 0.0
  %3145 = vmatpush1.msra.mxu0 0.0
  %3146 = vmatprep.subr.mxu0 0.0
  %3147 = vmatpush1.msra.mxu0 0.0
  %3148 = vmatprep.subr.mxu0 0.0
  %3149 = vmatpush1.msra.mxu0 0.0
  %3150 = vmatprep.subr.mxu0 0.0
  %3151 = vmatpush1.msra.mxu0 0.0
  %3152 = vmatprep.subr.mxu0 0.0
  %3153 = vmatpush1.msra.mxu0 0.0
  %3154 = vmatprep.subr.mxu0 0.0
  %3155 = vmatpush1.msra.mxu0 0.0
  %3156 = vmatprep.subr.mxu0 0.0
  %3157 = vmatpush1.msra.mxu0 0.0
  %3158 = vmatprep.subr.mxu0 0.0
  %3159 = vmatpush1.msra.mxu0 0.0
  %3160 = vmatprep.subr.mxu0 0.0
  %3161 = vmatpush1.msra.mxu0 0.0
  %3162 = vmatprep.subr.mxu0 0.0
  %3163 = vmatpush1.msra.mxu0 0.0
  %3164 = vmatprep.subr.mxu0 0.0
  %3165 = vmatpush1.msra.mxu0 0.0
  %3166 = vmatprep.subr.mxu0 0.0
  %3167 = vmatpush1.msra.mxu0 0.0
  %3168 = vmatprep.subr.mxu0 0.0
  %3169 = vmatpush1.msra.mxu0 0.0
  %3170 = vmatprep.subr.mxu0 0.0
  %3171 = vmatpush1.msra.mxu0 0.0
  %3172 = vmatprep.subr.mxu0 0.0
  %3173 = vmatpush1.msra.mxu0 0.0
  %3174 = vmatprep.subr.mxu0 0.0
  %3175 = vmatpush1.msra.mxu0 0.0
  %3176 = vmatprep.subr.mxu0 0.0
  %3177 = vmatpush1.msra.mxu0 0.0
  %3178 = vmatprep.subr.mxu0 0.0
  %3179 = vmatpush1.msra.mxu0 0.0
  %3180 = vmatprep.subr.mxu0 0.0
  %3181 = vmatpush1.msra.mxu0 0.0
  %3182 = vmatprep.subr.mxu0 0.0
  %3183 = vmatpush1.msra.mxu0 0.0
  %3184 = vmatprep.subr.mxu0 0.0
  %3185 = vmatpush1.msra.mxu0 0.0
  %3186 = vmatprep.subr.mxu0 0.0
  %3187 = vmatpush1.msra.mxu0 0.0
  %3188 = vmatprep.subr.mxu0 0.0
  %3189 = vmatpush1.msra.mxu0 0.0
  %3190 = vmatprep.subr.mxu0 0.0
  %3191 = vmatpush1.msra.mxu0 0.0
  %3192 = vmatprep.mubr.f32.mxu0 0.0
  %3193 = vmatmul.mubr.f32.gmra.mrb[0].mxu0 %v3126
  %v3194 = vpop.f32.mrb[0].mxu0
  %v3195 = vadd.f32 %v1880, %v3194
  %v3196 = vpop.f32.mrb[0].mxu0
  %3197 = vdwg.mxu0
  %v3199 = vrot.slane %v3195, 4
  %v3201 = vsub.f32 %v58, %v3199
  %v3202 = vmul.f32 %v3201, %v3201
  %v3203 = vsub.f32 0.0, %v3202
  %v3204 = vmul.f32 %v3203, 200.0
  %v3205 = vsub.f32 %v3204, -2.0767937
  %vm3206 = vcmask 29700
  %v3207 = vsel %vm3206, %v3205, 0.0
  %3208 = vadd.xlane.f32.xlu0 %v3207
  %v3209 = vpop.xlane.xlu0 %3208
  %v3210 = vmul.f32 %v3195, %v3195
  %v3211 = vsel %vm1962, %v3210, 0.0
  %3212 = vadd.xlane.f32.xlu0 %v3211
  %v3213 = vpop.xlane.xlu0 %3212
  %v3214 = vrsqrt.pop %v3213
  %v3215 = vmul.f32 %v3213, %v3214
  %vm3216 = vcmp.eq.f32.partialorder %v3213, inf
  %v3217 = vsel %vm3216, %v3213, %v3215
  %vm3218 = vcmp.eq.f32.partialorder %v3213, 0.0
  %v3219 = vand.u32 %v3213, 2147483648
  %v3220 = vsel %vm3218, %v3219, %v3217
  %v3222 = vrot.slane %v3209, 4
  %v3224 = vadd.f32 %v2616, %v3222
  %v3225 = vadd.f32 %v2617, %v3220
  %v3226 = vrot.slane %v1782, 6
  %3228 = vmatprep.subr.mxu0 0.0
  %3229 = vmatpush1.msra.mxu0 %v1983
  %3230 = vmatprep.subr.mxu0 0.0
  %3231 = vmatpush1.msra.mxu0 0.0
  %3232 = vmatprep.subr.mxu0 0.0
  %3233 = vmatpush1.msra.mxu0 0.0
  %3234 = vmatprep.subr.mxu0 0.0
  %3235 = vmatpush1.msra.mxu0 0.0
  %3236 = vmatprep.subr.mxu0 0.0
  %3237 = vmatpush1.msra.mxu0 0.0
  %3238 = vmatprep.subr.mxu0 0.0
  %3239 = vmatpush1.msra.mxu0 0.0
  %3240 = vmatprep.subr.mxu0 0.0
  %3241 = vmatpush1.msra.mxu0 0.0
  %3242 = vmatprep.subr.mxu0 0.0
  %3243 = vmatpush1.msra.mxu0 0.0
  %3244 = vmatprep.subr.mxu0 0.0
  %3245 = vmatpush1.msra.mxu0 0.0
  %3246 = vmatprep.subr.mxu0 0.0
  %3247 = vmatpush1.msra.mxu0 0.0
  %3248 = vmatprep.subr.mxu0 0.0
  %3249 = vmatpush1.msra.mxu0 0.0
  %3250 = vmatprep.subr.mxu0 0.0
  %3251 = vmatpush1.msra.mxu0 0.0
  %3252 = vmatprep.subr.mxu0 0.0
  %3253 = vmatpush1.msra.mxu0 0.0
  %3254 = vmatprep.subr.mxu0 0.0
  %3255 = vmatpush1.msra.mxu0 0.0
  %3256 = vmatprep.subr.mxu0 0.0
  %3257 = vmatpush1.msra.mxu0 0.0
  %3258 = vmatprep.subr.mxu0 0.0
  %3259 = vmatpush1.msra.mxu0 0.0
  %3260 = vmatprep.subr.mxu0 0.0
  %3261 = vmatpush1.msra.mxu0 0.0
  %3262 = vmatprep.subr.mxu0 0.0
  %3263 = vmatpush1.msra.mxu0 0.0
  %3264 = vmatprep.subr.mxu0 0.0
  %3265 = vmatpush1.msra.mxu0 0.0
  %3266 = vmatprep.subr.mxu0 0.0
  %3267 = vmatpush1.msra.mxu0 0.0
  %3268 = vmatprep.subr.mxu0 0.0
  %3269 = vmatpush1.msra.mxu0 0.0
  %3270 = vmatprep.subr.mxu0 0.0
  %3271 = vmatpush1.msra.mxu0 0.0
  %3272 = vmatprep.subr.mxu0 0.0
  %3273 = vmatpush1.msra.mxu0 0.0
  %3274 = vmatprep.subr.mxu0 0.0
  %3275 = vmatpush1.msra.mxu0 0.0
  %3276 = vmatprep.subr.mxu0 0.0
  %3277 = vmatpush1.msra.mxu0 0.0
  %3278 = vmatprep.subr.mxu0 0.0
  %3279 = vmatpush1.msra.mxu0 0.0
  %3280 = vmatprep.subr.mxu0 0.0
  %3281 = vmatpush1.msra.mxu0 0.0
  %3282 = vmatprep.subr.mxu0 0.0
  %3283 = vmatpush1.msra.mxu0 0.0
  %3284 = vmatprep.subr.mxu0 0.0
  %3285 = vmatpush1.msra.mxu0 0.0
  %3286 = vmatprep.subr.mxu0 0.0
  %3287 = vmatpush1.msra.mxu0 0.0
  %3288 = vmatprep.subr.mxu0 0.0
  %3289 = vmatpush1.msra.mxu0 0.0
  %3290 = vmatprep.subr.mxu0 0.0
  %3291 = vmatpush1.msra.mxu0 0.0
  %3292 = vmatprep.mubr.f32.mxu0 0.0
  %3293 = vmatmul.mubr.f32.gmra.mrb[0].mxu0 %v3126
  %v3294 = vpop.f32.mrb[0].mxu0
  %v3295 = vadd.f32 %v3226, %v3294
  %v3296 = vpop.f32.mrb[0].mxu0
  %3297 = vdwg.mxu0
  %v3298 = vmax.f32 %v3295, 0.0
  %vm3299 = vcmp.ne.f32.partialorder %v3295, %v3295
  %v3300 = vadd.f32 %v3295, 0.0
  %v3301 = vand.u32 2147483647, %v3295
  %v3302 = vsub.f32 0.0, %v3301
  %v3303 = vmul.f32 %v3302, 1.442695
  %v3304 = vpow.pop %v3303
  %v3305 = vadd.f32 %v3304, 1.0
  %v3306 = vlog2.pop %v3305
  %v3307 = vmul.f32 %v3306, 0.6931472
  %v3308 = vmul.f32 -0.5, %v3304
  %v3309 = vadd.f32 %v3308, 1.0
  %v3310 = vmul.f32 %v3309, %v3304
  %v3311 = vand.u32 2147483647, %v3304
  %vm3312 = vcmp.lt.f32.partialorder %v3311, 0.0004427343
  %v3313 = vsel %vm3312, %v3310, %v3307
  %v3314 = vadd.f32 %v3298, %v3313
  %v3315 = vsel %vm3299, %v3300, %v3314
  %v3317 = vsel %vm234, %v3315, 0
  %3319 = vmatprep.subr.mxu0 0.0
  %3320 = vmatpush1.msra.mxu0 %v35
  %3321 = vmatprep.subr.mxu0 0.0
  %3322 = vmatpush1.msra.mxu0 %v36
  %3323 = vmatprep.subr.mxu0 0.0
  %3324 = vmatpush1.msra.mxu0 0.0
  %3325 = vmatprep.subr.mxu0 0.0
  %3326 = vmatpush1.msra.mxu0 0.0
  %3327 = vmatprep.subr.mxu0 0.0
  %3328 = vmatpush1.msra.mxu0 0.0
  %3329 = vmatprep.subr.mxu0 0.0
  %3330 = vmatpush1.msra.mxu0 0.0
  %3331 = vmatprep.subr.mxu0 0.0
  %3332 = vmatpush1.msra.mxu0 0.0
  %3333 = vmatprep.subr.mxu0 0.0
  %3334 = vmatpush1.msra.mxu0 0.0
  %3335 = vmatprep.subr.mxu0 0.0
  %3336 = vmatpush1.msra.mxu0 0.0
  %3337 = vmatprep.subr.mxu0 0.0
  %3338 = vmatpush1.msra.mxu0 0.0
  %3339 = vmatprep.subr.mxu0 0.0
  %3340 = vmatpush1.msra.mxu0 0.0
  %3341 = vmatprep.subr.mxu0 0.0
  %3342 = vmatpush1.msra.mxu0 0.0
  %3343 = vmatprep.subr.mxu0 0.0
  %3344 = vmatpush1.msra.mxu0 0.0
  %3345 = vmatprep.subr.mxu0 0.0
  %3346 = vmatpush1.msra.mxu0 0.0
  %3347 = vmatprep.subr.mxu0 0.0
  %3348 = vmatpush1.msra.mxu0 0.0
  %3349 = vmatprep.subr.mxu0 0.0
  %3350 = vmatpush1.msra.mxu0 0.0
  %3351 = vmatprep.subr.mxu0 0.0
  %3352 = vmatpush1.msra.mxu0 0.0
  %3353 = vmatprep.subr.mxu0 0.0
  %3354 = vmatpush1.msra.mxu0 0.0
  %3355 = vmatprep.subr.mxu0 0.0
  %3356 = vmatpush1.msra.mxu0 0.0
  %3357 = vmatprep.subr.mxu0 0.0
  %3358 = vmatpush1.msra.mxu0 0.0
  %3359 = vmatprep.subr.mxu0 0.0
  %3360 = vmatpush1.msra.mxu0 0.0
  %3361 = vmatprep.subr.mxu0 0.0
  %3362 = vmatpush1.msra.mxu0 0.0
  %3363 = vmatprep.subr.mxu0 0.0
  %3364 = vmatpush1.msra.mxu0 0.0
  %3365 = vmatprep.subr.mxu0 0.0
  %3366 = vmatpush1.msra.mxu0 0.0
  %3367 = vmatprep.subr.mxu0 0.0
  %3368 = vmatpush1.msra.mxu0 0.0
  %3369 = vmatprep.subr.mxu0 0.0
  %3370 = vmatpush1.msra.mxu0 0.0
  %3371 = vmatprep.subr.mxu0 0.0
  %3372 = vmatpush1.msra.mxu0 0.0
  %3373 = vmatprep.subr.mxu0 0.0
  %3374 = vmatpush1.msra.mxu0 0.0
  %3375 = vmatprep.subr.mxu0 0.0
  %3376 = vmatpush1.msra.mxu0 0.0
  %3377 = vmatprep.subr.mxu0 0.0
  %3378 = vmatpush1.msra.mxu0 0.0
  %3379 = vmatprep.subr.mxu0 0.0
  %3380 = vmatpush1.msra.mxu0 0.0
  %3381 = vmatprep.subr.mxu0 0.0
  %3382 = vmatpush1.msra.mxu0 0.0
  %3383 = vmatprep.mubr.f32.mxu0 0.0
  %3384 = vmatmul.mubr.f32.gmra.mrb[0].mxu0 %v3317
  %v3385 = vpop.f32.mrb[0].mxu0
  %v3386 = vadd.f32 %v2076, %v3385
  %v3387 = vpop.f32.mrb[0].mxu0
  %3388 = vdwg.mxu0
  %v3389 = vmax.f32 %v3386, 0.0
  %vm3390 = vcmp.ne.f32.partialorder %v3386, %v3386
  %v3391 = vadd.f32 %v3386, 0.0
  %v3392 = vand.u32 2147483647, %v3386
  %v3393 = vsub.f32 0.0, %v3392
  %v3394 = vmul.f32 %v3393, 1.442695
  %v3395 = vpow.pop %v3394
  %v3396 = vadd.f32 %v3395, 1.0
  %v3397 = vlog2.pop %v3396
  %v3398 = vmul.f32 %v3397, 0.6931472
  %v3399 = vmul.f32 -0.5, %v3395
  %v3400 = vadd.f32 %v3399, 1.0
  %v3401 = vmul.f32 %v3400, %v3395
  %v3402 = vand.u32 2147483647, %v3395
  %vm3403 = vcmp.lt.f32.partialorder %v3402, 0.0004427343
  %v3404 = vsel %vm3403, %v3401, %v3398
  %v3405 = vadd.f32 %v3389, %v3404
  %v3406 = vsel %vm3390, %v3391, %v3405
  %v3408 = vsel %vm234, %v3406, 0
  %3410 = vmatprep.subr.mxu0 0.0
  %3411 = vmatpush1.msra.mxu0 %v38
  %3412 = vmatprep.subr.mxu0 0.0
  %3413 = vmatpush1.msra.mxu0 %v39
  %3414 = vmatprep.subr.mxu0 0.0
  %3415 = vmatpush1.msra.mxu0 0.0
  %3416 = vmatprep.subr.mxu0 0.0
  %3417 = vmatpush1.msra.mxu0 0.0
  %3418 = vmatprep.subr.mxu0 0.0
  %3419 = vmatpush1.msra.mxu0 0.0
  %3420 = vmatprep.subr.mxu0 0.0
  %3421 = vmatpush1.msra.mxu0 0.0
  %3422 = vmatprep.subr.mxu0 0.0
  %3423 = vmatpush1.msra.mxu0 0.0
  %3424 = vmatprep.subr.mxu0 0.0
  %3425 = vmatpush1.msra.mxu0 0.0
  %3426 = vmatprep.subr.mxu0 0.0
  %3427 = vmatpush1.msra.mxu0 0.0
  %3428 = vmatprep.subr.mxu0 0.0
  %3429 = vmatpush1.msra.mxu0 0.0
  %3430 = vmatprep.subr.mxu0 0.0
  %3431 = vmatpush1.msra.mxu0 0.0
  %3432 = vmatprep.subr.mxu0 0.0
  %3433 = vmatpush1.msra.mxu0 0.0
  %3434 = vmatprep.subr.mxu0 0.0
  %3435 = vmatpush1.msra.mxu0 0.0
  %3436 = vmatprep.subr.mxu0 0.0
  %3437 = vmatpush1.msra.mxu0 0.0
  %3438 = vmatprep.subr.mxu0 0.0
  %3439 = vmatpush1.msra.mxu0 0.0
  %3440 = vmatprep.subr.mxu0 0.0
  %3441 = vmatpush1.msra.mxu0 0.0
  %3442 = vmatprep.subr.mxu0 0.0
  %3443 = vmatpush1.msra.mxu0 0.0
  %3444 = vmatprep.subr.mxu0 0.0
  %3445 = vmatpush1.msra.mxu0 0.0
  %3446 = vmatprep.subr.mxu0 0.0
  %3447 = vmatpush1.msra.mxu0 0.0
  %3448 = vmatprep.subr.mxu0 0.0
  %3449 = vmatpush1.msra.mxu0 0.0
  %3450 = vmatprep.subr.mxu0 0.0
  %3451 = vmatpush1.msra.mxu0 0.0
  %3452 = vmatprep.subr.mxu0 0.0
  %3453 = vmatpush1.msra.mxu0 0.0
  %3454 = vmatprep.subr.mxu0 0.0
  %3455 = vmatpush1.msra.mxu0 0.0
  %3456 = vmatprep.subr.mxu0 0.0
  %3457 = vmatpush1.msra.mxu0 0.0
  %3458 = vmatprep.subr.mxu0 0.0
  %3459 = vmatpush1.msra.mxu0 0.0
  %3460 = vmatprep.subr.mxu0 0.0
  %3461 = vmatpush1.msra.mxu0 0.0
  %3462 = vmatprep.subr.mxu0 0.0
  %3463 = vmatpush1.msra.mxu0 0.0
  %3464 = vmatprep.subr.mxu0 0.0
  %3465 = vmatpush1.msra.mxu0 0.0
  %3466 = vmatprep.subr.mxu0 0.0
  %3467 = vmatpush1.msra.mxu0 0.0
  %3468 = vmatprep.subr.mxu0 0.0
  %3469 = vmatpush1.msra.mxu0 0.0
  %3470 = vmatprep.subr.mxu0 0.0
  %3471 = vmatpush1.msra.mxu0 0.0
  %3472 = vmatprep.subr.mxu0 0.0
  %3473 = vmatpush1.msra.mxu0 0.0
  %3474 = vmatprep.mubr.f32.mxu0 0.0
  %3475 = vmatmul.mubr.f32.gmra.mrb[0].mxu0 %v3408
  %v3476 = vpop.f32.mrb[0].mxu0
  %v3477 = vadd.f32 %v2171, %v3476
  %v3478 = vpop.f32.mrb[0].mxu0
  %3479 = vdwg.mxu0
  %3480 = vmatprep.subr.mxu0 0.0
  %3481 = vmatpush1.msra.mxu0 %v2250
  %3482 = vmatprep.subr.mxu0 0.0
  %3483 = vmatpush1.msra.mxu0 0.0
  %3484 = vmatprep.subr.mxu0 0.0
  %3485 = vmatpush1.msra.mxu0 0.0
  %3486 = vmatprep.subr.mxu0 0.0
  %3487 = vmatpush1.msra.mxu0 0.0
  %3488 = vmatprep.subr.mxu0 0.0
  %3489 = vmatpush1.msra.mxu0 0.0
  %3490 = vmatprep.subr.mxu0 0.0
  %3491 = vmatpush1.msra.mxu0 0.0
  %3492 = vmatprep.subr.mxu0 0.0
  %3493 = vmatpush1.msra.mxu0 0.0
  %3494 = vmatprep.subr.mxu0 0.0
  %3495 = vmatpush1.msra.mxu0 0.0
  %3496 = vmatprep.subr.mxu0 0.0
  %3497 = vmatpush1.msra.mxu0 0.0
  %3498 = vmatprep.subr.mxu0 0.0
  %3499 = vmatpush1.msra.mxu0 0.0
  %3500 = vmatprep.subr.mxu0 0.0
  %3501 = vmatpush1.msra.mxu0 0.0
  %3502 = vmatprep.subr.mxu0 0.0
  %3503 = vmatpush1.msra.mxu0 0.0
  %3504 = vmatprep.subr.mxu0 0.0
  %3505 = vmatpush1.msra.mxu0 0.0
  %3506 = vmatprep.subr.mxu0 0.0
  %3507 = vmatpush1.msra.mxu0 0.0
  %3508 = vmatprep.subr.mxu0 0.0
  %3509 = vmatpush1.msra.mxu0 0.0
  %3510 = vmatprep.subr.mxu0 0.0
  %3511 = vmatpush1.msra.mxu0 0.0
  %3512 = vmatprep.subr.mxu0 0.0
  %3513 = vmatpush1.msra.mxu0 0.0
  %3514 = vmatprep.subr.mxu0 0.0
  %3515 = vmatpush1.msra.mxu0 0.0
  %3516 = vmatprep.subr.mxu0 0.0
  %3517 = vmatpush1.msra.mxu0 0.0
  %3518 = vmatprep.subr.mxu0 0.0
  %3519 = vmatpush1.msra.mxu0 0.0
  %3520 = vmatprep.subr.mxu0 0.0
  %3521 = vmatpush1.msra.mxu0 0.0
  %3522 = vmatprep.subr.mxu0 0.0
  %3523 = vmatpush1.msra.mxu0 0.0
  %3524 = vmatprep.subr.mxu0 0.0
  %3525 = vmatpush1.msra.mxu0 0.0
  %3526 = vmatprep.subr.mxu0 0.0
  %3527 = vmatpush1.msra.mxu0 0.0
  %3528 = vmatprep.subr.mxu0 0.0
  %3529 = vmatpush1.msra.mxu0 0.0
  %3530 = vmatprep.subr.mxu0 0.0
  %3531 = vmatpush1.msra.mxu0 0.0
  %3532 = vmatprep.subr.mxu0 0.0
  %3533 = vmatpush1.msra.mxu0 0.0
  %3534 = vmatprep.subr.mxu0 0.0
  %3535 = vmatpush1.msra.mxu0 0.0
  %3536 = vmatprep.subr.mxu0 0.0
  %3537 = vmatpush1.msra.mxu0 0.0
  %3538 = vmatprep.subr.mxu0 0.0
  %3539 = vmatpush1.msra.mxu0 0.0
  %3540 = vmatprep.subr.mxu0 0.0
  %3541 = vmatpush1.msra.mxu0 0.0
  %3542 = vmatprep.subr.mxu0 0.0
  %3543 = vmatpush1.msra.mxu0 0.0
  %3544 = vmatprep.mubr.f32.mxu0 0.0
  %3545 = vmatmul.mubr.f32.gmra.mrb[0].mxu0 %v3126
  %v3546 = vpop.f32.mrb[0].mxu0
  %v3547 = vadd.f32 %v2248, %v3546
  %v3548 = vpop.f32.mrb[0].mxu0
  %3549 = vdwg.mxu0
  %3550 = vmatprep.subr.mxu0 0.0
  %3551 = vmatpush1.msra.mxu0 %v2327
  %3552 = vmatprep.subr.mxu0 0.0
  %3553 = vmatpush1.msra.mxu0 0.0
  %3554 = vmatprep.subr.mxu0 0.0
  %3555 = vmatpush1.msra.mxu0 0.0
  %3556 = vmatprep.subr.mxu0 0.0
  %3557 = vmatpush1.msra.mxu0 0.0
  %3558 = vmatprep.subr.mxu0 0.0
  %3559 = vmatpush1.msra.mxu0 0.0
  %3560 = vmatprep.subr.mxu0 0.0
  %3561 = vmatpush1.msra.mxu0 0.0
  %3562 = vmatprep.subr.mxu0 0.0
  %3563 = vmatpush1.msra.mxu0 0.0
  %3564 = vmatprep.subr.mxu0 0.0
  %3565 = vmatpush1.msra.mxu0 0.0
  %3566 = vmatprep.subr.mxu0 0.0
  %3567 = vmatpush1.msra.mxu0 0.0
  %3568 = vmatprep.subr.mxu0 0.0
  %3569 = vmatpush1.msra.mxu0 0.0
  %3570 = vmatprep.subr.mxu0 0.0
  %3571 = vmatpush1.msra.mxu0 0.0
  %3572 = vmatprep.subr.mxu0 0.0
  %3573 = vmatpush1.msra.mxu0 0.0
  %3574 = vmatprep.subr.mxu0 0.0
  %3575 = vmatpush1.msra.mxu0 0.0
  %3576 = vmatprep.subr.mxu0 0.0
  %3577 = vmatpush1.msra.mxu0 0.0
  %3578 = vmatprep.subr.mxu0 0.0
  %3579 = vmatpush1.msra.mxu0 0.0
  %3580 = vmatprep.subr.mxu0 0.0
  %3581 = vmatpush1.msra.mxu0 0.0
  %3582 = vmatprep.subr.mxu0 0.0
  %3583 = vmatpush1.msra.mxu0 0.0
  %3584 = vmatprep.subr.mxu0 0.0
  %3585 = vmatpush1.msra.mxu0 0.0
  %3586 = vmatprep.subr.mxu0 0.0
  %3587 = vmatpush1.msra.mxu0 0.0
  %3588 = vmatprep.subr.mxu0 0.0
  %3589 = vmatpush1.msra.mxu0 0.0
  %3590 = vmatprep.subr.mxu0 0.0
  %3591 = vmatpush1.msra.mxu0 0.0
  %3592 = vmatprep.subr.mxu0 0.0
  %3593 = vmatpush1.msra.mxu0 0.0
  %3594 = vmatprep.subr.mxu0 0.0
  %3595 = vmatpush1.msra.mxu0 0.0
  %3596 = vmatprep.subr.mxu0 0.0
  %3597 = vmatpush1.msra.mxu0 0.0
  %3598 = vmatprep.subr.mxu0 0.0
  %3599 = vmatpush1.msra.mxu0 0.0
  %3600 = vmatprep.subr.mxu0 0.0
  %3601 = vmatpush1.msra.mxu0 0.0
  %3602 = vmatprep.subr.mxu0 0.0
  %3603 = vmatpush1.msra.mxu0 0.0
  %3604 = vmatprep.subr.mxu0 0.0
  %3605 = vmatpush1.msra.mxu0 0.0
  %3606 = vmatprep.subr.mxu0 0.0
  %3607 = vmatpush1.msra.mxu0 0.0
  %3608 = vmatprep.subr.mxu0 0.0
  %3609 = vmatpush1.msra.mxu0 0.0
  %3610 = vmatprep.subr.mxu0 0.0
  %3611 = vmatpush1.msra.mxu0 0.0
  %3612 = vmatprep.subr.mxu0 0.0
  %3613 = vmatpush1.msra.mxu0 0.0
  %3614 = vmatprep.mubr.f32.mxu0 0.0
  %3615 = vmatmul.mubr.f32.gmra.mrb[0].mxu0 %v3126
  %v3616 = vpop.f32.mrb[0].mxu0
  %v3617 = vadd.f32 %v2325, %v3616
  %v3618 = vpop.f32.mrb[0].mxu0
  %3619 = vdwg.mxu0
  %v3620 = vmax.f32 %v3617, 0.0
  %vm3621 = vcmp.ne.f32.partialorder %v3617, %v3617
  %v3622 = vadd.f32 %v3617, 0.0
  %v3623 = vand.u32 2147483647, %v3617
  %v3624 = vsub.f32 0.0, %v3623
  %v3625 = vmul.f32 %v3624, 1.442695
  %v3626 = vpow.pop %v3625
  %v3627 = vadd.f32 %v3626, 1.0
  %v3628 = vlog2.pop %v3627
  %v3629 = vmul.f32 %v3628, 0.6931472
  %v3630 = vmul.f32 -0.5, %v3626
  %v3631 = vadd.f32 %v3630, 1.0
  %v3632 = vmul.f32 %v3631, %v3626
  %v3633 = vand.u32 2147483647, %v3626
  %vm3634 = vcmp.lt.f32.partialorder %v3633, 0.0004427343
  %v3635 = vsel %vm3634, %v3632, %v3629
  %v3636 = vadd.f32 %v3620, %v3635
  %v3637 = vsel %vm3621, %v3622, %v3636
  %v3639 = vsel %vm2421, %v3637, 0
  %3641 = vmatprep.subr.mxu0 0.0
  %3642 = vmatpush1.msra.mxu0 %v47
  %3643 = vmatprep.subr.mxu0 0.0
  %3644 = vmatpush1.msra.mxu0 %v48
  %3645 = vmatprep.subr.mxu0 0.0
  %3646 = vmatpush1.msra.mxu0 %v49
  %3647 = vmatprep.subr.mxu0 0.0
  %3648 = vmatpush1.msra.mxu0 %v50
  %3649 = vmatprep.subr.mxu0 0.0
  %3650 = vmatpush1.msra.mxu0 %v51
  %3651 = vmatprep.subr.mxu0 0.0
  %3652 = vmatpush1.msra.mxu0 %v52
  %3653 = vmatprep.subr.mxu0 0.0
  %3654 = vmatpush1.msra.mxu0 %v53
  %3655 = vmatprep.subr.mxu0 0.0
  %3656 = vmatpush1.msra.mxu0 %v54
  %3657 = vmatprep.subr.mxu0 0.0
  %3658 = vmatpush1.msra.mxu0 0.0
  %3659 = vmatprep.subr.mxu0 0.0
  %3660 = vmatpush1.msra.mxu0 0.0
  %3661 = vmatprep.subr.mxu0 0.0
  %3662 = vmatpush1.msra.mxu0 0.0
  %3663 = vmatprep.subr.mxu0 0.0
  %3664 = vmatpush1.msra.mxu0 0.0
  %3665 = vmatprep.subr.mxu0 0.0
  %3666 = vmatpush1.msra.mxu0 0.0
  %3667 = vmatprep.subr.mxu0 0.0
  %3668 = vmatpush1.msra.mxu0 0.0
  %3669 = vmatprep.subr.mxu0 0.0
  %3670 = vmatpush1.msra.mxu0 0.0
  %3671 = vmatprep.subr.mxu0 0.0
  %3672 = vmatpush1.msra.mxu0 0.0
  %3673 = vmatprep.subr.mxu0 0.0
  %3674 = vmatpush1.msra.mxu0 0.0
  %3675 = vmatprep.subr.mxu0 0.0
  %3676 = vmatpush1.msra.mxu0 0.0
  %3677 = vmatprep.subr.mxu0 0.0
  %3678 = vmatpush1.msra.mxu0 0.0
  %3679 = vmatprep.subr.mxu0 0.0
  %3680 = vmatpush1.msra.mxu0 0.0
  %3681 = vmatprep.subr.mxu0 0.0
  %3682 = vmatpush1.msra.mxu0 0.0
  %3683 = vmatprep.subr.mxu0 0.0
  %3684 = vmatpush1.msra.mxu0 0.0
  %3685 = vmatprep.subr.mxu0 0.0
  %3686 = vmatpush1.msra.mxu0 0.0
  %3687 = vmatprep.subr.mxu0 0.0
  %3688 = vmatpush1.msra.mxu0 0.0
  %3689 = vmatprep.subr.mxu0 0.0
  %3690 = vmatpush1.msra.mxu0 0.0
  %3691 = vmatprep.subr.mxu0 0.0
  %3692 = vmatpush1.msra.mxu0 0.0
  %3693 = vmatprep.subr.mxu0 0.0
  %3694 = vmatpush1.msra.mxu0 0.0
  %3695 = vmatprep.subr.mxu0 0.0
  %3696 = vmatpush1.msra.mxu0 0.0
  %3697 = vmatprep.subr.mxu0 0.0
  %3698 = vmatpush1.msra.mxu0 0.0
  %3699 = vmatprep.subr.mxu0 0.0
  %3700 = vmatpush1.msra.mxu0 0.0
  %3701 = vmatprep.subr.mxu0 0.0
  %3702 = vmatpush1.msra.mxu0 0.0
  %3703 = vmatprep.subr.mxu0 0.0
  %3704 = vmatpush1.msra.mxu0 0.0
  %3705 = vmatprep.mubr.f32.mxu0 0.0
  %3706 = vmatmul.mubr.f32.gmra.mrb[0].mxu0 %v3639
  %v3707 = vpop.f32.mrb[0].mxu0
  %v3708 = vadd.f32 %v2420, %v3707
  %v3709 = vpop.f32.mrb[0].mxu0
  %3710 = vdwg.mxu0
  %v3711 = vxor.u32 %v3708, 2147483648
  %v3712 = vmul.f32 %v3711, 1.442695
  %v3713 = vpow.pop %v3712
  %v3714 = vadd.f32 %v3713, 1.0
  %v3715 = vrcp.pop %v3714
  %v3716 = vmul.f32 1.0, %v3715
  %v3717 = vsub.f32 %v3477, %v3547
  %v3718 = vmax.f32 %v3716, 1e-07
  %v3719 = vrcp.pop %v3718
  %v3720 = vmul.f32 %v3717, %v3719
  %v3721 = vmul.f32 %v3720, %v3720
  %v3722 = vsel %vm1962, %v3721, 0.0
  %3723 = vadd.xlane.f32.xlu0 %v3722
  %v3724 = vpop.xlane.xlu0 %3723
  %v3725 = vmul.f32 %v3724, 0.005
  %v3726 = vadd.f32 %v3118, %v3725
  %v3727 = vmul.f32 %v3477, 0.01
  %v3728 = vadd.f32 %v3124, %v3727
  %v3729 = vrot.slane %v60, 6
  %v3731 = vmul.f32 %v3716, %v3729
  %v3732 = vadd.f32 %v3728, %v3731
  %v3734 = vsel %vm66, %v3732, 0
  %3736 = vmatprep.subr.mxu0 0.0
  %3737 = vmatpush1.msra.mxu0 %v1885
  %3738 = vmatprep.subr.mxu0 0.0
  %3739 = vmatpush1.msra.mxu0 0.0
  %3740 = vmatprep.subr.mxu0 0.0
  %3741 = vmatpush1.msra.mxu0 0.0
  %3742 = vmatprep.subr.mxu0 0.0
  %3743 = vmatpush1.msra.mxu0 0.0
  %3744 = vmatprep.subr.mxu0 0.0
  %3745 = vmatpush1.msra.mxu0 0.0
  %3746 = vmatprep.subr.mxu0 0.0
  %3747 = vmatpush1.msra.mxu0 0.0
  %3748 = vmatprep.subr.mxu0 0.0
  %3749 = vmatpush1.msra.mxu0 0.0
  %3750 = vmatprep.subr.mxu0 0.0
  %3751 = vmatpush1.msra.mxu0 0.0
  %3752 = vmatprep.subr.mxu0 0.0
  %3753 = vmatpush1.msra.mxu0 0.0
  %3754 = vmatprep.subr.mxu0 0.0
  %3755 = vmatpush1.msra.mxu0 0.0
  %3756 = vmatprep.subr.mxu0 0.0
  %3757 = vmatpush1.msra.mxu0 0.0
  %3758 = vmatprep.subr.mxu0 0.0
  %3759 = vmatpush1.msra.mxu0 0.0
  %3760 = vmatprep.subr.mxu0 0.0
  %3761 = vmatpush1.msra.mxu0 0.0
  %3762 = vmatprep.subr.mxu0 0.0
  %3763 = vmatpush1.msra.mxu0 0.0
  %3764 = vmatprep.subr.mxu0 0.0
  %3765 = vmatpush1.msra.mxu0 0.0
  %3766 = vmatprep.subr.mxu0 0.0
  %3767 = vmatpush1.msra.mxu0 0.0
  %3768 = vmatprep.subr.mxu0 0.0
  %3769 = vmatpush1.msra.mxu0 0.0
  %3770 = vmatprep.subr.mxu0 0.0
  %3771 = vmatpush1.msra.mxu0 0.0
  %3772 = vmatprep.subr.mxu0 0.0
  %3773 = vmatpush1.msra.mxu0 0.0
  %3774 = vmatprep.subr.mxu0 0.0
  %3775 = vmatpush1.msra.mxu0 0.0
  %3776 = vmatprep.subr.mxu0 0.0
  %3777 = vmatpush1.msra.mxu0 0.0
  %3778 = vmatprep.subr.mxu0 0.0
  %3779 = vmatpush1.msra.mxu0 0.0
  %3780 = vmatprep.subr.mxu0 0.0
  %3781 = vmatpush1.msra.mxu0 0.0
  %3782 = vmatprep.subr.mxu0 0.0
  %3783 = vmatpush1.msra.mxu0 0.0
  %3784 = vmatprep.subr.mxu0 0.0
  %3785 = vmatpush1.msra.mxu0 0.0
  %3786 = vmatprep.subr.mxu0 0.0
  %3787 = vmatpush1.msra.mxu0 0.0
  %3788 = vmatprep.subr.mxu0 0.0
  %3789 = vmatpush1.msra.mxu0 0.0
  %3790 = vmatprep.subr.mxu0 0.0
  %3791 = vmatpush1.msra.mxu0 0.0
  %3792 = vmatprep.subr.mxu0 0.0
  %3793 = vmatpush1.msra.mxu0 0.0
  %3794 = vmatprep.subr.mxu0 0.0
  %3795 = vmatpush1.msra.mxu0 0.0
  %3796 = vmatprep.subr.mxu0 0.0
  %3797 = vmatpush1.msra.mxu0 0.0
  %3798 = vmatprep.subr.mxu0 0.0
  %3799 = vmatpush1.msra.mxu0 0.0
  %3800 = vmatprep.mubr.f32.mxu0 0.0
  %3801 = vmatmul.mubr.f32.gmra.mrb[0].mxu0 %v3734
  %v3802 = vpop.f32.mrb[0].mxu0
  %v3803 = vadd.f32 %v1880, %v3802
  %v3804 = vpop.f32.mrb[0].mxu0
  %3805 = vdwg.mxu0
  %v3807 = vrot.slane %v3803, 2
  %v3809 = vsub.f32 %v58, %v3807
  %v3810 = vmul.f32 %v3809, %v3809
  %v3811 = vsub.f32 0.0, %v3810
  %v3812 = vmul.f32 %v3811, 200.0
  %v3813 = vsub.f32 %v3812, -2.0767937
  %vm3814 = vcmask 31750
  %v3815 = vsel %vm3814, %v3813, 0.0
  %3816 = vadd.xlane.f32.xlu0 %v3815
  %v3817 = vpop.xlane.xlu0 %3816
  %v3818 = vmul.f32 %v3803, %v3803
  %v3819 = vsel %vm1962, %v3818, 0.0
  %3820 = vadd.xlane.f32.xlu0 %v3819
  %v3821 = vpop.xlane.xlu0 %3820
  %v3822 = vrsqrt.pop %v3821
  %v3823 = vmul.f32 %v3821, %v3822
  %vm3824 = vcmp.eq.f32.partialorder %v3821, inf
  %v3825 = vsel %vm3824, %v3821, %v3823
  %vm3826 = vcmp.eq.f32.partialorder %v3821, 0.0
  %v3827 = vand.u32 %v3821, 2147483648
  %v3828 = vsel %vm3826, %v3827, %v3825
  %v3830 = vrot.slane %v3817, 6
  %v3832 = vadd.f32 %v3224, %v3830
  %v3833 = vadd.f32 %v3225, %v3828
  %3834 = vmatprep.subr.mxu0 0.0
  %3835 = vmatpush1.msra.mxu0 %v1983
  %3836 = vmatprep.subr.mxu0 0.0
  %3837 = vmatpush1.msra.mxu0 0.0
  %3838 = vmatprep.subr.mxu0 0.0
  %3839 = vmatpush1.msra.mxu0 0.0
  %3840 = vmatprep.subr.mxu0 0.0
  %3841 = vmatpush1.msra.mxu0 0.0
  %3842 = vmatprep.subr.mxu0 0.0
  %3843 = vmatpush1.msra.mxu0 0.0
  %3844 = vmatprep.subr.mxu0 0.0
  %3845 = vmatpush1.msra.mxu0 0.0
  %3846 = vmatprep.subr.mxu0 0.0
  %3847 = vmatpush1.msra.mxu0 0.0
  %3848 = vmatprep.subr.mxu0 0.0
  %3849 = vmatpush1.msra.mxu0 0.0
  %3850 = vmatprep.subr.mxu0 0.0
  %3851 = vmatpush1.msra.mxu0 0.0
  %3852 = vmatprep.subr.mxu0 0.0
  %3853 = vmatpush1.msra.mxu0 0.0
  %3854 = vmatprep.subr.mxu0 0.0
  %3855 = vmatpush1.msra.mxu0 0.0
  %3856 = vmatprep.subr.mxu0 0.0
  %3857 = vmatpush1.msra.mxu0 0.0
  %3858 = vmatprep.subr.mxu0 0.0
  %3859 = vmatpush1.msra.mxu0 0.0
  %3860 = vmatprep.subr.mxu0 0.0
  %3861 = vmatpush1.msra.mxu0 0.0
  %3862 = vmatprep.subr.mxu0 0.0
  %3863 = vmatpush1.msra.mxu0 0.0
  %3864 = vmatprep.subr.mxu0 0.0
  %3865 = vmatpush1.msra.mxu0 0.0
  %3866 = vmatprep.subr.mxu0 0.0
  %3867 = vmatpush1.msra.mxu0 0.0
  %3868 = vmatprep.subr.mxu0 0.0
  %3869 = vmatpush1.msra.mxu0 0.0
  %3870 = vmatprep.subr.mxu0 0.0
  %3871 = vmatpush1.msra.mxu0 0.0
  %3872 = vmatprep.subr.mxu0 0.0
  %3873 = vmatpush1.msra.mxu0 0.0
  %3874 = vmatprep.subr.mxu0 0.0
  %3875 = vmatpush1.msra.mxu0 0.0
  %3876 = vmatprep.subr.mxu0 0.0
  %3877 = vmatpush1.msra.mxu0 0.0
  %3878 = vmatprep.subr.mxu0 0.0
  %3879 = vmatpush1.msra.mxu0 0.0
  %3880 = vmatprep.subr.mxu0 0.0
  %3881 = vmatpush1.msra.mxu0 0.0
  %3882 = vmatprep.subr.mxu0 0.0
  %3883 = vmatpush1.msra.mxu0 0.0
  %3884 = vmatprep.subr.mxu0 0.0
  %3885 = vmatpush1.msra.mxu0 0.0
  %3886 = vmatprep.subr.mxu0 0.0
  %3887 = vmatpush1.msra.mxu0 0.0
  %3888 = vmatprep.subr.mxu0 0.0
  %3889 = vmatpush1.msra.mxu0 0.0
  %3890 = vmatprep.subr.mxu0 0.0
  %3891 = vmatpush1.msra.mxu0 0.0
  %3892 = vmatprep.subr.mxu0 0.0
  %3893 = vmatpush1.msra.mxu0 0.0
  %3894 = vmatprep.subr.mxu0 0.0
  %3895 = vmatpush1.msra.mxu0 0.0
  %3896 = vmatprep.subr.mxu0 0.0
  %3897 = vmatpush1.msra.mxu0 0.0
  %3898 = vmatprep.mubr.f32.mxu0 0.0
  %3899 = vmatmul.mubr.f32.gmra.mrb[0].mxu0 %v3734
  %v3900 = vpop.f32.mrb[0].mxu0
  %v3901 = vadd.f32 %v1787, %v3900
  %v3902 = vpop.f32.mrb[0].mxu0
  %3903 = vdwg.mxu0
  %v3904 = vmax.f32 %v3901, 0.0
  %vm3905 = vcmp.ne.f32.partialorder %v3901, %v3901
  %v3906 = vadd.f32 %v3901, 0.0
  %v3907 = vand.u32 2147483647, %v3901
  %v3908 = vsub.f32 0.0, %v3907
  %v3909 = vmul.f32 %v3908, 1.442695
  %v3910 = vpow.pop %v3909
  %v3911 = vadd.f32 %v3910, 1.0
  %v3912 = vlog2.pop %v3911
  %v3913 = vmul.f32 %v3912, 0.6931472
  %v3914 = vmul.f32 -0.5, %v3910
  %v3915 = vadd.f32 %v3914, 1.0
  %v3916 = vmul.f32 %v3915, %v3910
  %v3917 = vand.u32 2147483647, %v3910
  %vm3918 = vcmp.lt.f32.partialorder %v3917, 0.0004427343
  %v3919 = vsel %vm3918, %v3916, %v3913
  %v3920 = vadd.f32 %v3904, %v3919
  %v3921 = vsel %vm3905, %v3906, %v3920
  %v3923 = vsel %vm234, %v3921, 0
  %3925 = vmatprep.subr.mxu0 0.0
  %3926 = vmatpush1.msra.mxu0 %v35
  %3927 = vmatprep.subr.mxu0 0.0
  %3928 = vmatpush1.msra.mxu0 %v36
  %3929 = vmatprep.subr.mxu0 0.0
  %3930 = vmatpush1.msra.mxu0 0.0
  %3931 = vmatprep.subr.mxu0 0.0
  %3932 = vmatpush1.msra.mxu0 0.0
  %3933 = vmatprep.subr.mxu0 0.0
  %3934 = vmatpush1.msra.mxu0 0.0
  %3935 = vmatprep.subr.mxu0 0.0
  %3936 = vmatpush1.msra.mxu0 0.0
  %3937 = vmatprep.subr.mxu0 0.0
  %3938 = vmatpush1.msra.mxu0 0.0
  %3939 = vmatprep.subr.mxu0 0.0
  %3940 = vmatpush1.msra.mxu0 0.0
  %3941 = vmatprep.subr.mxu0 0.0
  %3942 = vmatpush1.msra.mxu0 0.0
  %3943 = vmatprep.subr.mxu0 0.0
  %3944 = vmatpush1.msra.mxu0 0.0
  %3945 = vmatprep.subr.mxu0 0.0
  %3946 = vmatpush1.msra.mxu0 0.0
  %3947 = vmatprep.subr.mxu0 0.0
  %3948 = vmatpush1.msra.mxu0 0.0
  %3949 = vmatprep.subr.mxu0 0.0
  %3950 = vmatpush1.msra.mxu0 0.0
  %3951 = vmatprep.subr.mxu0 0.0
  %3952 = vmatpush1.msra.mxu0 0.0
  %3953 = vmatprep.subr.mxu0 0.0
  %3954 = vmatpush1.msra.mxu0 0.0
  %3955 = vmatprep.subr.mxu0 0.0
  %3956 = vmatpush1.msra.mxu0 0.0
  %3957 = vmatprep.subr.mxu0 0.0
  %3958 = vmatpush1.msra.mxu0 0.0
  %3959 = vmatprep.subr.mxu0 0.0
  %3960 = vmatpush1.msra.mxu0 0.0
  %3961 = vmatprep.subr.mxu0 0.0
  %3962 = vmatpush1.msra.mxu0 0.0
  %3963 = vmatprep.subr.mxu0 0.0
  %3964 = vmatpush1.msra.mxu0 0.0
  %3965 = vmatprep.subr.mxu0 0.0
  %3966 = vmatpush1.msra.mxu0 0.0
  %3967 = vmatprep.subr.mxu0 0.0
  %3968 = vmatpush1.msra.mxu0 0.0
  %3969 = vmatprep.subr.mxu0 0.0
  %3970 = vmatpush1.msra.mxu0 0.0
  %3971 = vmatprep.subr.mxu0 0.0
  %3972 = vmatpush1.msra.mxu0 0.0
  %3973 = vmatprep.subr.mxu0 0.0
  %3974 = vmatpush1.msra.mxu0 0.0
  %3975 = vmatprep.subr.mxu0 0.0
  %3976 = vmatpush1.msra.mxu0 0.0
  %3977 = vmatprep.subr.mxu0 0.0
  %3978 = vmatpush1.msra.mxu0 0.0
  %3979 = vmatprep.subr.mxu0 0.0
  %3980 = vmatpush1.msra.mxu0 0.0
  %3981 = vmatprep.subr.mxu0 0.0
  %3982 = vmatpush1.msra.mxu0 0.0
  %3983 = vmatprep.subr.mxu0 0.0
  %3984 = vmatpush1.msra.mxu0 0.0
  %3985 = vmatprep.subr.mxu0 0.0
  %3986 = vmatpush1.msra.mxu0 0.0
  %3987 = vmatprep.subr.mxu0 0.0
  %3988 = vmatpush1.msra.mxu0 0.0
  %3989 = vmatprep.mubr.f32.mxu0 0.0
  %3990 = vmatmul.mubr.f32.gmra.mrb[0].mxu0 %v3923
  %v3991 = vpop.f32.mrb[0].mxu0
  %v3992 = vadd.f32 %v2076, %v3991
  %v3993 = vpop.f32.mrb[0].mxu0
  %3994 = vdwg.mxu0
  %v3995 = vmax.f32 %v3992, 0.0
  %vm3996 = vcmp.ne.f32.partialorder %v3992, %v3992
  %v3997 = vadd.f32 %v3992, 0.0
  %v3998 = vand.u32 2147483647, %v3992
  %v3999 = vsub.f32 0.0, %v3998
  %v4000 = vmul.f32 %v3999, 1.442695
  %v4001 = vpow.pop %v4000
  %v4002 = vadd.f32 %v4001, 1.0
  %v4003 = vlog2.pop %v4002
  %v4004 = vmul.f32 %v4003, 0.6931472
  %v4005 = vmul.f32 -0.5, %v4001
  %v4006 = vadd.f32 %v4005, 1.0
  %v4007 = vmul.f32 %v4006, %v4001
  %v4008 = vand.u32 2147483647, %v4001
  %vm4009 = vcmp.lt.f32.partialorder %v4008, 0.0004427343
  %v4010 = vsel %vm4009, %v4007, %v4004
  %v4011 = vadd.f32 %v3995, %v4010
  %v4012 = vsel %vm3996, %v3997, %v4011
  %v4014 = vsel %vm234, %v4012, 0
  %4016 = vmatprep.subr.mxu0 0.0
  %4017 = vmatpush1.msra.mxu0 %v38
  %4018 = vmatprep.subr.mxu0 0.0
  %4019 = vmatpush1.msra.mxu0 %v39
  %4020 = vmatprep.subr.mxu0 0.0
  %4021 = vmatpush1.msra.mxu0 0.0
  %4022 = vmatprep.subr.mxu0 0.0
  %4023 = vmatpush1.msra.mxu0 0.0
  %4024 = vmatprep.subr.mxu0 0.0
  %4025 = vmatpush1.msra.mxu0 0.0
  %4026 = vmatprep.subr.mxu0 0.0
  %4027 = vmatpush1.msra.mxu0 0.0
  %4028 = vmatprep.subr.mxu0 0.0
  %4029 = vmatpush1.msra.mxu0 0.0
  %4030 = vmatprep.subr.mxu0 0.0
  %4031 = vmatpush1.msra.mxu0 0.0
  %4032 = vmatprep.subr.mxu0 0.0
  %4033 = vmatpush1.msra.mxu0 0.0
  %4034 = vmatprep.subr.mxu0 0.0
  %4035 = vmatpush1.msra.mxu0 0.0
  %4036 = vmatprep.subr.mxu0 0.0
  %4037 = vmatpush1.msra.mxu0 0.0
  %4038 = vmatprep.subr.mxu0 0.0
  %4039 = vmatpush1.msra.mxu0 0.0
  %4040 = vmatprep.subr.mxu0 0.0
  %4041 = vmatpush1.msra.mxu0 0.0
  %4042 = vmatprep.subr.mxu0 0.0
  %4043 = vmatpush1.msra.mxu0 0.0
  %4044 = vmatprep.subr.mxu0 0.0
  %4045 = vmatpush1.msra.mxu0 0.0
  %4046 = vmatprep.subr.mxu0 0.0
  %4047 = vmatpush1.msra.mxu0 0.0
  %4048 = vmatprep.subr.mxu0 0.0
  %4049 = vmatpush1.msra.mxu0 0.0
  %4050 = vmatprep.subr.mxu0 0.0
  %4051 = vmatpush1.msra.mxu0 0.0
  %4052 = vmatprep.subr.mxu0 0.0
  %4053 = vmatpush1.msra.mxu0 0.0
  %4054 = vmatprep.subr.mxu0 0.0
  %4055 = vmatpush1.msra.mxu0 0.0
  %4056 = vmatprep.subr.mxu0 0.0
  %4057 = vmatpush1.msra.mxu0 0.0
  %4058 = vmatprep.subr.mxu0 0.0
  %4059 = vmatpush1.msra.mxu0 0.0
  %4060 = vmatprep.subr.mxu0 0.0
  %4061 = vmatpush1.msra.mxu0 0.0
  %4062 = vmatprep.subr.mxu0 0.0
  %4063 = vmatpush1.msra.mxu0 0.0
  %4064 = vmatprep.subr.mxu0 0.0
  %4065 = vmatpush1.msra.mxu0 0.0
  %4066 = vmatprep.subr.mxu0 0.0
  %4067 = vmatpush1.msra.mxu0 0.0
  %4068 = vmatprep.subr.mxu0 0.0
  %4069 = vmatpush1.msra.mxu0 0.0
  %4070 = vmatprep.subr.mxu0 0.0
  %4071 = vmatpush1.msra.mxu0 0.0
  %4072 = vmatprep.subr.mxu0 0.0
  %4073 = vmatpush1.msra.mxu0 0.0
  %4074 = vmatprep.subr.mxu0 0.0
  %4075 = vmatpush1.msra.mxu0 0.0
  %4076 = vmatprep.subr.mxu0 0.0
  %4077 = vmatpush1.msra.mxu0 0.0
  %4078 = vmatprep.subr.mxu0 0.0
  %4079 = vmatpush1.msra.mxu0 0.0
  %4080 = vmatprep.mubr.f32.mxu0 0.0
  %4081 = vmatmul.mubr.f32.gmra.mrb[0].mxu0 %v4014
  %v4082 = vpop.f32.mrb[0].mxu0
  %v4083 = vadd.f32 %v2171, %v4082
  %v4084 = vpop.f32.mrb[0].mxu0
  %4085 = vdwg.mxu0
  %4086 = vmatprep.subr.mxu0 0.0
  %4087 = vmatpush1.msra.mxu0 %v2250
  %4088 = vmatprep.subr.mxu0 0.0
  %4089 = vmatpush1.msra.mxu0 0.0
  %4090 = vmatprep.subr.mxu0 0.0
  %4091 = vmatpush1.msra.mxu0 0.0
  %4092 = vmatprep.subr.mxu0 0.0
  %4093 = vmatpush1.msra.mxu0 0.0
  %4094 = vmatprep.subr.mxu0 0.0
  %4095 = vmatpush1.msra.mxu0 0.0
  %4096 = vmatprep.subr.mxu0 0.0
  %4097 = vmatpush1.msra.mxu0 0.0
  %4098 = vmatprep.subr.mxu0 0.0
  %4099 = vmatpush1.msra.mxu0 0.0
  %4100 = vmatprep.subr.mxu0 0.0
  %4101 = vmatpush1.msra.mxu0 0.0
  %4102 = vmatprep.subr.mxu0 0.0
  %4103 = vmatpush1.msra.mxu0 0.0
  %4104 = vmatprep.subr.mxu0 0.0
  %4105 = vmatpush1.msra.mxu0 0.0
  %4106 = vmatprep.subr.mxu0 0.0
  %4107 = vmatpush1.msra.mxu0 0.0
  %4108 = vmatprep.subr.mxu0 0.0
  %4109 = vmatpush1.msra.mxu0 0.0
  %4110 = vmatprep.subr.mxu0 0.0
  %4111 = vmatpush1.msra.mxu0 0.0
  %4112 = vmatprep.subr.mxu0 0.0
  %4113 = vmatpush1.msra.mxu0 0.0
  %4114 = vmatprep.subr.mxu0 0.0
  %4115 = vmatpush1.msra.mxu0 0.0
  %4116 = vmatprep.subr.mxu0 0.0
  %4117 = vmatpush1.msra.mxu0 0.0
  %4118 = vmatprep.subr.mxu0 0.0
  %4119 = vmatpush1.msra.mxu0 0.0
  %4120 = vmatprep.subr.mxu0 0.0
  %4121 = vmatpush1.msra.mxu0 0.0
  %4122 = vmatprep.subr.mxu0 0.0
  %4123 = vmatpush1.msra.mxu0 0.0
  %4124 = vmatprep.subr.mxu0 0.0
  %4125 = vmatpush1.msra.mxu0 0.0
  %4126 = vmatprep.subr.mxu0 0.0
  %4127 = vmatpush1.msra.mxu0 0.0
  %4128 = vmatprep.subr.mxu0 0.0
  %4129 = vmatpush1.msra.mxu0 0.0
  %4130 = vmatprep.subr.mxu0 0.0
  %4131 = vmatpush1.msra.mxu0 0.0
  %4132 = vmatprep.subr.mxu0 0.0
  %4133 = vmatpush1.msra.mxu0 0.0
  %4134 = vmatprep.subr.mxu0 0.0
  %4135 = vmatpush1.msra.mxu0 0.0
  %4136 = vmatprep.subr.mxu0 0.0
  %4137 = vmatpush1.msra.mxu0 0.0
  %4138 = vmatprep.subr.mxu0 0.0
  %4139 = vmatpush1.msra.mxu0 0.0
  %4140 = vmatprep.subr.mxu0 0.0
  %4141 = vmatpush1.msra.mxu0 0.0
  %4142 = vmatprep.subr.mxu0 0.0
  %4143 = vmatpush1.msra.mxu0 0.0
  %4144 = vmatprep.subr.mxu0 0.0
  %4145 = vmatpush1.msra.mxu0 0.0
  %4146 = vmatprep.subr.mxu0 0.0
  %4147 = vmatpush1.msra.mxu0 0.0
  %4148 = vmatprep.subr.mxu0 0.0
  %4149 = vmatpush1.msra.mxu0 0.0
  %4150 = vmatprep.mubr.f32.mxu0 0.0
  %4151 = vmatmul.mubr.f32.gmra.mrb[0].mxu0 %v3734
  %v4152 = vpop.f32.mrb[0].mxu0
  %v4153 = vadd.f32 %v2248, %v4152
  %v4154 = vpop.f32.mrb[0].mxu0
  %4155 = vdwg.mxu0
  %4156 = vmatprep.subr.mxu0 0.0
  %4157 = vmatpush1.msra.mxu0 %v2327
  %4158 = vmatprep.subr.mxu0 0.0
  %4159 = vmatpush1.msra.mxu0 0.0
  %4160 = vmatprep.subr.mxu0 0.0
  %4161 = vmatpush1.msra.mxu0 0.0
  %4162 = vmatprep.subr.mxu0 0.0
  %4163 = vmatpush1.msra.mxu0 0.0
  %4164 = vmatprep.subr.mxu0 0.0
  %4165 = vmatpush1.msra.mxu0 0.0
  %4166 = vmatprep.subr.mxu0 0.0
  %4167 = vmatpush1.msra.mxu0 0.0
  %4168 = vmatprep.subr.mxu0 0.0
  %4169 = vmatpush1.msra.mxu0 0.0
  %4170 = vmatprep.subr.mxu0 0.0
  %4171 = vmatpush1.msra.mxu0 0.0
  %4172 = vmatprep.subr.mxu0 0.0
  %4173 = vmatpush1.msra.mxu0 0.0
  %4174 = vmatprep.subr.mxu0 0.0
  %4175 = vmatpush1.msra.mxu0 0.0
  %4176 = vmatprep.subr.mxu0 0.0
  %4177 = vmatpush1.msra.mxu0 0.0
  %4178 = vmatprep.subr.mxu0 0.0
  %4179 = vmatpush1.msra.mxu0 0.0
  %4180 = vmatprep.subr.mxu0 0.0
  %4181 = vmatpush1.msra.mxu0 0.0
  %4182 = vmatprep.subr.mxu0 0.0
  %4183 = vmatpush1.msra.mxu0 0.0
  %4184 = vmatprep.subr.mxu0 0.0
  %4185 = vmatpush1.msra.mxu0 0.0
  %4186 = vmatprep.subr.mxu0 0.0
  %4187 = vmatpush1.msra.mxu0 0.0
  %4188 = vmatprep.subr.mxu0 0.0
  %4189 = vmatpush1.msra.mxu0 0.0
  %4190 = vmatprep.subr.mxu0 0.0
  %4191 = vmatpush1.msra.mxu0 0.0
  %4192 = vmatprep.subr.mxu0 0.0
  %4193 = vmatpush1.msra.mxu0 0.0
  %4194 = vmatprep.subr.mxu0 0.0
  %4195 = vmatpush1.msra.mxu0 0.0
  %4196 = vmatprep.subr.mxu0 0.0
  %4197 = vmatpush1.msra.mxu0 0.0
  %4198 = vmatprep.subr.mxu0 0.0
  %4199 = vmatpush1.msra.mxu0 0.0
  %4200 = vmatprep.subr.mxu0 0.0
  %4201 = vmatpush1.msra.mxu0 0.0
  %4202 = vmatprep.subr.mxu0 0.0
  %4203 = vmatpush1.msra.mxu0 0.0
  %4204 = vmatprep.subr.mxu0 0.0
  %4205 = vmatpush1.msra.mxu0 0.0
  %4206 = vmatprep.subr.mxu0 0.0
  %4207 = vmatpush1.msra.mxu0 0.0
  %4208 = vmatprep.subr.mxu0 0.0
  %4209 = vmatpush1.msra.mxu0 0.0
  %4210 = vmatprep.subr.mxu0 0.0
  %4211 = vmatpush1.msra.mxu0 0.0
  %4212 = vmatprep.subr.mxu0 0.0
  %4213 = vmatpush1.msra.mxu0 0.0
  %4214 = vmatprep.subr.mxu0 0.0
  %4215 = vmatpush1.msra.mxu0 0.0
  %4216 = vmatprep.subr.mxu0 0.0
  %4217 = vmatpush1.msra.mxu0 0.0
  %4218 = vmatprep.subr.mxu0 0.0
  %4219 = vmatpush1.msra.mxu0 0.0
  %4220 = vmatprep.mubr.f32.mxu0 0.0
  %4221 = vmatmul.mubr.f32.gmra.mrb[0].mxu0 %v3734
  %v4222 = vpop.f32.mrb[0].mxu0
  %v4223 = vadd.f32 %v2325, %v4222
  %v4224 = vpop.f32.mrb[0].mxu0
  %4225 = vdwg.mxu0
  %v4226 = vmax.f32 %v4223, 0.0
  %vm4227 = vcmp.ne.f32.partialorder %v4223, %v4223
  %v4228 = vadd.f32 %v4223, 0.0
  %v4229 = vand.u32 2147483647, %v4223
  %v4230 = vsub.f32 0.0, %v4229
  %v4231 = vmul.f32 %v4230, 1.442695
  %v4232 = vpow.pop %v4231
  %v4233 = vadd.f32 %v4232, 1.0
  %v4234 = vlog2.pop %v4233
  %v4235 = vmul.f32 %v4234, 0.6931472
  %v4236 = vmul.f32 -0.5, %v4232
  %v4237 = vadd.f32 %v4236, 1.0
  %v4238 = vmul.f32 %v4237, %v4232
  %v4239 = vand.u32 2147483647, %v4232
  %vm4240 = vcmp.lt.f32.partialorder %v4239, 0.0004427343
  %v4241 = vsel %vm4240, %v4238, %v4235
  %v4242 = vadd.f32 %v4226, %v4241
  %v4243 = vsel %vm4227, %v4228, %v4242
  %v4245 = vsel %vm2421, %v4243, 0
  %4247 = vmatprep.subr.mxu0 0.0
  %4248 = vmatpush1.msra.mxu0 %v47
  %4249 = vmatprep.subr.mxu0 0.0
  %4250 = vmatpush1.msra.mxu0 %v48
  %4251 = vmatprep.subr.mxu0 0.0
  %4252 = vmatpush1.msra.mxu0 %v49
  %4253 = vmatprep.subr.mxu0 0.0
  %4254 = vmatpush1.msra.mxu0 %v50
  %4255 = vmatprep.subr.mxu0 0.0
  %4256 = vmatpush1.msra.mxu0 %v51
  %4257 = vmatprep.subr.mxu0 0.0
  %4258 = vmatpush1.msra.mxu0 %v52
  %4259 = vmatprep.subr.mxu0 0.0
  %4260 = vmatpush1.msra.mxu0 %v53
  %4261 = vmatprep.subr.mxu0 0.0
  %4262 = vmatpush1.msra.mxu0 %v54
  %4263 = vmatprep.subr.mxu0 0.0
  %4264 = vmatpush1.msra.mxu0 0.0
  %4265 = vmatprep.subr.mxu0 0.0
  %4266 = vmatpush1.msra.mxu0 0.0
  %4267 = vmatprep.subr.mxu0 0.0
  %4268 = vmatpush1.msra.mxu0 0.0
  %4269 = vmatprep.subr.mxu0 0.0
  %4270 = vmatpush1.msra.mxu0 0.0
  %4271 = vmatprep.subr.mxu0 0.0
  %4272 = vmatpush1.msra.mxu0 0.0
  %4273 = vmatprep.subr.mxu0 0.0
  %4274 = vmatpush1.msra.mxu0 0.0
  %4275 = vmatprep.subr.mxu0 0.0
  %4276 = vmatpush1.msra.mxu0 0.0
  %4277 = vmatprep.subr.mxu0 0.0
  %4278 = vmatpush1.msra.mxu0 0.0
  %4279 = vmatprep.subr.mxu0 0.0
  %4280 = vmatpush1.msra.mxu0 0.0
  %4281 = vmatprep.subr.mxu0 0.0
  %4282 = vmatpush1.msra.mxu0 0.0
  %4283 = vmatprep.subr.mxu0 0.0
  %4284 = vmatpush1.msra.mxu0 0.0
  %4285 = vmatprep.subr.mxu0 0.0
  %4286 = vmatpush1.msra.mxu0 0.0
  %4287 = vmatprep.subr.mxu0 0.0
  %4288 = vmatpush1.msra.mxu0 0.0
  %4289 = vmatprep.subr.mxu0 0.0
  %4290 = vmatpush1.msra.mxu0 0.0
  %4291 = vmatprep.subr.mxu0 0.0
  %4292 = vmatpush1.msra.mxu0 0.0
  %4293 = vmatprep.subr.mxu0 0.0
  %4294 = vmatpush1.msra.mxu0 0.0
  %4295 = vmatprep.subr.mxu0 0.0
  %4296 = vmatpush1.msra.mxu0 0.0
  %4297 = vmatprep.subr.mxu0 0.0
  %4298 = vmatpush1.msra.mxu0 0.0
  %4299 = vmatprep.subr.mxu0 0.0
  %4300 = vmatpush1.msra.mxu0 0.0
  %4301 = vmatprep.subr.mxu0 0.0
  %4302 = vmatpush1.msra.mxu0 0.0
  %4303 = vmatprep.subr.mxu0 0.0
  %4304 = vmatpush1.msra.mxu0 0.0
  %4305 = vmatprep.subr.mxu0 0.0
  %4306 = vmatpush1.msra.mxu0 0.0
  %4307 = vmatprep.subr.mxu0 0.0
  %4308 = vmatpush1.msra.mxu0 0.0
  %4309 = vmatprep.subr.mxu0 0.0
  %4310 = vmatpush1.msra.mxu0 0.0
  %4311 = vmatprep.mubr.f32.mxu0 0.0
  %4312 = vmatmul.mubr.f32.gmra.mrb[0].mxu0 %v4245
  %v4313 = vpop.f32.mrb[0].mxu0
  %v4314 = vadd.f32 %v2420, %v4313
  %v4315 = vpop.f32.mrb[0].mxu0
  %4316 = vdwg.mxu0
  %v4317 = vxor.u32 %v4314, 2147483648
  %v4318 = vmul.f32 %v4317, 1.442695
  %v4319 = vpow.pop %v4318
  %v4320 = vadd.f32 %v4319, 1.0
  %v4321 = vrcp.pop %v4320
  %v4322 = vmul.f32 1.0, %v4321
  %v4323 = vsub.f32 %v4083, %v4153
  %v4324 = vmax.f32 %v4322, 1e-07
  %v4325 = vrcp.pop %v4324
  %v4326 = vmul.f32 %v4323, %v4325
  %v4327 = vmul.f32 %v4326, %v4326
  %v4328 = vsel %vm1962, %v4327, 0.0
  %4329 = vadd.xlane.f32.xlu0 %v4328
  %v4330 = vpop.xlane.xlu0 %4329
  %v4331 = vmul.f32 %v4330, 0.005
  %v4332 = vadd.f32 %v3726, %v4331
  %v4333 = vmul.f32 %v4083, 0.01
  %v4334 = vadd.f32 %v3732, %v4333
  %v4335 = vmul.f32 %v4322, %v61
  %v4336 = vadd.f32 %v4334, %v4335
  %v4338 = vsel %vm66, %v4336, 0
  %4340 = vmatprep.subr.mxu0 0.0
  %4341 = vmatpush1.msra.mxu0 %v1885
  %4342 = vmatprep.subr.mxu0 0.0
  %4343 = vmatpush1.msra.mxu0 0.0
  %4344 = vmatprep.subr.mxu0 0.0
  %4345 = vmatpush1.msra.mxu0 0.0
  %4346 = vmatprep.subr.mxu0 0.0
  %4347 = vmatpush1.msra.mxu0 0.0
  %4348 = vmatprep.subr.mxu0 0.0
  %4349 = vmatpush1.msra.mxu0 0.0
  %4350 = vmatprep.subr.mxu0 0.0
  %4351 = vmatpush1.msra.mxu0 0.0
  %4352 = vmatprep.subr.mxu0 0.0
  %4353 = vmatpush1.msra.mxu0 0.0
  %4354 = vmatprep.subr.mxu0 0.0
  %4355 = vmatpush1.msra.mxu0 0.0
  %4356 = vmatprep.subr.mxu0 0.0
  %4357 = vmatpush1.msra.mxu0 0.0
  %4358 = vmatprep.subr.mxu0 0.0
  %4359 = vmatpush1.msra.mxu0 0.0
  %4360 = vmatprep.subr.mxu0 0.0
  %4361 = vmatpush1.msra.mxu0 0.0
  %4362 = vmatprep.subr.mxu0 0.0
  %4363 = vmatpush1.msra.mxu0 0.0
  %4364 = vmatprep.subr.mxu0 0.0
  %4365 = vmatpush1.msra.mxu0 0.0
  %4366 = vmatprep.subr.mxu0 0.0
  %4367 = vmatpush1.msra.mxu0 0.0
  %4368 = vmatprep.subr.mxu0 0.0
  %4369 = vmatpush1.msra.mxu0 0.0
  %4370 = vmatprep.subr.mxu0 0.0
  %4371 = vmatpush1.msra.mxu0 0.0
  %4372 = vmatprep.subr.mxu0 0.0
  %4373 = vmatpush1.msra.mxu0 0.0
  %4374 = vmatprep.subr.mxu0 0.0
  %4375 = vmatpush1.msra.mxu0 0.0
  %4376 = vmatprep.subr.mxu0 0.0
  %4377 = vmatpush1.msra.mxu0 0.0
  %4378 = vmatprep.subr.mxu0 0.0
  %4379 = vmatpush1.msra.mxu0 0.0
  %4380 = vmatprep.subr.mxu0 0.0
  %4381 = vmatpush1.msra.mxu0 0.0
  %4382 = vmatprep.subr.mxu0 0.0
  %4383 = vmatpush1.msra.mxu0 0.0
  %4384 = vmatprep.subr.mxu0 0.0
  %4385 = vmatpush1.msra.mxu0 0.0
  %4386 = vmatprep.subr.mxu0 0.0
  %4387 = vmatpush1.msra.mxu0 0.0
  %4388 = vmatprep.subr.mxu0 0.0
  %4389 = vmatpush1.msra.mxu0 0.0
  %4390 = vmatprep.subr.mxu0 0.0
  %4391 = vmatpush1.msra.mxu0 0.0
  %4392 = vmatprep.subr.mxu0 0.0
  %4393 = vmatpush1.msra.mxu0 0.0
  %4394 = vmatprep.subr.mxu0 0.0
  %4395 = vmatpush1.msra.mxu0 0.0
  %4396 = vmatprep.subr.mxu0 0.0
  %4397 = vmatpush1.msra.mxu0 0.0
  %4398 = vmatprep.subr.mxu0 0.0
  %4399 = vmatpush1.msra.mxu0 0.0
  %4400 = vmatprep.subr.mxu0 0.0
  %4401 = vmatpush1.msra.mxu0 0.0
  %4402 = vmatprep.subr.mxu0 0.0
  %4403 = vmatpush1.msra.mxu0 0.0
  %4404 = vmatprep.mubr.f32.mxu0 0.0
  %4405 = vmatmul.mubr.f32.gmra.mrb[0].mxu0 %v4338
  %v4406 = vpop.f32.mrb[0].mxu0
  %v4407 = vadd.f32 %v1880, %v4406
  %v4408 = vpop.f32.mrb[0].mxu0
  %4409 = vdwg.mxu0
  %v4410 = vsub.f32 %v59, %v4407
  %v4411 = vmul.f32 %v4410, %v4410
  %v4412 = vsub.f32 0.0, %v4411
  %v4413 = vmul.f32 %v4412, 200.0
  %v4414 = vsub.f32 %v4413, -2.0767937
  %v4415 = vsel %vm1962, %v4414, 0.0
  %4416 = vadd.xlane.f32.xlu0 %v4415
  %v4417 = vpop.xlane.xlu0 %4416
  %v4418 = vmul.f32 %v4407, %v4407
  %v4419 = vsel %vm1962, %v4418, 0.0
  %4420 = vadd.xlane.f32.xlu0 %v4419
  %v4421 = vpop.xlane.xlu0 %4420
  %v4422 = vrsqrt.pop %v4421
  %v4423 = vmul.f32 %v4421, %v4422
  %vm4424 = vcmp.eq.f32.partialorder %v4421, inf
  %v4425 = vsel %vm4424, %v4421, %v4423
  %vm4426 = vcmp.eq.f32.partialorder %v4421, 0.0
  %v4427 = vand.u32 %v4421, 2147483648
  %v4428 = vsel %vm4426, %v4427, %v4425
  %v4429 = vadd.f32 %v3832, %v4417
  %v4430 = vadd.f32 %v3833, %v4428
  %v4432 = vrot.slane %v1787, 2
  %4434 = vmatprep.subr.mxu0 0.0
  %4435 = vmatpush1.msra.mxu0 %v1983
  %4436 = vmatprep.subr.mxu0 0.0
  %4437 = vmatpush1.msra.mxu0 0.0
  %4438 = vmatprep.subr.mxu0 0.0
  %4439 = vmatpush1.msra.mxu0 0.0
  %4440 = vmatprep.subr.mxu0 0.0
  %4441 = vmatpush1.msra.mxu0 0.0
  %4442 = vmatprep.subr.mxu0 0.0
  %4443 = vmatpush1.msra.mxu0 0.0
  %4444 = vmatprep.subr.mxu0 0.0
  %4445 = vmatpush1.msra.mxu0 0.0
  %4446 = vmatprep.subr.mxu0 0.0
  %4447 = vmatpush1.msra.mxu0 0.0
  %4448 = vmatprep.subr.mxu0 0.0
  %4449 = vmatpush1.msra.mxu0 0.0
  %4450 = vmatprep.subr.mxu0 0.0
  %4451 = vmatpush1.msra.mxu0 0.0
  %4452 = vmatprep.subr.mxu0 0.0
  %4453 = vmatpush1.msra.mxu0 0.0
  %4454 = vmatprep.subr.mxu0 0.0
  %4455 = vmatpush1.msra.mxu0 0.0
  %4456 = vmatprep.subr.mxu0 0.0
  %4457 = vmatpush1.msra.mxu0 0.0
  %4458 = vmatprep.subr.mxu0 0.0
  %4459 = vmatpush1.msra.mxu0 0.0
  %4460 = vmatprep.subr.mxu0 0.0
  %4461 = vmatpush1.msra.mxu0 0.0
  %4462 = vmatprep.subr.mxu0 0.0
  %4463 = vmatpush1.msra.mxu0 0.0
  %4464 = vmatprep.subr.mxu0 0.0
  %4465 = vmatpush1.msra.mxu0 0.0
  %4466 = vmatprep.subr.mxu0 0.0
  %4467 = vmatpush1.msra.mxu0 0.0
  %4468 = vmatprep.subr.mxu0 0.0
  %4469 = vmatpush1.msra.mxu0 0.0
  %4470 = vmatprep.subr.mxu0 0.0
  %4471 = vmatpush1.msra.mxu0 0.0
  %4472 = vmatprep.subr.mxu0 0.0
  %4473 = vmatpush1.msra.mxu0 0.0
  %4474 = vmatprep.subr.mxu0 0.0
  %4475 = vmatpush1.msra.mxu0 0.0
  %4476 = vmatprep.subr.mxu0 0.0
  %4477 = vmatpush1.msra.mxu0 0.0
  %4478 = vmatprep.subr.mxu0 0.0
  %4479 = vmatpush1.msra.mxu0 0.0
  %4480 = vmatprep.subr.mxu0 0.0
  %4481 = vmatpush1.msra.mxu0 0.0
  %4482 = vmatprep.subr.mxu0 0.0
  %4483 = vmatpush1.msra.mxu0 0.0
  %4484 = vmatprep.subr.mxu0 0.0
  %4485 = vmatpush1.msra.mxu0 0.0
  %4486 = vmatprep.subr.mxu0 0.0
  %4487 = vmatpush1.msra.mxu0 0.0
  %4488 = vmatprep.subr.mxu0 0.0
  %4489 = vmatpush1.msra.mxu0 0.0
  %4490 = vmatprep.subr.mxu0 0.0
  %4491 = vmatpush1.msra.mxu0 0.0
  %4492 = vmatprep.subr.mxu0 0.0
  %4493 = vmatpush1.msra.mxu0 0.0
  %4494 = vmatprep.subr.mxu0 0.0
  %4495 = vmatpush1.msra.mxu0 0.0
  %4496 = vmatprep.subr.mxu0 0.0
  %4497 = vmatpush1.msra.mxu0 0.0
  %4498 = vmatprep.mubr.f32.mxu0 0.0
  %4499 = vmatmul.mubr.f32.gmra.mrb[0].mxu0 %v4338
  %v4500 = vpop.f32.mrb[0].mxu0
  %v4501 = vadd.f32 %v4432, %v4500
  %v4502 = vpop.f32.mrb[0].mxu0
  %4503 = vdwg.mxu0
  %v4504 = vmax.f32 %v4501, 0.0
  %vm4505 = vcmp.ne.f32.partialorder %v4501, %v4501
  %v4506 = vadd.f32 %v4501, 0.0
  %v4507 = vand.u32 2147483647, %v4501
  %v4508 = vsub.f32 0.0, %v4507
  %v4509 = vmul.f32 %v4508, 1.442695
  %v4510 = vpow.pop %v4509
  %v4511 = vadd.f32 %v4510, 1.0
  %v4512 = vlog2.pop %v4511
  %v4513 = vmul.f32 %v4512, 0.6931472
  %v4514 = vmul.f32 -0.5, %v4510
  %v4515 = vadd.f32 %v4514, 1.0
  %v4516 = vmul.f32 %v4515, %v4510
  %v4517 = vand.u32 2147483647, %v4510
  %vm4518 = vcmp.lt.f32.partialorder %v4517, 0.0004427343
  %v4519 = vsel %vm4518, %v4516, %v4513
  %v4520 = vadd.f32 %v4504, %v4519
  %v4521 = vsel %vm4505, %v4506, %v4520
  %v4523 = vsel %vm234, %v4521, 0
  %4525 = vmatprep.subr.mxu0 0.0
  %4526 = vmatpush1.msra.mxu0 %v35
  %4527 = vmatprep.subr.mxu0 0.0
  %4528 = vmatpush1.msra.mxu0 %v36
  %4529 = vmatprep.subr.mxu0 0.0
  %4530 = vmatpush1.msra.mxu0 0.0
  %4531 = vmatprep.subr.mxu0 0.0
  %4532 = vmatpush1.msra.mxu0 0.0
  %4533 = vmatprep.subr.mxu0 0.0
  %4534 = vmatpush1.msra.mxu0 0.0
  %4535 = vmatprep.subr.mxu0 0.0
  %4536 = vmatpush1.msra.mxu0 0.0
  %4537 = vmatprep.subr.mxu0 0.0
  %4538 = vmatpush1.msra.mxu0 0.0
  %4539 = vmatprep.subr.mxu0 0.0
  %4540 = vmatpush1.msra.mxu0 0.0
  %4541 = vmatprep.subr.mxu0 0.0
  %4542 = vmatpush1.msra.mxu0 0.0
  %4543 = vmatprep.subr.mxu0 0.0
  %4544 = vmatpush1.msra.mxu0 0.0
  %4545 = vmatprep.subr.mxu0 0.0
  %4546 = vmatpush1.msra.mxu0 0.0
  %4547 = vmatprep.subr.mxu0 0.0
  %4548 = vmatpush1.msra.mxu0 0.0
  %4549 = vmatprep.subr.mxu0 0.0
  %4550 = vmatpush1.msra.mxu0 0.0
  %4551 = vmatprep.subr.mxu0 0.0
  %4552 = vmatpush1.msra.mxu0 0.0
  %4553 = vmatprep.subr.mxu0 0.0
  %4554 = vmatpush1.msra.mxu0 0.0
  %4555 = vmatprep.subr.mxu0 0.0
  %4556 = vmatpush1.msra.mxu0 0.0
  %4557 = vmatprep.subr.mxu0 0.0
  %4558 = vmatpush1.msra.mxu0 0.0
  %4559 = vmatprep.subr.mxu0 0.0
  %4560 = vmatpush1.msra.mxu0 0.0
  %4561 = vmatprep.subr.mxu0 0.0
  %4562 = vmatpush1.msra.mxu0 0.0
  %4563 = vmatprep.subr.mxu0 0.0
  %4564 = vmatpush1.msra.mxu0 0.0
  %4565 = vmatprep.subr.mxu0 0.0
  %4566 = vmatpush1.msra.mxu0 0.0
  %4567 = vmatprep.subr.mxu0 0.0
  %4568 = vmatpush1.msra.mxu0 0.0
  %4569 = vmatprep.subr.mxu0 0.0
  %4570 = vmatpush1.msra.mxu0 0.0
  %4571 = vmatprep.subr.mxu0 0.0
  %4572 = vmatpush1.msra.mxu0 0.0
  %4573 = vmatprep.subr.mxu0 0.0
  %4574 = vmatpush1.msra.mxu0 0.0
  %4575 = vmatprep.subr.mxu0 0.0
  %4576 = vmatpush1.msra.mxu0 0.0
  %4577 = vmatprep.subr.mxu0 0.0
  %4578 = vmatpush1.msra.mxu0 0.0
  %4579 = vmatprep.subr.mxu0 0.0
  %4580 = vmatpush1.msra.mxu0 0.0
  %4581 = vmatprep.subr.mxu0 0.0
  %4582 = vmatpush1.msra.mxu0 0.0
  %4583 = vmatprep.subr.mxu0 0.0
  %4584 = vmatpush1.msra.mxu0 0.0
  %4585 = vmatprep.subr.mxu0 0.0
  %4586 = vmatpush1.msra.mxu0 0.0
  %4587 = vmatprep.subr.mxu0 0.0
  %4588 = vmatpush1.msra.mxu0 0.0
  %4589 = vmatprep.mubr.f32.mxu0 0.0
  %4590 = vmatmul.mubr.f32.gmra.mrb[0].mxu0 %v4523
  %v4591 = vpop.f32.mrb[0].mxu0
  %v4592 = vadd.f32 %v2076, %v4591
  %v4593 = vpop.f32.mrb[0].mxu0
  %4594 = vdwg.mxu0
  %v4595 = vmax.f32 %v4592, 0.0
  %vm4596 = vcmp.ne.f32.partialorder %v4592, %v4592
  %v4597 = vadd.f32 %v4592, 0.0
  %v4598 = vand.u32 2147483647, %v4592
  %v4599 = vsub.f32 0.0, %v4598
  %v4600 = vmul.f32 %v4599, 1.442695
  %v4601 = vpow.pop %v4600
  %v4602 = vadd.f32 %v4601, 1.0
  %v4603 = vlog2.pop %v4602
  %v4604 = vmul.f32 %v4603, 0.6931472
  %v4605 = vmul.f32 -0.5, %v4601
  %v4606 = vadd.f32 %v4605, 1.0
  %v4607 = vmul.f32 %v4606, %v4601
  %v4608 = vand.u32 2147483647, %v4601
  %vm4609 = vcmp.lt.f32.partialorder %v4608, 0.0004427343
  %v4610 = vsel %vm4609, %v4607, %v4604
  %v4611 = vadd.f32 %v4595, %v4610
  %v4612 = vsel %vm4596, %v4597, %v4611
  %v4614 = vsel %vm234, %v4612, 0
  %4616 = vmatprep.subr.mxu0 0.0
  %4617 = vmatpush1.msra.mxu0 %v38
  %4618 = vmatprep.subr.mxu0 0.0
  %4619 = vmatpush1.msra.mxu0 %v39
  %4620 = vmatprep.subr.mxu0 0.0
  %4621 = vmatpush1.msra.mxu0 0.0
  %4622 = vmatprep.subr.mxu0 0.0
  %4623 = vmatpush1.msra.mxu0 0.0
  %4624 = vmatprep.subr.mxu0 0.0
  %4625 = vmatpush1.msra.mxu0 0.0
  %4626 = vmatprep.subr.mxu0 0.0
  %4627 = vmatpush1.msra.mxu0 0.0
  %4628 = vmatprep.subr.mxu0 0.0
  %4629 = vmatpush1.msra.mxu0 0.0
  %4630 = vmatprep.subr.mxu0 0.0
  %4631 = vmatpush1.msra.mxu0 0.0
  %4632 = vmatprep.subr.mxu0 0.0
  %4633 = vmatpush1.msra.mxu0 0.0
  %4634 = vmatprep.subr.mxu0 0.0
  %4635 = vmatpush1.msra.mxu0 0.0
  %4636 = vmatprep.subr.mxu0 0.0
  %4637 = vmatpush1.msra.mxu0 0.0
  %4638 = vmatprep.subr.mxu0 0.0
  %4639 = vmatpush1.msra.mxu0 0.0
  %4640 = vmatprep.subr.mxu0 0.0
  %4641 = vmatpush1.msra.mxu0 0.0
  %4642 = vmatprep.subr.mxu0 0.0
  %4643 = vmatpush1.msra.mxu0 0.0
  %4644 = vmatprep.subr.mxu0 0.0
  %4645 = vmatpush1.msra.mxu0 0.0
  %4646 = vmatprep.subr.mxu0 0.0
  %4647 = vmatpush1.msra.mxu0 0.0
  %4648 = vmatprep.subr.mxu0 0.0
  %4649 = vmatpush1.msra.mxu0 0.0
  %4650 = vmatprep.subr.mxu0 0.0
  %4651 = vmatpush1.msra.mxu0 0.0
  %4652 = vmatprep.subr.mxu0 0.0
  %4653 = vmatpush1.msra.mxu0 0.0
  %4654 = vmatprep.subr.mxu0 0.0
  %4655 = vmatpush1.msra.mxu0 0.0
  %4656 = vmatprep.subr.mxu0 0.0
  %4657 = vmatpush1.msra.mxu0 0.0
  %4658 = vmatprep.subr.mxu0 0.0
  %4659 = vmatpush1.msra.mxu0 0.0
  %4660 = vmatprep.subr.mxu0 0.0
  %4661 = vmatpush1.msra.mxu0 0.0
  %4662 = vmatprep.subr.mxu0 0.0
  %4663 = vmatpush1.msra.mxu0 0.0
  %4664 = vmatprep.subr.mxu0 0.0
  %4665 = vmatpush1.msra.mxu0 0.0
  %4666 = vmatprep.subr.mxu0 0.0
  %4667 = vmatpush1.msra.mxu0 0.0
  %4668 = vmatprep.subr.mxu0 0.0
  %4669 = vmatpush1.msra.mxu0 0.0
  %4670 = vmatprep.subr.mxu0 0.0
  %4671 = vmatpush1.msra.mxu0 0.0
  %4672 = vmatprep.subr.mxu0 0.0
  %4673 = vmatpush1.msra.mxu0 0.0
  %4674 = vmatprep.subr.mxu0 0.0
  %4675 = vmatpush1.msra.mxu0 0.0
  %4676 = vmatprep.subr.mxu0 0.0
  %4677 = vmatpush1.msra.mxu0 0.0
  %4678 = vmatprep.subr.mxu0 0.0
  %4679 = vmatpush1.msra.mxu0 0.0
  %4680 = vmatprep.mubr.f32.mxu0 0.0
  %4681 = vmatmul.mubr.f32.gmra.mrb[0].mxu0 %v4614
  %v4682 = vpop.f32.mrb[0].mxu0
  %v4683 = vadd.f32 %v2171, %v4682
  %v4684 = vpop.f32.mrb[0].mxu0
  %4685 = vdwg.mxu0
  %4686 = vmatprep.subr.mxu0 0.0
  %4687 = vmatpush1.msra.mxu0 %v2250
  %4688 = vmatprep.subr.mxu0 0.0
  %4689 = vmatpush1.msra.mxu0 0.0
  %4690 = vmatprep.subr.mxu0 0.0
  %4691 = vmatpush1.msra.mxu0 0.0
  %4692 = vmatprep.subr.mxu0 0.0
  %4693 = vmatpush1.msra.mxu0 0.0
  %4694 = vmatprep.subr.mxu0 0.0
  %4695 = vmatpush1.msra.mxu0 0.0
  %4696 = vmatprep.subr.mxu0 0.0
  %4697 = vmatpush1.msra.mxu0 0.0
  %4698 = vmatprep.subr.mxu0 0.0
  %4699 = vmatpush1.msra.mxu0 0.0
  %4700 = vmatprep.subr.mxu0 0.0
  %4701 = vmatpush1.msra.mxu0 0.0
  %4702 = vmatprep.subr.mxu0 0.0
  %4703 = vmatpush1.msra.mxu0 0.0
  %4704 = vmatprep.subr.mxu0 0.0
  %4705 = vmatpush1.msra.mxu0 0.0
  %4706 = vmatprep.subr.mxu0 0.0
  %4707 = vmatpush1.msra.mxu0 0.0
  %4708 = vmatprep.subr.mxu0 0.0
  %4709 = vmatpush1.msra.mxu0 0.0
  %4710 = vmatprep.subr.mxu0 0.0
  %4711 = vmatpush1.msra.mxu0 0.0
  %4712 = vmatprep.subr.mxu0 0.0
  %4713 = vmatpush1.msra.mxu0 0.0
  %4714 = vmatprep.subr.mxu0 0.0
  %4715 = vmatpush1.msra.mxu0 0.0
  %4716 = vmatprep.subr.mxu0 0.0
  %4717 = vmatpush1.msra.mxu0 0.0
  %4718 = vmatprep.subr.mxu0 0.0
  %4719 = vmatpush1.msra.mxu0 0.0
  %4720 = vmatprep.subr.mxu0 0.0
  %4721 = vmatpush1.msra.mxu0 0.0
  %4722 = vmatprep.subr.mxu0 0.0
  %4723 = vmatpush1.msra.mxu0 0.0
  %4724 = vmatprep.subr.mxu0 0.0
  %4725 = vmatpush1.msra.mxu0 0.0
  %4726 = vmatprep.subr.mxu0 0.0
  %4727 = vmatpush1.msra.mxu0 0.0
  %4728 = vmatprep.subr.mxu0 0.0
  %4729 = vmatpush1.msra.mxu0 0.0
  %4730 = vmatprep.subr.mxu0 0.0
  %4731 = vmatpush1.msra.mxu0 0.0
  %4732 = vmatprep.subr.mxu0 0.0
  %4733 = vmatpush1.msra.mxu0 0.0
  %4734 = vmatprep.subr.mxu0 0.0
  %4735 = vmatpush1.msra.mxu0 0.0
  %4736 = vmatprep.subr.mxu0 0.0
  %4737 = vmatpush1.msra.mxu0 0.0
  %4738 = vmatprep.subr.mxu0 0.0
  %4739 = vmatpush1.msra.mxu0 0.0
  %4740 = vmatprep.subr.mxu0 0.0
  %4741 = vmatpush1.msra.mxu0 0.0
  %4742 = vmatprep.subr.mxu0 0.0
  %4743 = vmatpush1.msra.mxu0 0.0
  %4744 = vmatprep.subr.mxu0 0.0
  %4745 = vmatpush1.msra.mxu0 0.0
  %4746 = vmatprep.subr.mxu0 0.0
  %4747 = vmatpush1.msra.mxu0 0.0
  %4748 = vmatprep.subr.mxu0 0.0
  %4749 = vmatpush1.msra.mxu0 0.0
  %4750 = vmatprep.mubr.f32.mxu0 0.0
  %4751 = vmatmul.mubr.f32.gmra.mrb[0].mxu0 %v4338
  %v4752 = vpop.f32.mrb[0].mxu0
  %v4753 = vadd.f32 %v2248, %v4752
  %v4754 = vpop.f32.mrb[0].mxu0
  %4755 = vdwg.mxu0
  %4756 = vmatprep.subr.mxu0 0.0
  %4757 = vmatpush1.msra.mxu0 %v2327
  %4758 = vmatprep.subr.mxu0 0.0
  %4759 = vmatpush1.msra.mxu0 0.0
  %4760 = vmatprep.subr.mxu0 0.0
  %4761 = vmatpush1.msra.mxu0 0.0
  %4762 = vmatprep.subr.mxu0 0.0
  %4763 = vmatpush1.msra.mxu0 0.0
  %4764 = vmatprep.subr.mxu0 0.0
  %4765 = vmatpush1.msra.mxu0 0.0
  %4766 = vmatprep.subr.mxu0 0.0
  %4767 = vmatpush1.msra.mxu0 0.0
  %4768 = vmatprep.subr.mxu0 0.0
  %4769 = vmatpush1.msra.mxu0 0.0
  %4770 = vmatprep.subr.mxu0 0.0
  %4771 = vmatpush1.msra.mxu0 0.0
  %4772 = vmatprep.subr.mxu0 0.0
  %4773 = vmatpush1.msra.mxu0 0.0
  %4774 = vmatprep.subr.mxu0 0.0
  %4775 = vmatpush1.msra.mxu0 0.0
  %4776 = vmatprep.subr.mxu0 0.0
  %4777 = vmatpush1.msra.mxu0 0.0
  %4778 = vmatprep.subr.mxu0 0.0
  %4779 = vmatpush1.msra.mxu0 0.0
  %4780 = vmatprep.subr.mxu0 0.0
  %4781 = vmatpush1.msra.mxu0 0.0
  %4782 = vmatprep.subr.mxu0 0.0
  %4783 = vmatpush1.msra.mxu0 0.0
  %4784 = vmatprep.subr.mxu0 0.0
  %4785 = vmatpush1.msra.mxu0 0.0
  %4786 = vmatprep.subr.mxu0 0.0
  %4787 = vmatpush1.msra.mxu0 0.0
  %4788 = vmatprep.subr.mxu0 0.0
  %4789 = vmatpush1.msra.mxu0 0.0
  %4790 = vmatprep.subr.mxu0 0.0
  %4791 = vmatpush1.msra.mxu0 0.0
  %4792 = vmatprep.subr.mxu0 0.0
  %4793 = vmatpush1.msra.mxu0 0.0
  %4794 = vmatprep.subr.mxu0 0.0
  %4795 = vmatpush1.msra.mxu0 0.0
  %4796 = vmatprep.subr.mxu0 0.0
  %4797 = vmatpush1.msra.mxu0 0.0
  %4798 = vmatprep.subr.mxu0 0.0
  %4799 = vmatpush1.msra.mxu0 0.0
  %4800 = vmatprep.subr.mxu0 0.0
  %4801 = vmatpush1.msra.mxu0 0.0
  %4802 = vmatprep.subr.mxu0 0.0
  %4803 = vmatpush1.msra.mxu0 0.0
  %4804 = vmatprep.subr.mxu0 0.0
  %4805 = vmatpush1.msra.mxu0 0.0
  %4806 = vmatprep.subr.mxu0 0.0
  %4807 = vmatpush1.msra.mxu0 0.0
  %4808 = vmatprep.subr.mxu0 0.0
  %4809 = vmatpush1.msra.mxu0 0.0
  %4810 = vmatprep.subr.mxu0 0.0
  %4811 = vmatpush1.msra.mxu0 0.0
  %4812 = vmatprep.subr.mxu0 0.0
  %4813 = vmatpush1.msra.mxu0 0.0
  %4814 = vmatprep.subr.mxu0 0.0
  %4815 = vmatpush1.msra.mxu0 0.0
  %4816 = vmatprep.subr.mxu0 0.0
  %4817 = vmatpush1.msra.mxu0 0.0
  %4818 = vmatprep.subr.mxu0 0.0
  %4819 = vmatpush1.msra.mxu0 0.0
  %4820 = vmatprep.mubr.f32.mxu0 0.0
  %4821 = vmatmul.mubr.f32.gmra.mrb[0].mxu0 %v4338
  %v4822 = vpop.f32.mrb[0].mxu0
  %v4823 = vadd.f32 %v2325, %v4822
  %v4824 = vpop.f32.mrb[0].mxu0
  %4825 = vdwg.mxu0
  %v4826 = vmax.f32 %v4823, 0.0
  %vm4827 = vcmp.ne.f32.partialorder %v4823, %v4823
  %v4828 = vadd.f32 %v4823, 0.0
  %v4829 = vand.u32 2147483647, %v4823
  %v4830 = vsub.f32 0.0, %v4829
  %v4831 = vmul.f32 %v4830, 1.442695
  %v4832 = vpow.pop %v4831
  %v4833 = vadd.f32 %v4832, 1.0
  %v4834 = vlog2.pop %v4833
  %v4835 = vmul.f32 %v4834, 0.6931472
  %v4836 = vmul.f32 -0.5, %v4832
  %v4837 = vadd.f32 %v4836, 1.0
  %v4838 = vmul.f32 %v4837, %v4832
  %v4839 = vand.u32 2147483647, %v4832
  %vm4840 = vcmp.lt.f32.partialorder %v4839, 0.0004427343
  %v4841 = vsel %vm4840, %v4838, %v4835
  %v4842 = vadd.f32 %v4826, %v4841
  %v4843 = vsel %vm4827, %v4828, %v4842
  %v4845 = vsel %vm2421, %v4843, 0
  %4847 = vmatprep.subr.mxu0 0.0
  %4848 = vmatpush1.msra.mxu0 %v47
  %4849 = vmatprep.subr.mxu0 0.0
  %4850 = vmatpush1.msra.mxu0 %v48
  %4851 = vmatprep.subr.mxu0 0.0
  %4852 = vmatpush1.msra.mxu0 %v49
  %4853 = vmatprep.subr.mxu0 0.0
  %4854 = vmatpush1.msra.mxu0 %v50
  %4855 = vmatprep.subr.mxu0 0.0
  %4856 = vmatpush1.msra.mxu0 %v51
  %4857 = vmatprep.subr.mxu0 0.0
  %4858 = vmatpush1.msra.mxu0 %v52
  %4859 = vmatprep.subr.mxu0 0.0
  %4860 = vmatpush1.msra.mxu0 %v53
  %4861 = vmatprep.subr.mxu0 0.0
  %4862 = vmatpush1.msra.mxu0 %v54
  %4863 = vmatprep.subr.mxu0 0.0
  %4864 = vmatpush1.msra.mxu0 0.0
  %4865 = vmatprep.subr.mxu0 0.0
  %4866 = vmatpush1.msra.mxu0 0.0
  %4867 = vmatprep.subr.mxu0 0.0
  %4868 = vmatpush1.msra.mxu0 0.0
  %4869 = vmatprep.subr.mxu0 0.0
  %4870 = vmatpush1.msra.mxu0 0.0
  %4871 = vmatprep.subr.mxu0 0.0
  %4872 = vmatpush1.msra.mxu0 0.0
  %4873 = vmatprep.subr.mxu0 0.0
  %4874 = vmatpush1.msra.mxu0 0.0
  %4875 = vmatprep.subr.mxu0 0.0
  %4876 = vmatpush1.msra.mxu0 0.0
  %4877 = vmatprep.subr.mxu0 0.0
  %4878 = vmatpush1.msra.mxu0 0.0
  %4879 = vmatprep.subr.mxu0 0.0
  %4880 = vmatpush1.msra.mxu0 0.0
  %4881 = vmatprep.subr.mxu0 0.0
  %4882 = vmatpush1.msra.mxu0 0.0
  %4883 = vmatprep.subr.mxu0 0.0
  %4884 = vmatpush1.msra.mxu0 0.0
  %4885 = vmatprep.subr.mxu0 0.0
  %4886 = vmatpush1.msra.mxu0 0.0
  %4887 = vmatprep.subr.mxu0 0.0
  %4888 = vmatpush1.msra.mxu0 0.0
  %4889 = vmatprep.subr.mxu0 0.0
  %4890 = vmatpush1.msra.mxu0 0.0
  %4891 = vmatprep.subr.mxu0 0.0
  %4892 = vmatpush1.msra.mxu0 0.0
  %4893 = vmatprep.subr.mxu0 0.0
  %4894 = vmatpush1.msra.mxu0 0.0
  %4895 = vmatprep.subr.mxu0 0.0
  %4896 = vmatpush1.msra.mxu0 0.0
  %4897 = vmatprep.subr.mxu0 0.0
  %4898 = vmatpush1.msra.mxu0 0.0
  %4899 = vmatprep.subr.mxu0 0.0
  %4900 = vmatpush1.msra.mxu0 0.0
  %4901 = vmatprep.subr.mxu0 0.0
  %4902 = vmatpush1.msra.mxu0 0.0
  %4903 = vmatprep.subr.mxu0 0.0
  %4904 = vmatpush1.msra.mxu0 0.0
  %4905 = vmatprep.subr.mxu0 0.0
  %4906 = vmatpush1.msra.mxu0 0.0
  %4907 = vmatprep.subr.mxu0 0.0
  %4908 = vmatpush1.msra.mxu0 0.0
  %4909 = vmatprep.subr.mxu0 0.0
  %4910 = vmatpush1.msra.mxu0 0.0
  %4911 = vmatprep.mubr.f32.mxu0 0.0
  %4912 = vmatmul.mubr.f32.gmra.mrb[0].mxu0 %v4845
  %v4913 = vpop.f32.mrb[0].mxu0
  %v4914 = vadd.f32 %v2420, %v4913
  %v4915 = vpop.f32.mrb[0].mxu0
  %4916 = vdwg.mxu0
  %v4917 = vxor.u32 %v4914, 2147483648
  %v4918 = vmul.f32 %v4917, 1.442695
  %v4919 = vpow.pop %v4918
  %v4920 = vadd.f32 %v4919, 1.0
  %v4921 = vrcp.pop %v4920
  %v4922 = vmul.f32 1.0, %v4921
  %v4923 = vsub.f32 %v4683, %v4753
  %v4924 = vmax.f32 %v4922, 1e-07
  %v4925 = vrcp.pop %v4924
  %v4926 = vmul.f32 %v4923, %v4925
  %v4927 = vmul.f32 %v4926, %v4926
  %v4928 = vsel %vm1962, %v4927, 0.0
  %4929 = vadd.xlane.f32.xlu0 %v4928
  %v4930 = vpop.xlane.xlu0 %4929
  %v4931 = vmul.f32 %v4930, 0.005
  %v4932 = vadd.f32 %v4332, %v4931
  %v4933 = vmul.f32 %v4683, 0.01
  %v4934 = vadd.f32 %v4336, %v4933
  %v4936 = vrot.slane %v61, 2
  %v4938 = vmul.f32 %v4922, %v4936
  %v4939 = vadd.f32 %v4934, %v4938
  %v4941 = vsel %vm66, %v4939, 0
  %4943 = vmatprep.subr.mxu0 0.0
  %4944 = vmatpush1.msra.mxu0 %v1885
  %4945 = vmatprep.subr.mxu0 0.0
  %4946 = vmatpush1.msra.mxu0 0.0
  %4947 = vmatprep.subr.mxu0 0.0
  %4948 = vmatpush1.msra.mxu0 0.0
  %4949 = vmatprep.subr.mxu0 0.0
  %4950 = vmatpush1.msra.mxu0 0.0
  %4951 = vmatprep.subr.mxu0 0.0
  %4952 = vmatpush1.msra.mxu0 0.0
  %4953 = vmatprep.subr.mxu0 0.0
  %4954 = vmatpush1.msra.mxu0 0.0
  %4955 = vmatprep.subr.mxu0 0.0
  %4956 = vmatpush1.msra.mxu0 0.0
  %4957 = vmatprep.subr.mxu0 0.0
  %4958 = vmatpush1.msra.mxu0 0.0
  %4959 = vmatprep.subr.mxu0 0.0
  %4960 = vmatpush1.msra.mxu0 0.0
  %4961 = vmatprep.subr.mxu0 0.0
  %4962 = vmatpush1.msra.mxu0 0.0
  %4963 = vmatprep.subr.mxu0 0.0
  %4964 = vmatpush1.msra.mxu0 0.0
  %4965 = vmatprep.subr.mxu0 0.0
  %4966 = vmatpush1.msra.mxu0 0.0
  %4967 = vmatprep.subr.mxu0 0.0
  %4968 = vmatpush1.msra.mxu0 0.0
  %4969 = vmatprep.subr.mxu0 0.0
  %4970 = vmatpush1.msra.mxu0 0.0
  %4971 = vmatprep.subr.mxu0 0.0
  %4972 = vmatpush1.msra.mxu0 0.0
  %4973 = vmatprep.subr.mxu0 0.0
  %4974 = vmatpush1.msra.mxu0 0.0
  %4975 = vmatprep.subr.mxu0 0.0
  %4976 = vmatpush1.msra.mxu0 0.0
  %4977 = vmatprep.subr.mxu0 0.0
  %4978 = vmatpush1.msra.mxu0 0.0
  %4979 = vmatprep.subr.mxu0 0.0
  %4980 = vmatpush1.msra.mxu0 0.0
  %4981 = vmatprep.subr.mxu0 0.0
  %4982 = vmatpush1.msra.mxu0 0.0
  %4983 = vmatprep.subr.mxu0 0.0
  %4984 = vmatpush1.msra.mxu0 0.0
  %4985 = vmatprep.subr.mxu0 0.0
  %4986 = vmatpush1.msra.mxu0 0.0
  %4987 = vmatprep.subr.mxu0 0.0
  %4988 = vmatpush1.msra.mxu0 0.0
  %4989 = vmatprep.subr.mxu0 0.0
  %4990 = vmatpush1.msra.mxu0 0.0
  %4991 = vmatprep.subr.mxu0 0.0
  %4992 = vmatpush1.msra.mxu0 0.0
  %4993 = vmatprep.subr.mxu0 0.0
  %4994 = vmatpush1.msra.mxu0 0.0
  %4995 = vmatprep.subr.mxu0 0.0
  %4996 = vmatpush1.msra.mxu0 0.0
  %4997 = vmatprep.subr.mxu0 0.0
  %4998 = vmatpush1.msra.mxu0 0.0
  %4999 = vmatprep.subr.mxu0 0.0
  %5000 = vmatpush1.msra.mxu0 0.0
  %5001 = vmatprep.subr.mxu0 0.0
  %5002 = vmatpush1.msra.mxu0 0.0
  %5003 = vmatprep.subr.mxu0 0.0
  %5004 = vmatpush1.msra.mxu0 0.0
  %5005 = vmatprep.subr.mxu0 0.0
  %5006 = vmatpush1.msra.mxu0 0.0
  %5007 = vmatprep.mubr.f32.mxu0 0.0
  %5008 = vmatmul.mubr.f32.gmra.mrb[0].mxu0 %v4941
  %v5009 = vpop.f32.mrb[0].mxu0
  %v5010 = vadd.f32 %v1880, %v5009
  %v5011 = vpop.f32.mrb[0].mxu0
  %5012 = vdwg.mxu0
  %v5014 = vrot.slane %v5010, 6
  %v5016 = vsub.f32 %v59, %v5014
  %v5017 = vmul.f32 %v5016, %v5016
  %v5018 = vsub.f32 0.0, %v5017
  %v5019 = vmul.f32 %v5018, 200.0
  %v5020 = vsub.f32 %v5019, -2.0767937
  %v5021 = vsel %vm2598, %v5020, 0.0
  %5022 = vadd.xlane.f32.xlu0 %v5021
  %v5023 = vpop.xlane.xlu0 %5022
  %v5024 = vmul.f32 %v5010, %v5010
  %v5025 = vsel %vm1962, %v5024, 0.0
  %5026 = vadd.xlane.f32.xlu0 %v5025
  %v5027 = vpop.xlane.xlu0 %5026
  %v5028 = vrsqrt.pop %v5027
  %v5029 = vmul.f32 %v5027, %v5028
  %vm5030 = vcmp.eq.f32.partialorder %v5027, inf
  %v5031 = vsel %vm5030, %v5027, %v5029
  %vm5032 = vcmp.eq.f32.partialorder %v5027, 0.0
  %v5033 = vand.u32 %v5027, 2147483648
  %v5034 = vsel %vm5032, %v5033, %v5031
  %v5036 = vrot.slane %v5023, 2
  %v5038 = vadd.f32 %v4429, %v5036
  %v5039 = vadd.f32 %v4430, %v5034
  %v5040 = vrot.slane %v1787, 4
  %5042 = vmatprep.subr.mxu0 0.0
  %5043 = vmatpush1.msra.mxu0 %v1983
  %5044 = vmatprep.subr.mxu0 0.0
  %5045 = vmatpush1.msra.mxu0 0.0
  %5046 = vmatprep.subr.mxu0 0.0
  %5047 = vmatpush1.msra.mxu0 0.0
  %5048 = vmatprep.subr.mxu0 0.0
  %5049 = vmatpush1.msra.mxu0 0.0
  %5050 = vmatprep.subr.mxu0 0.0
  %5051 = vmatpush1.msra.mxu0 0.0
  %5052 = vmatprep.subr.mxu0 0.0
  %5053 = vmatpush1.msra.mxu0 0.0
  %5054 = vmatprep.subr.mxu0 0.0
  %5055 = vmatpush1.msra.mxu0 0.0
  %5056 = vmatprep.subr.mxu0 0.0
  %5057 = vmatpush1.msra.mxu0 0.0
  %5058 = vmatprep.subr.mxu0 0.0
  %5059 = vmatpush1.msra.mxu0 0.0
  %5060 = vmatprep.subr.mxu0 0.0
  %5061 = vmatpush1.msra.mxu0 0.0
  %5062 = vmatprep.subr.mxu0 0.0
  %5063 = vmatpush1.msra.mxu0 0.0
  %5064 = vmatprep.subr.mxu0 0.0
  %5065 = vmatpush1.msra.mxu0 0.0
  %5066 = vmatprep.subr.mxu0 0.0
  %5067 = vmatpush1.msra.mxu0 0.0
  %5068 = vmatprep.subr.mxu0 0.0
  %5069 = vmatpush1.msra.mxu0 0.0
  %5070 = vmatprep.subr.mxu0 0.0
  %5071 = vmatpush1.msra.mxu0 0.0
  %5072 = vmatprep.subr.mxu0 0.0
  %5073 = vmatpush1.msra.mxu0 0.0
  %5074 = vmatprep.subr.mxu0 0.0
  %5075 = vmatpush1.msra.mxu0 0.0
  %5076 = vmatprep.subr.mxu0 0.0
  %5077 = vmatpush1.msra.mxu0 0.0
  %5078 = vmatprep.subr.mxu0 0.0
  %5079 = vmatpush1.msra.mxu0 0.0
  %5080 = vmatprep.subr.mxu0 0.0
  %5081 = vmatpush1.msra.mxu0 0.0
  %5082 = vmatprep.subr.mxu0 0.0
  %5083 = vmatpush1.msra.mxu0 0.0
  %5084 = vmatprep.subr.mxu0 0.0
  %5085 = vmatpush1.msra.mxu0 0.0
  %5086 = vmatprep.subr.mxu0 0.0
  %5087 = vmatpush1.msra.mxu0 0.0
  %5088 = vmatprep.subr.mxu0 0.0
  %5089 = vmatpush1.msra.mxu0 0.0
  %5090 = vmatprep.subr.mxu0 0.0
  %5091 = vmatpush1.msra.mxu0 0.0
  %5092 = vmatprep.subr.mxu0 0.0
  %5093 = vmatpush1.msra.mxu0 0.0
  %5094 = vmatprep.subr.mxu0 0.0
  %5095 = vmatpush1.msra.mxu0 0.0
  %5096 = vmatprep.subr.mxu0 0.0
  %5097 = vmatpush1.msra.mxu0 0.0
  %5098 = vmatprep.subr.mxu0 0.0
  %5099 = vmatpush1.msra.mxu0 0.0
  %5100 = vmatprep.subr.mxu0 0.0
  %5101 = vmatpush1.msra.mxu0 0.0
  %5102 = vmatprep.subr.mxu0 0.0
  %5103 = vmatpush1.msra.mxu0 0.0
  %5104 = vmatprep.subr.mxu0 0.0
  %5105 = vmatpush1.msra.mxu0 0.0
  %5106 = vmatprep.mubr.f32.mxu0 0.0
  %5107 = vmatmul.mubr.f32.gmra.mrb[0].mxu0 %v4941
  %v5108 = vpop.f32.mrb[0].mxu0
  %v5109 = vadd.f32 %v5040, %v5108
  %v5110 = vpop.f32.mrb[0].mxu0
  %5111 = vdwg.mxu0
  %v5112 = vmax.f32 %v5109, 0.0
  %vm5113 = vcmp.ne.f32.partialorder %v5109, %v5109
  %v5114 = vadd.f32 %v5109, 0.0
  %v5115 = vand.u32 2147483647, %v5109
  %v5116 = vsub.f32 0.0, %v5115
  %v5117 = vmul.f32 %v5116, 1.442695
  %v5118 = vpow.pop %v5117
  %v5119 = vadd.f32 %v5118, 1.0
  %v5120 = vlog2.pop %v5119
  %v5121 = vmul.f32 %v5120, 0.6931472
  %v5122 = vmul.f32 -0.5, %v5118
  %v5123 = vadd.f32 %v5122, 1.0
  %v5124 = vmul.f32 %v5123, %v5118
  %v5125 = vand.u32 2147483647, %v5118
  %vm5126 = vcmp.lt.f32.partialorder %v5125, 0.0004427343
  %v5127 = vsel %vm5126, %v5124, %v5121
  %v5128 = vadd.f32 %v5112, %v5127
  %v5129 = vsel %vm5113, %v5114, %v5128
  %v5131 = vsel %vm234, %v5129, 0
  %5133 = vmatprep.subr.mxu0 0.0
  %5134 = vmatpush1.msra.mxu0 %v35
  %5135 = vmatprep.subr.mxu0 0.0
  %5136 = vmatpush1.msra.mxu0 %v36
  %5137 = vmatprep.subr.mxu0 0.0
  %5138 = vmatpush1.msra.mxu0 0.0
  %5139 = vmatprep.subr.mxu0 0.0
  %5140 = vmatpush1.msra.mxu0 0.0
  %5141 = vmatprep.subr.mxu0 0.0
  %5142 = vmatpush1.msra.mxu0 0.0
  %5143 = vmatprep.subr.mxu0 0.0
  %5144 = vmatpush1.msra.mxu0 0.0
  %5145 = vmatprep.subr.mxu0 0.0
  %5146 = vmatpush1.msra.mxu0 0.0
  %5147 = vmatprep.subr.mxu0 0.0
  %5148 = vmatpush1.msra.mxu0 0.0
  %5149 = vmatprep.subr.mxu0 0.0
  %5150 = vmatpush1.msra.mxu0 0.0
  %5151 = vmatprep.subr.mxu0 0.0
  %5152 = vmatpush1.msra.mxu0 0.0
  %5153 = vmatprep.subr.mxu0 0.0
  %5154 = vmatpush1.msra.mxu0 0.0
  %5155 = vmatprep.subr.mxu0 0.0
  %5156 = vmatpush1.msra.mxu0 0.0
  %5157 = vmatprep.subr.mxu0 0.0
  %5158 = vmatpush1.msra.mxu0 0.0
  %5159 = vmatprep.subr.mxu0 0.0
  %5160 = vmatpush1.msra.mxu0 0.0
  %5161 = vmatprep.subr.mxu0 0.0
  %5162 = vmatpush1.msra.mxu0 0.0
  %5163 = vmatprep.subr.mxu0 0.0
  %5164 = vmatpush1.msra.mxu0 0.0
  %5165 = vmatprep.subr.mxu0 0.0
  %5166 = vmatpush1.msra.mxu0 0.0
  %5167 = vmatprep.subr.mxu0 0.0
  %5168 = vmatpush1.msra.mxu0 0.0
  %5169 = vmatprep.subr.mxu0 0.0
  %5170 = vmatpush1.msra.mxu0 0.0
  %5171 = vmatprep.subr.mxu0 0.0
  %5172 = vmatpush1.msra.mxu0 0.0
  %5173 = vmatprep.subr.mxu0 0.0
  %5174 = vmatpush1.msra.mxu0 0.0
  %5175 = vmatprep.subr.mxu0 0.0
  %5176 = vmatpush1.msra.mxu0 0.0
  %5177 = vmatprep.subr.mxu0 0.0
  %5178 = vmatpush1.msra.mxu0 0.0
  %5179 = vmatprep.subr.mxu0 0.0
  %5180 = vmatpush1.msra.mxu0 0.0
  %5181 = vmatprep.subr.mxu0 0.0
  %5182 = vmatpush1.msra.mxu0 0.0
  %5183 = vmatprep.subr.mxu0 0.0
  %5184 = vmatpush1.msra.mxu0 0.0
  %5185 = vmatprep.subr.mxu0 0.0
  %5186 = vmatpush1.msra.mxu0 0.0
  %5187 = vmatprep.subr.mxu0 0.0
  %5188 = vmatpush1.msra.mxu0 0.0
  %5189 = vmatprep.subr.mxu0 0.0
  %5190 = vmatpush1.msra.mxu0 0.0
  %5191 = vmatprep.subr.mxu0 0.0
  %5192 = vmatpush1.msra.mxu0 0.0
  %5193 = vmatprep.subr.mxu0 0.0
  %5194 = vmatpush1.msra.mxu0 0.0
  %5195 = vmatprep.subr.mxu0 0.0
  %5196 = vmatpush1.msra.mxu0 0.0
  %5197 = vmatprep.mubr.f32.mxu0 0.0
  %5198 = vmatmul.mubr.f32.gmra.mrb[0].mxu0 %v5131
  %v5199 = vpop.f32.mrb[0].mxu0
  %v5200 = vadd.f32 %v2076, %v5199
  %v5201 = vpop.f32.mrb[0].mxu0
  %5202 = vdwg.mxu0
  %v5203 = vmax.f32 %v5200, 0.0
  %vm5204 = vcmp.ne.f32.partialorder %v5200, %v5200
  %v5205 = vadd.f32 %v5200, 0.0
  %v5206 = vand.u32 2147483647, %v5200
  %v5207 = vsub.f32 0.0, %v5206
  %v5208 = vmul.f32 %v5207, 1.442695
  %v5209 = vpow.pop %v5208
  %v5210 = vadd.f32 %v5209, 1.0
  %v5211 = vlog2.pop %v5210
  %v5212 = vmul.f32 %v5211, 0.6931472
  %v5213 = vmul.f32 -0.5, %v5209
  %v5214 = vadd.f32 %v5213, 1.0
  %v5215 = vmul.f32 %v5214, %v5209
  %v5216 = vand.u32 2147483647, %v5209
  %vm5217 = vcmp.lt.f32.partialorder %v5216, 0.0004427343
  %v5218 = vsel %vm5217, %v5215, %v5212
  %v5219 = vadd.f32 %v5203, %v5218
  %v5220 = vsel %vm5204, %v5205, %v5219
  %v5222 = vsel %vm234, %v5220, 0
  %5224 = vmatprep.subr.mxu0 0.0
  %5225 = vmatpush1.msra.mxu0 %v38
  %5226 = vmatprep.subr.mxu0 0.0
  %5227 = vmatpush1.msra.mxu0 %v39
  %5228 = vmatprep.subr.mxu0 0.0
  %5229 = vmatpush1.msra.mxu0 0.0
  %5230 = vmatprep.subr.mxu0 0.0
  %5231 = vmatpush1.msra.mxu0 0.0
  %5232 = vmatprep.subr.mxu0 0.0
  %5233 = vmatpush1.msra.mxu0 0.0
  %5234 = vmatprep.subr.mxu0 0.0
  %5235 = vmatpush1.msra.mxu0 0.0
  %5236 = vmatprep.subr.mxu0 0.0
  %5237 = vmatpush1.msra.mxu0 0.0
  %5238 = vmatprep.subr.mxu0 0.0
  %5239 = vmatpush1.msra.mxu0 0.0
  %5240 = vmatprep.subr.mxu0 0.0
  %5241 = vmatpush1.msra.mxu0 0.0
  %5242 = vmatprep.subr.mxu0 0.0
  %5243 = vmatpush1.msra.mxu0 0.0
  %5244 = vmatprep.subr.mxu0 0.0
  %5245 = vmatpush1.msra.mxu0 0.0
  %5246 = vmatprep.subr.mxu0 0.0
  %5247 = vmatpush1.msra.mxu0 0.0
  %5248 = vmatprep.subr.mxu0 0.0
  %5249 = vmatpush1.msra.mxu0 0.0
  %5250 = vmatprep.subr.mxu0 0.0
  %5251 = vmatpush1.msra.mxu0 0.0
  %5252 = vmatprep.subr.mxu0 0.0
  %5253 = vmatpush1.msra.mxu0 0.0
  %5254 = vmatprep.subr.mxu0 0.0
  %5255 = vmatpush1.msra.mxu0 0.0
  %5256 = vmatprep.subr.mxu0 0.0
  %5257 = vmatpush1.msra.mxu0 0.0
  %5258 = vmatprep.subr.mxu0 0.0
  %5259 = vmatpush1.msra.mxu0 0.0
  %5260 = vmatprep.subr.mxu0 0.0
  %5261 = vmatpush1.msra.mxu0 0.0
  %5262 = vmatprep.subr.mxu0 0.0
  %5263 = vmatpush1.msra.mxu0 0.0
  %5264 = vmatprep.subr.mxu0 0.0
  %5265 = vmatpush1.msra.mxu0 0.0
  %5266 = vmatprep.subr.mxu0 0.0
  %5267 = vmatpush1.msra.mxu0 0.0
  %5268 = vmatprep.subr.mxu0 0.0
  %5269 = vmatpush1.msra.mxu0 0.0
  %5270 = vmatprep.subr.mxu0 0.0
  %5271 = vmatpush1.msra.mxu0 0.0
  %5272 = vmatprep.subr.mxu0 0.0
  %5273 = vmatpush1.msra.mxu0 0.0
  %5274 = vmatprep.subr.mxu0 0.0
  %5275 = vmatpush1.msra.mxu0 0.0
  %5276 = vmatprep.subr.mxu0 0.0
  %5277 = vmatpush1.msra.mxu0 0.0
  %5278 = vmatprep.subr.mxu0 0.0
  %5279 = vmatpush1.msra.mxu0 0.0
  %5280 = vmatprep.subr.mxu0 0.0
  %5281 = vmatpush1.msra.mxu0 0.0
  %5282 = vmatprep.subr.mxu0 0.0
  %5283 = vmatpush1.msra.mxu0 0.0
  %5284 = vmatprep.subr.mxu0 0.0
  %5285 = vmatpush1.msra.mxu0 0.0
  %5286 = vmatprep.subr.mxu0 0.0
  %5287 = vmatpush1.msra.mxu0 0.0
  %5288 = vmatprep.mubr.f32.mxu0 0.0
  %5289 = vmatmul.mubr.f32.gmra.mrb[0].mxu0 %v5222
  %v5290 = vpop.f32.mrb[0].mxu0
  %v5291 = vadd.f32 %v2171, %v5290
  %v5292 = vpop.f32.mrb[0].mxu0
  %5293 = vdwg.mxu0
  %5294 = vmatprep.subr.mxu0 0.0
  %5295 = vmatpush1.msra.mxu0 %v2250
  %5296 = vmatprep.subr.mxu0 0.0
  %5297 = vmatpush1.msra.mxu0 0.0
  %5298 = vmatprep.subr.mxu0 0.0
  %5299 = vmatpush1.msra.mxu0 0.0
  %5300 = vmatprep.subr.mxu0 0.0
  %5301 = vmatpush1.msra.mxu0 0.0
  %5302 = vmatprep.subr.mxu0 0.0
  %5303 = vmatpush1.msra.mxu0 0.0
  %5304 = vmatprep.subr.mxu0 0.0
  %5305 = vmatpush1.msra.mxu0 0.0
  %5306 = vmatprep.subr.mxu0 0.0
  %5307 = vmatpush1.msra.mxu0 0.0
  %5308 = vmatprep.subr.mxu0 0.0
  %5309 = vmatpush1.msra.mxu0 0.0
  %5310 = vmatprep.subr.mxu0 0.0
  %5311 = vmatpush1.msra.mxu0 0.0
  %5312 = vmatprep.subr.mxu0 0.0
  %5313 = vmatpush1.msra.mxu0 0.0
  %5314 = vmatprep.subr.mxu0 0.0
  %5315 = vmatpush1.msra.mxu0 0.0
  %5316 = vmatprep.subr.mxu0 0.0
  %5317 = vmatpush1.msra.mxu0 0.0
  %5318 = vmatprep.subr.mxu0 0.0
  %5319 = vmatpush1.msra.mxu0 0.0
  %5320 = vmatprep.subr.mxu0 0.0
  %5321 = vmatpush1.msra.mxu0 0.0
  %5322 = vmatprep.subr.mxu0 0.0
  %5323 = vmatpush1.msra.mxu0 0.0
  %5324 = vmatprep.subr.mxu0 0.0
  %5325 = vmatpush1.msra.mxu0 0.0
  %5326 = vmatprep.subr.mxu0 0.0
  %5327 = vmatpush1.msra.mxu0 0.0
  %5328 = vmatprep.subr.mxu0 0.0
  %5329 = vmatpush1.msra.mxu0 0.0
  %5330 = vmatprep.subr.mxu0 0.0
  %5331 = vmatpush1.msra.mxu0 0.0
  %5332 = vmatprep.subr.mxu0 0.0
  %5333 = vmatpush1.msra.mxu0 0.0
  %5334 = vmatprep.subr.mxu0 0.0
  %5335 = vmatpush1.msra.mxu0 0.0
  %5336 = vmatprep.subr.mxu0 0.0
  %5337 = vmatpush1.msra.mxu0 0.0
  %5338 = vmatprep.subr.mxu0 0.0
  %5339 = vmatpush1.msra.mxu0 0.0
  %5340 = vmatprep.subr.mxu0 0.0
  %5341 = vmatpush1.msra.mxu0 0.0
  %5342 = vmatprep.subr.mxu0 0.0
  %5343 = vmatpush1.msra.mxu0 0.0
  %5344 = vmatprep.subr.mxu0 0.0
  %5345 = vmatpush1.msra.mxu0 0.0
  %5346 = vmatprep.subr.mxu0 0.0
  %5347 = vmatpush1.msra.mxu0 0.0
  %5348 = vmatprep.subr.mxu0 0.0
  %5349 = vmatpush1.msra.mxu0 0.0
  %5350 = vmatprep.subr.mxu0 0.0
  %5351 = vmatpush1.msra.mxu0 0.0
  %5352 = vmatprep.subr.mxu0 0.0
  %5353 = vmatpush1.msra.mxu0 0.0
  %5354 = vmatprep.subr.mxu0 0.0
  %5355 = vmatpush1.msra.mxu0 0.0
  %5356 = vmatprep.subr.mxu0 0.0
  %5357 = vmatpush1.msra.mxu0 0.0
  %5358 = vmatprep.mubr.f32.mxu0 0.0
  %5359 = vmatmul.mubr.f32.gmra.mrb[0].mxu0 %v4941
  %v5360 = vpop.f32.mrb[0].mxu0
  %v5361 = vadd.f32 %v2248, %v5360
  %v5362 = vpop.f32.mrb[0].mxu0
  %5363 = vdwg.mxu0
  %5364 = vmatprep.subr.mxu0 0.0
  %5365 = vmatpush1.msra.mxu0 %v2327
  %5366 = vmatprep.subr.mxu0 0.0
  %5367 = vmatpush1.msra.mxu0 0.0
  %5368 = vmatprep.subr.mxu0 0.0
  %5369 = vmatpush1.msra.mxu0 0.0
  %5370 = vmatprep.subr.mxu0 0.0
  %5371 = vmatpush1.msra.mxu0 0.0
  %5372 = vmatprep.subr.mxu0 0.0
  %5373 = vmatpush1.msra.mxu0 0.0
  %5374 = vmatprep.subr.mxu0 0.0
  %5375 = vmatpush1.msra.mxu0 0.0
  %5376 = vmatprep.subr.mxu0 0.0
  %5377 = vmatpush1.msra.mxu0 0.0
  %5378 = vmatprep.subr.mxu0 0.0
  %5379 = vmatpush1.msra.mxu0 0.0
  %5380 = vmatprep.subr.mxu0 0.0
  %5381 = vmatpush1.msra.mxu0 0.0
  %5382 = vmatprep.subr.mxu0 0.0
  %5383 = vmatpush1.msra.mxu0 0.0
  %5384 = vmatprep.subr.mxu0 0.0
  %5385 = vmatpush1.msra.mxu0 0.0
  %5386 = vmatprep.subr.mxu0 0.0
  %5387 = vmatpush1.msra.mxu0 0.0
  %5388 = vmatprep.subr.mxu0 0.0
  %5389 = vmatpush1.msra.mxu0 0.0
  %5390 = vmatprep.subr.mxu0 0.0
  %5391 = vmatpush1.msra.mxu0 0.0
  %5392 = vmatprep.subr.mxu0 0.0
  %5393 = vmatpush1.msra.mxu0 0.0
  %5394 = vmatprep.subr.mxu0 0.0
  %5395 = vmatpush1.msra.mxu0 0.0
  %5396 = vmatprep.subr.mxu0 0.0
  %5397 = vmatpush1.msra.mxu0 0.0
  %5398 = vmatprep.subr.mxu0 0.0
  %5399 = vmatpush1.msra.mxu0 0.0
  %5400 = vmatprep.subr.mxu0 0.0
  %5401 = vmatpush1.msra.mxu0 0.0
  %5402 = vmatprep.subr.mxu0 0.0
  %5403 = vmatpush1.msra.mxu0 0.0
  %5404 = vmatprep.subr.mxu0 0.0
  %5405 = vmatpush1.msra.mxu0 0.0
  %5406 = vmatprep.subr.mxu0 0.0
  %5407 = vmatpush1.msra.mxu0 0.0
  %5408 = vmatprep.subr.mxu0 0.0
  %5409 = vmatpush1.msra.mxu0 0.0
  %5410 = vmatprep.subr.mxu0 0.0
  %5411 = vmatpush1.msra.mxu0 0.0
  %5412 = vmatprep.subr.mxu0 0.0
  %5413 = vmatpush1.msra.mxu0 0.0
  %5414 = vmatprep.subr.mxu0 0.0
  %5415 = vmatpush1.msra.mxu0 0.0
  %5416 = vmatprep.subr.mxu0 0.0
  %5417 = vmatpush1.msra.mxu0 0.0
  %5418 = vmatprep.subr.mxu0 0.0
  %5419 = vmatpush1.msra.mxu0 0.0
  %5420 = vmatprep.subr.mxu0 0.0
  %5421 = vmatpush1.msra.mxu0 0.0
  %5422 = vmatprep.subr.mxu0 0.0
  %5423 = vmatpush1.msra.mxu0 0.0
  %5424 = vmatprep.subr.mxu0 0.0
  %5425 = vmatpush1.msra.mxu0 0.0
  %5426 = vmatprep.subr.mxu0 0.0
  %5427 = vmatpush1.msra.mxu0 0.0
  %5428 = vmatprep.mubr.f32.mxu0 0.0
  %5429 = vmatmul.mubr.f32.gmra.mrb[0].mxu0 %v4941
  %v5430 = vpop.f32.mrb[0].mxu0
  %v5431 = vadd.f32 %v2325, %v5430
  %v5432 = vpop.f32.mrb[0].mxu0
  %5433 = vdwg.mxu0
  %v5434 = vmax.f32 %v5431, 0.0
  %vm5435 = vcmp.ne.f32.partialorder %v5431, %v5431
  %v5436 = vadd.f32 %v5431, 0.0
  %v5437 = vand.u32 2147483647, %v5431
  %v5438 = vsub.f32 0.0, %v5437
  %v5439 = vmul.f32 %v5438, 1.442695
  %v5440 = vpow.pop %v5439
  %v5441 = vadd.f32 %v5440, 1.0
  %v5442 = vlog2.pop %v5441
  %v5443 = vmul.f32 %v5442, 0.6931472
  %v5444 = vmul.f32 -0.5, %v5440
  %v5445 = vadd.f32 %v5444, 1.0
  %v5446 = vmul.f32 %v5445, %v5440
  %v5447 = vand.u32 2147483647, %v5440
  %vm5448 = vcmp.lt.f32.partialorder %v5447, 0.0004427343
  %v5449 = vsel %vm5448, %v5446, %v5443
  %v5450 = vadd.f32 %v5434, %v5449
  %v5451 = vsel %vm5435, %v5436, %v5450
  %v5453 = vsel %vm2421, %v5451, 0
  %5455 = vmatprep.subr.mxu0 0.0
  %5456 = vmatpush1.msra.mxu0 %v47
  %5457 = vmatprep.subr.mxu0 0.0
  %5458 = vmatpush1.msra.mxu0 %v48
  %5459 = vmatprep.subr.mxu0 0.0
  %5460 = vmatpush1.msra.mxu0 %v49
  %5461 = vmatprep.subr.mxu0 0.0
  %5462 = vmatpush1.msra.mxu0 %v50
  %5463 = vmatprep.subr.mxu0 0.0
  %5464 = vmatpush1.msra.mxu0 %v51
  %5465 = vmatprep.subr.mxu0 0.0
  %5466 = vmatpush1.msra.mxu0 %v52
  %5467 = vmatprep.subr.mxu0 0.0
  %5468 = vmatpush1.msra.mxu0 %v53
  %5469 = vmatprep.subr.mxu0 0.0
  %5470 = vmatpush1.msra.mxu0 %v54
  %5471 = vmatprep.subr.mxu0 0.0
  %5472 = vmatpush1.msra.mxu0 0.0
  %5473 = vmatprep.subr.mxu0 0.0
  %5474 = vmatpush1.msra.mxu0 0.0
  %5475 = vmatprep.subr.mxu0 0.0
  %5476 = vmatpush1.msra.mxu0 0.0
  %5477 = vmatprep.subr.mxu0 0.0
  %5478 = vmatpush1.msra.mxu0 0.0
  %5479 = vmatprep.subr.mxu0 0.0
  %5480 = vmatpush1.msra.mxu0 0.0
  %5481 = vmatprep.subr.mxu0 0.0
  %5482 = vmatpush1.msra.mxu0 0.0
  %5483 = vmatprep.subr.mxu0 0.0
  %5484 = vmatpush1.msra.mxu0 0.0
  %5485 = vmatprep.subr.mxu0 0.0
  %5486 = vmatpush1.msra.mxu0 0.0
  %5487 = vmatprep.subr.mxu0 0.0
  %5488 = vmatpush1.msra.mxu0 0.0
  %5489 = vmatprep.subr.mxu0 0.0
  %5490 = vmatpush1.msra.mxu0 0.0
  %5491 = vmatprep.subr.mxu0 0.0
  %5492 = vmatpush1.msra.mxu0 0.0
  %5493 = vmatprep.subr.mxu0 0.0
  %5494 = vmatpush1.msra.mxu0 0.0
  %5495 = vmatprep.subr.mxu0 0.0
  %5496 = vmatpush1.msra.mxu0 0.0
  %5497 = vmatprep.subr.mxu0 0.0
  %5498 = vmatpush1.msra.mxu0 0.0
  %5499 = vmatprep.subr.mxu0 0.0
  %5500 = vmatpush1.msra.mxu0 0.0
  %5501 = vmatprep.subr.mxu0 0.0
  %5502 = vmatpush1.msra.mxu0 0.0
  %5503 = vmatprep.subr.mxu0 0.0
  %5504 = vmatpush1.msra.mxu0 0.0
  %5505 = vmatprep.subr.mxu0 0.0
  %5506 = vmatpush1.msra.mxu0 0.0
  %5507 = vmatprep.subr.mxu0 0.0
  %5508 = vmatpush1.msra.mxu0 0.0
  %5509 = vmatprep.subr.mxu0 0.0
  %5510 = vmatpush1.msra.mxu0 0.0
  %5511 = vmatprep.subr.mxu0 0.0
  %5512 = vmatpush1.msra.mxu0 0.0
  %5513 = vmatprep.subr.mxu0 0.0
  %5514 = vmatpush1.msra.mxu0 0.0
  %5515 = vmatprep.subr.mxu0 0.0
  %5516 = vmatpush1.msra.mxu0 0.0
  %5517 = vmatprep.subr.mxu0 0.0
  %5518 = vmatpush1.msra.mxu0 0.0
  %5519 = vmatprep.mubr.f32.mxu0 0.0
  %5520 = vmatmul.mubr.f32.gmra.mrb[0].mxu0 %v5453
  %v5521 = vpop.f32.mrb[0].mxu0
  %v5522 = vadd.f32 %v2420, %v5521
  %v5523 = vpop.f32.mrb[0].mxu0
  %5524 = vdwg.mxu0
  %v5525 = vxor.u32 %v5522, 2147483648
  %v5526 = vmul.f32 %v5525, 1.442695
  %v5527 = vpow.pop %v5526
  %v5528 = vadd.f32 %v5527, 1.0
  %v5529 = vrcp.pop %v5528
  %v5530 = vmul.f32 1.0, %v5529
  %v5531 = vsub.f32 %v5291, %v5361
  %v5532 = vmax.f32 %v5530, 1e-07
  %v5533 = vrcp.pop %v5532
  %v5534 = vmul.f32 %v5531, %v5533
  %v5535 = vmul.f32 %v5534, %v5534
  %v5536 = vsel %vm1962, %v5535, 0.0
  %5537 = vadd.xlane.f32.xlu0 %v5536
  %v5538 = vpop.xlane.xlu0 %5537
  %v5539 = vmul.f32 %v5538, 0.005
  %v5540 = vadd.f32 %v4932, %v5539
  %v5541 = vmul.f32 %v5291, 0.01
  %v5542 = vadd.f32 %v4939, %v5541
  %v5543 = vrot.slane %v61, 4
  %v5545 = vmul.f32 %v5530, %v5543
  %v5546 = vadd.f32 %v5542, %v5545
  %v5548 = vsel %vm66, %v5546, 0
  %5550 = vmatprep.subr.mxu0 0.0
  %5551 = vmatpush1.msra.mxu0 %v1885
  %5552 = vmatprep.subr.mxu0 0.0
  %5553 = vmatpush1.msra.mxu0 0.0
  %5554 = vmatprep.subr.mxu0 0.0
  %5555 = vmatpush1.msra.mxu0 0.0
  %5556 = vmatprep.subr.mxu0 0.0
  %5557 = vmatpush1.msra.mxu0 0.0
  %5558 = vmatprep.subr.mxu0 0.0
  %5559 = vmatpush1.msra.mxu0 0.0
  %5560 = vmatprep.subr.mxu0 0.0
  %5561 = vmatpush1.msra.mxu0 0.0
  %5562 = vmatprep.subr.mxu0 0.0
  %5563 = vmatpush1.msra.mxu0 0.0
  %5564 = vmatprep.subr.mxu0 0.0
  %5565 = vmatpush1.msra.mxu0 0.0
  %5566 = vmatprep.subr.mxu0 0.0
  %5567 = vmatpush1.msra.mxu0 0.0
  %5568 = vmatprep.subr.mxu0 0.0
  %5569 = vmatpush1.msra.mxu0 0.0
  %5570 = vmatprep.subr.mxu0 0.0
  %5571 = vmatpush1.msra.mxu0 0.0
  %5572 = vmatprep.subr.mxu0 0.0
  %5573 = vmatpush1.msra.mxu0 0.0
  %5574 = vmatprep.subr.mxu0 0.0
  %5575 = vmatpush1.msra.mxu0 0.0
  %5576 = vmatprep.subr.mxu0 0.0
  %5577 = vmatpush1.msra.mxu0 0.0
  %5578 = vmatprep.subr.mxu0 0.0
  %5579 = vmatpush1.msra.mxu0 0.0
  %5580 = vmatprep.subr.mxu0 0.0
  %5581 = vmatpush1.msra.mxu0 0.0
  %5582 = vmatprep.subr.mxu0 0.0
  %5583 = vmatpush1.msra.mxu0 0.0
  %5584 = vmatprep.subr.mxu0 0.0
  %5585 = vmatpush1.msra.mxu0 0.0
  %5586 = vmatprep.subr.mxu0 0.0
  %5587 = vmatpush1.msra.mxu0 0.0
  %5588 = vmatprep.subr.mxu0 0.0
  %5589 = vmatpush1.msra.mxu0 0.0
  %5590 = vmatprep.subr.mxu0 0.0
  %5591 = vmatpush1.msra.mxu0 0.0
  %5592 = vmatprep.subr.mxu0 0.0
  %5593 = vmatpush1.msra.mxu0 0.0
  %5594 = vmatprep.subr.mxu0 0.0
  %5595 = vmatpush1.msra.mxu0 0.0
  %5596 = vmatprep.subr.mxu0 0.0
  %5597 = vmatpush1.msra.mxu0 0.0
  %5598 = vmatprep.subr.mxu0 0.0
  %5599 = vmatpush1.msra.mxu0 0.0
  %5600 = vmatprep.subr.mxu0 0.0
  %5601 = vmatpush1.msra.mxu0 0.0
  %5602 = vmatprep.subr.mxu0 0.0
  %5603 = vmatpush1.msra.mxu0 0.0
  %5604 = vmatprep.subr.mxu0 0.0
  %5605 = vmatpush1.msra.mxu0 0.0
  %5606 = vmatprep.subr.mxu0 0.0
  %5607 = vmatpush1.msra.mxu0 0.0
  %5608 = vmatprep.subr.mxu0 0.0
  %5609 = vmatpush1.msra.mxu0 0.0
  %5610 = vmatprep.subr.mxu0 0.0
  %5611 = vmatpush1.msra.mxu0 0.0
  %5612 = vmatprep.subr.mxu0 0.0
  %5613 = vmatpush1.msra.mxu0 0.0
  %5614 = vmatprep.mubr.f32.mxu0 0.0
  %5615 = vmatmul.mubr.f32.gmra.mrb[0].mxu0 %v5548
  %v5616 = vpop.f32.mrb[0].mxu0
  %v5617 = vadd.f32 %v1880, %v5616
  %v5618 = vpop.f32.mrb[0].mxu0
  %5619 = vdwg.mxu0
  %v5621 = vrot.slane %v5617, 4
  %v5623 = vsub.f32 %v59, %v5621
  %v5624 = vmul.f32 %v5623, %v5623
  %v5625 = vsub.f32 0.0, %v5624
  %v5626 = vmul.f32 %v5625, 200.0
  %v5627 = vsub.f32 %v5626, -2.0767937
  %v5628 = vsel %vm3206, %v5627, 0.0
  %5629 = vadd.xlane.f32.xlu0 %v5628
  %v5630 = vpop.xlane.xlu0 %5629
  %v5631 = vmul.f32 %v5617, %v5617
  %v5632 = vsel %vm1962, %v5631, 0.0
  %5633 = vadd.xlane.f32.xlu0 %v5632
  %v5634 = vpop.xlane.xlu0 %5633
  %v5635 = vrsqrt.pop %v5634
  %v5636 = vmul.f32 %v5634, %v5635
  %vm5637 = vcmp.eq.f32.partialorder %v5634, inf
  %v5638 = vsel %vm5637, %v5634, %v5636
  %vm5639 = vcmp.eq.f32.partialorder %v5634, 0.0
  %v5640 = vand.u32 %v5634, 2147483648
  %v5641 = vsel %vm5639, %v5640, %v5638
  %v5643 = vrot.slane %v5630, 4
  %v5645 = vadd.f32 %v5038, %v5643
  %v5646 = vadd.f32 %v5039, %v5641
  %v5647 = vrot.slane %v1787, 6
  %5649 = vmatprep.subr.mxu0 0.0
  %5650 = vmatpush1.msra.mxu0 %v1983
  %5651 = vmatprep.subr.mxu0 0.0
  %5652 = vmatpush1.msra.mxu0 0.0
  %5653 = vmatprep.subr.mxu0 0.0
  %5654 = vmatpush1.msra.mxu0 0.0
  %5655 = vmatprep.subr.mxu0 0.0
  %5656 = vmatpush1.msra.mxu0 0.0
  %5657 = vmatprep.subr.mxu0 0.0
  %5658 = vmatpush1.msra.mxu0 0.0
  %5659 = vmatprep.subr.mxu0 0.0
  %5660 = vmatpush1.msra.mxu0 0.0
  %5661 = vmatprep.subr.mxu0 0.0
  %5662 = vmatpush1.msra.mxu0 0.0
  %5663 = vmatprep.subr.mxu0 0.0
  %5664 = vmatpush1.msra.mxu0 0.0
  %5665 = vmatprep.subr.mxu0 0.0
  %5666 = vmatpush1.msra.mxu0 0.0
  %5667 = vmatprep.subr.mxu0 0.0
  %5668 = vmatpush1.msra.mxu0 0.0
  %5669 = vmatprep.subr.mxu0 0.0
  %5670 = vmatpush1.msra.mxu0 0.0
  %5671 = vmatprep.subr.mxu0 0.0
  %5672 = vmatpush1.msra.mxu0 0.0
  %5673 = vmatprep.subr.mxu0 0.0
  %5674 = vmatpush1.msra.mxu0 0.0
  %5675 = vmatprep.subr.mxu0 0.0
  %5676 = vmatpush1.msra.mxu0 0.0
  %5677 = vmatprep.subr.mxu0 0.0
  %5678 = vmatpush1.msra.mxu0 0.0
  %5679 = vmatprep.subr.mxu0 0.0
  %5680 = vmatpush1.msra.mxu0 0.0
  %5681 = vmatprep.subr.mxu0 0.0
  %5682 = vmatpush1.msra.mxu0 0.0
  %5683 = vmatprep.subr.mxu0 0.0
  %5684 = vmatpush1.msra.mxu0 0.0
  %5685 = vmatprep.subr.mxu0 0.0
  %5686 = vmatpush1.msra.mxu0 0.0
  %5687 = vmatprep.subr.mxu0 0.0
  %5688 = vmatpush1.msra.mxu0 0.0
  %5689 = vmatprep.subr.mxu0 0.0
  %5690 = vmatpush1.msra.mxu0 0.0
  %5691 = vmatprep.subr.mxu0 0.0
  %5692 = vmatpush1.msra.mxu0 0.0
  %5693 = vmatprep.subr.mxu0 0.0
  %5694 = vmatpush1.msra.mxu0 0.0
  %5695 = vmatprep.subr.mxu0 0.0
  %5696 = vmatpush1.msra.mxu0 0.0
  %5697 = vmatprep.subr.mxu0 0.0
  %5698 = vmatpush1.msra.mxu0 0.0
  %5699 = vmatprep.subr.mxu0 0.0
  %5700 = vmatpush1.msra.mxu0 0.0
  %5701 = vmatprep.subr.mxu0 0.0
  %5702 = vmatpush1.msra.mxu0 0.0
  %5703 = vmatprep.subr.mxu0 0.0
  %5704 = vmatpush1.msra.mxu0 0.0
  %5705 = vmatprep.subr.mxu0 0.0
  %5706 = vmatpush1.msra.mxu0 0.0
  %5707 = vmatprep.subr.mxu0 0.0
  %5708 = vmatpush1.msra.mxu0 0.0
  %5709 = vmatprep.subr.mxu0 0.0
  %5710 = vmatpush1.msra.mxu0 0.0
  %5711 = vmatprep.subr.mxu0 0.0
  %5712 = vmatpush1.msra.mxu0 0.0
  %5713 = vmatprep.mubr.f32.mxu0 0.0
  %5714 = vmatmul.mubr.f32.gmra.mrb[0].mxu0 %v5548
  %v5715 = vpop.f32.mrb[0].mxu0
  %v5716 = vadd.f32 %v5647, %v5715
  %v5717 = vpop.f32.mrb[0].mxu0
  %5718 = vdwg.mxu0
  %v5719 = vmax.f32 %v5716, 0.0
  %vm5720 = vcmp.ne.f32.partialorder %v5716, %v5716
  %v5721 = vadd.f32 %v5716, 0.0
  %v5722 = vand.u32 2147483647, %v5716
  %v5723 = vsub.f32 0.0, %v5722
  %v5724 = vmul.f32 %v5723, 1.442695
  %v5725 = vpow.pop %v5724
  %v5726 = vadd.f32 %v5725, 1.0
  %v5727 = vlog2.pop %v5726
  %v5728 = vmul.f32 %v5727, 0.6931472
  %v5729 = vmul.f32 -0.5, %v5725
  %v5730 = vadd.f32 %v5729, 1.0
  %v5731 = vmul.f32 %v5730, %v5725
  %v5732 = vand.u32 2147483647, %v5725
  %vm5733 = vcmp.lt.f32.partialorder %v5732, 0.0004427343
  %v5734 = vsel %vm5733, %v5731, %v5728
  %v5735 = vadd.f32 %v5719, %v5734
  %v5736 = vsel %vm5720, %v5721, %v5735
  %v5738 = vsel %vm234, %v5736, 0
  %5740 = vmatprep.subr.mxu0 0.0
  %5741 = vmatpush1.msra.mxu0 %v35
  %5742 = vmatprep.subr.mxu0 0.0
  %5743 = vmatpush1.msra.mxu0 %v36
  %5744 = vmatprep.subr.mxu0 0.0
  %5745 = vmatpush1.msra.mxu0 0.0
  %5746 = vmatprep.subr.mxu0 0.0
  %5747 = vmatpush1.msra.mxu0 0.0
  %5748 = vmatprep.subr.mxu0 0.0
  %5749 = vmatpush1.msra.mxu0 0.0
  %5750 = vmatprep.subr.mxu0 0.0
  %5751 = vmatpush1.msra.mxu0 0.0
  %5752 = vmatprep.subr.mxu0 0.0
  %5753 = vmatpush1.msra.mxu0 0.0
  %5754 = vmatprep.subr.mxu0 0.0
  %5755 = vmatpush1.msra.mxu0 0.0
  %5756 = vmatprep.subr.mxu0 0.0
  %5757 = vmatpush1.msra.mxu0 0.0
  %5758 = vmatprep.subr.mxu0 0.0
  %5759 = vmatpush1.msra.mxu0 0.0
  %5760 = vmatprep.subr.mxu0 0.0
  %5761 = vmatpush1.msra.mxu0 0.0
  %5762 = vmatprep.subr.mxu0 0.0
  %5763 = vmatpush1.msra.mxu0 0.0
  %5764 = vmatprep.subr.mxu0 0.0
  %5765 = vmatpush1.msra.mxu0 0.0
  %5766 = vmatprep.subr.mxu0 0.0
  %5767 = vmatpush1.msra.mxu0 0.0
  %5768 = vmatprep.subr.mxu0 0.0
  %5769 = vmatpush1.msra.mxu0 0.0
  %5770 = vmatprep.subr.mxu0 0.0
  %5771 = vmatpush1.msra.mxu0 0.0
  %5772 = vmatprep.subr.mxu0 0.0
  %5773 = vmatpush1.msra.mxu0 0.0
  %5774 = vmatprep.subr.mxu0 0.0
  %5775 = vmatpush1.msra.mxu0 0.0
  %5776 = vmatprep.subr.mxu0 0.0
  %5777 = vmatpush1.msra.mxu0 0.0
  %5778 = vmatprep.subr.mxu0 0.0
  %5779 = vmatpush1.msra.mxu0 0.0
  %5780 = vmatprep.subr.mxu0 0.0
  %5781 = vmatpush1.msra.mxu0 0.0
  %5782 = vmatprep.subr.mxu0 0.0
  %5783 = vmatpush1.msra.mxu0 0.0
  %5784 = vmatprep.subr.mxu0 0.0
  %5785 = vmatpush1.msra.mxu0 0.0
  %5786 = vmatprep.subr.mxu0 0.0
  %5787 = vmatpush1.msra.mxu0 0.0
  %5788 = vmatprep.subr.mxu0 0.0
  %5789 = vmatpush1.msra.mxu0 0.0
  %5790 = vmatprep.subr.mxu0 0.0
  %5791 = vmatpush1.msra.mxu0 0.0
  %5792 = vmatprep.subr.mxu0 0.0
  %5793 = vmatpush1.msra.mxu0 0.0
  %5794 = vmatprep.subr.mxu0 0.0
  %5795 = vmatpush1.msra.mxu0 0.0
  %5796 = vmatprep.subr.mxu0 0.0
  %5797 = vmatpush1.msra.mxu0 0.0
  %5798 = vmatprep.subr.mxu0 0.0
  %5799 = vmatpush1.msra.mxu0 0.0
  %5800 = vmatprep.subr.mxu0 0.0
  %5801 = vmatpush1.msra.mxu0 0.0
  %5802 = vmatprep.subr.mxu0 0.0
  %5803 = vmatpush1.msra.mxu0 0.0
  %5804 = vmatprep.mubr.f32.mxu0 0.0
  %5805 = vmatmul.mubr.f32.gmra.mrb[0].mxu0 %v5738
  %v5806 = vpop.f32.mrb[0].mxu0
  %v5807 = vadd.f32 %v2076, %v5806
  %v5808 = vpop.f32.mrb[0].mxu0
  %5809 = vdwg.mxu0
  %v5810 = vmax.f32 %v5807, 0.0
  %vm5811 = vcmp.ne.f32.partialorder %v5807, %v5807
  %v5812 = vadd.f32 %v5807, 0.0
  %v5813 = vand.u32 2147483647, %v5807
  %v5814 = vsub.f32 0.0, %v5813
  %v5815 = vmul.f32 %v5814, 1.442695
  %v5816 = vpow.pop %v5815
  %v5817 = vadd.f32 %v5816, 1.0
  %v5818 = vlog2.pop %v5817
  %v5819 = vmul.f32 %v5818, 0.6931472
  %v5820 = vmul.f32 -0.5, %v5816
  %v5821 = vadd.f32 %v5820, 1.0
  %v5822 = vmul.f32 %v5821, %v5816
  %v5823 = vand.u32 2147483647, %v5816
  %vm5824 = vcmp.lt.f32.partialorder %v5823, 0.0004427343
  %v5825 = vsel %vm5824, %v5822, %v5819
  %v5826 = vadd.f32 %v5810, %v5825
  %v5827 = vsel %vm5811, %v5812, %v5826
  %v5829 = vsel %vm234, %v5827, 0
  %5831 = vmatprep.subr.mxu0 0.0
  %5832 = vmatpush1.msra.mxu0 %v38
  %5833 = vmatprep.subr.mxu0 0.0
  %5834 = vmatpush1.msra.mxu0 %v39
  %5835 = vmatprep.subr.mxu0 0.0
  %5836 = vmatpush1.msra.mxu0 0.0
  %5837 = vmatprep.subr.mxu0 0.0
  %5838 = vmatpush1.msra.mxu0 0.0
  %5839 = vmatprep.subr.mxu0 0.0
  %5840 = vmatpush1.msra.mxu0 0.0
  %5841 = vmatprep.subr.mxu0 0.0
  %5842 = vmatpush1.msra.mxu0 0.0
  %5843 = vmatprep.subr.mxu0 0.0
  %5844 = vmatpush1.msra.mxu0 0.0
  %5845 = vmatprep.subr.mxu0 0.0
  %5846 = vmatpush1.msra.mxu0 0.0
  %5847 = vmatprep.subr.mxu0 0.0
  %5848 = vmatpush1.msra.mxu0 0.0
  %5849 = vmatprep.subr.mxu0 0.0
  %5850 = vmatpush1.msra.mxu0 0.0
  %5851 = vmatprep.subr.mxu0 0.0
  %5852 = vmatpush1.msra.mxu0 0.0
  %5853 = vmatprep.subr.mxu0 0.0
  %5854 = vmatpush1.msra.mxu0 0.0
  %5855 = vmatprep.subr.mxu0 0.0
  %5856 = vmatpush1.msra.mxu0 0.0
  %5857 = vmatprep.subr.mxu0 0.0
  %5858 = vmatpush1.msra.mxu0 0.0
  %5859 = vmatprep.subr.mxu0 0.0
  %5860 = vmatpush1.msra.mxu0 0.0
  %5861 = vmatprep.subr.mxu0 0.0
  %5862 = vmatpush1.msra.mxu0 0.0
  %5863 = vmatprep.subr.mxu0 0.0
  %5864 = vmatpush1.msra.mxu0 0.0
  %5865 = vmatprep.subr.mxu0 0.0
  %5866 = vmatpush1.msra.mxu0 0.0
  %5867 = vmatprep.subr.mxu0 0.0
  %5868 = vmatpush1.msra.mxu0 0.0
  %5869 = vmatprep.subr.mxu0 0.0
  %5870 = vmatpush1.msra.mxu0 0.0
  %5871 = vmatprep.subr.mxu0 0.0
  %5872 = vmatpush1.msra.mxu0 0.0
  %5873 = vmatprep.subr.mxu0 0.0
  %5874 = vmatpush1.msra.mxu0 0.0
  %5875 = vmatprep.subr.mxu0 0.0
  %5876 = vmatpush1.msra.mxu0 0.0
  %5877 = vmatprep.subr.mxu0 0.0
  %5878 = vmatpush1.msra.mxu0 0.0
  %5879 = vmatprep.subr.mxu0 0.0
  %5880 = vmatpush1.msra.mxu0 0.0
  %5881 = vmatprep.subr.mxu0 0.0
  %5882 = vmatpush1.msra.mxu0 0.0
  %5883 = vmatprep.subr.mxu0 0.0
  %5884 = vmatpush1.msra.mxu0 0.0
  %5885 = vmatprep.subr.mxu0 0.0
  %5886 = vmatpush1.msra.mxu0 0.0
  %5887 = vmatprep.subr.mxu0 0.0
  %5888 = vmatpush1.msra.mxu0 0.0
  %5889 = vmatprep.subr.mxu0 0.0
  %5890 = vmatpush1.msra.mxu0 0.0
  %5891 = vmatprep.subr.mxu0 0.0
  %5892 = vmatpush1.msra.mxu0 0.0
  %5893 = vmatprep.subr.mxu0 0.0
  %5894 = vmatpush1.msra.mxu0 0.0
  %5895 = vmatprep.mubr.f32.mxu0 0.0
  %5896 = vmatmul.mubr.f32.gmra.mrb[0].mxu0 %v5829
  %v5897 = vpop.f32.mrb[0].mxu0
  %v5898 = vadd.f32 %v2171, %v5897
  %v5899 = vpop.f32.mrb[0].mxu0
  %5900 = vdwg.mxu0
  %5901 = vmatprep.subr.mxu0 0.0
  %5902 = vmatpush1.msra.mxu0 %v2250
  %5903 = vmatprep.subr.mxu0 0.0
  %5904 = vmatpush1.msra.mxu0 0.0
  %5905 = vmatprep.subr.mxu0 0.0
  %5906 = vmatpush1.msra.mxu0 0.0
  %5907 = vmatprep.subr.mxu0 0.0
  %5908 = vmatpush1.msra.mxu0 0.0
  %5909 = vmatprep.subr.mxu0 0.0
  %5910 = vmatpush1.msra.mxu0 0.0
  %5911 = vmatprep.subr.mxu0 0.0
  %5912 = vmatpush1.msra.mxu0 0.0
  %5913 = vmatprep.subr.mxu0 0.0
  %5914 = vmatpush1.msra.mxu0 0.0
  %5915 = vmatprep.subr.mxu0 0.0
  %5916 = vmatpush1.msra.mxu0 0.0
  %5917 = vmatprep.subr.mxu0 0.0
  %5918 = vmatpush1.msra.mxu0 0.0
  %5919 = vmatprep.subr.mxu0 0.0
  %5920 = vmatpush1.msra.mxu0 0.0
  %5921 = vmatprep.subr.mxu0 0.0
  %5922 = vmatpush1.msra.mxu0 0.0
  %5923 = vmatprep.subr.mxu0 0.0
  %5924 = vmatpush1.msra.mxu0 0.0
  %5925 = vmatprep.subr.mxu0 0.0
  %5926 = vmatpush1.msra.mxu0 0.0
  %5927 = vmatprep.subr.mxu0 0.0
  %5928 = vmatpush1.msra.mxu0 0.0
  %5929 = vmatprep.subr.mxu0 0.0
  %5930 = vmatpush1.msra.mxu0 0.0
  %5931 = vmatprep.subr.mxu0 0.0
  %5932 = vmatpush1.msra.mxu0 0.0
  %5933 = vmatprep.subr.mxu0 0.0
  %5934 = vmatpush1.msra.mxu0 0.0
  %5935 = vmatprep.subr.mxu0 0.0
  %5936 = vmatpush1.msra.mxu0 0.0
  %5937 = vmatprep.subr.mxu0 0.0
  %5938 = vmatpush1.msra.mxu0 0.0
  %5939 = vmatprep.subr.mxu0 0.0
  %5940 = vmatpush1.msra.mxu0 0.0
  %5941 = vmatprep.subr.mxu0 0.0
  %5942 = vmatpush1.msra.mxu0 0.0
  %5943 = vmatprep.subr.mxu0 0.0
  %5944 = vmatpush1.msra.mxu0 0.0
  %5945 = vmatprep.subr.mxu0 0.0
  %5946 = vmatpush1.msra.mxu0 0.0
  %5947 = vmatprep.subr.mxu0 0.0
  %5948 = vmatpush1.msra.mxu0 0.0
  %5949 = vmatprep.subr.mxu0 0.0
  %5950 = vmatpush1.msra.mxu0 0.0
  %5951 = vmatprep.subr.mxu0 0.0
  %5952 = vmatpush1.msra.mxu0 0.0
  %5953 = vmatprep.subr.mxu0 0.0
  %5954 = vmatpush1.msra.mxu0 0.0
  %5955 = vmatprep.subr.mxu0 0.0
  %5956 = vmatpush1.msra.mxu0 0.0
  %5957 = vmatprep.subr.mxu0 0.0
  %5958 = vmatpush1.msra.mxu0 0.0
  %5959 = vmatprep.subr.mxu0 0.0
  %5960 = vmatpush1.msra.mxu0 0.0
  %5961 = vmatprep.subr.mxu0 0.0
  %5962 = vmatpush1.msra.mxu0 0.0
  %5963 = vmatprep.subr.mxu0 0.0
  %5964 = vmatpush1.msra.mxu0 0.0
  %5965 = vmatprep.mubr.f32.mxu0 0.0
  %5966 = vmatmul.mubr.f32.gmra.mrb[0].mxu0 %v5548
  %v5967 = vpop.f32.mrb[0].mxu0
  %v5968 = vadd.f32 %v2248, %v5967
  %v5969 = vpop.f32.mrb[0].mxu0
  %5970 = vdwg.mxu0
  %5971 = vmatprep.subr.mxu0 0.0
  %5972 = vmatpush1.msra.mxu0 %v2327
  %5973 = vmatprep.subr.mxu0 0.0
  %5974 = vmatpush1.msra.mxu0 0.0
  %5975 = vmatprep.subr.mxu0 0.0
  %5976 = vmatpush1.msra.mxu0 0.0
  %5977 = vmatprep.subr.mxu0 0.0
  %5978 = vmatpush1.msra.mxu0 0.0
  %5979 = vmatprep.subr.mxu0 0.0
  %5980 = vmatpush1.msra.mxu0 0.0
  %5981 = vmatprep.subr.mxu0 0.0
  %5982 = vmatpush1.msra.mxu0 0.0
  %5983 = vmatprep.subr.mxu0 0.0
  %5984 = vmatpush1.msra.mxu0 0.0
  %5985 = vmatprep.subr.mxu0 0.0
  %5986 = vmatpush1.msra.mxu0 0.0
  %5987 = vmatprep.subr.mxu0 0.0
  %5988 = vmatpush1.msra.mxu0 0.0
  %5989 = vmatprep.subr.mxu0 0.0
  %5990 = vmatpush1.msra.mxu0 0.0
  %5991 = vmatprep.subr.mxu0 0.0
  %5992 = vmatpush1.msra.mxu0 0.0
  %5993 = vmatprep.subr.mxu0 0.0
  %5994 = vmatpush1.msra.mxu0 0.0
  %5995 = vmatprep.subr.mxu0 0.0
  %5996 = vmatpush1.msra.mxu0 0.0
  %5997 = vmatprep.subr.mxu0 0.0
  %5998 = vmatpush1.msra.mxu0 0.0
  %5999 = vmatprep.subr.mxu0 0.0
  %6000 = vmatpush1.msra.mxu0 0.0
  %6001 = vmatprep.subr.mxu0 0.0
  %6002 = vmatpush1.msra.mxu0 0.0
  %6003 = vmatprep.subr.mxu0 0.0
  %6004 = vmatpush1.msra.mxu0 0.0
  %6005 = vmatprep.subr.mxu0 0.0
  %6006 = vmatpush1.msra.mxu0 0.0
  %6007 = vmatprep.subr.mxu0 0.0
  %6008 = vmatpush1.msra.mxu0 0.0
  %6009 = vmatprep.subr.mxu0 0.0
  %6010 = vmatpush1.msra.mxu0 0.0
  %6011 = vmatprep.subr.mxu0 0.0
  %6012 = vmatpush1.msra.mxu0 0.0
  %6013 = vmatprep.subr.mxu0 0.0
  %6014 = vmatpush1.msra.mxu0 0.0
  %6015 = vmatprep.subr.mxu0 0.0
  %6016 = vmatpush1.msra.mxu0 0.0
  %6017 = vmatprep.subr.mxu0 0.0
  %6018 = vmatpush1.msra.mxu0 0.0
  %6019 = vmatprep.subr.mxu0 0.0
  %6020 = vmatpush1.msra.mxu0 0.0
  %6021 = vmatprep.subr.mxu0 0.0
  %6022 = vmatpush1.msra.mxu0 0.0
  %6023 = vmatprep.subr.mxu0 0.0
  %6024 = vmatpush1.msra.mxu0 0.0
  %6025 = vmatprep.subr.mxu0 0.0
  %6026 = vmatpush1.msra.mxu0 0.0
  %6027 = vmatprep.subr.mxu0 0.0
  %6028 = vmatpush1.msra.mxu0 0.0
  %6029 = vmatprep.subr.mxu0 0.0
  %6030 = vmatpush1.msra.mxu0 0.0
  %6031 = vmatprep.subr.mxu0 0.0
  %6032 = vmatpush1.msra.mxu0 0.0
  %6033 = vmatprep.subr.mxu0 0.0
  %6034 = vmatpush1.msra.mxu0 0.0
  %6035 = vmatprep.mubr.f32.mxu0 0.0
  %6036 = vmatmul.mubr.f32.gmra.mrb[0].mxu0 %v5548
  %v6037 = vpop.f32.mrb[0].mxu0
  %v6038 = vadd.f32 %v2325, %v6037
  %v6039 = vpop.f32.mrb[0].mxu0
  %6040 = vdwg.mxu0
  %v6041 = vmax.f32 %v6038, 0.0
  %vm6042 = vcmp.ne.f32.partialorder %v6038, %v6038
  %v6043 = vadd.f32 %v6038, 0.0
  %v6044 = vand.u32 2147483647, %v6038
  %v6045 = vsub.f32 0.0, %v6044
  %v6046 = vmul.f32 %v6045, 1.442695
  %v6047 = vpow.pop %v6046
  %v6048 = vadd.f32 %v6047, 1.0
  %v6049 = vlog2.pop %v6048
  %v6050 = vmul.f32 %v6049, 0.6931472
  %v6051 = vmul.f32 -0.5, %v6047
  %v6052 = vadd.f32 %v6051, 1.0
  %v6053 = vmul.f32 %v6052, %v6047
  %v6054 = vand.u32 2147483647, %v6047
  %vm6055 = vcmp.lt.f32.partialorder %v6054, 0.0004427343
  %v6056 = vsel %vm6055, %v6053, %v6050
  %v6057 = vadd.f32 %v6041, %v6056
  %v6058 = vsel %vm6042, %v6043, %v6057
  %v6060 = vsel %vm2421, %v6058, 0
  %6062 = vmatprep.subr.mxu0 0.0
  %6063 = vmatpush1.msra.mxu0 %v47
  %6064 = vmatprep.subr.mxu0 0.0
  %6065 = vmatpush1.msra.mxu0 %v48
  %6066 = vmatprep.subr.mxu0 0.0
  %6067 = vmatpush1.msra.mxu0 %v49
  %6068 = vmatprep.subr.mxu0 0.0
  %6069 = vmatpush1.msra.mxu0 %v50
  %6070 = vmatprep.subr.mxu0 0.0
  %6071 = vmatpush1.msra.mxu0 %v51
  %6072 = vmatprep.subr.mxu0 0.0
  %6073 = vmatpush1.msra.mxu0 %v52
  %6074 = vmatprep.subr.mxu0 0.0
  %6075 = vmatpush1.msra.mxu0 %v53
  %6076 = vmatprep.subr.mxu0 0.0
  %6077 = vmatpush1.msra.mxu0 %v54
  %6078 = vmatprep.subr.mxu0 0.0
  %6079 = vmatpush1.msra.mxu0 0.0
  %6080 = vmatprep.subr.mxu0 0.0
  %6081 = vmatpush1.msra.mxu0 0.0
  %6082 = vmatprep.subr.mxu0 0.0
  %6083 = vmatpush1.msra.mxu0 0.0
  %6084 = vmatprep.subr.mxu0 0.0
  %6085 = vmatpush1.msra.mxu0 0.0
  %6086 = vmatprep.subr.mxu0 0.0
  %6087 = vmatpush1.msra.mxu0 0.0
  %6088 = vmatprep.subr.mxu0 0.0
  %6089 = vmatpush1.msra.mxu0 0.0
  %6090 = vmatprep.subr.mxu0 0.0
  %6091 = vmatpush1.msra.mxu0 0.0
  %6092 = vmatprep.subr.mxu0 0.0
  %6093 = vmatpush1.msra.mxu0 0.0
  %6094 = vmatprep.subr.mxu0 0.0
  %6095 = vmatpush1.msra.mxu0 0.0
  %6096 = vmatprep.subr.mxu0 0.0
  %6097 = vmatpush1.msra.mxu0 0.0
  %6098 = vmatprep.subr.mxu0 0.0
  %6099 = vmatpush1.msra.mxu0 0.0
  %6100 = vmatprep.subr.mxu0 0.0
  %6101 = vmatpush1.msra.mxu0 0.0
  %6102 = vmatprep.subr.mxu0 0.0
  %6103 = vmatpush1.msra.mxu0 0.0
  %6104 = vmatprep.subr.mxu0 0.0
  %6105 = vmatpush1.msra.mxu0 0.0
  %6106 = vmatprep.subr.mxu0 0.0
  %6107 = vmatpush1.msra.mxu0 0.0
  %6108 = vmatprep.subr.mxu0 0.0
  %6109 = vmatpush1.msra.mxu0 0.0
  %6110 = vmatprep.subr.mxu0 0.0
  %6111 = vmatpush1.msra.mxu0 0.0
  %6112 = vmatprep.subr.mxu0 0.0
  %6113 = vmatpush1.msra.mxu0 0.0
  %6114 = vmatprep.subr.mxu0 0.0
  %6115 = vmatpush1.msra.mxu0 0.0
  %6116 = vmatprep.subr.mxu0 0.0
  %6117 = vmatpush1.msra.mxu0 0.0
  %6118 = vmatprep.subr.mxu0 0.0
  %6119 = vmatpush1.msra.mxu0 0.0
  %6120 = vmatprep.subr.mxu0 0.0
  %6121 = vmatpush1.msra.mxu0 0.0
  %6122 = vmatprep.subr.mxu0 0.0
  %6123 = vmatpush1.msra.mxu0 0.0
  %6124 = vmatprep.subr.mxu0 0.0
  %6125 = vmatpush1.msra.mxu0 0.0
  %6126 = vmatprep.mubr.f32.mxu0 0.0
  %6127 = vmatmul.mubr.f32.gmra.mrb[0].mxu0 %v6060
  %v6128 = vpop.f32.mrb[0].mxu0
  %v6129 = vadd.f32 %v2420, %v6128
  %v6130 = vpop.f32.mrb[0].mxu0
  %6131 = vdwg.mxu0
  %v6132 = vxor.u32 %v6129, 2147483648
  %v6133 = vmul.f32 %v6132, 1.442695
  %v6134 = vpow.pop %v6133
  %v6135 = vadd.f32 %v6134, 1.0
  %v6136 = vrcp.pop %v6135
  %v6137 = vmul.f32 1.0, %v6136
  %v6138 = vsub.f32 %v5898, %v5968
  %v6139 = vmax.f32 %v6137, 1e-07
  %v6140 = vrcp.pop %v6139
  %v6141 = vmul.f32 %v6138, %v6140
  %v6142 = vmul.f32 %v6141, %v6141
  %v6143 = vsel %vm1962, %v6142, 0.0
  %6144 = vadd.xlane.f32.xlu0 %v6143
  %v6145 = vpop.xlane.xlu0 %6144
  %v6146 = vmul.f32 %v6145, 0.005
  %v6147 = vadd.f32 %v5540, %v6146
  %v6148 = vmul.f32 %v5898, 0.01
  %v6149 = vadd.f32 %v5546, %v6148
  %v6150 = vrot.slane %v61, 6
  %v6152 = vmul.f32 %v6137, %v6150
  %v6153 = vadd.f32 %v6149, %v6152
  %v6155 = vsel %vm66, %v6153, 0
  %6157 = vmatprep.subr.mxu0 0.0
  %6158 = vmatpush1.msra.mxu0 %v1885
  %6159 = vmatprep.subr.mxu0 0.0
  %6160 = vmatpush1.msra.mxu0 0.0
  %6161 = vmatprep.subr.mxu0 0.0
  %6162 = vmatpush1.msra.mxu0 0.0
  %6163 = vmatprep.subr.mxu0 0.0
  %6164 = vmatpush1.msra.mxu0 0.0
  %6165 = vmatprep.subr.mxu0 0.0
  %6166 = vmatpush1.msra.mxu0 0.0
  %6167 = vmatprep.subr.mxu0 0.0
  %6168 = vmatpush1.msra.mxu0 0.0
  %6169 = vmatprep.subr.mxu0 0.0
  %6170 = vmatpush1.msra.mxu0 0.0
  %6171 = vmatprep.subr.mxu0 0.0
  %6172 = vmatpush1.msra.mxu0 0.0
  %6173 = vmatprep.subr.mxu0 0.0
  %6174 = vmatpush1.msra.mxu0 0.0
  %6175 = vmatprep.subr.mxu0 0.0
  %6176 = vmatpush1.msra.mxu0 0.0
  %6177 = vmatprep.subr.mxu0 0.0
  %6178 = vmatpush1.msra.mxu0 0.0
  %6179 = vmatprep.subr.mxu0 0.0
  %6180 = vmatpush1.msra.mxu0 0.0
  %6181 = vmatprep.subr.mxu0 0.0
  %6182 = vmatpush1.msra.mxu0 0.0
  %6183 = vmatprep.subr.mxu0 0.0
  %6184 = vmatpush1.msra.mxu0 0.0
  %6185 = vmatprep.subr.mxu0 0.0
  %6186 = vmatpush1.msra.mxu0 0.0
  %6187 = vmatprep.subr.mxu0 0.0
  %6188 = vmatpush1.msra.mxu0 0.0
  %6189 = vmatprep.subr.mxu0 0.0
  %6190 = vmatpush1.msra.mxu0 0.0
  %6191 = vmatprep.subr.mxu0 0.0
  %6192 = vmatpush1.msra.mxu0 0.0
  %6193 = vmatprep.subr.mxu0 0.0
  %6194 = vmatpush1.msra.mxu0 0.0
  %6195 = vmatprep.subr.mxu0 0.0
  %6196 = vmatpush1.msra.mxu0 0.0
  %6197 = vmatprep.subr.mxu0 0.0
  %6198 = vmatpush1.msra.mxu0 0.0
  %6199 = vmatprep.subr.mxu0 0.0
  %6200 = vmatpush1.msra.mxu0 0.0
  %6201 = vmatprep.subr.mxu0 0.0
  %6202 = vmatpush1.msra.mxu0 0.0
  %6203 = vmatprep.subr.mxu0 0.0
  %6204 = vmatpush1.msra.mxu0 0.0
  %6205 = vmatprep.subr.mxu0 0.0
  %6206 = vmatpush1.msra.mxu0 0.0
  %6207 = vmatprep.subr.mxu0 0.0
  %6208 = vmatpush1.msra.mxu0 0.0
  %6209 = vmatprep.subr.mxu0 0.0
  %6210 = vmatpush1.msra.mxu0 0.0
  %6211 = vmatprep.subr.mxu0 0.0
  %6212 = vmatpush1.msra.mxu0 0.0
  %6213 = vmatprep.subr.mxu0 0.0
  %6214 = vmatpush1.msra.mxu0 0.0
  %6215 = vmatprep.subr.mxu0 0.0
  %6216 = vmatpush1.msra.mxu0 0.0
  %6217 = vmatprep.subr.mxu0 0.0
  %6218 = vmatpush1.msra.mxu0 0.0
  %6219 = vmatprep.subr.mxu0 0.0
  %6220 = vmatpush1.msra.mxu0 0.0
  %6221 = vmatprep.mubr.f32.mxu0 0.0
  %6222 = vmatmul.mubr.f32.gmra.mrb[0].mxu0 %v6155
  %v6223 = vpop.f32.mrb[0].mxu0
  %v6224 = vadd.f32 %v1880, %v6223
  %v6225 = vpop.f32.mrb[0].mxu0
  %6226 = vdwg.mxu0
  %v6228 = vrot.slane %v6224, 2
  %v6230 = vsub.f32 %v59, %v6228
  %v6231 = vmul.f32 %v6230, %v6230
  %v6232 = vsub.f32 0.0, %v6231
  %v6233 = vmul.f32 %v6232, 200.0
  %v6234 = vsub.f32 %v6233, -2.0767937
  %v6235 = vsel %vm3814, %v6234, 0.0
  %6236 = vadd.xlane.f32.xlu0 %v6235
  %v6237 = vpop.xlane.xlu0 %6236
  %v6238 = vmul.f32 %v6224, %v6224
  %v6239 = vsel %vm1962, %v6238, 0.0
  %6240 = vadd.xlane.f32.xlu0 %v6239
  %v6241 = vpop.xlane.xlu0 %6240
  %v6242 = vrsqrt.pop %v6241
  %v6243 = vmul.f32 %v6241, %v6242
  %vm6244 = vcmp.eq.f32.partialorder %v6241, inf
  %v6245 = vsel %vm6244, %v6241, %v6243
  %vm6246 = vcmp.eq.f32.partialorder %v6241, 0.0
  %v6247 = vand.u32 %v6241, 2147483648
  %v6248 = vsel %vm6246, %v6247, %v6245
  %v6250 = vrot.slane %v6237, 6
  %v6252 = vadd.f32 %v5645, %v6250
  %v6253 = vadd.f32 %v5646, %v6248
  %v6254 = vlaneseq
  %v6255 = vshrl.u32 %v6254, 7
  %v6256 = vsub.s32 0, %v6255
  %v6257 = vrot.slane %v57, %v6256
  %6259 = vrot.lane.b32.xlu0 %v1861, 124
  %v6260 = vpop.permute.xlu0 %6259
  %v6262 = vsub.f32 %v6257, %v6260
  %v6263 = vmul.f32 %v1861, 2.0
  %v6264 = vmul.f32 %v6263, 1.442695
  %v6265 = vpow.pop %v6264
  %v6266 = vlaneseq
  %v6267 = vshrl.u32 %v6266, 7
  %v6268 = vsub.s32 0, %v6267
  %v6269 = vrot.slane %v56, %v6268
  %v6270 = vsub.f32 %v1861, %v6269
  %v6271 = vmul.f32 %v6270, %v6270
  %6273 = vrot.lane.b32.xlu0 %v6271, 4
  %v6274 = vpop.permute.xlu0 %6273
  %v6276 = vadd.f32 %v6265, %v6274
  %v6277 = vmul.f32 %v57, 2.0
  %v6278 = vmul.f32 %v6277, 1.442695
  %v6279 = vpow.pop %v6278
  %v6280 = vmul.f32 %v6279, 2.0
  %v6281 = vlaneseq
  %v6282 = vshrl.u32 %v6281, 7
  %v6283 = vsub.s32 0, %v6282
  %v6284 = vrot.slane %v6280, %v6283
  %6286 = vrot.lane.b32.xlu0 %v6284, 4
  %v6287 = vpop.permute.xlu0 %6286
  %v6289 = vrcp.pop %v6287
  %v6290 = vmul.f32 %v6276, %v6289
  %6292 = vrot.lane.b32.xlu0 %v6290, 124
  %v6293 = vpop.permute.xlu0 %6292
  %v6295 = vadd.f32 %v6262, %v6293
  %v6296 = vsub.f32 %v6295, 0.5
  %v6297 = vsel %vm1962, %v6296, 0.0
  %6298 = vadd.xlane.f32.xlu0 %v6297
  %v6299 = vpop.xlane.xlu0 %6298
  %vm6300 = vcmask 1024
  %v6301 = vsel %vm6300, %v6252, 0.0
  %v6302 = vrot.slane %v6301, 4
  %v6303 = vadd.f32 %v6301, %v6302
  %v6304 = vrot.slane %v6303, 2
  %v6305 = vadd.f32 %v6303, %v6304
  %v6306 = vrot.slane %v6305, 1
  %v6307 = vadd.f32 %v6305, %v6306
  %v6308 = vmul.f32 %v6307, 0.5
  %v6309 = vmul.f32 %v6147, 35.0
  %v6310 = vadd.f32 %v6299, %v6309
  %v6311 = vsel %vm1607, %v6310, 0.0
  %v6312 = vrot.slane %v6311, 4
  %v6313 = vadd.f32 %v6311, %v6312
  %v6314 = vrot.slane %v6313, 2
  %v6315 = vadd.f32 %v6313, %v6314
  %v6316 = vrot.slane %v6315, 1
  %v6317 = vadd.f32 %v6315, %v6316
  %v6318 = vmul.f32 %v6317, 0.5
  %v6319 = vsel %vm1607, %v6253, 0.0
  %v6320 = vrot.slane %v6319, 4
  %v6321 = vadd.f32 %v6319, %v6320
  %v6322 = vrot.slane %v6321, 2
  %v6323 = vadd.f32 %v6321, %v6322
  %v6324 = vrot.slane %v6323, 1
  %v6325 = vadd.f32 %v6323, %v6324
  %v6326 = vmul.f32 %v6325, 0.5
  %v6327 = vlaneseq
  %v6328 = vand.u32 %v6327, 127
  %vm6329 = vcmp.eq.s32.totalorder %v6328, 0
  %vm6330 = vcmp.eq.s32.totalorder %v6328, 1
  %vm6331 = vcmp.eq.s32.totalorder %v6328, 2
  %v6332 = vsel %vm6331, %v6326, 0.0
  %v6333 = vsel %vm6330, %v6318, %v6332
  %6335 = vset.pattern.permute.xlu0 0
  %6336 = vperm.xlu0 %6335, %v6308
  %v6337 = vpop.permute.xlu0 %6336
  %v6339 = vsel %vm6329, %v6337, %v6333
  %6340 = vst [vmem:[%s4] sm:$0x1] %v6339
  // Predicated region
  $region18: #{latent_sde_forward.3} parent=0 // pred_check
    _
  $region19: #{latent_sde_forward.3} parent=0 // pred_check_branch
    %6342 = sbr.rel (0) target = $region21
  $region20: #{latent_sde_forward.3} parent=0 // pred_region
    _
  $region21: #{latent_sde_forward.3} parent=0 // pred_fallthru
    _
  // Predicated region
  $region22: #{latent_sde_forward.3} parent=0 // pred_check
    _
  $region23: #{latent_sde_forward.3} parent=0 // pred_check_branch
    %6344 = sbr.rel (0) target = $region25
  $region24: #{latent_sde_forward.3} parent=0 // pred_region
    _
  $region25: #{latent_sde_forward.3} parent=0 // pred_fallthru
    _

</llo_original>
